<compile_context>
chip_gen: v5e
topology: v5e:2x2
jax: 0.10.0
libtpu: 0.0.40
codegen_flags: <defaults>
</compile_context>

<pallas_src>
import functools

import jax
import jax.numpy as jnp
from jax.experimental import pallas as pl
from jax.experimental.pallas import tpu as pltpu

HIGHEST = jax.lax.Precision.HIGHEST
USE_BF16 = True   # bf16 storage / MXU inputs, f32 accumulation


def _dot(a, b):
    return jnp.dot(a, b, preferred_element_type=jnp.float32)


# ---------------------------------------------------------------------------
# Fused GPS forward kernel: all layers in one invocation, everything in VMEM.
# ---------------------------------------------------------------------------
def make_gps_kernel(num_layers, num_heads, head_ch, m_feat, channels, use_bf16):
    mh = num_heads * m_feat           # folded q / k feature width
    ch = channels
    cdt = jnp.bfloat16 if use_bf16 else jnp.float32

    def kernel(x_ref, a_ref,
               wg1_ref, bg1_ref, wg2_ref, bg2_ref, bn1s_ref, bn1b_ref,
               wf_ref, bo_ref, bn2s_ref, bn2b_ref,
               wm1_ref, bm1_ref, wm2_ref, bm2_ref, bn3s_ref, bn3b_ref,
               out_ref):
        h = x_ref[...]                              # (N, C) f32
        a = a_ref[...]                              # (N, N) adjacency counts (cdt)

        for l in range(num_layers):                 # small L: static unroll is fine
            hb = h.astype(cdt)

            # -------- local branch: GINEConv (eps=0, edge_attr == 0) --------
            msg = _dot(a, jnp.maximum(hb, 0))                      # sum_j relu(x_j)
            g = jnp.maximum(_dot((h + msg).astype(cdt), wg1_ref[l]) + bg1_ref[l], 0.0)
            g = _dot(g.astype(cdt), wg2_ref[l]) + bg2_ref[l]
            h_local = (g + h) * bn1s_ref[l] + bn1b_ref[l]          # residual + BN1

            # -------- global branch: Performer linear attention (folded) --------
            fused = _dot(hb, wf_ref[l])            # (N, 2*mh + heads*C), one wide matmul
            qp = jnp.maximum(fused[:, :mh], 0.0) + 1e-3            # phi(q)
            kp = jnp.maximum(fused[:, mh:2 * mh], 0.0) + 1e-3      # phi(k)
            vw = fused[:, 2 * mh:]                                 # v @ wo (folded)
            kpT = jnp.transpose(kp)                # single transpose per layer (mh, N)

            attn = None
            for hd in range(num_heads):            # all slices 128-lane aligned
                qh = qp[:, hd * m_feat:(hd + 1) * m_feat]          # (N, m)
                kh = kp[:, hd * m_feat:(hd + 1) * m_feat]          # (N, m)
                vh = vw[:, hd * ch:(hd + 1) * ch]                  # (N, C)
                ksum = jnp.sum(kh, axis=0, keepdims=True)          # (1, m)
                denom = jnp.sum(qh * ksum, axis=-1, keepdims=True)  # (N, 1)
                d_inv = pl.reciprocal(denom, approx=True)
                ctx = _dot(kpT[hd * m_feat:(hd + 1) * m_feat, :].astype(cdt),
                           vh.astype(cdt))                         # (m, C)
                ho = _dot(qh.astype(cdt), ctx.astype(cdt)) * d_inv  # (N, C)
                attn = ho if attn is None else attn + ho
            attn = attn + bo_ref[l]                                # attn_out bias
            h_attn = (attn + h) * bn2s_ref[l] + bn2b_ref[l]        # residual + BN2

            # -------- combine branches + feed-forward block --------
            out = h_local + h_attn
            mm = jnp.maximum(_dot(out.astype(cdt), wm1_ref[l]) + bm1_ref[l], 0.0)
            mm = _dot(mm.astype(cdt), wm2_ref[l]) + bm2_ref[l]
            out = out + mm                                         # FFN residual
            h = out * bn3s_ref[l] + bn3b_ref[l]                    # BN3

        out_ref[...] = h

    return kernel


_FOLDED_ORDER = ("wg1", "bg1", "wg2", "bg2", "bn1_s", "bn1_b",
                 "wf", "bo", "bn2_s", "bn2_b",
                 "wm1", "bm1", "wm2", "bm2", "bn3_s", "bn3_b")


@functools.partial(jax.jit, static_argnames=("num_heads", "head_ch", "m_feat"))
def gps_forward(x, a_dense, folded, *, num_heads, head_ch, m_feat):
    n, c = x.shape
    num_layers = folded["wg1"].shape[0]
    use_bf16 = folded["wf"].dtype == jnp.bfloat16
    kernel = make_gps_kernel(num_layers, num_heads, head_ch, m_feat, c, use_bf16)
    args = (x, a_dense) + tuple(folded[k] for k in _FOLDED_ORDER)
    vmem = pl.BlockSpec(memory_space=pltpu.MemorySpace.VMEM)   # whole array, VMEM
    return pl.pallas_call(
        kernel,
        out_shape=jax.ShapeDtypeStruct((n, c), jnp.float32),
        in_specs=[vmem] * len(args),
        out_specs=vmem,
    )(*args)


# ---------------------------------------------------------------------------
# Host-side weight folding: proj into Wq/Wk, wo into Wv, fuse into one matrix.
# ---------------------------------------------------------------------------
def fold_params(p, num_heads, head_ch, m_feat, use_bf16=True):
    L, C, _ = p["wq"].shape
    wq = p["wq"].reshape(L, C, num_heads, head_ch)
    wk = p["wk"].reshape(L, C, num_heads, head_ch)
    wv = p["wv"].reshape(L, C, num_heads, head_ch)
    wo = p["wo"].reshape(L, num_heads, head_ch, C)
    proj = p["proj"]                                              # (L, head_ch, m)
    wqp = jnp.einsum("lchk,lkm->lchm", wq, proj,
                     precision=HIGHEST).reshape(L, C, num_heads * m_feat)
    wkp = jnp.einsum("lchk,lkm->lchm", wk, proj,
                     precision=HIGHEST).reshape(L, C, num_heads * m_feat)
    wvo = jnp.einsum("lchk,lhkd->lchd", wv, wo,
                     precision=HIGHEST).reshape(L, C, num_heads * C)
    wf = jnp.concatenate([wqp, wkp, wvo], axis=-1)                # (L, C, 2*H*m + H*C)

    wdt = jnp.bfloat16 if use_bf16 else jnp.float32
    return {
        "wg1": p["wg1"].astype(wdt), "bg1": p["bg1"],
        "wg2": p["wg2"].astype(wdt), "bg2": p["bg2"],
        "bn1_s": p["bn1_s"], "bn1_b": p["bn1_b"],
        "wf": wf.astype(wdt), "bo": p["bo"],
        "bn2_s": p["bn2_s"], "bn2_b": p["bn2_b"],
        "wm1": p["wm1"].astype(wdt), "bm1": p["bm1"],
        "wm2": p["wm2"].astype(wdt), "bm2": p["bm2"],
        "bn3_s": p["bn3_s"], "bn3_b": p["bn3_b"],
    }


# ---------------------------------------------------------------------------
# Pure-JAX reference (original unfolded math, f32 HIGHEST precision).
# ---------------------------------------------------------------------------
def gps_reference(x, a, p):
    hp = HIGHEST
    num_layers = p["wg1"].shape[0]
    head_ch = p["proj"].shape[1]
    num_heads = p["wq"].shape[2] // head_ch

    h = x
    for l in range(num_layers):
        msg = jnp.dot(a, jnp.maximum(h, 0.0), precision=hp)
        g = jnp.maximum(jnp.dot(h + msg, p["wg1"][l], precision=hp) + p["bg1"][l], 0.0)
        g = jnp.dot(g, p["wg2"][l], precision=hp) + p["bg2"][l]
        h_local = (g + h) * p["bn1_s"][l] + p["bn1_b"][l]

        q = jnp.dot(h, p["wq"][l], precision=hp)
        k = jnp.dot(h, p["wk"][l], precision=hp)
        v = jnp.dot(h, p["wv"][l], precision=hp)
        pt = p["proj"][l]
        outs = []
        for hd in range(num_heads):
            sl = slice(hd * head_ch, (hd + 1) * head_ch)
            qp = jnp.maximum(jnp.dot(q[:, sl], pt, precision=hp), 0.0) + 1e-3
            kp = jnp.maximum(jnp.dot(k[:, sl], pt, precision=hp), 0.0) + 1e-3
            ksum = jnp.sum(kp, axis=0, keepdims=True)
            d_inv = 1.0 / jnp.sum(qp * ksum, axis=-1, keepdims=True)
            ctx = jnp.dot(kp.T, v[:, sl], precision=hp)
            outs.append(jnp.dot(qp, ctx, precision=hp) * d_inv)
        attn = jnp.concatenate(outs, axis=-1)
        attn = jnp.dot(attn, p["wo"][l], precision=hp) + p["bo"][l]
        h_attn = (attn + h) * p["bn2_s"][l] + p["bn2_b"][l]

        out = h_local + h_attn
        m = jnp.maximum(jnp.dot(out, p["wm1"][l], precision=hp) + p["bm1"][l], 0.0)
        m = jnp.dot(m, p["wm2"][l], precision=hp) + p["bm2"][l]
        out = out + m
        h = out * p["bn3_s"][l] + p["bn3_b"][l]
    return h


# ---------------------------------------------------------------------------
# Parameter / input construction
# ---------------------------------------------------------------------------
def _bn_scale_shift(key, num_layers, c):
    kg, kb, km, kv = jax.random.split(key, 4)
    gamma = 1.0 + 0.1 * jax.random.normal(kg, (num_layers, 1, c), jnp.float32)
    beta = 0.1 * jax.random.normal(kb, (num_layers, 1, c), jnp.float32)
    mean = 0.1 * jax.random.normal(km, (num_layers, 1, c), jnp.float32)
    var = 1.0 + 0.1 * jnp.abs(jax.random.normal(kv, (num_layers, 1, c), jnp.float32))
    scale = gamma * jax.lax.rsqrt(var + 1e-5)          # eval-mode BatchNorm folded
    shift = beta - mean * scale
    return scale, shift


def init_params(key, c, num_layers, heads, head_ch, m_feat):
    inner = heads * head_ch
    ks = jax.random.split(key, 18)
    s = 0.08

    def g(k, shape):
        return s * jax.random.normal(k, shape, jnp.float32)

    bn1_s, bn1_b = _bn_scale_shift(ks[0], num_layers, c)
    bn2_s, bn2_b = _bn_scale_shift(ks[1], num_layers, c)
    bn3_s, bn3_b = _bn_scale_shift(ks[2], num_layers, c)
    return {
        # GINEConv nn: Linear(C,C) -> ReLU -> Linear(C,C)
        "wg1": g(ks[3], (num_layers, c, c)), "bg1": g(ks[4], (num_layers, 1, c)),
        "wg2": g(ks[5], (num_layers, c, c)), "bg2": g(ks[6], (num_layers, 1, c)),
        "bn1_s": bn1_s, "bn1_b": bn1_b,
        # PerformerAttention: q/k/v (no bias), shared random projection, attn_out
        "wq": g(ks[7], (num_layers, c, inner)),
        "wk": g(ks[8], (num_layers, c, inner)),
        "wv": g(ks[9], (num_layers, c, inner)),
        "proj": jax.random.normal(ks[10], (num_layers, head_ch, m_feat), jnp.float32),
        "wo": g(ks[11], (num_layers, inner, c)), "bo": g(ks[12], (num_layers, 1, c)),
        "bn2_s": bn2_s, "bn2_b": bn2_b,
        # GPSConv MLP: Linear(C,2C) -> ReLU -> Linear(2C,C)
        "wm1": g(ks[13], (num_layers, c, 2 * c)), "bm1": g(ks[14], (num_layers, 1, 2 * c)),
        "wm2": g(ks[15], (num_layers, 2 * c, c)), "bm2": g(ks[16], (num_layers, 1, c)),
        "bn3_s": bn3_s, "bn3_b": bn3_b,
    }


def build_dense_adj(edge_index, n):
    # A[dst, src] counts edge multiplicities (== PyG sum aggregation over edges).
    a = jnp.zeros((n, n), dtype=jnp.float32)
    return a.at[edge_index[1], edge_index[0]].add(1.0)


if __name__ == "__main__":
    # Small config: layers=2, channels=128, heads=2, head_channels=64, 128 random
    # features; 256 nodes (full MXU row occupancy), bidirectional ring graph.
    N, C, LAYERS, HEADS, HEAD_CH, M_FEAT = 256, 128, 2, 2, 64, 128

    key = jax.random.PRNGKey(0)
    k_x, k_p = jax.random.split(key)

    inputs = jax.random.normal(k_x, (N, C), jnp.float32)     # node features

    src = jnp.arange(N, dtype=jnp.int32)
    dst = (src + 1) % N
    edge_index = jnp.concatenate(
        [jnp.stack([src, dst]), jnp.stack([dst, src])], axis=1)   # [2, 2N]

    a_dense = build_dense_adj(edge_index, N)                 # f32 (exact counts)
    params = init_params(k_p, C, LAYERS, HEADS, HEAD_CH, M_FEAT)
    folded = fold_params(params, HEADS, HEAD_CH, M_FEAT, use_bf16=USE_BF16)
    a_kernel = a_dense.astype(jnp.bfloat16 if USE_BF16 else jnp.float32)

    out = gps_forward(inputs, a_kernel, folded,
                      num_heads=HEADS, head_ch=HEAD_CH, m_feat=M_FEAT)
    jax.block_until_ready(out)

    ref = gps_reference(inputs, a_dense, params)
    assert out.shape == (N, C)
    # bf16 weight/activation storage with f32 accumulation: check relative
    # Frobenius error (expected ~0.5-1%); structural bugs would be O(1).
    rel = float(jnp.linalg.norm(out - ref) / jnp.linalg.norm(ref))
    assert jnp.all(jnp.isfinite(out)) and rel < 3e-2, "rel frob err = %g" % rel
    print("KERNEL_OK")
</pallas_src>

<mosaic_0001>
module attributes {stable_mosaic.version = 11 : i64} {
  func.func @kernel(%arg0: memref<256x128xf32, #tpu.memory_space<vmem>>, %arg1: memref<256x256xbf16, #tpu.memory_space<vmem>>, %arg2: memref<2x128x128xbf16, #tpu.memory_space<vmem>>, %arg3: memref<2x1x128xf32, #tpu.memory_space<vmem>>, %arg4: memref<2x128x128xbf16, #tpu.memory_space<vmem>>, %arg5: memref<2x1x128xf32, #tpu.memory_space<vmem>>, %arg6: memref<2x1x128xf32, #tpu.memory_space<vmem>>, %arg7: memref<2x1x128xf32, #tpu.memory_space<vmem>>, %arg8: memref<2x128x768xbf16, #tpu.memory_space<vmem>>, %arg9: memref<2x1x128xf32, #tpu.memory_space<vmem>>, %arg10: memref<2x1x128xf32, #tpu.memory_space<vmem>>, %arg11: memref<2x1x128xf32, #tpu.memory_space<vmem>>, %arg12: memref<2x128x256xbf16, #tpu.memory_space<vmem>>, %arg13: memref<2x1x256xf32, #tpu.memory_space<vmem>>, %arg14: memref<2x256x128xbf16, #tpu.memory_space<vmem>>, %arg15: memref<2x1x128xf32, #tpu.memory_space<vmem>>, %arg16: memref<2x1x128xf32, #tpu.memory_space<vmem>>, %arg17: memref<2x1x128xf32, #tpu.memory_space<vmem>>, %arg18: memref<256x128xf32, #tpu.memory_space<vmem>>) attributes {dimension_semantics = [], scalar_prefetch = 0 : i64, scratch_operands = 0 : i64, tpu.core_type = #tpu.core_type<tc>} {
    %c0 = arith.constant 0 : index
    %c0_0 = arith.constant 0 : index
    %0 = vector.load %arg0[%c0, %c0_0] : memref<256x128xf32, #tpu.memory_space<vmem>>, vector<256x128xf32>
    %c0_1 = arith.constant 0 : index
    %c0_2 = arith.constant 0 : index
    %1 = vector.load %arg1[%c0_1, %c0_2] : memref<256x256xbf16, #tpu.memory_space<vmem>>, vector<256x256xbf16>
    %2 = arith.truncf %0 : vector<256x128xf32> to vector<256x128xbf16>
    %cst = arith.constant 0.000000e+00 : bf16
    %3 = vector.broadcast %cst : bf16 to vector<256x128xbf16>
    %4 = arith.maximumf %2, %3 : vector<256x128xbf16>
    %cst_3 = arith.constant dense<0.000000e+00> : vector<256x128xf32>
    %5 = tpu.matmul %1, %4, %cst_3 {dimension_numbers = #tpu.dot_dimension_numbers<[1], [0], [0], [1], [0, 0, 1, 1], [], []>} : vector<256x256xbf16>, vector<256x128xbf16>, vector<256x128xf32> -> vector<256x128xf32>
    %6 = arith.addf %0, %5 : vector<256x128xf32>
    %7 = arith.truncf %6 : vector<256x128xf32> to vector<256x128xbf16>
    %c0_4 = arith.constant 0 : index
    %c0_5 = arith.constant 0 : index
    %c0_6 = arith.constant 0 : index
    %8 = vector.load %arg2[%c0_4, %c0_5, %c0_6] : memref<2x128x128xbf16, #tpu.memory_space<vmem>>, vector<1x128x128xbf16>
    %9 = vector.shape_cast %8 : vector<1x128x128xbf16> to vector<128x128xbf16>
    %cst_7 = arith.constant dense<0.000000e+00> : vector<256x128xf32>
    %10 = tpu.matmul %7, %9, %cst_7 {dimension_numbers = #tpu.dot_dimension_numbers<[1], [0], [0], [1], [0, 0, 1, 1], [], []>} : vector<256x128xbf16>, vector<128x128xbf16>, vector<256x128xf32> -> vector<256x128xf32>
    %c0_8 = arith.constant 0 : index
    %c0_9 = arith.constant 0 : index
    %c0_10 = arith.constant 0 : index
    %11 = vector.load %arg3[%c0_8, %c0_9, %c0_10] : memref<2x1x128xf32, #tpu.memory_space<vmem>>, vector<1x1x128xf32>
    %12 = vector.shape_cast %11 : vector<1x1x128xf32> to vector<1x128xf32>
    %13 = vector.broadcast %12 : vector<1x128xf32> to vector<256x128xf32>
    %14 = arith.addf %10, %13 : vector<256x128xf32>
    %cst_11 = arith.constant 0.000000e+00 : f32
    %15 = vector.broadcast %cst_11 : f32 to vector<256x128xf32>
    %16 = arith.maximumf %14, %15 : vector<256x128xf32>
    %17 = arith.truncf %16 : vector<256x128xf32> to vector<256x128xbf16>
    %c0_12 = arith.constant 0 : index
    %c0_13 = arith.constant 0 : index
    %c0_14 = arith.constant 0 : index
    %18 = vector.load %arg4[%c0_12, %c0_13, %c0_14] : memref<2x128x128xbf16, #tpu.memory_space<vmem>>, vector<1x128x128xbf16>
    %19 = vector.shape_cast %18 : vector<1x128x128xbf16> to vector<128x128xbf16>
    %cst_15 = arith.constant dense<0.000000e+00> : vector<256x128xf32>
    %20 = tpu.matmul %17, %19, %cst_15 {dimension_numbers = #tpu.dot_dimension_numbers<[1], [0], [0], [1], [0, 0, 1, 1], [], []>} : vector<256x128xbf16>, vector<128x128xbf16>, vector<256x128xf32> -> vector<256x128xf32>
    %c0_16 = arith.constant 0 : index
    %c0_17 = arith.constant 0 : index
    %c0_18 = arith.constant 0 : index
    %21 = vector.load %arg5[%c0_16, %c0_17, %c0_18] : memref<2x1x128xf32, #tpu.memory_space<vmem>>, vector<1x1x128xf32>
    %22 = vector.shape_cast %21 : vector<1x1x128xf32> to vector<1x128xf32>
    %23 = vector.broadcast %22 : vector<1x128xf32> to vector<256x128xf32>
    %24 = arith.addf %20, %23 : vector<256x128xf32>
    %25 = arith.addf %24, %0 : vector<256x128xf32>
    %c0_19 = arith.constant 0 : index
    %c0_20 = arith.constant 0 : index
    %c0_21 = arith.constant 0 : index
    %26 = vector.load %arg6[%c0_19, %c0_20, %c0_21] : memref<2x1x128xf32, #tpu.memory_space<vmem>>, vector<1x1x128xf32>
    %27 = vector.shape_cast %26 : vector<1x1x128xf32> to vector<1x128xf32>
    %28 = vector.broadcast %27 : vector<1x128xf32> to vector<256x128xf32>
    %29 = arith.mulf %25, %28 : vector<256x128xf32>
    %c0_22 = arith.constant 0 : index
    %c0_23 = arith.constant 0 : index
    %c0_24 = arith.constant 0 : index
    %30 = vector.load %arg7[%c0_22, %c0_23, %c0_24] : memref<2x1x128xf32, #tpu.memory_space<vmem>>, vector<1x1x128xf32>
    %31 = vector.shape_cast %30 : vector<1x1x128xf32> to vector<1x128xf32>
    %32 = vector.broadcast %31 : vector<1x128xf32> to vector<256x128xf32>
    %33 = arith.addf %29, %32 : vector<256x128xf32>
    %c0_25 = arith.constant 0 : index
    %c0_26 = arith.constant 0 : index
    %c0_27 = arith.constant 0 : index
    %34 = vector.load %arg8[%c0_25, %c0_26, %c0_27] : memref<2x128x768xbf16, #tpu.memory_space<vmem>>, vector<1x128x768xbf16>
    %35 = vector.shape_cast %34 : vector<1x128x768xbf16> to vector<128x768xbf16>
    %cst_28 = arith.constant dense<0.000000e+00> : vector<256x768xf32>
    %36 = tpu.matmul %2, %35, %cst_28 {dimension_numbers = #tpu.dot_dimension_numbers<[1], [0], [0], [1], [0, 0, 1, 1], [], []>} : vector<256x128xbf16>, vector<128x768xbf16>, vector<256x768xf32> -> vector<256x768xf32>
    %37 = vector.extract_strided_slice %36 {offsets = [0, 0], sizes = [256, 256], strides = [1, 1]} : vector<256x768xf32> to vector<256x256xf32>
    %cst_29 = arith.constant 0.000000e+00 : f32
    %38 = vector.broadcast %cst_29 : f32 to vector<256x256xf32>
    %39 = arith.maximumf %37, %38 : vector<256x256xf32>
    %cst_30 = arith.constant 1.000000e-03 : f32
    %40 = vector.broadcast %cst_30 : f32 to vector<256x256xf32>
    %41 = arith.addf %39, %40 : vector<256x256xf32>
    %42 = vector.extract_strided_slice %36 {offsets = [0, 256], sizes = [256, 256], strides = [1, 1]} : vector<256x768xf32> to vector<256x256xf32>
    %cst_31 = arith.constant 0.000000e+00 : f32
    %43 = vector.broadcast %cst_31 : f32 to vector<256x256xf32>
    %44 = arith.maximumf %42, %43 : vector<256x256xf32>
    %cst_32 = arith.constant 1.000000e-03 : f32
    %45 = vector.broadcast %cst_32 : f32 to vector<256x256xf32>
    %46 = arith.addf %44, %45 : vector<256x256xf32>
    %47 = vector.extract_strided_slice %36 {offsets = [0, 512], sizes = [256, 256], strides = [1, 1]} : vector<256x768xf32> to vector<256x256xf32>
    %48 = tpu.transpose %46, [1, 0] : vector<256x256xf32> -> vector<256x256xf32>
    %49 = vector.extract_strided_slice %41 {offsets = [0, 0], sizes = [256, 128], strides = [1, 1]} : vector<256x256xf32> to vector<256x128xf32>
    %50 = vector.extract_strided_slice %46 {offsets = [0, 0], sizes = [256, 128], strides = [1, 1]} : vector<256x256xf32> to vector<256x128xf32>
    %51 = vector.extract_strided_slice %47 {offsets = [0, 0], sizes = [256, 128], strides = [1, 1]} : vector<256x256xf32> to vector<256x128xf32>
    %cst_33 = arith.constant dense<0.000000e+00> : vector<128xf32>
    %52 = vector.multi_reduction <add>, %50, %cst_33 [0] : vector<256x128xf32> to vector<128xf32>
    %53 = vector.shape_cast %52 : vector<128xf32> to vector<1x128xf32>
    %54 = vector.broadcast %53 : vector<1x128xf32> to vector<256x128xf32>
    %55 = arith.mulf %49, %54 : vector<256x128xf32>
    %cst_34 = arith.constant dense<0.000000e+00> : vector<256xf32>
    %56 = vector.multi_reduction <add>, %55, %cst_34 [1] : vector<256x128xf32> to vector<256xf32>
    %57 = vector.shape_cast %56 : vector<256xf32> to vector<256x1xf32>
    %58 = tpu.reciprocal %57 {approx = true} : vector<256x1xf32> -> vector<256x1xf32>
    %59 = vector.extract_strided_slice %48 {offsets = [0, 0], sizes = [128, 256], strides = [1, 1]} : vector<256x256xf32> to vector<128x256xf32>
    %60 = arith.truncf %59 : vector<128x256xf32> to vector<128x256xbf16>
    %61 = arith.truncf %51 : vector<256x128xf32> to vector<256x128xbf16>
    %cst_35 = arith.constant dense<0.000000e+00> : vector<128x128xf32>
    %62 = tpu.matmul %60, %61, %cst_35 {dimension_numbers = #tpu.dot_dimension_numbers<[1], [0], [0], [1], [0, 0, 1, 1], [], []>} : vector<128x256xbf16>, vector<256x128xbf16>, vector<128x128xf32> -> vector<128x128xf32>
    %63 = arith.truncf %49 : vector<256x128xf32> to vector<256x128xbf16>
    %64 = arith.truncf %62 : vector<128x128xf32> to vector<128x128xbf16>
    %cst_36 = arith.constant dense<0.000000e+00> : vector<256x128xf32>
    %65 = tpu.matmul %63, %64, %cst_36 {dimension_numbers = #tpu.dot_dimension_numbers<[1], [0], [0], [1], [0, 0, 1, 1], [], []>} : vector<256x128xbf16>, vector<128x128xbf16>, vector<256x128xf32> -> vector<256x128xf32>
    %66 = vector.broadcast %58 : vector<256x1xf32> to vector<256x128xf32>
    %67 = arith.mulf %65, %66 : vector<256x128xf32>
    %68 = vector.extract_strided_slice %41 {offsets = [0, 128], sizes = [256, 128], strides = [1, 1]} : vector<256x256xf32> to vector<256x128xf32>
    %69 = vector.extract_strided_slice %46 {offsets = [0, 128], sizes = [256, 128], strides = [1, 1]} : vector<256x256xf32> to vector<256x128xf32>
    %70 = vector.extract_strided_slice %47 {offsets = [0, 128], sizes = [256, 128], strides = [1, 1]} : vector<256x256xf32> to vector<256x128xf32>
    %cst_37 = arith.constant dense<0.000000e+00> : vector<128xf32>
    %71 = vector.multi_reduction <add>, %69, %cst_37 [0] : vector<256x128xf32> to vector<128xf32>
    %72 = vector.shape_cast %71 : vector<128xf32> to vector<1x128xf32>
    %73 = vector.broadcast %72 : vector<1x128xf32> to vector<256x128xf32>
    %74 = arith.mulf %68, %73 : vector<256x128xf32>
    %cst_38 = arith.constant dense<0.000000e+00> : vector<256xf32>
    %75 = vector.multi_reduction <add>, %74, %cst_38 [1] : vector<256x128xf32> to vector<256xf32>
    %76 = vector.shape_cast %75 : vector<256xf32> to vector<256x1xf32>
    %77 = tpu.reciprocal %76 {approx = true} : vector<256x1xf32> -> vector<256x1xf32>
    %78 = vector.extract_strided_slice %48 {offsets = [128, 0], sizes = [128, 256], strides = [1, 1]} : vector<256x256xf32> to vector<128x256xf32>
    %79 = arith.truncf %78 : vector<128x256xf32> to vector<128x256xbf16>
    %80 = arith.truncf %70 : vector<256x128xf32> to vector<256x128xbf16>
    %cst_39 = arith.constant dense<0.000000e+00> : vector<128x128xf32>
    %81 = tpu.matmul %79, %80, %cst_39 {dimension_numbers = #tpu.dot_dimension_numbers<[1], [0], [0], [1], [0, 0, 1, 1], [], []>} : vector<128x256xbf16>, vector<256x128xbf16>, vector<128x128xf32> -> vector<128x128xf32>
    %82 = arith.truncf %68 : vector<256x128xf32> to vector<256x128xbf16>
    %83 = arith.truncf %81 : vector<128x128xf32> to vector<128x128xbf16>
    %cst_40 = arith.constant dense<0.000000e+00> : vector<256x128xf32>
    %84 = tpu.matmul %82, %83, %cst_40 {dimension_numbers = #tpu.dot_dimension_numbers<[1], [0], [0], [1], [0, 0, 1, 1], [], []>} : vector<256x128xbf16>, vector<128x128xbf16>, vector<256x128xf32> -> vector<256x128xf32>
    %85 = vector.broadcast %77 : vector<256x1xf32> to vector<256x128xf32>
    %86 = arith.mulf %84, %85 : vector<256x128xf32>
    %87 = arith.addf %67, %86 : vector<256x128xf32>
    %c0_41 = arith.constant 0 : index
    %c0_42 = arith.constant 0 : index
    %c0_43 = arith.constant 0 : index
    %88 = vector.load %arg9[%c0_41, %c0_42, %c0_43] : memref<2x1x128xf32, #tpu.memory_space<vmem>>, vector<1x1x128xf32>
    %89 = vector.shape_cast %88 : vector<1x1x128xf32> to vector<1x128xf32>
    %90 = vector.broadcast %89 : vector<1x128xf32> to vector<256x128xf32>
    %91 = arith.addf %87, %90 : vector<256x128xf32>
    %92 = arith.addf %91, %0 : vector<256x128xf32>
    %c0_44 = arith.constant 0 : index
    %c0_45 = arith.constant 0 : index
    %c0_46 = arith.constant 0 : index
    %93 = vector.load %arg10[%c0_44, %c0_45, %c0_46] : memref<2x1x128xf32, #tpu.memory_space<vmem>>, vector<1x1x128xf32>
    %94 = vector.shape_cast %93 : vector<1x1x128xf32> to vector<1x128xf32>
    %95 = vector.broadcast %94 : vector<1x128xf32> to vector<256x128xf32>
    %96 = arith.mulf %92, %95 : vector<256x128xf32>
    %c0_47 = arith.constant 0 : index
    %c0_48 = arith.constant 0 : index
    %c0_49 = arith.constant 0 : index
    %97 = vector.load %arg11[%c0_47, %c0_48, %c0_49] : memref<2x1x128xf32, #tpu.memory_space<vmem>>, vector<1x1x128xf32>
    %98 = vector.shape_cast %97 : vector<1x1x128xf32> to vector<1x128xf32>
    %99 = vector.broadcast %98 : vector<1x128xf32> to vector<256x128xf32>
    %100 = arith.addf %96, %99 : vector<256x128xf32>
    %101 = arith.addf %33, %100 : vector<256x128xf32>
    %102 = arith.truncf %101 : vector<256x128xf32> to vector<256x128xbf16>
    %c0_50 = arith.constant 0 : index
    %c0_51 = arith.constant 0 : index
    %c0_52 = arith.constant 0 : index
    %103 = vector.load %arg12[%c0_50, %c0_51, %c0_52] : memref<2x128x256xbf16, #tpu.memory_space<vmem>>, vector<1x128x256xbf16>
    %104 = vector.shape_cast %103 : vector<1x128x256xbf16> to vector<128x256xbf16>
    %cst_53 = arith.constant dense<0.000000e+00> : vector<256x256xf32>
    %105 = tpu.matmul %102, %104, %cst_53 {dimension_numbers = #tpu.dot_dimension_numbers<[1], [0], [0], [1], [0, 0, 1, 1], [], []>} : vector<256x128xbf16>, vector<128x256xbf16>, vector<256x256xf32> -> vector<256x256xf32>
    %c0_54 = arith.constant 0 : index
    %c0_55 = arith.constant 0 : index
    %c0_56 = arith.constant 0 : index
    %106 = vector.load %arg13[%c0_54, %c0_55, %c0_56] : memref<2x1x256xf32, #tpu.memory_space<vmem>>, vector<1x1x256xf32>
    %107 = vector.shape_cast %106 : vector<1x1x256xf32> to vector<1x256xf32>
    %108 = vector.broadcast %107 : vector<1x256xf32> to vector<256x256xf32>
    %109 = arith.addf %105, %108 : vector<256x256xf32>
    %cst_57 = arith.constant 0.000000e+00 : f32
    %110 = vector.broadcast %cst_57 : f32 to vector<256x256xf32>
    %111 = arith.maximumf %109, %110 : vector<256x256xf32>
    %112 = arith.truncf %111 : vector<256x256xf32> to vector<256x256xbf16>
    %c0_58 = arith.constant 0 : index
    %c0_59 = arith.constant 0 : index
    %c0_60 = arith.constant 0 : index
    %113 = vector.load %arg14[%c0_58, %c0_59, %c0_60] : memref<2x256x128xbf16, #tpu.memory_space<vmem>>, vector<1x256x128xbf16>
    %114 = vector.shape_cast %113 : vector<1x256x128xbf16> to vector<256x128xbf16>
    %cst_61 = arith.constant dense<0.000000e+00> : vector<256x128xf32>
    %115 = tpu.matmul %112, %114, %cst_61 {dimension_numbers = #tpu.dot_dimension_numbers<[1], [0], [0], [1], [0, 0, 1, 1], [], []>} : vector<256x256xbf16>, vector<256x128xbf16>, vector<256x128xf32> -> vector<256x128xf32>
    %c0_62 = arith.constant 0 : index
    %c0_63 = arith.constant 0 : index
    %c0_64 = arith.constant 0 : index
    %116 = vector.load %arg15[%c0_62, %c0_63, %c0_64] : memref<2x1x128xf32, #tpu.memory_space<vmem>>, vector<1x1x128xf32>
    %117 = vector.shape_cast %116 : vector<1x1x128xf32> to vector<1x128xf32>
    %118 = vector.broadcast %117 : vector<1x128xf32> to vector<256x128xf32>
    %119 = arith.addf %115, %118 : vector<256x128xf32>
    %120 = arith.addf %101, %119 : vector<256x128xf32>
    %c0_65 = arith.constant 0 : index
    %c0_66 = arith.constant 0 : index
    %c0_67 = arith.constant 0 : index
    %121 = vector.load %arg16[%c0_65, %c0_66, %c0_67] : memref<2x1x128xf32, #tpu.memory_space<vmem>>, vector<1x1x128xf32>
    %122 = vector.shape_cast %121 : vector<1x1x128xf32> to vector<1x128xf32>
    %123 = vector.broadcast %122 : vector<1x128xf32> to vector<256x128xf32>
    %124 = arith.mulf %120, %123 : vector<256x128xf32>
    %c0_68 = arith.constant 0 : index
    %c0_69 = arith.constant 0 : index
    %c0_70 = arith.constant 0 : index
    %125 = vector.load %arg17[%c0_68, %c0_69, %c0_70] : memref<2x1x128xf32, #tpu.memory_space<vmem>>, vector<1x1x128xf32>
    %126 = vector.shape_cast %125 : vector<1x1x128xf32> to vector<1x128xf32>
    %127 = vector.broadcast %126 : vector<1x128xf32> to vector<256x128xf32>
    %128 = arith.addf %124, %127 : vector<256x128xf32>
    %129 = arith.truncf %128 : vector<256x128xf32> to vector<256x128xbf16>
    %cst_71 = arith.constant 0.000000e+00 : bf16
    %130 = vector.broadcast %cst_71 : bf16 to vector<256x128xbf16>
    %131 = arith.maximumf %129, %130 : vector<256x128xbf16>
    %cst_72 = arith.constant dense<0.000000e+00> : vector<256x128xf32>
    %132 = tpu.matmul %1, %131, %cst_72 {dimension_numbers = #tpu.dot_dimension_numbers<[1], [0], [0], [1], [0, 0, 1, 1], [], []>} : vector<256x256xbf16>, vector<256x128xbf16>, vector<256x128xf32> -> vector<256x128xf32>
    %133 = arith.addf %128, %132 : vector<256x128xf32>
    %134 = arith.truncf %133 : vector<256x128xf32> to vector<256x128xbf16>
    %c1 = arith.constant 1 : index
    %c0_73 = arith.constant 0 : index
    %c0_74 = arith.constant 0 : index
    %135 = vector.load %arg2[%c1, %c0_73, %c0_74] : memref<2x128x128xbf16, #tpu.memory_space<vmem>>, vector<1x128x128xbf16>
    %136 = vector.shape_cast %135 : vector<1x128x128xbf16> to vector<128x128xbf16>
    %cst_75 = arith.constant dense<0.000000e+00> : vector<256x128xf32>
    %137 = tpu.matmul %134, %136, %cst_75 {dimension_numbers = #tpu.dot_dimension_numbers<[1], [0], [0], [1], [0, 0, 1, 1], [], []>} : vector<256x128xbf16>, vector<128x128xbf16>, vector<256x128xf32> -> vector<256x128xf32>
    %c1_76 = arith.constant 1 : index
    %c0_77 = arith.constant 0 : index
    %c0_78 = arith.constant 0 : index
    %138 = vector.load %arg3[%c1_76, %c0_77, %c0_78] : memref<2x1x128xf32, #tpu.memory_space<vmem>>, vector<1x1x128xf32>
    %139 = vector.shape_cast %138 : vector<1x1x128xf32> to vector<1x128xf32>
    %140 = vector.broadcast %139 : vector<1x128xf32> to vector<256x128xf32>
    %141 = arith.addf %137, %140 : vector<256x128xf32>
    %cst_79 = arith.constant 0.000000e+00 : f32
    %142 = vector.broadcast %cst_79 : f32 to vector<256x128xf32>
    %143 = arith.maximumf %141, %142 : vector<256x128xf32>
    %144 = arith.truncf %143 : vector<256x128xf32> to vector<256x128xbf16>
    %c1_80 = arith.constant 1 : index
    %c0_81 = arith.constant 0 : index
    %c0_82 = arith.constant 0 : index
    %145 = vector.load %arg4[%c1_80, %c0_81, %c0_82] : memref<2x128x128xbf16, #tpu.memory_space<vmem>>, vector<1x128x128xbf16>
    %146 = vector.shape_cast %145 : vector<1x128x128xbf16> to vector<128x128xbf16>
    %cst_83 = arith.constant dense<0.000000e+00> : vector<256x128xf32>
    %147 = tpu.matmul %144, %146, %cst_83 {dimension_numbers = #tpu.dot_dimension_numbers<[1], [0], [0], [1], [0, 0, 1, 1], [], []>} : vector<256x128xbf16>, vector<128x128xbf16>, vector<256x128xf32> -> vector<256x128xf32>
    %c1_84 = arith.constant 1 : index
    %c0_85 = arith.constant 0 : index
    %c0_86 = arith.constant 0 : index
    %148 = vector.load %arg5[%c1_84, %c0_85, %c0_86] : memref<2x1x128xf32, #tpu.memory_space<vmem>>, vector<1x1x128xf32>
    %149 = vector.shape_cast %148 : vector<1x1x128xf32> to vector<1x128xf32>
    %150 = vector.broadcast %149 : vector<1x128xf32> to vector<256x128xf32>
    %151 = arith.addf %147, %150 : vector<256x128xf32>
    %152 = arith.addf %151, %128 : vector<256x128xf32>
    %c1_87 = arith.constant 1 : index
    %c0_88 = arith.constant 0 : index
    %c0_89 = arith.constant 0 : index
    %153 = vector.load %arg6[%c1_87, %c0_88, %c0_89] : memref<2x1x128xf32, #tpu.memory_space<vmem>>, vector<1x1x128xf32>
    %154 = vector.shape_cast %153 : vector<1x1x128xf32> to vector<1x128xf32>
    %155 = vector.broadcast %154 : vector<1x128xf32> to vector<256x128xf32>
    %156 = arith.mulf %152, %155 : vector<256x128xf32>
    %c1_90 = arith.constant 1 : index
    %c0_91 = arith.constant 0 : index
    %c0_92 = arith.constant 0 : index
    %157 = vector.load %arg7[%c1_90, %c0_91, %c0_92] : memref<2x1x128xf32, #tpu.memory_space<vmem>>, vector<1x1x128xf32>
    %158 = vector.shape_cast %157 : vector<1x1x128xf32> to vector<1x128xf32>
    %159 = vector.broadcast %158 : vector<1x128xf32> to vector<256x128xf32>
    %160 = arith.addf %156, %159 : vector<256x128xf32>
    %c1_93 = arith.constant 1 : index
    %c0_94 = arith.constant 0 : index
    %c0_95 = arith.constant 0 : index
    %161 = vector.load %arg8[%c1_93, %c0_94, %c0_95] : memref<2x128x768xbf16, #tpu.memory_space<vmem>>, vector<1x128x768xbf16>
    %162 = vector.shape_cast %161 : vector<1x128x768xbf16> to vector<128x768xbf16>
    %cst_96 = arith.constant dense<0.000000e+00> : vector<256x768xf32>
    %163 = tpu.matmul %129, %162, %cst_96 {dimension_numbers = #tpu.dot_dimension_numbers<[1], [0], [0], [1], [0, 0, 1, 1], [], []>} : vector<256x128xbf16>, vector<128x768xbf16>, vector<256x768xf32> -> vector<256x768xf32>
    %164 = vector.extract_strided_slice %163 {offsets = [0, 0], sizes = [256, 256], strides = [1, 1]} : vector<256x768xf32> to vector<256x256xf32>
    %cst_97 = arith.constant 0.000000e+00 : f32
    %165 = vector.broadcast %cst_97 : f32 to vector<256x256xf32>
    %166 = arith.maximumf %164, %165 : vector<256x256xf32>
    %cst_98 = arith.constant 1.000000e-03 : f32
    %167 = vector.broadcast %cst_98 : f32 to vector<256x256xf32>
    %168 = arith.addf %166, %167 : vector<256x256xf32>
    %169 = vector.extract_strided_slice %163 {offsets = [0, 256], sizes = [256, 256], strides = [1, 1]} : vector<256x768xf32> to vector<256x256xf32>
    %cst_99 = arith.constant 0.000000e+00 : f32
    %170 = vector.broadcast %cst_99 : f32 to vector<256x256xf32>
    %171 = arith.maximumf %169, %170 : vector<256x256xf32>
    %cst_100 = arith.constant 1.000000e-03 : f32
    %172 = vector.broadcast %cst_100 : f32 to vector<256x256xf32>
    %173 = arith.addf %171, %172 : vector<256x256xf32>
    %174 = vector.extract_strided_slice %163 {offsets = [0, 512], sizes = [256, 256], strides = [1, 1]} : vector<256x768xf32> to vector<256x256xf32>
    %175 = tpu.transpose %173, [1, 0] : vector<256x256xf32> -> vector<256x256xf32>
    %176 = vector.extract_strided_slice %168 {offsets = [0, 0], sizes = [256, 128], strides = [1, 1]} : vector<256x256xf32> to vector<256x128xf32>
    %177 = vector.extract_strided_slice %173 {offsets = [0, 0], sizes = [256, 128], strides = [1, 1]} : vector<256x256xf32> to vector<256x128xf32>
    %178 = vector.extract_strided_slice %174 {offsets = [0, 0], sizes = [256, 128], strides = [1, 1]} : vector<256x256xf32> to vector<256x128xf32>
    %cst_101 = arith.constant dense<0.000000e+00> : vector<128xf32>
    %179 = vector.multi_reduction <add>, %177, %cst_101 [0] : vector<256x128xf32> to vector<128xf32>
    %180 = vector.shape_cast %179 : vector<128xf32> to vector<1x128xf32>
    %181 = vector.broadcast %180 : vector<1x128xf32> to vector<256x128xf32>
    %182 = arith.mulf %176, %181 : vector<256x128xf32>
    %cst_102 = arith.constant dense<0.000000e+00> : vector<256xf32>
    %183 = vector.multi_reduction <add>, %182, %cst_102 [1] : vector<256x128xf32> to vector<256xf32>
    %184 = vector.shape_cast %183 : vector<256xf32> to vector<256x1xf32>
    %185 = tpu.reciprocal %184 {approx = true} : vector<256x1xf32> -> vector<256x1xf32>
    %186 = vector.extract_strided_slice %175 {offsets = [0, 0], sizes = [128, 256], strides = [1, 1]} : vector<256x256xf32> to vector<128x256xf32>
    %187 = arith.truncf %186 : vector<128x256xf32> to vector<128x256xbf16>
    %188 = arith.truncf %178 : vector<256x128xf32> to vector<256x128xbf16>
    %cst_103 = arith.constant dense<0.000000e+00> : vector<128x128xf32>
    %189 = tpu.matmul %187, %188, %cst_103 {dimension_numbers = #tpu.dot_dimension_numbers<[1], [0], [0], [1], [0, 0, 1, 1], [], []>} : vector<128x256xbf16>, vector<256x128xbf16>, vector<128x128xf32> -> vector<128x128xf32>
    %190 = arith.truncf %176 : vector<256x128xf32> to vector<256x128xbf16>
    %191 = arith.truncf %189 : vector<128x128xf32> to vector<128x128xbf16>
    %cst_104 = arith.constant dense<0.000000e+00> : vector<256x128xf32>
    %192 = tpu.matmul %190, %191, %cst_104 {dimension_numbers = #tpu.dot_dimension_numbers<[1], [0], [0], [1], [0, 0, 1, 1], [], []>} : vector<256x128xbf16>, vector<128x128xbf16>, vector<256x128xf32> -> vector<256x128xf32>
    %193 = vector.broadcast %185 : vector<256x1xf32> to vector<256x128xf32>
    %194 = arith.mulf %192, %193 : vector<256x128xf32>
    %195 = vector.extract_strided_slice %168 {offsets = [0, 128], sizes = [256, 128], strides = [1, 1]} : vector<256x256xf32> to vector<256x128xf32>
    %196 = vector.extract_strided_slice %173 {offsets = [0, 128], sizes = [256, 128], strides = [1, 1]} : vector<256x256xf32> to vector<256x128xf32>
    %197 = vector.extract_strided_slice %174 {offsets = [0, 128], sizes = [256, 128], strides = [1, 1]} : vector<256x256xf32> to vector<256x128xf32>
    %cst_105 = arith.constant dense<0.000000e+00> : vector<128xf32>
    %198 = vector.multi_reduction <add>, %196, %cst_105 [0] : vector<256x128xf32> to vector<128xf32>
    %199 = vector.shape_cast %198 : vector<128xf32> to vector<1x128xf32>
    %200 = vector.broadcast %199 : vector<1x128xf32> to vector<256x128xf32>
    %201 = arith.mulf %195, %200 : vector<256x128xf32>
    %cst_106 = arith.constant dense<0.000000e+00> : vector<256xf32>
    %202 = vector.multi_reduction <add>, %201, %cst_106 [1] : vector<256x128xf32> to vector<256xf32>
    %203 = vector.shape_cast %202 : vector<256xf32> to vector<256x1xf32>
    %204 = tpu.reciprocal %203 {approx = true} : vector<256x1xf32> -> vector<256x1xf32>
    %205 = vector.extract_strided_slice %175 {offsets = [128, 0], sizes = [128, 256], strides = [1, 1]} : vector<256x256xf32> to vector<128x256xf32>
    %206 = arith.truncf %205 : vector<128x256xf32> to vector<128x256xbf16>
    %207 = arith.truncf %197 : vector<256x128xf32> to vector<256x128xbf16>
    %cst_107 = arith.constant dense<0.000000e+00> : vector<128x128xf32>
    %208 = tpu.matmul %206, %207, %cst_107 {dimension_numbers = #tpu.dot_dimension_numbers<[1], [0], [0], [1], [0, 0, 1, 1], [], []>} : vector<128x256xbf16>, vector<256x128xbf16>, vector<128x128xf32> -> vector<128x128xf32>
    %209 = arith.truncf %195 : vector<256x128xf32> to vector<256x128xbf16>
    %210 = arith.truncf %208 : vector<128x128xf32> to vector<128x128xbf16>
    %cst_108 = arith.constant dense<0.000000e+00> : vector<256x128xf32>
    %211 = tpu.matmul %209, %210, %cst_108 {dimension_numbers = #tpu.dot_dimension_numbers<[1], [0], [0], [1], [0, 0, 1, 1], [], []>} : vector<256x128xbf16>, vector<128x128xbf16>, vector<256x128xf32> -> vector<256x128xf32>
    %212 = vector.broadcast %204 : vector<256x1xf32> to vector<256x128xf32>
    %213 = arith.mulf %211, %212 : vector<256x128xf32>
    %214 = arith.addf %194, %213 : vector<256x128xf32>
    %c1_109 = arith.constant 1 : index
    %c0_110 = arith.constant 0 : index
    %c0_111 = arith.constant 0 : index
    %215 = vector.load %arg9[%c1_109, %c0_110, %c0_111] : memref<2x1x128xf32, #tpu.memory_space<vmem>>, vector<1x1x128xf32>
    %216 = vector.shape_cast %215 : vector<1x1x128xf32> to vector<1x128xf32>
    %217 = vector.broadcast %216 : vector<1x128xf32> to vector<256x128xf32>
    %218 = arith.addf %214, %217 : vector<256x128xf32>
    %219 = arith.addf %218, %128 : vector<256x128xf32>
    %c1_112 = arith.constant 1 : index
    %c0_113 = arith.constant 0 : index
    %c0_114 = arith.constant 0 : index
    %220 = vector.load %arg10[%c1_112, %c0_113, %c0_114] : memref<2x1x128xf32, #tpu.memory_space<vmem>>, vector<1x1x128xf32>
    %221 = vector.shape_cast %220 : vector<1x1x128xf32> to vector<1x128xf32>
    %222 = vector.broadcast %221 : vector<1x128xf32> to vector<256x128xf32>
    %223 = arith.mulf %219, %222 : vector<256x128xf32>
    %c1_115 = arith.constant 1 : index
    %c0_116 = arith.constant 0 : index
    %c0_117 = arith.constant 0 : index
    %224 = vector.load %arg11[%c1_115, %c0_116, %c0_117] : memref<2x1x128xf32, #tpu.memory_space<vmem>>, vector<1x1x128xf32>
    %225 = vector.shape_cast %224 : vector<1x1x128xf32> to vector<1x128xf32>
    %226 = vector.broadcast %225 : vector<1x128xf32> to vector<256x128xf32>
    %227 = arith.addf %223, %226 : vector<256x128xf32>
    %228 = arith.addf %160, %227 : vector<256x128xf32>
    %229 = arith.truncf %228 : vector<256x128xf32> to vector<256x128xbf16>
    %c1_118 = arith.constant 1 : index
    %c0_119 = arith.constant 0 : index
    %c0_120 = arith.constant 0 : index
    %230 = vector.load %arg12[%c1_118, %c0_119, %c0_120] : memref<2x128x256xbf16, #tpu.memory_space<vmem>>, vector<1x128x256xbf16>
    %231 = vector.shape_cast %230 : vector<1x128x256xbf16> to vector<128x256xbf16>
    %cst_121 = arith.constant dense<0.000000e+00> : vector<256x256xf32>
    %232 = tpu.matmul %229, %231, %cst_121 {dimension_numbers = #tpu.dot_dimension_numbers<[1], [0], [0], [1], [0, 0, 1, 1], [], []>} : vector<256x128xbf16>, vector<128x256xbf16>, vector<256x256xf32> -> vector<256x256xf32>
    %c1_122 = arith.constant 1 : index
    %c0_123 = arith.constant 0 : index
    %c0_124 = arith.constant 0 : index
    %233 = vector.load %arg13[%c1_122, %c0_123, %c0_124] : memref<2x1x256xf32, #tpu.memory_space<vmem>>, vector<1x1x256xf32>
    %234 = vector.shape_cast %233 : vector<1x1x256xf32> to vector<1x256xf32>
    %235 = vector.broadcast %234 : vector<1x256xf32> to vector<256x256xf32>
    %236 = arith.addf %232, %235 : vector<256x256xf32>
    %cst_125 = arith.constant 0.000000e+00 : f32
    %237 = vector.broadcast %cst_125 : f32 to vector<256x256xf32>
    %238 = arith.maximumf %236, %237 : vector<256x256xf32>
    %239 = arith.truncf %238 : vector<256x256xf32> to vector<256x256xbf16>
    %c1_126 = arith.constant 1 : index
    %c0_127 = arith.constant 0 : index
    %c0_128 = arith.constant 0 : index
    %240 = vector.load %arg14[%c1_126, %c0_127, %c0_128] : memref<2x256x128xbf16, #tpu.memory_space<vmem>>, vector<1x256x128xbf16>
    %241 = vector.shape_cast %240 : vector<1x256x128xbf16> to vector<256x128xbf16>
    %cst_129 = arith.constant dense<0.000000e+00> : vector<256x128xf32>
    %242 = tpu.matmul %239, %241, %cst_129 {dimension_numbers = #tpu.dot_dimension_numbers<[1], [0], [0], [1], [0, 0, 1, 1], [], []>} : vector<256x256xbf16>, vector<256x128xbf16>, vector<256x128xf32> -> vector<256x128xf32>
    %c1_130 = arith.constant 1 : index
    %c0_131 = arith.constant 0 : index
    %c0_132 = arith.constant 0 : index
    %243 = vector.load %arg15[%c1_130, %c0_131, %c0_132] : memref<2x1x128xf32, #tpu.memory_space<vmem>>, vector<1x1x128xf32>
    %244 = vector.shape_cast %243 : vector<1x1x128xf32> to vector<1x128xf32>
    %245 = vector.broadcast %244 : vector<1x128xf32> to vector<256x128xf32>
    %246 = arith.addf %242, %245 : vector<256x128xf32>
    %247 = arith.addf %228, %246 : vector<256x128xf32>
    %c1_133 = arith.constant 1 : index
    %c0_134 = arith.constant 0 : index
    %c0_135 = arith.constant 0 : index
    %248 = vector.load %arg16[%c1_133, %c0_134, %c0_135] : memref<2x1x128xf32, #tpu.memory_space<vmem>>, vector<1x1x128xf32>
    %249 = vector.shape_cast %248 : vector<1x1x128xf32> to vector<1x128xf32>
    %250 = vector.broadcast %249 : vector<1x128xf32> to vector<256x128xf32>
    %251 = arith.mulf %247, %250 : vector<256x128xf32>
    %c1_136 = arith.constant 1 : index
    %c0_137 = arith.constant 0 : index
    %c0_138 = arith.constant 0 : index
    %252 = vector.load %arg17[%c1_136, %c0_137, %c0_138] : memref<2x1x128xf32, #tpu.memory_space<vmem>>, vector<1x1x128xf32>
    %253 = vector.shape_cast %252 : vector<1x1x128xf32> to vector<1x128xf32>
    %254 = vector.broadcast %253 : vector<1x128xf32> to vector<256x128xf32>
    %255 = arith.addf %251, %254 : vector<256x128xf32>
    %c0_139 = arith.constant 0 : index
    %c0_140 = arith.constant 0 : index
    %256 = vector.load %arg18[%c0_139, %c0_140] : memref<256x128xf32, #tpu.memory_space<vmem>>, vector<256x128xf32>
    tpu.vector_store %arg18[%c0_139, %c0_140], %255 {strides = array<i32>} : memref<256x128xf32, #tpu.memory_space<vmem>>, vector<256x128xf32>,
    return
  }
}

</mosaic_0001>

<llo_original>
// kernel: gps_forward.1
$region0: #{gps_forward.1}
  #allocation0 [shape = 'u32[]', space=smem, size = 0x4, offset = 0x4, fixed_abs, tag = 'smem constant byte address 0x4 - core index']
  #allocation1 [shape = 'u32[72,128]{1,0:T(1,128)}', space=vmem, size = 0x9000, scoped, tag = 'internal scratch']
  %s0 = inlined_call_operand.hbm [shape: f32[256,128], index: 0, kind: input, shape index: {}]
  %s1 = inlined_call_operand.hbm [shape: bf16[256,256], index: 1, kind: input, shape index: {}]
  %s2 = inlined_call_operand.hbm [shape: bf16[2,128,128], index: 2, kind: input, shape index: {}]
  %s3 = inlined_call_operand.hbm [shape: f32[2,1,128], index: 3, kind: input, shape index: {}]
  %s4 = inlined_call_operand.hbm [shape: bf16[2,128,128], index: 4, kind: input, shape index: {}]
  %s5 = inlined_call_operand.vmem [shape: f32[2,1,128], index: 5, kind: input, shape index: {}]
  %s6 = inlined_call_operand.vmem [shape: f32[2,1,128], index: 6, kind: input, shape index: {}]
  %s7 = inlined_call_operand.hbm [shape: f32[2,1,128], index: 7, kind: input, shape index: {}]
  %s8 = inlined_call_operand.hbm [shape: bf16[2,128,768], index: 8, kind: input, shape index: {}]
  %s9 = inlined_call_operand.vmem [shape: f32[2,1,128], index: 9, kind: input, shape index: {}]
  %s10 = inlined_call_operand.vmem [shape: f32[2,1,128], index: 10, kind: input, shape index: {}]
  %s11 = inlined_call_operand.hbm [shape: f32[2,1,128], index: 11, kind: input, shape index: {}]
  %s12 = inlined_call_operand.hbm [shape: bf16[2,128,256], index: 12, kind: input, shape index: {}]
  %s13 = inlined_call_operand.hbm [shape: f32[2,1,256], index: 13, kind: input, shape index: {}]
  %s14 = inlined_call_operand.hbm [shape: bf16[2,256,128], index: 14, kind: input, shape index: {}]
  %s15 = inlined_call_operand.hbm [shape: f32[2,1,128], index: 15, kind: input, shape index: {}]
  %s16 = inlined_call_operand.vmem [shape: f32[2,1,128], index: 16, kind: input, shape index: {}]
  %s17 = inlined_call_operand.hbm [shape: f32[2,1,128], index: 17, kind: input, shape index: {}]
  %s18 = inlined_call_operand.hbm [shape: f32[256,128], index: 18, kind: output, shape index: {}]
  %s19 = sld [smem:[#allocation0]]
  $region134: #{gps_forward.1} parent=0
    _
  %s21 = ssub.s32 1, %s19
  %s22 = scalar_select 0, %s21, %s19
  $region1: #{gps_forward.1} parent=0
    #allocation2 [shape = 'u8[131072]{0}', space=vmem, size = 0x20000, scoped, tag = 'input window, operand 0, single buffered']
    #allocation3 [shape = 's32[1]{0}', space=sflag, size = 0x4, scoped, tag = 'scoped memory for gps_forward.1']
    #allocation4 [shape = 's32[1]{0}', space=sflag, size = 0x4, scoped, tag = 'scoped memory for gps_forward.1']
    #allocation5 [shape = 'u8[131072]{0}', space=vmem, size = 0x20000, scoped, tag = 'input window, operand 1, single buffered']
    #allocation6 [shape = 's32[1]{0}', space=sflag, size = 0x4, scoped, tag = 'scoped memory for gps_forward.1']
    #allocation7 [shape = 'u8[65536]{0}', space=vmem, size = 0x10000, scoped, tag = 'input window, operand 2, single buffered']
    #allocation8 [shape = 'u8[1024]{0}', space=vmem, size = 0x400, scoped, tag = 'input window, operand 3, single buffered']
    #allocation9 [shape = 's32[1]{0}', space=sflag, size = 0x4, scoped, tag = 'scoped memory for gps_forward.1']
    #allocation10 [shape = 'u8[65536]{0}', space=vmem, size = 0x10000, scoped, tag = 'input window, operand 4, single buffered']
    #allocation11 [shape = 'u8[1024]{0}', space=vmem, size = 0x400, scoped, tag = 'input window, operand 7, single buffered']
    #allocation12 [shape = 's32[1]{0}', space=sflag, size = 0x4, scoped, tag = 'scoped memory for gps_forward.1']
    #allocation13 [shape = 'u8[393216]{0}', space=vmem, size = 0x60000, scoped, tag = 'input window, operand 8, single buffered']
    #allocation14 [shape = 'u8[1024]{0}', space=vmem, size = 0x400, scoped, tag = 'input window, operand 11, single buffered']
    #allocation15 [shape = 's32[1]{0}', space=sflag, size = 0x4, scoped, tag = 'scoped memory for gps_forward.1']
    #allocation16 [shape = 'u8[131072]{0}', space=vmem, size = 0x20000, scoped, tag = 'input window, operand 12, single buffered']
    #allocation17 [shape = 'u8[2048]{0}', space=vmem, size = 0x800, scoped, tag = 'input window, operand 13, single buffered']
    #allocation18 [shape = 's32[1]{0}', space=sflag, size = 0x4, scoped, tag = 'scoped memory for gps_forward.1']
    #allocation19 [shape = 'u8[131072]{0}', space=vmem, size = 0x20000, scoped, tag = 'input window, operand 14, single buffered']
    #allocation20 [shape = 'u8[1024]{0}', space=vmem, size = 0x400, scoped, tag = 'input window, operand 15, single buffered']
    #allocation21 [shape = 's32[1]{0}', space=sflag, size = 0x4, scoped, tag = 'scoped memory for gps_forward.1']
    #allocation22 [shape = 'u8[1024]{0}', space=vmem, size = 0x400, scoped, tag = 'input window, operand 17, single buffered']
    #allocation23 [shape = 'u8[131072]{0}', space=vmem, size = 0x20000, scoped, tag = 'output window, operand 0, single buffered']
    %23 = vsyncpa [#allocation3], 0
    %24 = vsyncpa [#allocation6], 0
    %25 = vsyncpa [#allocation9], 0
    %26 = vsyncpa [#allocation12], 0
    %27 = vsyncpa [#allocation15], 0
    %28 = vsyncpa [#allocation18], 0
    %29 = vsyncpa [#allocation21], 0
    %30 = vsyncpa [#allocation4], 0
    // Predicated region
    $region2: #{gps_forward.1} parent=1 // pred_check
      _
    $region3: #{gps_forward.1} parent=1 // pred_check_branch
      %32 = sbr.rel (0) target = $region5
    $region4: #{gps_forward.1} parent=1 // pred_region
      %34 = vsyncadd [#allocation3], 0
      %s35 = sshll.u32 %s0, 4
      %s36 = int_to_ptr.hbm [resolvable:$true] %s35
      %s37 = sshll.u32 [#allocation2], 4
      %s38 = int_to_ptr.vmem [resolvable:$true] %s37
      %43 = dma.hbm_to_vmem [thread:$0]  %s36, 4096, %s38, [#allocation3], 128, 128, 8
    $region5: #{gps_forward.1} parent=1 // pred_fallthru
      _
    // Predicated region
    $region6: #{gps_forward.1} parent=1 // pred_check
      _
    $region7: #{gps_forward.1} parent=1 // pred_check_branch
      %45 = sbr.rel (0) target = $region9
    $region8: #{gps_forward.1} parent=1 // pred_region
      %47 = vsyncadd [#allocation6], 0
      %s48 = sshll.u32 %s1, 4
      %s49 = int_to_ptr.hbm [resolvable:$true] %s48
      %s50 = sshll.u32 [#allocation5], 4
      %s51 = int_to_ptr.vmem [resolvable:$true] %s50
      %56 = dma.hbm_to_vmem [thread:$0]  %s49, 4096, %s51, [#allocation6], 128, 128, 8
    $region9: #{gps_forward.1} parent=1 // pred_fallthru
      _
    // Predicated region
    $region10: #{gps_forward.1} parent=1 // pred_check
      _
    $region11: #{gps_forward.1} parent=1 // pred_check_branch
      %58 = sbr.rel (0) target = $region13
    $region12: #{gps_forward.1} parent=1 // pred_region
      %60 = vsyncadd [#allocation6], 0
      %s61 = sshll.u32 %s2, 4
      %s62 = int_to_ptr.hbm [resolvable:$true] %s61
      %s63 = sshll.u32 [#allocation7], 4
      %s64 = int_to_ptr.vmem [resolvable:$true] %s63
      %69 = dma.hbm_to_vmem [thread:$0]  %s62, 2048, %s64, [#allocation6], 64, 64, 4
    $region13: #{gps_forward.1} parent=1 // pred_fallthru
      _
    // Predicated region
    $region14: #{gps_forward.1} parent=1 // pred_check
      _
    $region15: #{gps_forward.1} parent=1 // pred_check_branch
      %71 = sbr.rel (0) target = $region17
    $region16: #{gps_forward.1} parent=1 // pred_region
      %73 = vsyncadd [#allocation9], 0
      %s74 = sshll.u32 %s3, 4
      %s75 = int_to_ptr.hbm [resolvable:$true] %s74
      %s76 = sshll.u32 [#allocation8], 4
      %s77 = int_to_ptr.vmem [resolvable:$true] %s76
      %82 = dma.hbm_to_vmem [thread:$0]  %s75, 32, %s77, [#allocation9], 16, 16, 1
    $region17: #{gps_forward.1} parent=1 // pred_fallthru
      _
    // Predicated region
    $region18: #{gps_forward.1} parent=1 // pred_check
      _
    $region19: #{gps_forward.1} parent=1 // pred_check_branch
      %84 = sbr.rel (0) target = $region21
    $region20: #{gps_forward.1} parent=1 // pred_region
      %86 = vsyncadd [#allocation9], 0
      %s87 = sshll.u32 %s4, 4
      %s88 = int_to_ptr.hbm [resolvable:$true] %s87
      %s89 = sshll.u32 [#allocation10], 4
      %s90 = int_to_ptr.vmem [resolvable:$true] %s89
      %95 = dma.hbm_to_vmem [thread:$0]  %s88, 2048, %s90, [#allocation9], 64, 64, 4
    $region21: #{gps_forward.1} parent=1 // pred_fallthru
      _
    // Predicated region
    $region22: #{gps_forward.1} parent=1 // pred_check
      _
    $region23: #{gps_forward.1} parent=1 // pred_check_branch
      %97 = sbr.rel (0) target = $region25
    $region24: #{gps_forward.1} parent=1 // pred_region
      _
    $region25: #{gps_forward.1} parent=1 // pred_fallthru
      _
    // Predicated region
    $region26: #{gps_forward.1} parent=1 // pred_check
      _
    $region27: #{gps_forward.1} parent=1 // pred_check_branch
      %99 = sbr.rel (0) target = $region29
    $region28: #{gps_forward.1} parent=1 // pred_region
      _
    $region29: #{gps_forward.1} parent=1 // pred_fallthru
      _
    // Predicated region
    $region30: #{gps_forward.1} parent=1 // pred_check
      _
    $region31: #{gps_forward.1} parent=1 // pred_check_branch
      %101 = sbr.rel (0) target = $region33
    $region32: #{gps_forward.1} parent=1 // pred_region
      %103 = vsyncadd [#allocation12], 0
      %s104 = sshll.u32 %s7, 4
      %s105 = int_to_ptr.hbm [resolvable:$true] %s104
      %s106 = sshll.u32 [#allocation11], 4
      %s107 = int_to_ptr.vmem [resolvable:$true] %s106
      %112 = dma.hbm_to_vmem [thread:$0]  %s105, 32, %s107, [#allocation12], 16, 16, 1
    $region33: #{gps_forward.1} parent=1 // pred_fallthru
      _
    // Predicated region
    $region34: #{gps_forward.1} parent=1 // pred_check
      _
    $region35: #{gps_forward.1} parent=1 // pred_check_branch
      %114 = sbr.rel (0) target = $region37
    $region36: #{gps_forward.1} parent=1 // pred_region
      %116 = vsyncadd [#allocation12], 0
      %s117 = sshll.u32 %s8, 4
      %s118 = int_to_ptr.hbm [resolvable:$true] %s117
      %s119 = sshll.u32 [#allocation13], 4
      %s120 = int_to_ptr.vmem [resolvable:$true] %s119
      %125 = dma.hbm_to_vmem [thread:$0]  %s118, 12288, %s120, [#allocation12], 384, 384, 24
    $region37: #{gps_forward.1} parent=1 // pred_fallthru
      _
    // Predicated region
    $region38: #{gps_forward.1} parent=1 // pred_check
      _
    $region39: #{gps_forward.1} parent=1 // pred_check_branch
      %127 = sbr.rel (0) target = $region41
    $region40: #{gps_forward.1} parent=1 // pred_region
      _
    $region41: #{gps_forward.1} parent=1 // pred_fallthru
      _
    // Predicated region
    $region42: #{gps_forward.1} parent=1 // pred_check
      _
    $region43: #{gps_forward.1} parent=1 // pred_check_branch
      %129 = sbr.rel (0) target = $region45
    $region44: #{gps_forward.1} parent=1 // pred_region
      _
    $region45: #{gps_forward.1} parent=1 // pred_fallthru
      _
    // Predicated region
    $region46: #{gps_forward.1} parent=1 // pred_check
      _
    $region47: #{gps_forward.1} parent=1 // pred_check_branch
      %131 = sbr.rel (0) target = $region49
    $region48: #{gps_forward.1} parent=1 // pred_region
      %133 = vsyncadd [#allocation15], 0
      %s134 = sshll.u32 %s11, 4
      %s135 = int_to_ptr.hbm [resolvable:$true] %s134
      %s136 = sshll.u32 [#allocation14], 4
      %s137 = int_to_ptr.vmem [resolvable:$true] %s136
      %142 = dma.hbm_to_vmem [thread:$0]  %s135, 32, %s137, [#allocation15], 16, 16, 1
    $region49: #{gps_forward.1} parent=1 // pred_fallthru
      _
    // Predicated region
    $region50: #{gps_forward.1} parent=1 // pred_check
      _
    $region51: #{gps_forward.1} parent=1 // pred_check_branch
      %144 = sbr.rel (0) target = $region53
    $region52: #{gps_forward.1} parent=1 // pred_region
      %146 = vsyncadd [#allocation15], 0
      %s147 = sshll.u32 %s12, 4
      %s148 = int_to_ptr.hbm [resolvable:$true] %s147
      %s149 = sshll.u32 [#allocation16], 4
      %s150 = int_to_ptr.vmem [resolvable:$true] %s149
      %155 = dma.hbm_to_vmem [thread:$0]  %s148, 4096, %s150, [#allocation15], 128, 128, 8
    $region53: #{gps_forward.1} parent=1 // pred_fallthru
      _
    // Predicated region
    $region54: #{gps_forward.1} parent=1 // pred_check
      _
    $region55: #{gps_forward.1} parent=1 // pred_check_branch
      %157 = sbr.rel (0) target = $region57
    $region56: #{gps_forward.1} parent=1 // pred_region
      %159 = vsyncadd [#allocation18], 0
      %s160 = sshll.u32 %s13, 4
      %s161 = int_to_ptr.hbm [resolvable:$true] %s160
      %s162 = sshll.u32 [#allocation17], 4
      %s163 = int_to_ptr.vmem [resolvable:$true] %s162
      %168 = dma.hbm_to_vmem [thread:$0]  %s161, 64, %s163, [#allocation18], 32, 32, 2
    $region57: #{gps_forward.1} parent=1 // pred_fallthru
      _
    // Predicated region
    $region58: #{gps_forward.1} parent=1 // pred_check
      _
    $region59: #{gps_forward.1} parent=1 // pred_check_branch
      %170 = sbr.rel (0) target = $region61
    $region60: #{gps_forward.1} parent=1 // pred_region
      %172 = vsyncadd [#allocation18], 0
      %s173 = sshll.u32 %s14, 4
      %s174 = int_to_ptr.hbm [resolvable:$true] %s173
      %s175 = sshll.u32 [#allocation19], 4
      %s176 = int_to_ptr.vmem [resolvable:$true] %s175
      %181 = dma.hbm_to_vmem [thread:$0]  %s174, 4096, %s176, [#allocation18], 64, 64, 4
    $region61: #{gps_forward.1} parent=1 // pred_fallthru
      _
    // Predicated region
    $region62: #{gps_forward.1} parent=1 // pred_check
      _
    $region63: #{gps_forward.1} parent=1 // pred_check_branch
      %183 = sbr.rel (0) target = $region65
    $region64: #{gps_forward.1} parent=1 // pred_region
      %185 = vsyncadd [#allocation21], 0
      %s186 = sshll.u32 %s15, 4
      %s187 = int_to_ptr.hbm [resolvable:$true] %s186
      %s188 = sshll.u32 [#allocation20], 4
      %s189 = int_to_ptr.vmem [resolvable:$true] %s188
      %194 = dma.hbm_to_vmem [thread:$0]  %s187, 32, %s189, [#allocation21], 16, 16, 1
    $region65: #{gps_forward.1} parent=1 // pred_fallthru
      _
    // Predicated region
    $region66: #{gps_forward.1} parent=1 // pred_check
      _
    $region67: #{gps_forward.1} parent=1 // pred_check_branch
      %196 = sbr.rel (0) target = $region69
    $region68: #{gps_forward.1} parent=1 // pred_region
      _
    $region69: #{gps_forward.1} parent=1 // pred_fallthru
      _
    // Predicated region
    $region70: #{gps_forward.1} parent=1 // pred_check
      _
    $region71: #{gps_forward.1} parent=1 // pred_check_branch
      %198 = sbr.rel (0) target = $region73
    $region72: #{gps_forward.1} parent=1 // pred_region
      %200 = vsyncadd [#allocation21], 0
      %s201 = sshll.u32 %s17, 4
      %s202 = int_to_ptr.hbm [resolvable:$true] %s201
      %s203 = sshll.u32 [#allocation22], 4
      %s204 = int_to_ptr.vmem [resolvable:$true] %s203
      %209 = dma.hbm_to_vmem [thread:$0]  %s202, 32, %s204, [#allocation21], 16, 16, 1
    $region73: #{gps_forward.1} parent=1 // pred_fallthru
      _
    // Predicated region
    $region74: #{gps_forward.1} parent=1 // pred_check
      _
    $region75: #{gps_forward.1} parent=1 // pred_check_branch
      %211 = sbr.rel (0) target = $region77
    $region76: #{gps_forward.1} parent=1 // pred_region
      %213 = dma.done [#allocation3], 4096
    $region77: #{gps_forward.1} parent=1 // pred_fallthru
      _
    // Predicated region
    $region78: #{gps_forward.1} parent=1 // pred_check
      _
    $region79: #{gps_forward.1} parent=1 // pred_check_branch
      %215 = sbr.rel (0) target = $region81
    $region80: #{gps_forward.1} parent=1 // pred_region
      %217 = dma.done [#allocation6], 4096
    $region81: #{gps_forward.1} parent=1 // pred_fallthru
      _
    // Predicated region
    $region82: #{gps_forward.1} parent=1 // pred_check
      _
    $region83: #{gps_forward.1} parent=1 // pred_check_branch
      %219 = sbr.rel (0) target = $region85
    $region84: #{gps_forward.1} parent=1 // pred_region
      %221 = dma.done [#allocation6], 2048
    $region85: #{gps_forward.1} parent=1 // pred_fallthru
      _
    // Predicated region
    $region86: #{gps_forward.1} parent=1 // pred_check
      _
    $region87: #{gps_forward.1} parent=1 // pred_check_branch
      %223 = sbr.rel (0) target = $region89
    $region88: #{gps_forward.1} parent=1 // pred_region
      %225 = dma.done [#allocation9], 32
    $region89: #{gps_forward.1} parent=1 // pred_fallthru
      _
    // Predicated region
    $region90: #{gps_forward.1} parent=1 // pred_check
      _
    $region91: #{gps_forward.1} parent=1 // pred_check_branch
      %227 = sbr.rel (0) target = $region93
    $region92: #{gps_forward.1} parent=1 // pred_region
      %229 = dma.done [#allocation9], 2048
    $region93: #{gps_forward.1} parent=1 // pred_fallthru
      _
    // Predicated region
    $region94: #{gps_forward.1} parent=1 // pred_check
      _
    $region95: #{gps_forward.1} parent=1 // pred_check_branch
      %231 = sbr.rel (0) target = $region97
    $region96: #{gps_forward.1} parent=1 // pred_region
      %233 = dma.done [#allocation12], 32
    $region97: #{gps_forward.1} parent=1 // pred_fallthru
      _
    // Predicated region
    $region98: #{gps_forward.1} parent=1 // pred_check
      _
    $region99: #{gps_forward.1} parent=1 // pred_check_branch
      %235 = sbr.rel (0) target = $region101
    $region100: #{gps_forward.1} parent=1 // pred_region
      %237 = dma.done [#allocation12], 12288
    $region101: #{gps_forward.1} parent=1 // pred_fallthru
      _
    // Predicated region
    $region102: #{gps_forward.1} parent=1 // pred_check
      _
    $region103: #{gps_forward.1} parent=1 // pred_check_branch
      %239 = sbr.rel (0) target = $region105
    $region104: #{gps_forward.1} parent=1 // pred_region
      %241 = dma.done [#allocation15], 32
    $region105: #{gps_forward.1} parent=1 // pred_fallthru
      _
    // Predicated region
    $region106: #{gps_forward.1} parent=1 // pred_check
      _
    $region107: #{gps_forward.1} parent=1 // pred_check_branch
      %243 = sbr.rel (0) target = $region109
    $region108: #{gps_forward.1} parent=1 // pred_region
      %245 = dma.done [#allocation15], 4096
    $region109: #{gps_forward.1} parent=1 // pred_fallthru
      _
    // Predicated region
    $region110: #{gps_forward.1} parent=1 // pred_check
      _
    $region111: #{gps_forward.1} parent=1 // pred_check_branch
      %247 = sbr.rel (0) target = $region113
    $region112: #{gps_forward.1} parent=1 // pred_region
      %249 = dma.done [#allocation18], 64
    $region113: #{gps_forward.1} parent=1 // pred_fallthru
      _
    // Predicated region
    $region114: #{gps_forward.1} parent=1 // pred_check
      _
    $region115: #{gps_forward.1} parent=1 // pred_check_branch
      %251 = sbr.rel (0) target = $region117
    $region116: #{gps_forward.1} parent=1 // pred_region
      %253 = dma.done [#allocation18], 4096
    $region117: #{gps_forward.1} parent=1 // pred_fallthru
      _
    // Predicated region
    $region118: #{gps_forward.1} parent=1 // pred_check
      _
    $region119: #{gps_forward.1} parent=1 // pred_check_branch
      %255 = sbr.rel (0) target = $region121
    $region120: #{gps_forward.1} parent=1 // pred_region
      %257 = dma.done [#allocation21], 32
    $region121: #{gps_forward.1} parent=1 // pred_fallthru
      _
    // Predicated region
    $region122: #{gps_forward.1} parent=1 // pred_check
      _
    $region123: #{gps_forward.1} parent=1 // pred_check_branch
      %259 = sbr.rel (0) target = $region125
    $region124: #{gps_forward.1} parent=1 // pred_region
      %261 = dma.done [#allocation21], 32
    $region125: #{gps_forward.1} parent=1 // pred_fallthru
      _
    %v262 = vld [vmem:[#allocation2] sm:$0xff]
    %v263 = vld [vmem:[#allocation2 + $0x8] sm:$0xff]
    %v264 = vld [vmem:[#allocation2 + $0x10] sm:$0xff]
    %v265 = vld [vmem:[#allocation2 + $0x18] sm:$0xff]
    %v266 = vld [vmem:[#allocation2 + $0x20] sm:$0xff]
    %v267 = vld [vmem:[#allocation2 + $0x28] sm:$0xff]
    %v268 = vld [vmem:[#allocation2 + $0x30] sm:$0xff]
    %v269 = vld [vmem:[#allocation2 + $0x38] sm:$0xff]
    %v270 = vld [vmem:[#allocation2 + $0x40] sm:$0xff]
    %v271 = vld [vmem:[#allocation2 + $0x48] sm:$0xff]
    %v272 = vld [vmem:[#allocation2 + $0x50] sm:$0xff]
    %v273 = vld [vmem:[#allocation2 + $0x58] sm:$0xff]
    %v274 = vld [vmem:[#allocation2 + $0x60] sm:$0xff]
    %v275 = vld [vmem:[#allocation2 + $0x68] sm:$0xff]
    %v276 = vld [vmem:[#allocation2 + $0x70] sm:$0xff]
    %v277 = vld [vmem:[#allocation2 + $0x78] sm:$0xff]
    %v278 = vld [vmem:[#allocation2 + $0x80] sm:$0xff]
    %v279 = vld [vmem:[#allocation2 + $0x88] sm:$0xff]
    %v280 = vld [vmem:[#allocation2 + $0x90] sm:$0xff]
    %v281 = vld [vmem:[#allocation2 + $0x98] sm:$0xff]
    %v282 = vld [vmem:[#allocation2 + $0xa0] sm:$0xff]
    %v283 = vld [vmem:[#allocation2 + $0xa8] sm:$0xff]
    %v284 = vld [vmem:[#allocation2 + $0xb0] sm:$0xff]
    %v285 = vld [vmem:[#allocation2 + $0xb8] sm:$0xff]
    %v286 = vld [vmem:[#allocation2 + $0xc0] sm:$0xff]
    %v287 = vld [vmem:[#allocation2 + $0xc8] sm:$0xff]
    %v288 = vld [vmem:[#allocation2 + $0xd0] sm:$0xff]
    %v289 = vld [vmem:[#allocation2 + $0xd8] sm:$0xff]
    %v290 = vld [vmem:[#allocation2 + $0xe0] sm:$0xff]
    %v291 = vld [vmem:[#allocation2 + $0xe8] sm:$0xff]
    %v292 = vld [vmem:[#allocation2 + $0xf0] sm:$0xff]
    %v293 = vld [vmem:[#allocation2 + $0xf8] sm:$0xff]
    %v294 = vld [vmem:[#allocation5] sm:$0xff]
    %v295 = vld [vmem:[#allocation5 + $0x8] sm:$0xff]
    %v296 = vld [vmem:[#allocation5 + $0x10] sm:$0xff]
    %v297 = vld [vmem:[#allocation5 + $0x18] sm:$0xff]
    %v298 = vld [vmem:[#allocation5 + $0x20] sm:$0xff]
    %v299 = vld [vmem:[#allocation5 + $0x28] sm:$0xff]
    %v300 = vld [vmem:[#allocation5 + $0x30] sm:$0xff]
    %v301 = vld [vmem:[#allocation5 + $0x38] sm:$0xff]
    %v302 = vld [vmem:[#allocation5 + $0x40] sm:$0xff]
    %v303 = vld [vmem:[#allocation5 + $0x48] sm:$0xff]
    %v304 = vld [vmem:[#allocation5 + $0x50] sm:$0xff]
    %v305 = vld [vmem:[#allocation5 + $0x58] sm:$0xff]
    %v306 = vld [vmem:[#allocation5 + $0x60] sm:$0xff]
    %v307 = vld [vmem:[#allocation5 + $0x68] sm:$0xff]
    %v308 = vld [vmem:[#allocation5 + $0x70] sm:$0xff]
    %v309 = vld [vmem:[#allocation5 + $0x78] sm:$0xff]
    %v310 = vld [vmem:[#allocation5 + $0x80] sm:$0xff]
    %v311 = vld [vmem:[#allocation5 + $0x88] sm:$0xff]
    %v312 = vld [vmem:[#allocation5 + $0x90] sm:$0xff]
    %v313 = vld [vmem:[#allocation5 + $0x98] sm:$0xff]
    %v314 = vld [vmem:[#allocation5 + $0xa0] sm:$0xff]
    %v315 = vld [vmem:[#allocation5 + $0xa8] sm:$0xff]
    %v316 = vld [vmem:[#allocation5 + $0xb0] sm:$0xff]
    %v317 = vld [vmem:[#allocation5 + $0xb8] sm:$0xff]
    %v318 = vld [vmem:[#allocation5 + $0xc0] sm:$0xff]
    %v319 = vld [vmem:[#allocation5 + $0xc8] sm:$0xff]
    %v320 = vld [vmem:[#allocation5 + $0xd0] sm:$0xff]
    %v321 = vld [vmem:[#allocation5 + $0xd8] sm:$0xff]
    %v322 = vld [vmem:[#allocation5 + $0xe0] sm:$0xff]
    %v323 = vld [vmem:[#allocation5 + $0xe8] sm:$0xff]
    %v324 = vld [vmem:[#allocation5 + $0xf0] sm:$0xff]
    %v325 = vld [vmem:[#allocation5 + $0xf8] sm:$0xff]
    %v326 = vpack.c.bf16 %v262, %v262
    %v327 = vpack.c.bf16 %v263, %v263
    %v328 = vpack.c.bf16 %v264, %v264
    %v329 = vpack.c.bf16 %v265, %v265
    %v330 = vpack.c.bf16 %v266, %v266
    %v331 = vpack.c.bf16 %v267, %v267
    %v332 = vpack.c.bf16 %v268, %v268
    %v333 = vpack.c.bf16 %v269, %v269
    %v334 = vpack.c.bf16 %v270, %v270
    %v335 = vpack.c.bf16 %v271, %v271
    %v336 = vpack.c.bf16 %v272, %v272
    %v337 = vpack.c.bf16 %v273, %v273
    %v338 = vpack.c.bf16 %v274, %v274
    %v339 = vpack.c.bf16 %v275, %v275
    %v340 = vpack.c.bf16 %v276, %v276
    %v341 = vpack.c.bf16 %v277, %v277
    %v342 = vpack.c.bf16 %v278, %v278
    %v343 = vpack.c.bf16 %v279, %v279
    %v344 = vpack.c.bf16 %v280, %v280
    %v345 = vpack.c.bf16 %v281, %v281
    %v346 = vpack.c.bf16 %v282, %v282
    %v347 = vpack.c.bf16 %v283, %v283
    %v348 = vpack.c.bf16 %v284, %v284
    %v349 = vpack.c.bf16 %v285, %v285
    %v350 = vpack.c.bf16 %v286, %v286
    %v351 = vpack.c.bf16 %v287, %v287
    %v352 = vpack.c.bf16 %v288, %v288
    %v353 = vpack.c.bf16 %v289, %v289
    %v354 = vpack.c.bf16 %v290, %v290
    %v355 = vpack.c.bf16 %v291, %v291
    %v356 = vpack.c.bf16 %v292, %v292
    %v357 = vpack.c.bf16 %v293, %v293
    %v358 = vunpack.c.l.bf16 %v326
    %v359 = vunpack.c.l.bf16 %v327
    %v360 = vunpack.c.l.bf16 %v328
    %v361 = vunpack.c.l.bf16 %v329
    %v362 = vunpack.c.l.bf16 %v330
    %v363 = vunpack.c.l.bf16 %v331
    %v364 = vunpack.c.l.bf16 %v332
    %v365 = vunpack.c.l.bf16 %v333
    %v366 = vunpack.c.l.bf16 %v334
    %v367 = vunpack.c.l.bf16 %v335
    %v368 = vunpack.c.l.bf16 %v336
    %v369 = vunpack.c.l.bf16 %v337
    %v370 = vunpack.c.l.bf16 %v338
    %v371 = vunpack.c.l.bf16 %v339
    %v372 = vunpack.c.l.bf16 %v340
    %v373 = vunpack.c.l.bf16 %v341
    %v374 = vunpack.c.l.bf16 %v342
    %v375 = vunpack.c.l.bf16 %v343
    %v376 = vunpack.c.l.bf16 %v344
    %v377 = vunpack.c.l.bf16 %v345
    %v378 = vunpack.c.l.bf16 %v346
    %v379 = vunpack.c.l.bf16 %v347
    %v380 = vunpack.c.l.bf16 %v348
    %v381 = vunpack.c.l.bf16 %v349
    %v382 = vunpack.c.l.bf16 %v350
    %v383 = vunpack.c.l.bf16 %v351
    %v384 = vunpack.c.l.bf16 %v352
    %v385 = vunpack.c.l.bf16 %v353
    %v386 = vunpack.c.l.bf16 %v354
    %v387 = vunpack.c.l.bf16 %v355
    %v388 = vunpack.c.l.bf16 %v356
    %v389 = vunpack.c.l.bf16 %v357
    %v390 = vmax.f32 %v358, 0.0
    %v391 = vmax.f32 %v359, 0.0
    %v392 = vmax.f32 %v360, 0.0
    %v393 = vmax.f32 %v361, 0.0
    %v394 = vmax.f32 %v362, 0.0
    %v395 = vmax.f32 %v363, 0.0
    %v396 = vmax.f32 %v364, 0.0
    %v397 = vmax.f32 %v365, 0.0
    %v398 = vmax.f32 %v366, 0.0
    %v399 = vmax.f32 %v367, 0.0
    %v400 = vmax.f32 %v368, 0.0
    %v401 = vmax.f32 %v369, 0.0
    %v402 = vmax.f32 %v370, 0.0
    %v403 = vmax.f32 %v371, 0.0
    %v404 = vmax.f32 %v372, 0.0
    %v405 = vmax.f32 %v373, 0.0
    %v406 = vmax.f32 %v374, 0.0
    %v407 = vmax.f32 %v375, 0.0
    %v408 = vmax.f32 %v376, 0.0
    %v409 = vmax.f32 %v377, 0.0
    %v410 = vmax.f32 %v378, 0.0
    %v411 = vmax.f32 %v379, 0.0
    %v412 = vmax.f32 %v380, 0.0
    %v413 = vmax.f32 %v381, 0.0
    %v414 = vmax.f32 %v382, 0.0
    %v415 = vmax.f32 %v383, 0.0
    %v416 = vmax.f32 %v384, 0.0
    %v417 = vmax.f32 %v385, 0.0
    %v418 = vmax.f32 %v386, 0.0
    %v419 = vmax.f32 %v387, 0.0
    %v420 = vmax.f32 %v388, 0.0
    %v421 = vmax.f32 %v389, 0.0
    %v422 = vpack.c.bf16 %v391, %v390
    %v423 = vpack.c.bf16 %v393, %v392
    %v424 = vpack.c.bf16 %v395, %v394
    %v425 = vpack.c.bf16 %v397, %v396
    %v426 = vpack.c.bf16 %v399, %v398
    %v427 = vpack.c.bf16 %v401, %v400
    %v428 = vpack.c.bf16 %v403, %v402
    %v429 = vpack.c.bf16 %v405, %v404
    %v430 = vpack.c.bf16 %v407, %v406
    %v431 = vpack.c.bf16 %v409, %v408
    %v432 = vpack.c.bf16 %v411, %v410
    %v433 = vpack.c.bf16 %v413, %v412
    %v434 = vpack.c.bf16 %v415, %v414
    %v435 = vpack.c.bf16 %v417, %v416
    %v436 = vpack.c.bf16 %v419, %v418
    %v437 = vpack.c.bf16 %v421, %v420
    %v470 = vunpack.c.l.b16 %v294
    %v471 = vunpack.c.h.b16 %v294
    %v472 = vunpack.c.l.b16 %v295
    %v473 = vunpack.c.h.b16 %v295
    %v474 = vunpack.c.l.b16 %v296
    %v475 = vunpack.c.h.b16 %v296
    %v476 = vunpack.c.l.b16 %v297
    %v477 = vunpack.c.h.b16 %v297
    %v478 = vunpack.c.l.b16 %v298
    %v479 = vunpack.c.h.b16 %v298
    %v480 = vunpack.c.l.b16 %v299
    %v481 = vunpack.c.h.b16 %v299
    %v482 = vunpack.c.l.b16 %v300
    %v483 = vunpack.c.h.b16 %v300
    %v484 = vunpack.c.l.b16 %v301
    %v485 = vunpack.c.h.b16 %v301
    %v486 = vunpack.c.l.b16 %v302
    %v487 = vunpack.c.h.b16 %v302
    %v488 = vunpack.c.l.b16 %v303
    %v489 = vunpack.c.h.b16 %v303
    %v490 = vunpack.c.l.b16 %v304
    %v491 = vunpack.c.h.b16 %v304
    %v492 = vunpack.c.l.b16 %v305
    %v493 = vunpack.c.h.b16 %v305
    %v494 = vunpack.c.l.b16 %v306
    %v495 = vunpack.c.h.b16 %v306
    %v496 = vunpack.c.l.b16 %v307
    %v497 = vunpack.c.h.b16 %v307
    %v498 = vunpack.c.l.b16 %v308
    %v499 = vunpack.c.h.b16 %v308
    %v500 = vunpack.c.l.b16 %v309
    %v501 = vunpack.c.h.b16 %v309
    %v502 = vunpack.c.l.b16 %v310
    %v503 = vunpack.c.h.b16 %v310
    %v504 = vunpack.c.l.b16 %v311
    %v505 = vunpack.c.h.b16 %v311
    %v506 = vunpack.c.l.b16 %v312
    %v507 = vunpack.c.h.b16 %v312
    %v508 = vunpack.c.l.b16 %v313
    %v509 = vunpack.c.h.b16 %v313
    %v510 = vunpack.c.l.b16 %v314
    %v511 = vunpack.c.h.b16 %v314
    %v512 = vunpack.c.l.b16 %v315
    %v513 = vunpack.c.h.b16 %v315
    %v514 = vunpack.c.l.b16 %v316
    %v515 = vunpack.c.h.b16 %v316
    %v516 = vunpack.c.l.b16 %v317
    %v517 = vunpack.c.h.b16 %v317
    %v518 = vunpack.c.l.b16 %v318
    %v519 = vunpack.c.h.b16 %v318
    %v520 = vunpack.c.l.b16 %v319
    %v521 = vunpack.c.h.b16 %v319
    %v522 = vunpack.c.l.b16 %v320
    %v523 = vunpack.c.h.b16 %v320
    %v524 = vunpack.c.l.b16 %v321
    %v525 = vunpack.c.h.b16 %v321
    %v526 = vunpack.c.l.b16 %v322
    %v527 = vunpack.c.h.b16 %v322
    %v528 = vunpack.c.l.b16 %v323
    %v529 = vunpack.c.h.b16 %v323
    %v530 = vunpack.c.l.b16 %v324
    %v531 = vunpack.c.h.b16 %v324
    %v532 = vunpack.c.l.b16 %v325
    %v533 = vunpack.c.h.b16 %v325
    %v534 = vpack.c.b16 %v472, %v470
    %v535 = vpack.c.b16 %v473, %v471
    %v536 = vpack.c.b16 %v476, %v474
    %v537 = vpack.c.b16 %v477, %v475
    %v538 = vpack.c.b16 %v480, %v478
    %v539 = vpack.c.b16 %v481, %v479
    %v540 = vpack.c.b16 %v484, %v482
    %v541 = vpack.c.b16 %v485, %v483
    %v542 = vpack.c.b16 %v488, %v486
    %v543 = vpack.c.b16 %v489, %v487
    %v544 = vpack.c.b16 %v492, %v490
    %v545 = vpack.c.b16 %v493, %v491
    %v546 = vpack.c.b16 %v496, %v494
    %v547 = vpack.c.b16 %v497, %v495
    %v548 = vpack.c.b16 %v500, %v498
    %v549 = vpack.c.b16 %v501, %v499
    %v550 = vpack.c.b16 %v504, %v502
    %v551 = vpack.c.b16 %v505, %v503
    %v552 = vpack.c.b16 %v508, %v506
    %v553 = vpack.c.b16 %v509, %v507
    %v554 = vpack.c.b16 %v512, %v510
    %v555 = vpack.c.b16 %v513, %v511
    %v556 = vpack.c.b16 %v516, %v514
    %v557 = vpack.c.b16 %v517, %v515
    %v558 = vpack.c.b16 %v520, %v518
    %v559 = vpack.c.b16 %v521, %v519
    %v560 = vpack.c.b16 %v524, %v522
    %v561 = vpack.c.b16 %v525, %v523
    %v562 = vpack.c.b16 %v528, %v526
    %v563 = vpack.c.b16 %v529, %v527
    %v564 = vpack.c.b16 %v532, %v530
    %v565 = vpack.c.b16 %v533, %v531
    %598 = vmatpush.bf16.msra.mxu0 %v429
    %599 = vmatpush.bf16.msra.mxu0 %v428
    %600 = vmatpush.bf16.msra.mxu0 %v427
    %601 = vmatpush.bf16.msra.mxu0 %v426
    %602 = vmatpush.bf16.msra.mxu0 %v425
    %603 = vmatpush.bf16.msra.mxu0 %v424
    %604 = vmatpush.bf16.msra.mxu0 %v423
    %605 = vmatpush.bf16.msra.mxu0 %v422
    %606 = vmatmul.bf16.gmra.mxu0 %v534
    %v607 = vpop.f32.mrf.mxu0
    %v608 = vadd.f32 0.0, %v607
    %v609 = vpop.f32.mrf.mxu0
    %v610 = vadd.f32 0.0, %v609
    %611 = vmatmul.bf16.gmra.mxu0 %v536
    %v612 = vpop.f32.mrf.mxu0
    %v613 = vadd.f32 0.0, %v612
    %v614 = vpop.f32.mrf.mxu0
    %v615 = vadd.f32 0.0, %v614
    %616 = vmatmul.bf16.gmra.mxu0 %v538
    %v617 = vpop.f32.mrf.mxu0
    %v618 = vadd.f32 0.0, %v617
    %v619 = vpop.f32.mrf.mxu0
    %v620 = vadd.f32 0.0, %v619
    %621 = vmatmul.bf16.gmra.mxu0 %v540
    %v622 = vpop.f32.mrf.mxu0
    %v623 = vadd.f32 0.0, %v622
    %v624 = vpop.f32.mrf.mxu0
    %v625 = vadd.f32 0.0, %v624
    %626 = vmatmul.bf16.gmra.mxu0 %v542
    %v627 = vpop.f32.mrf.mxu0
    %v628 = vadd.f32 0.0, %v627
    %v629 = vpop.f32.mrf.mxu0
    %v630 = vadd.f32 0.0, %v629
    %631 = vmatmul.bf16.gmra.mxu0 %v544
    %v632 = vpop.f32.mrf.mxu0
    %v633 = vadd.f32 0.0, %v632
    %v634 = vpop.f32.mrf.mxu0
    %v635 = vadd.f32 0.0, %v634
    %636 = vmatmul.bf16.gmra.mxu0 %v546
    %v637 = vpop.f32.mrf.mxu0
    %v638 = vadd.f32 0.0, %v637
    %v639 = vpop.f32.mrf.mxu0
    %v640 = vadd.f32 0.0, %v639
    %641 = vmatmul.bf16.gmra.mxu0 %v548
    %v642 = vpop.f32.mrf.mxu0
    %v643 = vadd.f32 0.0, %v642
    %v644 = vpop.f32.mrf.mxu0
    %v645 = vadd.f32 0.0, %v644
    %646 = vmatmul.bf16.gmra.mxu0 %v550
    %v647 = vpop.f32.mrf.mxu0
    %v648 = vadd.f32 0.0, %v647
    %v649 = vpop.f32.mrf.mxu0
    %v650 = vadd.f32 0.0, %v649
    %651 = vmatmul.bf16.gmra.mxu0 %v552
    %v652 = vpop.f32.mrf.mxu0
    %v653 = vadd.f32 0.0, %v652
    %v654 = vpop.f32.mrf.mxu0
    %v655 = vadd.f32 0.0, %v654
    %656 = vmatmul.bf16.gmra.mxu0 %v554
    %v657 = vpop.f32.mrf.mxu0
    %v658 = vadd.f32 0.0, %v657
    %v659 = vpop.f32.mrf.mxu0
    %v660 = vadd.f32 0.0, %v659
    %661 = vmatmul.bf16.gmra.mxu0 %v556
    %v662 = vpop.f32.mrf.mxu0
    %v663 = vadd.f32 0.0, %v662
    %v664 = vpop.f32.mrf.mxu0
    %v665 = vadd.f32 0.0, %v664
    %666 = vmatmul.bf16.gmra.mxu0 %v558
    %v667 = vpop.f32.mrf.mxu0
    %v668 = vadd.f32 0.0, %v667
    %v669 = vpop.f32.mrf.mxu0
    %v670 = vadd.f32 0.0, %v669
    %671 = vmatmul.bf16.gmra.mxu0 %v560
    %v672 = vpop.f32.mrf.mxu0
    %v673 = vadd.f32 0.0, %v672
    %v674 = vpop.f32.mrf.mxu0
    %v675 = vadd.f32 0.0, %v674
    %676 = vmatmul.bf16.gmra.mxu0 %v562
    %v677 = vpop.f32.mrf.mxu0
    %v678 = vadd.f32 0.0, %v677
    %v679 = vpop.f32.mrf.mxu0
    %v680 = vadd.f32 0.0, %v679
    %681 = vmatmul.bf16.gmra.mxu0 %v564
    %v682 = vpop.f32.mrf.mxu0
    %v683 = vadd.f32 0.0, %v682
    %v684 = vpop.f32.mrf.mxu0
    %v685 = vadd.f32 0.0, %v684
    %686 = vdwg.mxu0
    %687 = vmatpush.bf16.msra.mxu0 %v437
    %688 = vmatpush.bf16.msra.mxu0 %v436
    %689 = vmatpush.bf16.msra.mxu0 %v435
    %690 = vmatpush.bf16.msra.mxu0 %v434
    %691 = vmatpush.bf16.msra.mxu0 %v433
    %692 = vmatpush.bf16.msra.mxu0 %v432
    %693 = vmatpush.bf16.msra.mxu0 %v431
    %694 = vmatpush.bf16.msra.mxu0 %v430
    %695 = vmatmul.bf16.gmra.mxu0 %v535
    %v696 = vpop.f32.mrf.mxu0
    %v697 = vadd.f32 %v608, %v696
    %v698 = vpop.f32.mrf.mxu0
    %v699 = vadd.f32 %v610, %v698
    %700 = vmatmul.bf16.gmra.mxu0 %v537
    %v701 = vpop.f32.mrf.mxu0
    %v702 = vadd.f32 %v613, %v701
    %v703 = vpop.f32.mrf.mxu0
    %v704 = vadd.f32 %v615, %v703
    %705 = vmatmul.bf16.gmra.mxu0 %v539
    %v706 = vpop.f32.mrf.mxu0
    %v707 = vadd.f32 %v618, %v706
    %v708 = vpop.f32.mrf.mxu0
    %v709 = vadd.f32 %v620, %v708
    %710 = vmatmul.bf16.gmra.mxu0 %v541
    %v711 = vpop.f32.mrf.mxu0
    %v712 = vadd.f32 %v623, %v711
    %v713 = vpop.f32.mrf.mxu0
    %v714 = vadd.f32 %v625, %v713
    %715 = vmatmul.bf16.gmra.mxu0 %v543
    %v716 = vpop.f32.mrf.mxu0
    %v717 = vadd.f32 %v628, %v716
    %v718 = vpop.f32.mrf.mxu0
    %v719 = vadd.f32 %v630, %v718
    %720 = vmatmul.bf16.gmra.mxu0 %v545
    %v721 = vpop.f32.mrf.mxu0
    %v722 = vadd.f32 %v633, %v721
    %v723 = vpop.f32.mrf.mxu0
    %v724 = vadd.f32 %v635, %v723
    %725 = vmatmul.bf16.gmra.mxu0 %v547
    %v726 = vpop.f32.mrf.mxu0
    %v727 = vadd.f32 %v638, %v726
    %v728 = vpop.f32.mrf.mxu0
    %v729 = vadd.f32 %v640, %v728
    %730 = vmatmul.bf16.gmra.mxu0 %v549
    %v731 = vpop.f32.mrf.mxu0
    %v732 = vadd.f32 %v643, %v731
    %v733 = vpop.f32.mrf.mxu0
    %v734 = vadd.f32 %v645, %v733
    %735 = vmatmul.bf16.gmra.mxu0 %v551
    %v736 = vpop.f32.mrf.mxu0
    %v737 = vadd.f32 %v648, %v736
    %v738 = vpop.f32.mrf.mxu0
    %v739 = vadd.f32 %v650, %v738
    %740 = vmatmul.bf16.gmra.mxu0 %v553
    %v741 = vpop.f32.mrf.mxu0
    %v742 = vadd.f32 %v653, %v741
    %v743 = vpop.f32.mrf.mxu0
    %v744 = vadd.f32 %v655, %v743
    %745 = vmatmul.bf16.gmra.mxu0 %v555
    %v746 = vpop.f32.mrf.mxu0
    %v747 = vadd.f32 %v658, %v746
    %v748 = vpop.f32.mrf.mxu0
    %v749 = vadd.f32 %v660, %v748
    %750 = vmatmul.bf16.gmra.mxu0 %v557
    %v751 = vpop.f32.mrf.mxu0
    %v752 = vadd.f32 %v663, %v751
    %v753 = vpop.f32.mrf.mxu0
    %v754 = vadd.f32 %v665, %v753
    %755 = vmatmul.bf16.gmra.mxu0 %v559
    %v756 = vpop.f32.mrf.mxu0
    %v757 = vadd.f32 %v668, %v756
    %v758 = vpop.f32.mrf.mxu0
    %v759 = vadd.f32 %v670, %v758
    %760 = vmatmul.bf16.gmra.mxu0 %v561
    %v761 = vpop.f32.mrf.mxu0
    %v762 = vadd.f32 %v673, %v761
    %v763 = vpop.f32.mrf.mxu0
    %v764 = vadd.f32 %v675, %v763
    %765 = vmatmul.bf16.gmra.mxu0 %v563
    %v766 = vpop.f32.mrf.mxu0
    %v767 = vadd.f32 %v678, %v766
    %v768 = vpop.f32.mrf.mxu0
    %v769 = vadd.f32 %v680, %v768
    %770 = vmatmul.bf16.gmra.mxu0 %v565
    %v771 = vpop.f32.mrf.mxu0
    %v772 = vadd.f32 %v683, %v771
    %v773 = vpop.f32.mrf.mxu0
    %v774 = vadd.f32 %v685, %v773
    %775 = vdwg.mxu0
    %v776 = vadd.f32 %v262, %v697
    %v777 = vadd.f32 %v263, %v699
    %v778 = vadd.f32 %v264, %v702
    %v779 = vadd.f32 %v265, %v704
    %v780 = vadd.f32 %v266, %v707
    %v781 = vadd.f32 %v267, %v709
    %v782 = vadd.f32 %v268, %v712
    %v783 = vadd.f32 %v269, %v714
    %v784 = vadd.f32 %v270, %v717
    %v785 = vadd.f32 %v271, %v719
    %v786 = vadd.f32 %v272, %v722
    %v787 = vadd.f32 %v273, %v724
    %v788 = vadd.f32 %v274, %v727
    %v789 = vadd.f32 %v275, %v729
    %v790 = vadd.f32 %v276, %v732
    %v791 = vadd.f32 %v277, %v734
    %v792 = vadd.f32 %v278, %v737
    %v793 = vadd.f32 %v279, %v739
    %v794 = vadd.f32 %v280, %v742
    %v795 = vadd.f32 %v281, %v744
    %v796 = vadd.f32 %v282, %v747
    %v797 = vadd.f32 %v283, %v749
    %v798 = vadd.f32 %v284, %v752
    %v799 = vadd.f32 %v285, %v754
    %v800 = vadd.f32 %v286, %v757
    %v801 = vadd.f32 %v287, %v759
    %v802 = vadd.f32 %v288, %v762
    %v803 = vadd.f32 %v289, %v764
    %v804 = vadd.f32 %v290, %v767
    %v805 = vadd.f32 %v291, %v769
    %v806 = vadd.f32 %v292, %v772
    %v807 = vadd.f32 %v293, %v774
    %v808 = vpack.c.bf16 %v777, %v776
    %v809 = vpack.c.bf16 %v779, %v778
    %v810 = vpack.c.bf16 %v781, %v780
    %v811 = vpack.c.bf16 %v783, %v782
    %v812 = vpack.c.bf16 %v785, %v784
    %v813 = vpack.c.bf16 %v787, %v786
    %v814 = vpack.c.bf16 %v789, %v788
    %v815 = vpack.c.bf16 %v791, %v790
    %v816 = vpack.c.bf16 %v793, %v792
    %v817 = vpack.c.bf16 %v795, %v794
    %v818 = vpack.c.bf16 %v797, %v796
    %v819 = vpack.c.bf16 %v799, %v798
    %v820 = vpack.c.bf16 %v801, %v800
    %v821 = vpack.c.bf16 %v803, %v802
    %v822 = vpack.c.bf16 %v805, %v804
    %v823 = vpack.c.bf16 %v807, %v806
    %v824 = vld [vmem:[#allocation7] sm:$0xf]
    %v825 = vld [vmem:[#allocation7 + $0x4] sm:$0xf]
    %v826 = vld [vmem:[#allocation7 + $0x8] sm:$0xf]
    %v827 = vld [vmem:[#allocation7 + $0xc] sm:$0xf]
    %v828 = vld [vmem:[#allocation7 + $0x10] sm:$0xf]
    %v829 = vld [vmem:[#allocation7 + $0x14] sm:$0xf]
    %v830 = vld [vmem:[#allocation7 + $0x18] sm:$0xf]
    %v831 = vld [vmem:[#allocation7 + $0x1c] sm:$0xf]
    %v832 = vld [vmem:[#allocation7 + $0x20] sm:$0xf]
    %v833 = vld [vmem:[#allocation7 + $0x24] sm:$0xf]
    %v834 = vld [vmem:[#allocation7 + $0x28] sm:$0xf]
    %v835 = vld [vmem:[#allocation7 + $0x2c] sm:$0xf]
    %v836 = vld [vmem:[#allocation7 + $0x30] sm:$0xf]
    %v837 = vld [vmem:[#allocation7 + $0x34] sm:$0xf]
    %v838 = vld [vmem:[#allocation7 + $0x38] sm:$0xf]
    %v839 = vld [vmem:[#allocation7 + $0x3c] sm:$0xf]
    %v840 = vld [vmem:[#allocation8] sm:$0x1]
    %v842 = vperm.slane %v840, 0
    %v860 = vunpack.c.l.b16 %v824
    %v861 = vunpack.c.l.b16 %v825
    %v862 = vunpack.c.l.b16 %v826
    %v863 = vunpack.c.l.b16 %v827
    %v864 = vunpack.c.l.b16 %v828
    %v865 = vunpack.c.l.b16 %v829
    %v866 = vunpack.c.l.b16 %v830
    %v867 = vunpack.c.l.b16 %v831
    %v868 = vunpack.c.l.b16 %v832
    %v869 = vunpack.c.l.b16 %v833
    %v870 = vunpack.c.l.b16 %v834
    %v871 = vunpack.c.l.b16 %v835
    %v872 = vunpack.c.l.b16 %v836
    %v873 = vunpack.c.l.b16 %v837
    %v874 = vunpack.c.l.b16 %v838
    %v875 = vunpack.c.l.b16 %v839
    %v876 = vpack.c.b16 %v861, %v860
    %v877 = vpack.c.b16 %v863, %v862
    %v878 = vpack.c.b16 %v865, %v864
    %v879 = vpack.c.b16 %v867, %v866
    %v880 = vpack.c.b16 %v869, %v868
    %v881 = vpack.c.b16 %v871, %v870
    %v882 = vpack.c.b16 %v873, %v872
    %v883 = vpack.c.b16 %v875, %v874
    %892 = vmatpush.bf16.msra.mxu0 %v883
    %893 = vmatpush.bf16.msra.mxu0 %v882
    %894 = vmatpush.bf16.msra.mxu0 %v881
    %895 = vmatpush.bf16.msra.mxu0 %v880
    %896 = vmatpush.bf16.msra.mxu0 %v879
    %897 = vmatpush.bf16.msra.mxu0 %v878
    %898 = vmatpush.bf16.msra.mxu0 %v877
    %899 = vmatpush.bf16.msra.mxu0 %v876
    %900 = vmatmul.bf16.gmra.mxu0 %v808
    %v901 = vpop.f32.mrf.mxu0
    %v902 = vadd.f32 %v842, %v901
    %v903 = vpop.f32.mrf.mxu0
    %v904 = vadd.f32 %v842, %v903
    %905 = vmatmul.bf16.gmra.mxu0 %v809
    %v906 = vpop.f32.mrf.mxu0
    %v907 = vadd.f32 %v842, %v906
    %v908 = vpop.f32.mrf.mxu0
    %v909 = vadd.f32 %v842, %v908
    %910 = vmatmul.bf16.gmra.mxu0 %v810
    %v911 = vpop.f32.mrf.mxu0
    %v912 = vadd.f32 %v842, %v911
    %v913 = vpop.f32.mrf.mxu0
    %v914 = vadd.f32 %v842, %v913
    %915 = vmatmul.bf16.gmra.mxu0 %v811
    %v916 = vpop.f32.mrf.mxu0
    %v917 = vadd.f32 %v842, %v916
    %v918 = vpop.f32.mrf.mxu0
    %v919 = vadd.f32 %v842, %v918
    %920 = vmatmul.bf16.gmra.mxu0 %v812
    %v921 = vpop.f32.mrf.mxu0
    %v922 = vadd.f32 %v842, %v921
    %v923 = vpop.f32.mrf.mxu0
    %v924 = vadd.f32 %v842, %v923
    %925 = vmatmul.bf16.gmra.mxu0 %v813
    %v926 = vpop.f32.mrf.mxu0
    %v927 = vadd.f32 %v842, %v926
    %v928 = vpop.f32.mrf.mxu0
    %v929 = vadd.f32 %v842, %v928
    %930 = vmatmul.bf16.gmra.mxu0 %v814
    %v931 = vpop.f32.mrf.mxu0
    %v932 = vadd.f32 %v842, %v931
    %v933 = vpop.f32.mrf.mxu0
    %v934 = vadd.f32 %v842, %v933
    %935 = vmatmul.bf16.gmra.mxu0 %v815
    %v936 = vpop.f32.mrf.mxu0
    %v937 = vadd.f32 %v842, %v936
    %v938 = vpop.f32.mrf.mxu0
    %v939 = vadd.f32 %v842, %v938
    %940 = vmatmul.bf16.gmra.mxu0 %v816
    %v941 = vpop.f32.mrf.mxu0
    %v942 = vadd.f32 %v842, %v941
    %v943 = vpop.f32.mrf.mxu0
    %v944 = vadd.f32 %v842, %v943
    %945 = vmatmul.bf16.gmra.mxu0 %v817
    %v946 = vpop.f32.mrf.mxu0
    %v947 = vadd.f32 %v842, %v946
    %v948 = vpop.f32.mrf.mxu0
    %v949 = vadd.f32 %v842, %v948
    %950 = vmatmul.bf16.gmra.mxu0 %v818
    %v951 = vpop.f32.mrf.mxu0
    %v952 = vadd.f32 %v842, %v951
    %v953 = vpop.f32.mrf.mxu0
    %v954 = vadd.f32 %v842, %v953
    %955 = vmatmul.bf16.gmra.mxu0 %v819
    %v956 = vpop.f32.mrf.mxu0
    %v957 = vadd.f32 %v842, %v956
    %v958 = vpop.f32.mrf.mxu0
    %v959 = vadd.f32 %v842, %v958
    %960 = vmatmul.bf16.gmra.mxu0 %v820
    %v961 = vpop.f32.mrf.mxu0
    %v962 = vadd.f32 %v842, %v961
    %v963 = vpop.f32.mrf.mxu0
    %v964 = vadd.f32 %v842, %v963
    %965 = vmatmul.bf16.gmra.mxu0 %v821
    %v966 = vpop.f32.mrf.mxu0
    %v967 = vadd.f32 %v842, %v966
    %v968 = vpop.f32.mrf.mxu0
    %v969 = vadd.f32 %v842, %v968
    %970 = vmatmul.bf16.gmra.mxu0 %v822
    %v971 = vpop.f32.mrf.mxu0
    %v972 = vadd.f32 %v842, %v971
    %v973 = vpop.f32.mrf.mxu0
    %v974 = vadd.f32 %v842, %v973
    %975 = vmatmul.bf16.gmra.mxu0 %v823
    %v976 = vpop.f32.mrf.mxu0
    %v977 = vadd.f32 %v842, %v976
    %v978 = vpop.f32.mrf.mxu0
    %v979 = vadd.f32 %v842, %v978
    %980 = vdwg.mxu0
    %v981 = vmax.f32 %v902, 0.0
    %v982 = vmax.f32 %v904, 0.0
    %v983 = vmax.f32 %v907, 0.0
    %v984 = vmax.f32 %v909, 0.0
    %v985 = vmax.f32 %v912, 0.0
    %v986 = vmax.f32 %v914, 0.0
    %v987 = vmax.f32 %v917, 0.0
    %v988 = vmax.f32 %v919, 0.0
    %v989 = vmax.f32 %v922, 0.0
    %v990 = vmax.f32 %v924, 0.0
    %v991 = vmax.f32 %v927, 0.0
    %v992 = vmax.f32 %v929, 0.0
    %v993 = vmax.f32 %v932, 0.0
    %v994 = vmax.f32 %v934, 0.0
    %v995 = vmax.f32 %v937, 0.0
    %v996 = vmax.f32 %v939, 0.0
    %v997 = vmax.f32 %v942, 0.0
    %v998 = vmax.f32 %v944, 0.0
    %v999 = vmax.f32 %v947, 0.0
    %v1000 = vmax.f32 %v949, 0.0
    %v1001 = vmax.f32 %v952, 0.0
    %v1002 = vmax.f32 %v954, 0.0
    %v1003 = vmax.f32 %v957, 0.0
    %v1004 = vmax.f32 %v959, 0.0
    %v1005 = vmax.f32 %v962, 0.0
    %v1006 = vmax.f32 %v964, 0.0
    %v1007 = vmax.f32 %v967, 0.0
    %v1008 = vmax.f32 %v969, 0.0
    %v1009 = vmax.f32 %v972, 0.0
    %v1010 = vmax.f32 %v974, 0.0
    %v1011 = vmax.f32 %v977, 0.0
    %v1012 = vmax.f32 %v979, 0.0
    %v1013 = vpack.c.bf16 %v982, %v981
    %v1014 = vpack.c.bf16 %v984, %v983
    %v1015 = vpack.c.bf16 %v986, %v985
    %v1016 = vpack.c.bf16 %v988, %v987
    %v1017 = vpack.c.bf16 %v990, %v989
    %v1018 = vpack.c.bf16 %v992, %v991
    %v1019 = vpack.c.bf16 %v994, %v993
    %v1020 = vpack.c.bf16 %v996, %v995
    %v1021 = vpack.c.bf16 %v998, %v997
    %v1022 = vpack.c.bf16 %v1000, %v999
    %v1023 = vpack.c.bf16 %v1002, %v1001
    %v1024 = vpack.c.bf16 %v1004, %v1003
    %v1025 = vpack.c.bf16 %v1006, %v1005
    %v1026 = vpack.c.bf16 %v1008, %v1007
    %v1027 = vpack.c.bf16 %v1010, %v1009
    %v1028 = vpack.c.bf16 %v1012, %v1011
    %v1029 = vld [vmem:[#allocation10] sm:$0xf]
    %v1030 = vld [vmem:[#allocation10 + $0x4] sm:$0xf]
    %v1031 = vld [vmem:[#allocation10 + $0x8] sm:$0xf]
    %v1032 = vld [vmem:[#allocation10 + $0xc] sm:$0xf]
    %v1033 = vld [vmem:[#allocation10 + $0x10] sm:$0xf]
    %v1034 = vld [vmem:[#allocation10 + $0x14] sm:$0xf]
    %v1035 = vld [vmem:[#allocation10 + $0x18] sm:$0xf]
    %v1036 = vld [vmem:[#allocation10 + $0x1c] sm:$0xf]
    %v1037 = vld [vmem:[#allocation10 + $0x20] sm:$0xf]
    %v1038 = vld [vmem:[#allocation10 + $0x24] sm:$0xf]
    %v1039 = vld [vmem:[#allocation10 + $0x28] sm:$0xf]
    %v1040 = vld [vmem:[#allocation10 + $0x2c] sm:$0xf]
    %v1041 = vld [vmem:[#allocation10 + $0x30] sm:$0xf]
    %v1042 = vld [vmem:[#allocation10 + $0x34] sm:$0xf]
    %v1043 = vld [vmem:[#allocation10 + $0x38] sm:$0xf]
    %v1044 = vld [vmem:[#allocation10 + $0x3c] sm:$0xf]
    %v1045 = vld [vmem:[%s5] sm:$0x1]
    %v1047 = vperm.slane %v1045, 0
    %v1065 = vunpack.c.l.b16 %v1029
    %v1066 = vunpack.c.l.b16 %v1030
    %v1067 = vunpack.c.l.b16 %v1031
    %v1068 = vunpack.c.l.b16 %v1032
    %v1069 = vunpack.c.l.b16 %v1033
    %v1070 = vunpack.c.l.b16 %v1034
    %v1071 = vunpack.c.l.b16 %v1035
    %v1072 = vunpack.c.l.b16 %v1036
    %v1073 = vunpack.c.l.b16 %v1037
    %v1074 = vunpack.c.l.b16 %v1038
    %v1075 = vunpack.c.l.b16 %v1039
    %v1076 = vunpack.c.l.b16 %v1040
    %v1077 = vunpack.c.l.b16 %v1041
    %v1078 = vunpack.c.l.b16 %v1042
    %v1079 = vunpack.c.l.b16 %v1043
    %v1080 = vunpack.c.l.b16 %v1044
    %v1081 = vpack.c.b16 %v1066, %v1065
    %v1082 = vpack.c.b16 %v1068, %v1067
    %v1083 = vpack.c.b16 %v1070, %v1069
    %v1084 = vpack.c.b16 %v1072, %v1071
    %v1085 = vpack.c.b16 %v1074, %v1073
    %v1086 = vpack.c.b16 %v1076, %v1075
    %v1087 = vpack.c.b16 %v1078, %v1077
    %v1088 = vpack.c.b16 %v1080, %v1079
    %1097 = vmatpush.bf16.msra.mxu0 %v1088
    %1098 = vmatpush.bf16.msra.mxu0 %v1087
    %1099 = vmatpush.bf16.msra.mxu0 %v1086
    %1100 = vmatpush.bf16.msra.mxu0 %v1085
    %1101 = vmatpush.bf16.msra.mxu0 %v1084
    %1102 = vmatpush.bf16.msra.mxu0 %v1083
    %1103 = vmatpush.bf16.msra.mxu0 %v1082
    %1104 = vmatpush.bf16.msra.mxu0 %v1081
    %1105 = vmatmul.bf16.gmra.mxu0 %v1013
    %v1106 = vpop.f32.mrf.mxu0
    %v1107 = vadd.f32 %v1047, %v1106
    %v1108 = vpop.f32.mrf.mxu0
    %v1109 = vadd.f32 %v1047, %v1108
    %1110 = vmatmul.bf16.gmra.mxu0 %v1014
    %v1111 = vpop.f32.mrf.mxu0
    %v1112 = vadd.f32 %v1047, %v1111
    %v1113 = vpop.f32.mrf.mxu0
    %v1114 = vadd.f32 %v1047, %v1113
    %1115 = vmatmul.bf16.gmra.mxu0 %v1015
    %v1116 = vpop.f32.mrf.mxu0
    %v1117 = vadd.f32 %v1047, %v1116
    %v1118 = vpop.f32.mrf.mxu0
    %v1119 = vadd.f32 %v1047, %v1118
    %1120 = vmatmul.bf16.gmra.mxu0 %v1016
    %v1121 = vpop.f32.mrf.mxu0
    %v1122 = vadd.f32 %v1047, %v1121
    %v1123 = vpop.f32.mrf.mxu0
    %v1124 = vadd.f32 %v1047, %v1123
    %1125 = vmatmul.bf16.gmra.mxu0 %v1017
    %v1126 = vpop.f32.mrf.mxu0
    %v1127 = vadd.f32 %v1047, %v1126
    %v1128 = vpop.f32.mrf.mxu0
    %v1129 = vadd.f32 %v1047, %v1128
    %1130 = vmatmul.bf16.gmra.mxu0 %v1018
    %v1131 = vpop.f32.mrf.mxu0
    %v1132 = vadd.f32 %v1047, %v1131
    %v1133 = vpop.f32.mrf.mxu0
    %v1134 = vadd.f32 %v1047, %v1133
    %1135 = vmatmul.bf16.gmra.mxu0 %v1019
    %v1136 = vpop.f32.mrf.mxu0
    %v1137 = vadd.f32 %v1047, %v1136
    %v1138 = vpop.f32.mrf.mxu0
    %v1139 = vadd.f32 %v1047, %v1138
    %1140 = vmatmul.bf16.gmra.mxu0 %v1020
    %v1141 = vpop.f32.mrf.mxu0
    %v1142 = vadd.f32 %v1047, %v1141
    %v1143 = vpop.f32.mrf.mxu0
    %v1144 = vadd.f32 %v1047, %v1143
    %1145 = vmatmul.bf16.gmra.mxu0 %v1021
    %v1146 = vpop.f32.mrf.mxu0
    %v1147 = vadd.f32 %v1047, %v1146
    %v1148 = vpop.f32.mrf.mxu0
    %v1149 = vadd.f32 %v1047, %v1148
    %1150 = vmatmul.bf16.gmra.mxu0 %v1022
    %v1151 = vpop.f32.mrf.mxu0
    %v1152 = vadd.f32 %v1047, %v1151
    %v1153 = vpop.f32.mrf.mxu0
    %v1154 = vadd.f32 %v1047, %v1153
    %1155 = vmatmul.bf16.gmra.mxu0 %v1023
    %v1156 = vpop.f32.mrf.mxu0
    %v1157 = vadd.f32 %v1047, %v1156
    %v1158 = vpop.f32.mrf.mxu0
    %v1159 = vadd.f32 %v1047, %v1158
    %1160 = vmatmul.bf16.gmra.mxu0 %v1024
    %v1161 = vpop.f32.mrf.mxu0
    %v1162 = vadd.f32 %v1047, %v1161
    %v1163 = vpop.f32.mrf.mxu0
    %v1164 = vadd.f32 %v1047, %v1163
    %1165 = vmatmul.bf16.gmra.mxu0 %v1025
    %v1166 = vpop.f32.mrf.mxu0
    %v1167 = vadd.f32 %v1047, %v1166
    %v1168 = vpop.f32.mrf.mxu0
    %v1169 = vadd.f32 %v1047, %v1168
    %1170 = vmatmul.bf16.gmra.mxu0 %v1026
    %v1171 = vpop.f32.mrf.mxu0
    %v1172 = vadd.f32 %v1047, %v1171
    %v1173 = vpop.f32.mrf.mxu0
    %v1174 = vadd.f32 %v1047, %v1173
    %1175 = vmatmul.bf16.gmra.mxu0 %v1027
    %v1176 = vpop.f32.mrf.mxu0
    %v1177 = vadd.f32 %v1047, %v1176
    %v1178 = vpop.f32.mrf.mxu0
    %v1179 = vadd.f32 %v1047, %v1178
    %1180 = vmatmul.bf16.gmra.mxu0 %v1028
    %v1181 = vpop.f32.mrf.mxu0
    %v1182 = vadd.f32 %v1047, %v1181
    %v1183 = vpop.f32.mrf.mxu0
    %v1184 = vadd.f32 %v1047, %v1183
    %1185 = vdwg.mxu0
    %v1186 = vadd.f32 %v1107, %v262
    %v1187 = vadd.f32 %v1109, %v263
    %v1188 = vadd.f32 %v1112, %v264
    %v1189 = vadd.f32 %v1114, %v265
    %v1190 = vadd.f32 %v1117, %v266
    %v1191 = vadd.f32 %v1119, %v267
    %v1192 = vadd.f32 %v1122, %v268
    %v1193 = vadd.f32 %v1124, %v269
    %v1194 = vadd.f32 %v1127, %v270
    %v1195 = vadd.f32 %v1129, %v271
    %v1196 = vadd.f32 %v1132, %v272
    %v1197 = vadd.f32 %v1134, %v273
    %v1198 = vadd.f32 %v1137, %v274
    %v1199 = vadd.f32 %v1139, %v275
    %v1200 = vadd.f32 %v1142, %v276
    %v1201 = vadd.f32 %v1144, %v277
    %v1202 = vadd.f32 %v1147, %v278
    %v1203 = vadd.f32 %v1149, %v279
    %v1204 = vadd.f32 %v1152, %v280
    %v1205 = vadd.f32 %v1154, %v281
    %v1206 = vadd.f32 %v1157, %v282
    %v1207 = vadd.f32 %v1159, %v283
    %v1208 = vadd.f32 %v1162, %v284
    %v1209 = vadd.f32 %v1164, %v285
    %v1210 = vadd.f32 %v1167, %v286
    %v1211 = vadd.f32 %v1169, %v287
    %v1212 = vadd.f32 %v1172, %v288
    %v1213 = vadd.f32 %v1174, %v289
    %v1214 = vadd.f32 %v1177, %v290
    %v1215 = vadd.f32 %v1179, %v291
    %v1216 = vadd.f32 %v1182, %v292
    %v1217 = vadd.f32 %v1184, %v293
    %v1218 = vld [vmem:[%s6] sm:$0x1]
    %v1220 = vperm.slane %v1218, 0
    %v1222 = vmul.f32 %v1186, %v1220
    %v1223 = vmul.f32 %v1187, %v1220
    %v1224 = vmul.f32 %v1188, %v1220
    %v1225 = vmul.f32 %v1189, %v1220
    %v1226 = vmul.f32 %v1190, %v1220
    %v1227 = vmul.f32 %v1191, %v1220
    %v1228 = vmul.f32 %v1192, %v1220
    %v1229 = vmul.f32 %v1193, %v1220
    %v1230 = vmul.f32 %v1194, %v1220
    %v1231 = vmul.f32 %v1195, %v1220
    %v1232 = vmul.f32 %v1196, %v1220
    %v1233 = vmul.f32 %v1197, %v1220
    %v1234 = vmul.f32 %v1198, %v1220
    %v1235 = vmul.f32 %v1199, %v1220
    %v1236 = vmul.f32 %v1200, %v1220
    %v1237 = vmul.f32 %v1201, %v1220
    %v1238 = vmul.f32 %v1202, %v1220
    %v1239 = vmul.f32 %v1203, %v1220
    %v1240 = vmul.f32 %v1204, %v1220
    %v1241 = vmul.f32 %v1205, %v1220
    %v1242 = vmul.f32 %v1206, %v1220
    %v1243 = vmul.f32 %v1207, %v1220
    %v1244 = vmul.f32 %v1208, %v1220
    %v1245 = vmul.f32 %v1209, %v1220
    %v1246 = vmul.f32 %v1210, %v1220
    %v1247 = vmul.f32 %v1211, %v1220
    %v1248 = vmul.f32 %v1212, %v1220
    %v1249 = vmul.f32 %v1213, %v1220
    %v1250 = vmul.f32 %v1214, %v1220
    %v1251 = vmul.f32 %v1215, %v1220
    %v1252 = vmul.f32 %v1216, %v1220
    %v1253 = vmul.f32 %v1217, %v1220
    %v1254 = vld [vmem:[#allocation11] sm:$0x1]
    %v1256 = vperm.slane %v1254, 0
    %v1258 = vadd.f32 %v1222, %v1256
    %v1259 = vadd.f32 %v1223, %v1256
    %v1260 = vadd.f32 %v1224, %v1256
    %v1261 = vadd.f32 %v1225, %v1256
    %v1262 = vadd.f32 %v1226, %v1256
    %v1263 = vadd.f32 %v1227, %v1256
    %v1264 = vadd.f32 %v1228, %v1256
    %v1265 = vadd.f32 %v1229, %v1256
    %v1266 = vadd.f32 %v1230, %v1256
    %v1267 = vadd.f32 %v1231, %v1256
    %v1268 = vadd.f32 %v1232, %v1256
    %v1269 = vadd.f32 %v1233, %v1256
    %v1270 = vadd.f32 %v1234, %v1256
    %v1271 = vadd.f32 %v1235, %v1256
    %v1272 = vadd.f32 %v1236, %v1256
    %v1273 = vadd.f32 %v1237, %v1256
    %v1274 = vadd.f32 %v1238, %v1256
    %v1275 = vadd.f32 %v1239, %v1256
    %v1276 = vadd.f32 %v1240, %v1256
    %v1277 = vadd.f32 %v1241, %v1256
    %v1278 = vadd.f32 %v1242, %v1256
    %v1279 = vadd.f32 %v1243, %v1256
    %v1280 = vadd.f32 %v1244, %v1256
    %v1281 = vadd.f32 %v1245, %v1256
    %v1282 = vadd.f32 %v1246, %v1256
    %v1283 = vadd.f32 %v1247, %v1256
    %v1284 = vadd.f32 %v1248, %v1256
    %v1285 = vadd.f32 %v1249, %v1256
    %v1286 = vadd.f32 %v1250, %v1256
    %v1287 = vadd.f32 %v1251, %v1256
    %v1288 = vadd.f32 %v1252, %v1256
    %v1289 = vadd.f32 %v1253, %v1256
    %v1290 = vld [vmem:[#allocation13] sm:$0xff]
    %v1291 = vld [vmem:[#allocation13 + $0x8] sm:$0xff]
    %v1292 = vld [vmem:[#allocation13 + $0x10] sm:$0xff]
    %v1293 = vld [vmem:[#allocation13 + $0x18] sm:$0xff]
    %v1294 = vld [vmem:[#allocation13 + $0x20] sm:$0xff]
    %v1295 = vld [vmem:[#allocation13 + $0x28] sm:$0xff]
    %v1296 = vld [vmem:[#allocation13 + $0x30] sm:$0xff]
    %v1297 = vld [vmem:[#allocation13 + $0x38] sm:$0xff]
    %v1298 = vld [vmem:[#allocation13 + $0x40] sm:$0xff]
    %v1299 = vld [vmem:[#allocation13 + $0x48] sm:$0xff]
    %v1300 = vld [vmem:[#allocation13 + $0x50] sm:$0xff]
    %v1301 = vld [vmem:[#allocation13 + $0x58] sm:$0xff]
    %v1302 = vld [vmem:[#allocation13 + $0x60] sm:$0xff]
    %v1303 = vld [vmem:[#allocation13 + $0x68] sm:$0xff]
    %v1304 = vld [vmem:[#allocation13 + $0x70] sm:$0xff]
    %v1305 = vld [vmem:[#allocation13 + $0x78] sm:$0xff]
    %v1306 = vld [vmem:[#allocation13 + $0x80] sm:$0xff]
    %v1307 = vld [vmem:[#allocation13 + $0x88] sm:$0xff]
    %v1308 = vld [vmem:[#allocation13 + $0x90] sm:$0xff]
    %v1309 = vld [vmem:[#allocation13 + $0x98] sm:$0xff]
    %v1310 = vld [vmem:[#allocation13 + $0xa0] sm:$0xff]
    %v1311 = vld [vmem:[#allocation13 + $0xa8] sm:$0xff]
    %v1312 = vld [vmem:[#allocation13 + $0xb0] sm:$0xff]
    %v1313 = vld [vmem:[#allocation13 + $0xb8] sm:$0xff]
    %v1314 = vld [vmem:[#allocation13 + $0xc0] sm:$0xff]
    %v1315 = vld [vmem:[#allocation13 + $0xc8] sm:$0xff]
    %v1316 = vld [vmem:[#allocation13 + $0xd0] sm:$0xff]
    %v1317 = vld [vmem:[#allocation13 + $0xd8] sm:$0xff]
    %v1318 = vld [vmem:[#allocation13 + $0xe0] sm:$0xff]
    %v1319 = vld [vmem:[#allocation13 + $0xe8] sm:$0xff]
    %v1320 = vld [vmem:[#allocation13 + $0xf0] sm:$0xff]
    %v1321 = vld [vmem:[#allocation13 + $0xf8] sm:$0xff]
    %v1322 = vld [vmem:[#allocation13 + $0x100] sm:$0xff]
    %v1323 = vld [vmem:[#allocation13 + $0x108] sm:$0xff]
    %v1324 = vld [vmem:[#allocation13 + $0x110] sm:$0xff]
    %v1325 = vld [vmem:[#allocation13 + $0x118] sm:$0xff]
    %v1326 = vld [vmem:[#allocation13 + $0x120] sm:$0xff]
    %v1327 = vld [vmem:[#allocation13 + $0x128] sm:$0xff]
    %v1328 = vld [vmem:[#allocation13 + $0x130] sm:$0xff]
    %v1329 = vld [vmem:[#allocation13 + $0x138] sm:$0xff]
    %v1330 = vld [vmem:[#allocation13 + $0x140] sm:$0xff]
    %v1331 = vld [vmem:[#allocation13 + $0x148] sm:$0xff]
    %v1332 = vld [vmem:[#allocation13 + $0x150] sm:$0xff]
    %v1333 = vld [vmem:[#allocation13 + $0x158] sm:$0xff]
    %v1334 = vld [vmem:[#allocation13 + $0x160] sm:$0xff]
    %v1335 = vld [vmem:[#allocation13 + $0x168] sm:$0xff]
    %v1336 = vld [vmem:[#allocation13 + $0x170] sm:$0xff]
    %v1337 = vld [vmem:[#allocation13 + $0x178] sm:$0xff]
    %v1370 = vunpack.c.l.b16 %v326
    %v1371 = vunpack.c.l.b16 %v327
    %v1372 = vunpack.c.l.b16 %v328
    %v1373 = vunpack.c.l.b16 %v329
    %v1374 = vunpack.c.l.b16 %v330
    %v1375 = vunpack.c.l.b16 %v331
    %v1376 = vunpack.c.l.b16 %v332
    %v1377 = vunpack.c.l.b16 %v333
    %v1378 = vunpack.c.l.b16 %v334
    %v1379 = vunpack.c.l.b16 %v335
    %v1380 = vunpack.c.l.b16 %v336
    %v1381 = vunpack.c.l.b16 %v337
    %v1382 = vunpack.c.l.b16 %v338
    %v1383 = vunpack.c.l.b16 %v339
    %v1384 = vunpack.c.l.b16 %v340
    %v1385 = vunpack.c.l.b16 %v341
    %v1386 = vunpack.c.l.b16 %v342
    %v1387 = vunpack.c.l.b16 %v343
    %v1388 = vunpack.c.l.b16 %v344
    %v1389 = vunpack.c.l.b16 %v345
    %v1390 = vunpack.c.l.b16 %v346
    %v1391 = vunpack.c.l.b16 %v347
    %v1392 = vunpack.c.l.b16 %v348
    %v1393 = vunpack.c.l.b16 %v349
    %v1394 = vunpack.c.l.b16 %v350
    %v1395 = vunpack.c.l.b16 %v351
    %v1396 = vunpack.c.l.b16 %v352
    %v1397 = vunpack.c.l.b16 %v353
    %v1398 = vunpack.c.l.b16 %v354
    %v1399 = vunpack.c.l.b16 %v355
    %v1400 = vunpack.c.l.b16 %v356
    %v1401 = vunpack.c.l.b16 %v357
    %v1402 = vpack.c.b16 %v1371, %v1370
    %v1403 = vpack.c.b16 %v1373, %v1372
    %v1404 = vpack.c.b16 %v1375, %v1374
    %v1405 = vpack.c.b16 %v1377, %v1376
    %v1406 = vpack.c.b16 %v1379, %v1378
    %v1407 = vpack.c.b16 %v1381, %v1380
    %v1408 = vpack.c.b16 %v1383, %v1382
    %v1409 = vpack.c.b16 %v1385, %v1384
    %v1410 = vpack.c.b16 %v1387, %v1386
    %v1411 = vpack.c.b16 %v1389, %v1388
    %v1412 = vpack.c.b16 %v1391, %v1390
    %v1413 = vpack.c.b16 %v1393, %v1392
    %v1414 = vpack.c.b16 %v1395, %v1394
    %v1415 = vpack.c.b16 %v1397, %v1396
    %v1416 = vpack.c.b16 %v1399, %v1398
    %v1417 = vpack.c.b16 %v1401, %v1400
    %v1482 = vunpack.c.l.b16 %v1290
    %v1483 = vunpack.c.h.b16 %v1290
    %v1484 = vunpack.c.l.b16 %v1291
    %v1485 = vunpack.c.h.b16 %v1291
    %v1486 = vunpack.c.l.b16 %v1292
    %v1487 = vunpack.c.h.b16 %v1292
    %v1488 = vunpack.c.l.b16 %v1293
    %v1489 = vunpack.c.h.b16 %v1293
    %v1490 = vunpack.c.l.b16 %v1294
    %v1491 = vunpack.c.h.b16 %v1294
    %v1492 = vunpack.c.l.b16 %v1295
    %v1493 = vunpack.c.h.b16 %v1295
    %v1494 = vunpack.c.l.b16 %v1296
    %v1495 = vunpack.c.h.b16 %v1296
    %v1496 = vunpack.c.l.b16 %v1297
    %v1497 = vunpack.c.h.b16 %v1297
    %v1498 = vunpack.c.l.b16 %v1298
    %v1499 = vunpack.c.h.b16 %v1298
    %v1500 = vunpack.c.l.b16 %v1299
    %v1501 = vunpack.c.h.b16 %v1299
    %v1502 = vunpack.c.l.b16 %v1300
    %v1503 = vunpack.c.h.b16 %v1300
    %v1504 = vunpack.c.l.b16 %v1301
    %v1505 = vunpack.c.h.b16 %v1301
    %v1506 = vunpack.c.l.b16 %v1302
    %v1507 = vunpack.c.h.b16 %v1302
    %v1508 = vunpack.c.l.b16 %v1303
    %v1509 = vunpack.c.h.b16 %v1303
    %v1510 = vunpack.c.l.b16 %v1304
    %v1511 = vunpack.c.h.b16 %v1304
    %v1512 = vunpack.c.l.b16 %v1305
    %v1513 = vunpack.c.h.b16 %v1305
    %v1514 = vunpack.c.l.b16 %v1306
    %v1515 = vunpack.c.h.b16 %v1306
    %v1516 = vunpack.c.l.b16 %v1307
    %v1517 = vunpack.c.h.b16 %v1307
    %v1518 = vunpack.c.l.b16 %v1308
    %v1519 = vunpack.c.h.b16 %v1308
    %v1520 = vunpack.c.l.b16 %v1309
    %v1521 = vunpack.c.h.b16 %v1309
    %v1522 = vunpack.c.l.b16 %v1310
    %v1523 = vunpack.c.h.b16 %v1310
    %v1524 = vunpack.c.l.b16 %v1311
    %v1525 = vunpack.c.h.b16 %v1311
    %v1526 = vunpack.c.l.b16 %v1312
    %v1527 = vunpack.c.h.b16 %v1312
    %v1528 = vunpack.c.l.b16 %v1313
    %v1529 = vunpack.c.h.b16 %v1313
    %v1530 = vunpack.c.l.b16 %v1314
    %v1531 = vunpack.c.h.b16 %v1314
    %v1532 = vunpack.c.l.b16 %v1315
    %v1533 = vunpack.c.h.b16 %v1315
    %v1534 = vunpack.c.l.b16 %v1316
    %v1535 = vunpack.c.h.b16 %v1316
    %v1536 = vunpack.c.l.b16 %v1317
    %v1537 = vunpack.c.h.b16 %v1317
    %v1538 = vunpack.c.l.b16 %v1318
    %v1539 = vunpack.c.h.b16 %v1318
    %v1540 = vunpack.c.l.b16 %v1319
    %v1541 = vunpack.c.h.b16 %v1319
    %v1542 = vunpack.c.l.b16 %v1320
    %v1543 = vunpack.c.h.b16 %v1320
    %v1544 = vunpack.c.l.b16 %v1321
    %v1545 = vunpack.c.h.b16 %v1321
    %v1546 = vunpack.c.l.b16 %v1322
    %v1547 = vunpack.c.h.b16 %v1322
    %v1548 = vunpack.c.l.b16 %v1323
    %v1549 = vunpack.c.h.b16 %v1323
    %v1550 = vunpack.c.l.b16 %v1324
    %v1551 = vunpack.c.h.b16 %v1324
    %v1552 = vunpack.c.l.b16 %v1325
    %v1553 = vunpack.c.h.b16 %v1325
    %v1554 = vunpack.c.l.b16 %v1326
    %v1555 = vunpack.c.h.b16 %v1326
    %v1556 = vunpack.c.l.b16 %v1327
    %v1557 = vunpack.c.h.b16 %v1327
    %v1558 = vunpack.c.l.b16 %v1328
    %v1559 = vunpack.c.h.b16 %v1328
    %v1560 = vunpack.c.l.b16 %v1329
    %v1561 = vunpack.c.h.b16 %v1329
    %v1562 = vunpack.c.l.b16 %v1330
    %v1563 = vunpack.c.h.b16 %v1330
    %v1564 = vunpack.c.l.b16 %v1331
    %v1565 = vunpack.c.h.b16 %v1331
    %v1566 = vunpack.c.l.b16 %v1332
    %v1567 = vunpack.c.h.b16 %v1332
    %v1568 = vunpack.c.l.b16 %v1333
    %v1569 = vunpack.c.h.b16 %v1333
    %v1570 = vunpack.c.l.b16 %v1334
    %v1571 = vunpack.c.h.b16 %v1334
    %v1572 = vunpack.c.l.b16 %v1335
    %v1573 = vunpack.c.h.b16 %v1335
    %v1574 = vunpack.c.l.b16 %v1336
    %v1575 = vunpack.c.h.b16 %v1336
    %v1576 = vunpack.c.l.b16 %v1337
    %v1577 = vunpack.c.h.b16 %v1337
    %v1578 = vpack.c.b16 %v1488, %v1482
    %v1579 = vpack.c.b16 %v1489, %v1483
    %v1580 = vpack.c.b16 %v1490, %v1484
    %v1581 = vpack.c.b16 %v1491, %v1485
    %v1582 = vpack.c.b16 %v1492, %v1486
    %v1583 = vpack.c.b16 %v1493, %v1487
    %v1584 = vpack.c.b16 %v1500, %v1494
    %v1585 = vpack.c.b16 %v1501, %v1495
    %v1586 = vpack.c.b16 %v1502, %v1496
    %v1587 = vpack.c.b16 %v1503, %v1497
    %v1588 = vpack.c.b16 %v1504, %v1498
    %v1589 = vpack.c.b16 %v1505, %v1499
    %v1590 = vpack.c.b16 %v1512, %v1506
    %v1591 = vpack.c.b16 %v1513, %v1507
    %v1592 = vpack.c.b16 %v1514, %v1508
    %v1593 = vpack.c.b16 %v1515, %v1509
    %v1594 = vpack.c.b16 %v1516, %v1510
    %v1595 = vpack.c.b16 %v1517, %v1511
    %v1596 = vpack.c.b16 %v1524, %v1518
    %v1597 = vpack.c.b16 %v1525, %v1519
    %v1598 = vpack.c.b16 %v1526, %v1520
    %v1599 = vpack.c.b16 %v1527, %v1521
    %v1600 = vpack.c.b16 %v1528, %v1522
    %v1601 = vpack.c.b16 %v1529, %v1523
    %v1602 = vpack.c.b16 %v1536, %v1530
    %v1603 = vpack.c.b16 %v1537, %v1531
    %v1604 = vpack.c.b16 %v1538, %v1532
    %v1605 = vpack.c.b16 %v1539, %v1533
    %v1606 = vpack.c.b16 %v1540, %v1534
    %v1607 = vpack.c.b16 %v1541, %v1535
    %v1608 = vpack.c.b16 %v1548, %v1542
    %v1609 = vpack.c.b16 %v1549, %v1543
    %v1610 = vpack.c.b16 %v1550, %v1544
    %v1611 = vpack.c.b16 %v1551, %v1545
    %v1612 = vpack.c.b16 %v1552, %v1546
    %v1613 = vpack.c.b16 %v1553, %v1547
    %v1614 = vpack.c.b16 %v1560, %v1554
    %v1615 = vpack.c.b16 %v1561, %v1555
    %v1616 = vpack.c.b16 %v1562, %v1556
    %v1617 = vpack.c.b16 %v1563, %v1557
    %v1618 = vpack.c.b16 %v1564, %v1558
    %v1619 = vpack.c.b16 %v1565, %v1559
    %v1620 = vpack.c.b16 %v1572, %v1566
    %v1621 = vpack.c.b16 %v1573, %v1567
    %v1622 = vpack.c.b16 %v1574, %v1568
    %v1623 = vpack.c.b16 %v1575, %v1569
    %v1624 = vpack.c.b16 %v1576, %v1570
    %v1625 = vpack.c.b16 %v1577, %v1571
    %1674 = vmatpush.bf16.msra.mxu0 %v1620
    %1675 = vmatpush.bf16.msra.mxu0 %v1614
    %1676 = vmatpush.bf16.msra.mxu0 %v1608
    %1677 = vmatpush.bf16.msra.mxu0 %v1602
    %1678 = vmatpush.bf16.msra.mxu0 %v1596
    %1679 = vmatpush.bf16.msra.mxu0 %v1590
    %1680 = vmatpush.bf16.msra.mxu0 %v1584
    %1681 = vmatpush.bf16.msra.mxu0 %v1578
    %1682 = vmatmul.bf16.gmra.mxu0 %v1402
    %v1683 = vpop.f32.mrf.mxu0
    %v1684 = vadd.f32 0.0, %v1683
    %v1685 = vpop.f32.mrf.mxu0
    %v1686 = vadd.f32 0.0, %v1685
    %1687 = vmatmul.bf16.gmra.mxu0 %v1403
    %v1688 = vpop.f32.mrf.mxu0
    %v1689 = vadd.f32 0.0, %v1688
    %v1690 = vpop.f32.mrf.mxu0
    %v1691 = vadd.f32 0.0, %v1690
    %1692 = vmatmul.bf16.gmra.mxu0 %v1404
    %v1693 = vpop.f32.mrf.mxu0
    %v1694 = vadd.f32 0.0, %v1693
    %v1695 = vpop.f32.mrf.mxu0
    %v1696 = vadd.f32 0.0, %v1695
    %1697 = vmatmul.bf16.gmra.mxu0 %v1405
    %v1698 = vpop.f32.mrf.mxu0
    %v1699 = vadd.f32 0.0, %v1698
    %v1700 = vpop.f32.mrf.mxu0
    %v1701 = vadd.f32 0.0, %v1700
    %1702 = vmatmul.bf16.gmra.mxu0 %v1406
    %v1703 = vpop.f32.mrf.mxu0
    %v1704 = vadd.f32 0.0, %v1703
    %v1705 = vpop.f32.mrf.mxu0
    %v1706 = vadd.f32 0.0, %v1705
    %1707 = vmatmul.bf16.gmra.mxu0 %v1407
    %v1708 = vpop.f32.mrf.mxu0
    %v1709 = vadd.f32 0.0, %v1708
    %v1710 = vpop.f32.mrf.mxu0
    %v1711 = vadd.f32 0.0, %v1710
    %1712 = vmatmul.bf16.gmra.mxu0 %v1408
    %v1713 = vpop.f32.mrf.mxu0
    %v1714 = vadd.f32 0.0, %v1713
    %v1715 = vpop.f32.mrf.mxu0
    %v1716 = vadd.f32 0.0, %v1715
    %1717 = vmatmul.bf16.gmra.mxu0 %v1409
    %v1718 = vpop.f32.mrf.mxu0
    %v1719 = vadd.f32 0.0, %v1718
    %v1720 = vpop.f32.mrf.mxu0
    %v1721 = vadd.f32 0.0, %v1720
    %1722 = vmatmul.bf16.gmra.mxu0 %v1410
    %v1723 = vpop.f32.mrf.mxu0
    %v1724 = vadd.f32 0.0, %v1723
    %v1725 = vpop.f32.mrf.mxu0
    %v1726 = vadd.f32 0.0, %v1725
    %1727 = vmatmul.bf16.gmra.mxu0 %v1411
    %v1728 = vpop.f32.mrf.mxu0
    %v1729 = vadd.f32 0.0, %v1728
    %v1730 = vpop.f32.mrf.mxu0
    %v1731 = vadd.f32 0.0, %v1730
    %1732 = vmatmul.bf16.gmra.mxu0 %v1412
    %v1733 = vpop.f32.mrf.mxu0
    %v1734 = vadd.f32 0.0, %v1733
    %v1735 = vpop.f32.mrf.mxu0
    %v1736 = vadd.f32 0.0, %v1735
    %1737 = vmatmul.bf16.gmra.mxu0 %v1413
    %v1738 = vpop.f32.mrf.mxu0
    %v1739 = vadd.f32 0.0, %v1738
    %v1740 = vpop.f32.mrf.mxu0
    %v1741 = vadd.f32 0.0, %v1740
    %1742 = vmatmul.bf16.gmra.mxu0 %v1414
    %v1743 = vpop.f32.mrf.mxu0
    %v1744 = vadd.f32 0.0, %v1743
    %v1745 = vpop.f32.mrf.mxu0
    %v1746 = vadd.f32 0.0, %v1745
    %1747 = vmatmul.bf16.gmra.mxu0 %v1415
    %v1748 = vpop.f32.mrf.mxu0
    %v1749 = vadd.f32 0.0, %v1748
    %v1750 = vpop.f32.mrf.mxu0
    %v1751 = vadd.f32 0.0, %v1750
    %1752 = vmatmul.bf16.gmra.mxu0 %v1416
    %v1753 = vpop.f32.mrf.mxu0
    %v1754 = vadd.f32 0.0, %v1753
    %v1755 = vpop.f32.mrf.mxu0
    %v1756 = vadd.f32 0.0, %v1755
    %1757 = vmatmul.bf16.gmra.mxu0 %v1417
    %v1758 = vpop.f32.mrf.mxu0
    %v1759 = vadd.f32 0.0, %v1758
    %v1760 = vpop.f32.mrf.mxu0
    %v1761 = vadd.f32 0.0, %v1760
    %1762 = vdwg.mxu0
    %1763 = vmatpush.bf16.msra.mxu0 %v1621
    %1764 = vmatpush.bf16.msra.mxu0 %v1615
    %1765 = vmatpush.bf16.msra.mxu0 %v1609
    %1766 = vmatpush.bf16.msra.mxu0 %v1603
    %1767 = vmatpush.bf16.msra.mxu0 %v1597
    %1768 = vmatpush.bf16.msra.mxu0 %v1591
    %1769 = vmatpush.bf16.msra.mxu0 %v1585
    %1770 = vmatpush.bf16.msra.mxu0 %v1579
    %1771 = vmatmul.bf16.gmra.mxu0 %v1402
    %v1772 = vpop.f32.mrf.mxu0
    %v1773 = vadd.f32 0.0, %v1772
    %v1774 = vpop.f32.mrf.mxu0
    %v1775 = vadd.f32 0.0, %v1774
    %1776 = vmatmul.bf16.gmra.mxu0 %v1403
    %v1777 = vpop.f32.mrf.mxu0
    %v1778 = vadd.f32 0.0, %v1777
    %v1779 = vpop.f32.mrf.mxu0
    %v1780 = vadd.f32 0.0, %v1779
    %1781 = vmatmul.bf16.gmra.mxu0 %v1404
    %v1782 = vpop.f32.mrf.mxu0
    %v1783 = vadd.f32 0.0, %v1782
    %v1784 = vpop.f32.mrf.mxu0
    %v1785 = vadd.f32 0.0, %v1784
    %1786 = vmatmul.bf16.gmra.mxu0 %v1405
    %v1787 = vpop.f32.mrf.mxu0
    %v1788 = vadd.f32 0.0, %v1787
    %v1789 = vpop.f32.mrf.mxu0
    %v1790 = vadd.f32 0.0, %v1789
    %1791 = vmatmul.bf16.gmra.mxu0 %v1406
    %v1792 = vpop.f32.mrf.mxu0
    %v1793 = vadd.f32 0.0, %v1792
    %v1794 = vpop.f32.mrf.mxu0
    %v1795 = vadd.f32 0.0, %v1794
    %1796 = vmatmul.bf16.gmra.mxu0 %v1407
    %v1797 = vpop.f32.mrf.mxu0
    %v1798 = vadd.f32 0.0, %v1797
    %v1799 = vpop.f32.mrf.mxu0
    %v1800 = vadd.f32 0.0, %v1799
    %1801 = vmatmul.bf16.gmra.mxu0 %v1408
    %v1802 = vpop.f32.mrf.mxu0
    %v1803 = vadd.f32 0.0, %v1802
    %v1804 = vpop.f32.mrf.mxu0
    %v1805 = vadd.f32 0.0, %v1804
    %1806 = vmatmul.bf16.gmra.mxu0 %v1409
    %v1807 = vpop.f32.mrf.mxu0
    %v1808 = vadd.f32 0.0, %v1807
    %v1809 = vpop.f32.mrf.mxu0
    %v1810 = vadd.f32 0.0, %v1809
    %1811 = vmatmul.bf16.gmra.mxu0 %v1410
    %v1812 = vpop.f32.mrf.mxu0
    %v1813 = vadd.f32 0.0, %v1812
    %v1814 = vpop.f32.mrf.mxu0
    %v1815 = vadd.f32 0.0, %v1814
    %1816 = vmatmul.bf16.gmra.mxu0 %v1411
    %v1817 = vpop.f32.mrf.mxu0
    %v1818 = vadd.f32 0.0, %v1817
    %v1819 = vpop.f32.mrf.mxu0
    %v1820 = vadd.f32 0.0, %v1819
    %1821 = vmatmul.bf16.gmra.mxu0 %v1412
    %v1822 = vpop.f32.mrf.mxu0
    %v1823 = vadd.f32 0.0, %v1822
    %v1824 = vpop.f32.mrf.mxu0
    %v1825 = vadd.f32 0.0, %v1824
    %1826 = vmatmul.bf16.gmra.mxu0 %v1413
    %v1827 = vpop.f32.mrf.mxu0
    %v1828 = vadd.f32 0.0, %v1827
    %v1829 = vpop.f32.mrf.mxu0
    %v1830 = vadd.f32 0.0, %v1829
    %1831 = vmatmul.bf16.gmra.mxu0 %v1414
    %v1832 = vpop.f32.mrf.mxu0
    %v1833 = vadd.f32 0.0, %v1832
    %v1834 = vpop.f32.mrf.mxu0
    %v1835 = vadd.f32 0.0, %v1834
    %1836 = vmatmul.bf16.gmra.mxu0 %v1415
    %v1837 = vpop.f32.mrf.mxu0
    %v1838 = vadd.f32 0.0, %v1837
    %v1839 = vpop.f32.mrf.mxu0
    %v1840 = vadd.f32 0.0, %v1839
    %1841 = vmatmul.bf16.gmra.mxu0 %v1416
    %v1842 = vpop.f32.mrf.mxu0
    %v1843 = vadd.f32 0.0, %v1842
    %v1844 = vpop.f32.mrf.mxu0
    %v1845 = vadd.f32 0.0, %v1844
    %1846 = vmatmul.bf16.gmra.mxu0 %v1417
    %v1847 = vpop.f32.mrf.mxu0
    %v1848 = vadd.f32 0.0, %v1847
    %v1849 = vpop.f32.mrf.mxu0
    %v1850 = vadd.f32 0.0, %v1849
    %1851 = vdwg.mxu0
    %1852 = vmatpush.bf16.msra.mxu0 %v1622
    %1853 = vmatpush.bf16.msra.mxu0 %v1616
    %1854 = vmatpush.bf16.msra.mxu0 %v1610
    %1855 = vmatpush.bf16.msra.mxu0 %v1604
    %1856 = vmatpush.bf16.msra.mxu0 %v1598
    %1857 = vmatpush.bf16.msra.mxu0 %v1592
    %1858 = vmatpush.bf16.msra.mxu0 %v1586
    %1859 = vmatpush.bf16.msra.mxu0 %v1580
    %1860 = vmatmul.bf16.gmra.mxu0 %v1402
    %v1861 = vpop.f32.mrf.mxu0
    %v1862 = vadd.f32 0.0, %v1861
    %v1863 = vpop.f32.mrf.mxu0
    %v1864 = vadd.f32 0.0, %v1863
    %1865 = vmatmul.bf16.gmra.mxu0 %v1403
    %v1866 = vpop.f32.mrf.mxu0
    %v1867 = vadd.f32 0.0, %v1866
    %v1868 = vpop.f32.mrf.mxu0
    %v1869 = vadd.f32 0.0, %v1868
    %1870 = vmatmul.bf16.gmra.mxu0 %v1404
    %v1871 = vpop.f32.mrf.mxu0
    %v1872 = vadd.f32 0.0, %v1871
    %v1873 = vpop.f32.mrf.mxu0
    %v1874 = vadd.f32 0.0, %v1873
    %1875 = vmatmul.bf16.gmra.mxu0 %v1405
    %v1876 = vpop.f32.mrf.mxu0
    %v1877 = vadd.f32 0.0, %v1876
    %v1878 = vpop.f32.mrf.mxu0
    %v1879 = vadd.f32 0.0, %v1878
    %1880 = vmatmul.bf16.gmra.mxu0 %v1406
    %v1881 = vpop.f32.mrf.mxu0
    %v1882 = vadd.f32 0.0, %v1881
    %v1883 = vpop.f32.mrf.mxu0
    %v1884 = vadd.f32 0.0, %v1883
    %1885 = vmatmul.bf16.gmra.mxu0 %v1407
    %v1886 = vpop.f32.mrf.mxu0
    %v1887 = vadd.f32 0.0, %v1886
    %v1888 = vpop.f32.mrf.mxu0
    %v1889 = vadd.f32 0.0, %v1888
    %1890 = vmatmul.bf16.gmra.mxu0 %v1408
    %v1891 = vpop.f32.mrf.mxu0
    %v1892 = vadd.f32 0.0, %v1891
    %v1893 = vpop.f32.mrf.mxu0
    %v1894 = vadd.f32 0.0, %v1893
    %1895 = vmatmul.bf16.gmra.mxu0 %v1409
    %v1896 = vpop.f32.mrf.mxu0
    %v1897 = vadd.f32 0.0, %v1896
    %v1898 = vpop.f32.mrf.mxu0
    %v1899 = vadd.f32 0.0, %v1898
    %1900 = vmatmul.bf16.gmra.mxu0 %v1410
    %v1901 = vpop.f32.mrf.mxu0
    %v1902 = vadd.f32 0.0, %v1901
    %v1903 = vpop.f32.mrf.mxu0
    %v1904 = vadd.f32 0.0, %v1903
    %1905 = vmatmul.bf16.gmra.mxu0 %v1411
    %v1906 = vpop.f32.mrf.mxu0
    %v1907 = vadd.f32 0.0, %v1906
    %v1908 = vpop.f32.mrf.mxu0
    %v1909 = vadd.f32 0.0, %v1908
    %1910 = vmatmul.bf16.gmra.mxu0 %v1412
    %v1911 = vpop.f32.mrf.mxu0
    %v1912 = vadd.f32 0.0, %v1911
    %v1913 = vpop.f32.mrf.mxu0
    %v1914 = vadd.f32 0.0, %v1913
    %1915 = vmatmul.bf16.gmra.mxu0 %v1413
    %v1916 = vpop.f32.mrf.mxu0
    %v1917 = vadd.f32 0.0, %v1916
    %v1918 = vpop.f32.mrf.mxu0
    %v1919 = vadd.f32 0.0, %v1918
    %1920 = vmatmul.bf16.gmra.mxu0 %v1414
    %v1921 = vpop.f32.mrf.mxu0
    %v1922 = vadd.f32 0.0, %v1921
    %v1923 = vpop.f32.mrf.mxu0
    %v1924 = vadd.f32 0.0, %v1923
    %1925 = vmatmul.bf16.gmra.mxu0 %v1415
    %v1926 = vpop.f32.mrf.mxu0
    %v1927 = vadd.f32 0.0, %v1926
    %v1928 = vpop.f32.mrf.mxu0
    %v1929 = vadd.f32 0.0, %v1928
    %1930 = vmatmul.bf16.gmra.mxu0 %v1416
    %v1931 = vpop.f32.mrf.mxu0
    %v1932 = vadd.f32 0.0, %v1931
    %v1933 = vpop.f32.mrf.mxu0
    %v1934 = vadd.f32 0.0, %v1933
    %1935 = vmatmul.bf16.gmra.mxu0 %v1417
    %v1936 = vpop.f32.mrf.mxu0
    %v1937 = vadd.f32 0.0, %v1936
    %v1938 = vpop.f32.mrf.mxu0
    %v1939 = vadd.f32 0.0, %v1938
    %1940 = vdwg.mxu0
    %1941 = vmatpush.bf16.msra.mxu0 %v1623
    %1942 = vmatpush.bf16.msra.mxu0 %v1617
    %1943 = vmatpush.bf16.msra.mxu0 %v1611
    %1944 = vmatpush.bf16.msra.mxu0 %v1605
    %1945 = vmatpush.bf16.msra.mxu0 %v1599
    %1946 = vmatpush.bf16.msra.mxu0 %v1593
    %1947 = vmatpush.bf16.msra.mxu0 %v1587
    %1948 = vmatpush.bf16.msra.mxu0 %v1581
    %1949 = vmatmul.bf16.gmra.mxu0 %v1402
    %v1950 = vpop.f32.mrf.mxu0
    %v1951 = vadd.f32 0.0, %v1950
    %v1952 = vpop.f32.mrf.mxu0
    %v1953 = vadd.f32 0.0, %v1952
    %1954 = vmatmul.bf16.gmra.mxu0 %v1403
    %v1955 = vpop.f32.mrf.mxu0
    %v1956 = vadd.f32 0.0, %v1955
    %v1957 = vpop.f32.mrf.mxu0
    %v1958 = vadd.f32 0.0, %v1957
    %1959 = vmatmul.bf16.gmra.mxu0 %v1404
    %v1960 = vpop.f32.mrf.mxu0
    %v1961 = vadd.f32 0.0, %v1960
    %v1962 = vpop.f32.mrf.mxu0
    %v1963 = vadd.f32 0.0, %v1962
    %1964 = vmatmul.bf16.gmra.mxu0 %v1405
    %v1965 = vpop.f32.mrf.mxu0
    %v1966 = vadd.f32 0.0, %v1965
    %v1967 = vpop.f32.mrf.mxu0
    %v1968 = vadd.f32 0.0, %v1967
    %1969 = vmatmul.bf16.gmra.mxu0 %v1406
    %v1970 = vpop.f32.mrf.mxu0
    %v1971 = vadd.f32 0.0, %v1970
    %v1972 = vpop.f32.mrf.mxu0
    %v1973 = vadd.f32 0.0, %v1972
    %1974 = vmatmul.bf16.gmra.mxu0 %v1407
    %v1975 = vpop.f32.mrf.mxu0
    %v1976 = vadd.f32 0.0, %v1975
    %v1977 = vpop.f32.mrf.mxu0
    %v1978 = vadd.f32 0.0, %v1977
    %1979 = vmatmul.bf16.gmra.mxu0 %v1408
    %v1980 = vpop.f32.mrf.mxu0
    %v1981 = vadd.f32 0.0, %v1980
    %v1982 = vpop.f32.mrf.mxu0
    %v1983 = vadd.f32 0.0, %v1982
    %1984 = vmatmul.bf16.gmra.mxu0 %v1409
    %v1985 = vpop.f32.mrf.mxu0
    %v1986 = vadd.f32 0.0, %v1985
    %v1987 = vpop.f32.mrf.mxu0
    %v1988 = vadd.f32 0.0, %v1987
    %1989 = vmatmul.bf16.gmra.mxu0 %v1410
    %v1990 = vpop.f32.mrf.mxu0
    %v1991 = vadd.f32 0.0, %v1990
    %v1992 = vpop.f32.mrf.mxu0
    %v1993 = vadd.f32 0.0, %v1992
    %1994 = vmatmul.bf16.gmra.mxu0 %v1411
    %v1995 = vpop.f32.mrf.mxu0
    %v1996 = vadd.f32 0.0, %v1995
    %v1997 = vpop.f32.mrf.mxu0
    %v1998 = vadd.f32 0.0, %v1997
    %1999 = vmatmul.bf16.gmra.mxu0 %v1412
    %v2000 = vpop.f32.mrf.mxu0
    %v2001 = vadd.f32 0.0, %v2000
    %v2002 = vpop.f32.mrf.mxu0
    %v2003 = vadd.f32 0.0, %v2002
    %2004 = vmatmul.bf16.gmra.mxu0 %v1413
    %v2005 = vpop.f32.mrf.mxu0
    %v2006 = vadd.f32 0.0, %v2005
    %v2007 = vpop.f32.mrf.mxu0
    %v2008 = vadd.f32 0.0, %v2007
    %2009 = vmatmul.bf16.gmra.mxu0 %v1414
    %v2010 = vpop.f32.mrf.mxu0
    %v2011 = vadd.f32 0.0, %v2010
    %v2012 = vpop.f32.mrf.mxu0
    %v2013 = vadd.f32 0.0, %v2012
    %2014 = vmatmul.bf16.gmra.mxu0 %v1415
    %v2015 = vpop.f32.mrf.mxu0
    %v2016 = vadd.f32 0.0, %v2015
    %v2017 = vpop.f32.mrf.mxu0
    %v2018 = vadd.f32 0.0, %v2017
    %2019 = vmatmul.bf16.gmra.mxu0 %v1416
    %v2020 = vpop.f32.mrf.mxu0
    %v2021 = vadd.f32 0.0, %v2020
    %v2022 = vpop.f32.mrf.mxu0
    %v2023 = vadd.f32 0.0, %v2022
    %2024 = vmatmul.bf16.gmra.mxu0 %v1417
    %v2025 = vpop.f32.mrf.mxu0
    %v2026 = vadd.f32 0.0, %v2025
    %v2027 = vpop.f32.mrf.mxu0
    %v2028 = vadd.f32 0.0, %v2027
    %2029 = vdwg.mxu0
    %2030 = vmatpush.bf16.msra.mxu0 %v1624
    %2031 = vmatpush.bf16.msra.mxu0 %v1618
    %2032 = vmatpush.bf16.msra.mxu0 %v1612
    %2033 = vmatpush.bf16.msra.mxu0 %v1606
    %2034 = vmatpush.bf16.msra.mxu0 %v1600
    %2035 = vmatpush.bf16.msra.mxu0 %v1594
    %2036 = vmatpush.bf16.msra.mxu0 %v1588
    %2037 = vmatpush.bf16.msra.mxu0 %v1582
    %2038 = vmatmul.bf16.gmra.mxu0 %v1402
    %v2039 = vpop.f32.mrf.mxu0
    %v2040 = vadd.f32 0.0, %v2039
    %v2041 = vpop.f32.mrf.mxu0
    %v2042 = vadd.f32 0.0, %v2041
    %2043 = vmatmul.bf16.gmra.mxu0 %v1403
    %v2044 = vpop.f32.mrf.mxu0
    %v2045 = vadd.f32 0.0, %v2044
    %v2046 = vpop.f32.mrf.mxu0
    %v2047 = vadd.f32 0.0, %v2046
    %2048 = vmatmul.bf16.gmra.mxu0 %v1404
    %v2049 = vpop.f32.mrf.mxu0
    %v2050 = vadd.f32 0.0, %v2049
    %v2051 = vpop.f32.mrf.mxu0
    %v2052 = vadd.f32 0.0, %v2051
    %2053 = vmatmul.bf16.gmra.mxu0 %v1405
    %v2054 = vpop.f32.mrf.mxu0
    %v2055 = vadd.f32 0.0, %v2054
    %v2056 = vpop.f32.mrf.mxu0
    %v2057 = vadd.f32 0.0, %v2056
    %2058 = vmatmul.bf16.gmra.mxu0 %v1406
    %v2059 = vpop.f32.mrf.mxu0
    %v2060 = vadd.f32 0.0, %v2059
    %v2061 = vpop.f32.mrf.mxu0
    %v2062 = vadd.f32 0.0, %v2061
    %2063 = vmatmul.bf16.gmra.mxu0 %v1407
    %v2064 = vpop.f32.mrf.mxu0
    %v2065 = vadd.f32 0.0, %v2064
    %v2066 = vpop.f32.mrf.mxu0
    %v2067 = vadd.f32 0.0, %v2066
    %2068 = vmatmul.bf16.gmra.mxu0 %v1408
    %v2069 = vpop.f32.mrf.mxu0
    %v2070 = vadd.f32 0.0, %v2069
    %v2071 = vpop.f32.mrf.mxu0
    %v2072 = vadd.f32 0.0, %v2071
    %2073 = vmatmul.bf16.gmra.mxu0 %v1409
    %v2074 = vpop.f32.mrf.mxu0
    %v2075 = vadd.f32 0.0, %v2074
    %v2076 = vpop.f32.mrf.mxu0
    %v2077 = vadd.f32 0.0, %v2076
    %2078 = vmatmul.bf16.gmra.mxu0 %v1410
    %v2079 = vpop.f32.mrf.mxu0
    %v2080 = vadd.f32 0.0, %v2079
    %v2081 = vpop.f32.mrf.mxu0
    %v2082 = vadd.f32 0.0, %v2081
    %2083 = vmatmul.bf16.gmra.mxu0 %v1411
    %v2084 = vpop.f32.mrf.mxu0
    %v2085 = vadd.f32 0.0, %v2084
    %v2086 = vpop.f32.mrf.mxu0
    %v2087 = vadd.f32 0.0, %v2086
    %2088 = vmatmul.bf16.gmra.mxu0 %v1412
    %v2089 = vpop.f32.mrf.mxu0
    %v2090 = vadd.f32 0.0, %v2089
    %v2091 = vpop.f32.mrf.mxu0
    %v2092 = vadd.f32 0.0, %v2091
    %2093 = vmatmul.bf16.gmra.mxu0 %v1413
    %v2094 = vpop.f32.mrf.mxu0
    %v2095 = vadd.f32 0.0, %v2094
    %v2096 = vpop.f32.mrf.mxu0
    %v2097 = vadd.f32 0.0, %v2096
    %2098 = vmatmul.bf16.gmra.mxu0 %v1414
    %v2099 = vpop.f32.mrf.mxu0
    %v2100 = vadd.f32 0.0, %v2099
    %v2101 = vpop.f32.mrf.mxu0
    %v2102 = vadd.f32 0.0, %v2101
    %2103 = vmatmul.bf16.gmra.mxu0 %v1415
    %v2104 = vpop.f32.mrf.mxu0
    %v2105 = vadd.f32 0.0, %v2104
    %v2106 = vpop.f32.mrf.mxu0
    %v2107 = vadd.f32 0.0, %v2106
    %2108 = vmatmul.bf16.gmra.mxu0 %v1416
    %v2109 = vpop.f32.mrf.mxu0
    %v2110 = vadd.f32 0.0, %v2109
    %v2111 = vpop.f32.mrf.mxu0
    %v2112 = vadd.f32 0.0, %v2111
    %2113 = vmatmul.bf16.gmra.mxu0 %v1417
    %v2114 = vpop.f32.mrf.mxu0
    %v2115 = vadd.f32 0.0, %v2114
    %v2116 = vpop.f32.mrf.mxu0
    %v2117 = vadd.f32 0.0, %v2116
    %2118 = vdwg.mxu0
    %2119 = vmatpush.bf16.msra.mxu0 %v1625
    %2120 = vmatpush.bf16.msra.mxu0 %v1619
    %2121 = vmatpush.bf16.msra.mxu0 %v1613
    %2122 = vmatpush.bf16.msra.mxu0 %v1607
    %2123 = vmatpush.bf16.msra.mxu0 %v1601
    %2124 = vmatpush.bf16.msra.mxu0 %v1595
    %2125 = vmatpush.bf16.msra.mxu0 %v1589
    %2126 = vmatpush.bf16.msra.mxu0 %v1583
    %2127 = vmatmul.bf16.gmra.mxu0 %v1402
    %v2128 = vpop.f32.mrf.mxu0
    %v2129 = vadd.f32 0.0, %v2128
    %v2130 = vpop.f32.mrf.mxu0
    %v2131 = vadd.f32 0.0, %v2130
    %2132 = vmatmul.bf16.gmra.mxu0 %v1403
    %v2133 = vpop.f32.mrf.mxu0
    %v2134 = vadd.f32 0.0, %v2133
    %v2135 = vpop.f32.mrf.mxu0
    %v2136 = vadd.f32 0.0, %v2135
    %2137 = vmatmul.bf16.gmra.mxu0 %v1404
    %v2138 = vpop.f32.mrf.mxu0
    %v2139 = vadd.f32 0.0, %v2138
    %v2140 = vpop.f32.mrf.mxu0
    %v2141 = vadd.f32 0.0, %v2140
    %2142 = vmatmul.bf16.gmra.mxu0 %v1405
    %v2143 = vpop.f32.mrf.mxu0
    %v2144 = vadd.f32 0.0, %v2143
    %v2145 = vpop.f32.mrf.mxu0
    %v2146 = vadd.f32 0.0, %v2145
    %2147 = vmatmul.bf16.gmra.mxu0 %v1406
    %v2148 = vpop.f32.mrf.mxu0
    %v2149 = vadd.f32 0.0, %v2148
    %v2150 = vpop.f32.mrf.mxu0
    %v2151 = vadd.f32 0.0, %v2150
    %2152 = vmatmul.bf16.gmra.mxu0 %v1407
    %v2153 = vpop.f32.mrf.mxu0
    %v2154 = vadd.f32 0.0, %v2153
    %v2155 = vpop.f32.mrf.mxu0
    %v2156 = vadd.f32 0.0, %v2155
    %2157 = vmatmul.bf16.gmra.mxu0 %v1408
    %v2158 = vpop.f32.mrf.mxu0
    %v2159 = vadd.f32 0.0, %v2158
    %v2160 = vpop.f32.mrf.mxu0
    %v2161 = vadd.f32 0.0, %v2160
    %2162 = vmatmul.bf16.gmra.mxu0 %v1409
    %v2163 = vpop.f32.mrf.mxu0
    %v2164 = vadd.f32 0.0, %v2163
    %v2165 = vpop.f32.mrf.mxu0
    %v2166 = vadd.f32 0.0, %v2165
    %2167 = vmatmul.bf16.gmra.mxu0 %v1410
    %v2168 = vpop.f32.mrf.mxu0
    %v2169 = vadd.f32 0.0, %v2168
    %v2170 = vpop.f32.mrf.mxu0
    %v2171 = vadd.f32 0.0, %v2170
    %2172 = vmatmul.bf16.gmra.mxu0 %v1411
    %v2173 = vpop.f32.mrf.mxu0
    %v2174 = vadd.f32 0.0, %v2173
    %v2175 = vpop.f32.mrf.mxu0
    %v2176 = vadd.f32 0.0, %v2175
    %2177 = vmatmul.bf16.gmra.mxu0 %v1412
    %v2178 = vpop.f32.mrf.mxu0
    %v2179 = vadd.f32 0.0, %v2178
    %v2180 = vpop.f32.mrf.mxu0
    %v2181 = vadd.f32 0.0, %v2180
    %2182 = vmatmul.bf16.gmra.mxu0 %v1413
    %v2183 = vpop.f32.mrf.mxu0
    %v2184 = vadd.f32 0.0, %v2183
    %v2185 = vpop.f32.mrf.mxu0
    %v2186 = vadd.f32 0.0, %v2185
    %2187 = vmatmul.bf16.gmra.mxu0 %v1414
    %v2188 = vpop.f32.mrf.mxu0
    %v2189 = vadd.f32 0.0, %v2188
    %v2190 = vpop.f32.mrf.mxu0
    %v2191 = vadd.f32 0.0, %v2190
    %2192 = vmatmul.bf16.gmra.mxu0 %v1415
    %v2193 = vpop.f32.mrf.mxu0
    %v2194 = vadd.f32 0.0, %v2193
    %v2195 = vpop.f32.mrf.mxu0
    %v2196 = vadd.f32 0.0, %v2195
    %2197 = vmatmul.bf16.gmra.mxu0 %v1416
    %v2198 = vpop.f32.mrf.mxu0
    %v2199 = vadd.f32 0.0, %v2198
    %v2200 = vpop.f32.mrf.mxu0
    %v2201 = vadd.f32 0.0, %v2200
    %2202 = vmatmul.bf16.gmra.mxu0 %v1417
    %v2203 = vpop.f32.mrf.mxu0
    %v2204 = vadd.f32 0.0, %v2203
    %v2205 = vpop.f32.mrf.mxu0
    %v2206 = vadd.f32 0.0, %v2205
    %2207 = vdwg.mxu0
    %v2208 = vmax.f32 %v1684, 0.0
    %v2209 = vmax.f32 %v1773, 0.0
    %v2210 = vmax.f32 %v1686, 0.0
    %v2211 = vmax.f32 %v1775, 0.0
    %v2212 = vmax.f32 %v1689, 0.0
    %v2213 = vmax.f32 %v1778, 0.0
    %v2214 = vmax.f32 %v1691, 0.0
    %v2215 = vmax.f32 %v1780, 0.0
    %v2216 = vmax.f32 %v1694, 0.0
    %v2217 = vmax.f32 %v1783, 0.0
    %v2218 = vmax.f32 %v1696, 0.0
    %v2219 = vmax.f32 %v1785, 0.0
    %v2220 = vmax.f32 %v1699, 0.0
    %v2221 = vmax.f32 %v1788, 0.0
    %v2222 = vmax.f32 %v1701, 0.0
    %v2223 = vmax.f32 %v1790, 0.0
    %v2224 = vmax.f32 %v1704, 0.0
    %v2225 = vmax.f32 %v1793, 0.0
    %v2226 = vmax.f32 %v1706, 0.0
    %v2227 = vmax.f32 %v1795, 0.0
    %v2228 = vmax.f32 %v1709, 0.0
    %v2229 = vmax.f32 %v1798, 0.0
    %v2230 = vmax.f32 %v1711, 0.0
    %v2231 = vmax.f32 %v1800, 0.0
    %v2232 = vmax.f32 %v1714, 0.0
    %v2233 = vmax.f32 %v1803, 0.0
    %v2234 = vmax.f32 %v1716, 0.0
    %v2235 = vmax.f32 %v1805, 0.0
    %v2236 = vmax.f32 %v1719, 0.0
    %v2237 = vmax.f32 %v1808, 0.0
    %v2238 = vmax.f32 %v1721, 0.0
    %v2239 = vmax.f32 %v1810, 0.0
    %v2240 = vmax.f32 %v1724, 0.0
    %v2241 = vmax.f32 %v1813, 0.0
    %v2242 = vmax.f32 %v1726, 0.0
    %v2243 = vmax.f32 %v1815, 0.0
    %v2244 = vmax.f32 %v1729, 0.0
    %v2245 = vmax.f32 %v1818, 0.0
    %v2246 = vmax.f32 %v1731, 0.0
    %v2247 = vmax.f32 %v1820, 0.0
    %v2248 = vmax.f32 %v1734, 0.0
    %v2249 = vmax.f32 %v1823, 0.0
    %v2250 = vmax.f32 %v1736, 0.0
    %v2251 = vmax.f32 %v1825, 0.0
    %v2252 = vmax.f32 %v1739, 0.0
    %v2253 = vmax.f32 %v1828, 0.0
    %v2254 = vmax.f32 %v1741, 0.0
    %v2255 = vmax.f32 %v1830, 0.0
    %v2256 = vmax.f32 %v1744, 0.0
    %v2257 = vmax.f32 %v1833, 0.0
    %v2258 = vmax.f32 %v1746, 0.0
    %v2259 = vmax.f32 %v1835, 0.0
    %v2260 = vmax.f32 %v1749, 0.0
    %v2261 = vmax.f32 %v1838, 0.0
    %v2262 = vmax.f32 %v1751, 0.0
    %v2263 = vmax.f32 %v1840, 0.0
    %v2264 = vmax.f32 %v1754, 0.0
    %v2265 = vmax.f32 %v1843, 0.0
    %v2266 = vmax.f32 %v1756, 0.0
    %v2267 = vmax.f32 %v1845, 0.0
    %v2268 = vmax.f32 %v1759, 0.0
    %v2269 = vmax.f32 %v1848, 0.0
    %v2270 = vmax.f32 %v1761, 0.0
    %v2271 = vmax.f32 %v1850, 0.0
    %v2272 = vadd.f32 %v2208, 0.001
    %v2273 = vadd.f32 %v2209, 0.001
    %v2274 = vadd.f32 %v2210, 0.001
    %v2275 = vadd.f32 %v2211, 0.001
    %v2276 = vadd.f32 %v2212, 0.001
    %v2277 = vadd.f32 %v2213, 0.001
    %v2278 = vadd.f32 %v2214, 0.001
    %v2279 = vadd.f32 %v2215, 0.001
    %v2280 = vadd.f32 %v2216, 0.001
    %v2281 = vadd.f32 %v2217, 0.001
    %v2282 = vadd.f32 %v2218, 0.001
    %v2283 = vadd.f32 %v2219, 0.001
    %v2284 = vadd.f32 %v2220, 0.001
    %v2285 = vadd.f32 %v2221, 0.001
    %v2286 = vadd.f32 %v2222, 0.001
    %v2287 = vadd.f32 %v2223, 0.001
    %v2288 = vadd.f32 %v2224, 0.001
    %v2289 = vadd.f32 %v2225, 0.001
    %v2290 = vadd.f32 %v2226, 0.001
    %v2291 = vadd.f32 %v2227, 0.001
    %v2292 = vadd.f32 %v2228, 0.001
    %v2293 = vadd.f32 %v2229, 0.001
    %v2294 = vadd.f32 %v2230, 0.001
    %v2295 = vadd.f32 %v2231, 0.001
    %v2296 = vadd.f32 %v2232, 0.001
    %v2297 = vadd.f32 %v2233, 0.001
    %v2298 = vadd.f32 %v2234, 0.001
    %v2299 = vadd.f32 %v2235, 0.001
    %v2300 = vadd.f32 %v2236, 0.001
    %v2301 = vadd.f32 %v2237, 0.001
    %v2302 = vadd.f32 %v2238, 0.001
    %v2303 = vadd.f32 %v2239, 0.001
    %v2304 = vadd.f32 %v2240, 0.001
    %v2305 = vadd.f32 %v2241, 0.001
    %v2306 = vadd.f32 %v2242, 0.001
    %v2307 = vadd.f32 %v2243, 0.001
    %v2308 = vadd.f32 %v2244, 0.001
    %v2309 = vadd.f32 %v2245, 0.001
    %v2310 = vadd.f32 %v2246, 0.001
    %v2311 = vadd.f32 %v2247, 0.001
    %v2312 = vadd.f32 %v2248, 0.001
    %v2313 = vadd.f32 %v2249, 0.001
    %v2314 = vadd.f32 %v2250, 0.001
    %v2315 = vadd.f32 %v2251, 0.001
    %v2316 = vadd.f32 %v2252, 0.001
    %v2317 = vadd.f32 %v2253, 0.001
    %v2318 = vadd.f32 %v2254, 0.001
    %v2319 = vadd.f32 %v2255, 0.001
    %v2320 = vadd.f32 %v2256, 0.001
    %v2321 = vadd.f32 %v2257, 0.001
    %v2322 = vadd.f32 %v2258, 0.001
    %v2323 = vadd.f32 %v2259, 0.001
    %v2324 = vadd.f32 %v2260, 0.001
    %v2325 = vadd.f32 %v2261, 0.001
    %v2326 = vadd.f32 %v2262, 0.001
    %v2327 = vadd.f32 %v2263, 0.001
    %v2328 = vadd.f32 %v2264, 0.001
    %v2329 = vadd.f32 %v2265, 0.001
    %v2330 = vadd.f32 %v2266, 0.001
    %v2331 = vadd.f32 %v2267, 0.001
    %v2332 = vadd.f32 %v2268, 0.001
    %v2333 = vadd.f32 %v2269, 0.001
    %v2334 = vadd.f32 %v2270, 0.001
    %v2335 = vadd.f32 %v2271, 0.001
    %v2336 = vmax.f32 %v1862, 0.0
    %v2337 = vmax.f32 %v1951, 0.0
    %v2338 = vmax.f32 %v1864, 0.0
    %v2339 = vmax.f32 %v1953, 0.0
    %v2340 = vmax.f32 %v1867, 0.0
    %v2341 = vmax.f32 %v1956, 0.0
    %v2342 = vmax.f32 %v1869, 0.0
    %v2343 = vmax.f32 %v1958, 0.0
    %v2344 = vmax.f32 %v1872, 0.0
    %v2345 = vmax.f32 %v1961, 0.0
    %v2346 = vmax.f32 %v1874, 0.0
    %v2347 = vmax.f32 %v1963, 0.0
    %v2348 = vmax.f32 %v1877, 0.0
    %v2349 = vmax.f32 %v1966, 0.0
    %v2350 = vmax.f32 %v1879, 0.0
    %v2351 = vmax.f32 %v1968, 0.0
    %v2352 = vmax.f32 %v1882, 0.0
    %v2353 = vmax.f32 %v1971, 0.0
    %v2354 = vmax.f32 %v1884, 0.0
    %v2355 = vmax.f32 %v1973, 0.0
    %v2356 = vmax.f32 %v1887, 0.0
    %v2357 = vmax.f32 %v1976, 0.0
    %v2358 = vmax.f32 %v1889, 0.0
    %v2359 = vmax.f32 %v1978, 0.0
    %v2360 = vmax.f32 %v1892, 0.0
    %v2361 = vmax.f32 %v1981, 0.0
    %v2362 = vmax.f32 %v1894, 0.0
    %v2363 = vmax.f32 %v1983, 0.0
    %v2364 = vmax.f32 %v1897, 0.0
    %v2365 = vmax.f32 %v1986, 0.0
    %v2366 = vmax.f32 %v1899, 0.0
    %v2367 = vmax.f32 %v1988, 0.0
    %v2368 = vmax.f32 %v1902, 0.0
    %v2369 = vmax.f32 %v1991, 0.0
    %v2370 = vmax.f32 %v1904, 0.0
    %v2371 = vmax.f32 %v1993, 0.0
    %v2372 = vmax.f32 %v1907, 0.0
    %v2373 = vmax.f32 %v1996, 0.0
    %v2374 = vmax.f32 %v1909, 0.0
    %v2375 = vmax.f32 %v1998, 0.0
    %v2376 = vmax.f32 %v1912, 0.0
    %v2377 = vmax.f32 %v2001, 0.0
    %v2378 = vmax.f32 %v1914, 0.0
    %v2379 = vmax.f32 %v2003, 0.0
    %v2380 = vmax.f32 %v1917, 0.0
    %v2381 = vmax.f32 %v2006, 0.0
    %v2382 = vmax.f32 %v1919, 0.0
    %v2383 = vmax.f32 %v2008, 0.0
    %v2384 = vmax.f32 %v1922, 0.0
    %v2385 = vmax.f32 %v2011, 0.0
    %v2386 = vmax.f32 %v1924, 0.0
    %v2387 = vmax.f32 %v2013, 0.0
    %v2388 = vmax.f32 %v1927, 0.0
    %v2389 = vmax.f32 %v2016, 0.0
    %v2390 = vmax.f32 %v1929, 0.0
    %v2391 = vmax.f32 %v2018, 0.0
    %v2392 = vmax.f32 %v1932, 0.0
    %v2393 = vmax.f32 %v2021, 0.0
    %v2394 = vmax.f32 %v1934, 0.0
    %v2395 = vmax.f32 %v2023, 0.0
    %v2396 = vmax.f32 %v1937, 0.0
    %v2397 = vmax.f32 %v2026, 0.0
    %v2398 = vmax.f32 %v1939, 0.0
    %v2399 = vmax.f32 %v2028, 0.0
    %v2400 = vadd.f32 %v2336, 0.001
    %v2401 = vadd.f32 %v2337, 0.001
    %v2402 = vadd.f32 %v2338, 0.001
    %v2403 = vadd.f32 %v2339, 0.001
    %v2404 = vadd.f32 %v2340, 0.001
    %v2405 = vadd.f32 %v2341, 0.001
    %v2406 = vadd.f32 %v2342, 0.001
    %v2407 = vadd.f32 %v2343, 0.001
    %v2408 = vadd.f32 %v2344, 0.001
    %v2409 = vadd.f32 %v2345, 0.001
    %v2410 = vadd.f32 %v2346, 0.001
    %v2411 = vadd.f32 %v2347, 0.001
    %v2412 = vadd.f32 %v2348, 0.001
    %v2413 = vadd.f32 %v2349, 0.001
    %v2414 = vadd.f32 %v2350, 0.001
    %v2415 = vadd.f32 %v2351, 0.001
    %v2416 = vadd.f32 %v2352, 0.001
    %v2417 = vadd.f32 %v2353, 0.001
    %v2418 = vadd.f32 %v2354, 0.001
    %v2419 = vadd.f32 %v2355, 0.001
    %v2420 = vadd.f32 %v2356, 0.001
    %v2421 = vadd.f32 %v2357, 0.001
    %v2422 = vadd.f32 %v2358, 0.001
    %v2423 = vadd.f32 %v2359, 0.001
    %v2424 = vadd.f32 %v2360, 0.001
    %v2425 = vadd.f32 %v2361, 0.001
    %v2426 = vadd.f32 %v2362, 0.001
    %v2427 = vadd.f32 %v2363, 0.001
    %v2428 = vadd.f32 %v2364, 0.001
    %v2429 = vadd.f32 %v2365, 0.001
    %v2430 = vadd.f32 %v2366, 0.001
    %v2431 = vadd.f32 %v2367, 0.001
    %v2432 = vadd.f32 %v2368, 0.001
    %v2433 = vadd.f32 %v2369, 0.001
    %v2434 = vadd.f32 %v2370, 0.001
    %v2435 = vadd.f32 %v2371, 0.001
    %v2436 = vadd.f32 %v2372, 0.001
    %v2437 = vadd.f32 %v2373, 0.001
    %v2438 = vadd.f32 %v2374, 0.001
    %v2439 = vadd.f32 %v2375, 0.001
    %v2440 = vadd.f32 %v2376, 0.001
    %v2441 = vadd.f32 %v2377, 0.001
    %v2442 = vadd.f32 %v2378, 0.001
    %v2443 = vadd.f32 %v2379, 0.001
    %v2444 = vadd.f32 %v2380, 0.001
    %v2445 = vadd.f32 %v2381, 0.001
    %v2446 = vadd.f32 %v2382, 0.001
    %v2447 = vadd.f32 %v2383, 0.001
    %v2448 = vadd.f32 %v2384, 0.001
    %v2449 = vadd.f32 %v2385, 0.001
    %v2450 = vadd.f32 %v2386, 0.001
    %v2451 = vadd.f32 %v2387, 0.001
    %v2452 = vadd.f32 %v2388, 0.001
    %v2453 = vadd.f32 %v2389, 0.001
    %v2454 = vadd.f32 %v2390, 0.001
    %v2455 = vadd.f32 %v2391, 0.001
    %v2456 = vadd.f32 %v2392, 0.001
    %v2457 = vadd.f32 %v2393, 0.001
    %v2458 = vadd.f32 %v2394, 0.001
    %v2459 = vadd.f32 %v2395, 0.001
    %v2460 = vadd.f32 %v2396, 0.001
    %v2461 = vadd.f32 %v2397, 0.001
    %v2462 = vadd.f32 %v2398, 0.001
    %v2463 = vadd.f32 %v2399, 0.001
    %2464 = vxpose.xlu0.b32.start [1/16] %v2400, 128
    %2465 = vxpose.xlu0.b32.cont [2/16] %v2402, 128
    %2466 = vxpose.xlu0.b32.cont [3/16] %v2404, 128
    %2467 = vxpose.xlu0.b32.cont [4/16] %v2406, 128
    %2468 = vxpose.xlu0.b32.cont [5/16] %v2408, 128
    %2469 = vxpose.xlu0.b32.cont [6/16] %v2410, 128
    %2470 = vxpose.xlu0.b32.cont [7/16] %v2412, 128
    %2471 = vxpose.xlu0.b32.cont [8/16] %v2414, 128
    %2472 = vxpose.xlu0.b32.cont [9/16] %v2416, 128
    %2473 = vxpose.xlu0.b32.cont [10/16] %v2418, 128
    %2474 = vxpose.xlu0.b32.cont [11/16] %v2420, 128
    %2475 = vxpose.xlu0.b32.cont [12/16] %v2422, 128
    %2476 = vxpose.xlu0.b32.cont [13/16] %v2424, 128
    %2477 = vxpose.xlu0.b32.cont [14/16] %v2426, 128
    %2478 = vxpose.xlu0.b32.cont [15/16] %v2428, 128
    %2479 = vxpose.xlu0.b32.end [16/16] %v2430, 128
    %v2480 = vpop.trf.xlu0
    %v2481 = vpop.trf.xlu0
    %v2482 = vpop.trf.xlu0
    %v2483 = vpop.trf.xlu0
    %v2484 = vpop.trf.xlu0
    %v2485 = vpop.trf.xlu0
    %v2486 = vpop.trf.xlu0
    %v2487 = vpop.trf.xlu0
    %v2488 = vpop.trf.xlu0
    %v2489 = vpop.trf.xlu0
    %v2490 = vpop.trf.xlu0
    %v2491 = vpop.trf.xlu0
    %v2492 = vpop.trf.xlu0
    %v2493 = vpop.trf.xlu0
    %v2494 = vpop.trf.xlu0
    %v2495 = vpop.trf.xlu0
    %2496 = vxpose.xlu0.b32.start [1/16] %v2401, 128
    %2497 = vxpose.xlu0.b32.cont [2/16] %v2403, 128
    %2498 = vxpose.xlu0.b32.cont [3/16] %v2405, 128
    %2499 = vxpose.xlu0.b32.cont [4/16] %v2407, 128
    %2500 = vxpose.xlu0.b32.cont [5/16] %v2409, 128
    %2501 = vxpose.xlu0.b32.cont [6/16] %v2411, 128
    %2502 = vxpose.xlu0.b32.cont [7/16] %v2413, 128
    %2503 = vxpose.xlu0.b32.cont [8/16] %v2415, 128
    %2504 = vxpose.xlu0.b32.cont [9/16] %v2417, 128
    %2505 = vxpose.xlu0.b32.cont [10/16] %v2419, 128
    %2506 = vxpose.xlu0.b32.cont [11/16] %v2421, 128
    %2507 = vxpose.xlu0.b32.cont [12/16] %v2423, 128
    %2508 = vxpose.xlu0.b32.cont [13/16] %v2425, 128
    %2509 = vxpose.xlu0.b32.cont [14/16] %v2427, 128
    %2510 = vxpose.xlu0.b32.cont [15/16] %v2429, 128
    %2511 = vxpose.xlu0.b32.end [16/16] %v2431, 128
    %v2512 = vpop.trf.xlu0
    %v2513 = vpop.trf.xlu0
    %v2514 = vpop.trf.xlu0
    %v2515 = vpop.trf.xlu0
    %v2516 = vpop.trf.xlu0
    %v2517 = vpop.trf.xlu0
    %v2518 = vpop.trf.xlu0
    %v2519 = vpop.trf.xlu0
    %v2520 = vpop.trf.xlu0
    %v2521 = vpop.trf.xlu0
    %v2522 = vpop.trf.xlu0
    %v2523 = vpop.trf.xlu0
    %v2524 = vpop.trf.xlu0
    %v2525 = vpop.trf.xlu0
    %v2526 = vpop.trf.xlu0
    %v2527 = vpop.trf.xlu0
    %2528 = vxpose.xlu0.b32.start [1/16] %v2432, 128
    %2529 = vxpose.xlu0.b32.cont [2/16] %v2434, 128
    %2530 = vxpose.xlu0.b32.cont [3/16] %v2436, 128
    %2531 = vxpose.xlu0.b32.cont [4/16] %v2438, 128
    %2532 = vxpose.xlu0.b32.cont [5/16] %v2440, 128
    %2533 = vxpose.xlu0.b32.cont [6/16] %v2442, 128
    %2534 = vxpose.xlu0.b32.cont [7/16] %v2444, 128
    %2535 = vxpose.xlu0.b32.cont [8/16] %v2446, 128
    %2536 = vxpose.xlu0.b32.cont [9/16] %v2448, 128
    %2537 = vxpose.xlu0.b32.cont [10/16] %v2450, 128
    %2538 = vxpose.xlu0.b32.cont [11/16] %v2452, 128
    %2539 = vxpose.xlu0.b32.cont [12/16] %v2454, 128
    %2540 = vxpose.xlu0.b32.cont [13/16] %v2456, 128
    %2541 = vxpose.xlu0.b32.cont [14/16] %v2458, 128
    %2542 = vxpose.xlu0.b32.cont [15/16] %v2460, 128
    %2543 = vxpose.xlu0.b32.end [16/16] %v2462, 128
    %v2544 = vpop.trf.xlu0
    %v2545 = vpop.trf.xlu0
    %v2546 = vpop.trf.xlu0
    %v2547 = vpop.trf.xlu0
    %v2548 = vpop.trf.xlu0
    %v2549 = vpop.trf.xlu0
    %v2550 = vpop.trf.xlu0
    %v2551 = vpop.trf.xlu0
    %v2552 = vpop.trf.xlu0
    %v2553 = vpop.trf.xlu0
    %v2554 = vpop.trf.xlu0
    %v2555 = vpop.trf.xlu0
    %v2556 = vpop.trf.xlu0
    %v2557 = vpop.trf.xlu0
    %v2558 = vpop.trf.xlu0
    %v2559 = vpop.trf.xlu0
    %2560 = vxpose.xlu0.b32.start [1/16] %v2433, 128
    %2561 = vxpose.xlu0.b32.cont [2/16] %v2435, 128
    %2562 = vxpose.xlu0.b32.cont [3/16] %v2437, 128
    %2563 = vxpose.xlu0.b32.cont [4/16] %v2439, 128
    %2564 = vxpose.xlu0.b32.cont [5/16] %v2441, 128
    %2565 = vxpose.xlu0.b32.cont [6/16] %v2443, 128
    %2566 = vxpose.xlu0.b32.cont [7/16] %v2445, 128
    %2567 = vxpose.xlu0.b32.cont [8/16] %v2447, 128
    %2568 = vxpose.xlu0.b32.cont [9/16] %v2449, 128
    %2569 = vxpose.xlu0.b32.cont [10/16] %v2451, 128
    %2570 = vxpose.xlu0.b32.cont [11/16] %v2453, 128
    %2571 = vxpose.xlu0.b32.cont [12/16] %v2455, 128
    %2572 = vxpose.xlu0.b32.cont [13/16] %v2457, 128
    %2573 = vxpose.xlu0.b32.cont [14/16] %v2459, 128
    %2574 = vxpose.xlu0.b32.cont [15/16] %v2461, 128
    %2575 = vxpose.xlu0.b32.end [16/16] %v2463, 128
    %v2576 = vpop.trf.xlu0
    %v2577 = vpop.trf.xlu0
    %v2578 = vpop.trf.xlu0
    %v2579 = vpop.trf.xlu0
    %v2580 = vpop.trf.xlu0
    %v2581 = vpop.trf.xlu0
    %v2582 = vpop.trf.xlu0
    %v2583 = vpop.trf.xlu0
    %v2584 = vpop.trf.xlu0
    %v2585 = vpop.trf.xlu0
    %v2586 = vpop.trf.xlu0
    %v2587 = vpop.trf.xlu0
    %v2588 = vpop.trf.xlu0
    %v2589 = vpop.trf.xlu0
    %v2590 = vpop.trf.xlu0
    %v2591 = vpop.trf.xlu0
    %v2592 = vadd.f32 %v2400, %v2402
    %v2593 = vadd.f32 %v2592, %v2404
    %v2594 = vadd.f32 %v2593, %v2406
    %v2595 = vadd.f32 %v2594, %v2408
    %v2596 = vadd.f32 %v2595, %v2410
    %v2597 = vadd.f32 %v2596, %v2412
    %v2598 = vadd.f32 %v2597, %v2414
    %v2599 = vadd.f32 %v2598, %v2416
    %v2600 = vadd.f32 %v2599, %v2418
    %v2601 = vadd.f32 %v2600, %v2420
    %v2602 = vadd.f32 %v2601, %v2422
    %v2603 = vadd.f32 %v2602, %v2424
    %v2604 = vadd.f32 %v2603, %v2426
    %v2605 = vadd.f32 %v2604, %v2428
    %v2606 = vadd.f32 %v2605, %v2430
    %v2607 = vadd.f32 %v2606, %v2432
    %v2608 = vadd.f32 %v2607, %v2434
    %v2609 = vadd.f32 %v2608, %v2436
    %v2610 = vadd.f32 %v2609, %v2438
    %v2611 = vadd.f32 %v2610, %v2440
    %v2612 = vadd.f32 %v2611, %v2442
    %v2613 = vadd.f32 %v2612, %v2444
    %v2614 = vadd.f32 %v2613, %v2446
    %v2615 = vadd.f32 %v2614, %v2448
    %v2616 = vadd.f32 %v2615, %v2450
    %v2617 = vadd.f32 %v2616, %v2452
    %v2618 = vadd.f32 %v2617, %v2454
    %v2619 = vadd.f32 %v2618, %v2456
    %v2620 = vadd.f32 %v2619, %v2458
    %v2621 = vadd.f32 %v2620, %v2460
    %v2622 = vadd.f32 %v2621, %v2462
    %v2623 = vrot.slane %v2622, 4
    %v2624 = vadd.f32 %v2622, %v2623
    %v2625 = vrot.slane %v2624, 2
    %v2626 = vadd.f32 %v2624, %v2625
    %v2627 = vrot.slane %v2626, 1
    %v2628 = vadd.f32 %v2626, %v2627
    %v2629 = vmul.f32 %v2272, %v2628
    %v2630 = vmul.f32 %v2274, %v2628
    %v2631 = vmul.f32 %v2276, %v2628
    %v2632 = vmul.f32 %v2278, %v2628
    %v2633 = vmul.f32 %v2280, %v2628
    %v2634 = vmul.f32 %v2282, %v2628
    %v2635 = vmul.f32 %v2284, %v2628
    %v2636 = vmul.f32 %v2286, %v2628
    %v2637 = vmul.f32 %v2288, %v2628
    %v2638 = vmul.f32 %v2290, %v2628
    %v2639 = vmul.f32 %v2292, %v2628
    %v2640 = vmul.f32 %v2294, %v2628
    %v2641 = vmul.f32 %v2296, %v2628
    %v2642 = vmul.f32 %v2298, %v2628
    %v2643 = vmul.f32 %v2300, %v2628
    %v2644 = vmul.f32 %v2302, %v2628
    %v2645 = vmul.f32 %v2304, %v2628
    %v2646 = vmul.f32 %v2306, %v2628
    %v2647 = vmul.f32 %v2308, %v2628
    %v2648 = vmul.f32 %v2310, %v2628
    %v2649 = vmul.f32 %v2312, %v2628
    %v2650 = vmul.f32 %v2314, %v2628
    %v2651 = vmul.f32 %v2316, %v2628
    %v2652 = vmul.f32 %v2318, %v2628
    %v2653 = vmul.f32 %v2320, %v2628
    %v2654 = vmul.f32 %v2322, %v2628
    %v2655 = vmul.f32 %v2324, %v2628
    %v2656 = vmul.f32 %v2326, %v2628
    %v2657 = vmul.f32 %v2328, %v2628
    %v2658 = vmul.f32 %v2330, %v2628
    %v2659 = vmul.f32 %v2332, %v2628
    %v2660 = vmul.f32 %v2334, %v2628
    %2661 = vadd.xlane.f32.xlu0 %v2629
    %v2662 = vpop.xlane.xlu0 %2661
    %2663 = vadd.xlane.f32.xlu0 %v2630
    %v2664 = vpop.xlane.xlu0 %2663
    %2665 = vadd.xlane.f32.xlu0 %v2631
    %v2666 = vpop.xlane.xlu0 %2665
    %2667 = vadd.xlane.f32.xlu0 %v2632
    %v2668 = vpop.xlane.xlu0 %2667
    %2669 = vadd.xlane.f32.xlu0 %v2633
    %v2670 = vpop.xlane.xlu0 %2669
    %2671 = vadd.xlane.f32.xlu0 %v2634
    %v2672 = vpop.xlane.xlu0 %2671
    %2673 = vadd.xlane.f32.xlu0 %v2635
    %v2674 = vpop.xlane.xlu0 %2673
    %2675 = vadd.xlane.f32.xlu0 %v2636
    %v2676 = vpop.xlane.xlu0 %2675
    %2677 = vadd.xlane.f32.xlu0 %v2637
    %v2678 = vpop.xlane.xlu0 %2677
    %2679 = vadd.xlane.f32.xlu0 %v2638
    %v2680 = vpop.xlane.xlu0 %2679
    %2681 = vadd.xlane.f32.xlu0 %v2639
    %v2682 = vpop.xlane.xlu0 %2681
    %2683 = vadd.xlane.f32.xlu0 %v2640
    %v2684 = vpop.xlane.xlu0 %2683
    %2685 = vadd.xlane.f32.xlu0 %v2641
    %v2686 = vpop.xlane.xlu0 %2685
    %2687 = vadd.xlane.f32.xlu0 %v2642
    %v2688 = vpop.xlane.xlu0 %2687
    %2689 = vadd.xlane.f32.xlu0 %v2643
    %v2690 = vpop.xlane.xlu0 %2689
    %2691 = vadd.xlane.f32.xlu0 %v2644
    %v2692 = vpop.xlane.xlu0 %2691
    %2693 = vadd.xlane.f32.xlu0 %v2645
    %v2694 = vpop.xlane.xlu0 %2693
    %2695 = vadd.xlane.f32.xlu0 %v2646
    %v2696 = vpop.xlane.xlu0 %2695
    %2697 = vadd.xlane.f32.xlu0 %v2647
    %v2698 = vpop.xlane.xlu0 %2697
    %2699 = vadd.xlane.f32.xlu0 %v2648
    %v2700 = vpop.xlane.xlu0 %2699
    %2701 = vadd.xlane.f32.xlu0 %v2649
    %v2702 = vpop.xlane.xlu0 %2701
    %2703 = vadd.xlane.f32.xlu0 %v2650
    %v2704 = vpop.xlane.xlu0 %2703
    %2705 = vadd.xlane.f32.xlu0 %v2651
    %v2706 = vpop.xlane.xlu0 %2705
    %2707 = vadd.xlane.f32.xlu0 %v2652
    %v2708 = vpop.xlane.xlu0 %2707
    %2709 = vadd.xlane.f32.xlu0 %v2653
    %v2710 = vpop.xlane.xlu0 %2709
    %2711 = vadd.xlane.f32.xlu0 %v2654
    %v2712 = vpop.xlane.xlu0 %2711
    %2713 = vadd.xlane.f32.xlu0 %v2655
    %v2714 = vpop.xlane.xlu0 %2713
    %2715 = vadd.xlane.f32.xlu0 %v2656
    %v2716 = vpop.xlane.xlu0 %2715
    %2717 = vadd.xlane.f32.xlu0 %v2657
    %v2718 = vpop.xlane.xlu0 %2717
    %2719 = vadd.xlane.f32.xlu0 %v2658
    %v2720 = vpop.xlane.xlu0 %2719
    %2721 = vadd.xlane.f32.xlu0 %v2659
    %v2722 = vpop.xlane.xlu0 %2721
    %2723 = vadd.xlane.f32.xlu0 %v2660
    %v2724 = vpop.xlane.xlu0 %2723
    %v2725 = vrcp.pop %v2662
    %v2726 = vrcp.pop %v2664
    %v2727 = vrcp.pop %v2666
    %v2728 = vrcp.pop %v2668
    %v2729 = vrcp.pop %v2670
    %v2730 = vrcp.pop %v2672
    %v2731 = vrcp.pop %v2674
    %v2732 = vrcp.pop %v2676
    %v2733 = vrcp.pop %v2678
    %v2734 = vrcp.pop %v2680
    %v2735 = vrcp.pop %v2682
    %v2736 = vrcp.pop %v2684
    %v2737 = vrcp.pop %v2686
    %v2738 = vrcp.pop %v2688
    %v2739 = vrcp.pop %v2690
    %v2740 = vrcp.pop %v2692
    %v2741 = vrcp.pop %v2694
    %v2742 = vrcp.pop %v2696
    %v2743 = vrcp.pop %v2698
    %v2744 = vrcp.pop %v2700
    %v2745 = vrcp.pop %v2702
    %v2746 = vrcp.pop %v2704
    %v2747 = vrcp.pop %v2706
    %v2748 = vrcp.pop %v2708
    %v2749 = vrcp.pop %v2710
    %v2750 = vrcp.pop %v2712
    %v2751 = vrcp.pop %v2714
    %v2752 = vrcp.pop %v2716
    %v2753 = vrcp.pop %v2718
    %v2754 = vrcp.pop %v2720
    %v2755 = vrcp.pop %v2722
    %v2756 = vrcp.pop %v2724
    %v2757 = vpack.c.bf16 %v2481, %v2480
    %v2758 = vpack.c.bf16 %v2545, %v2544
    %v2759 = vpack.c.bf16 %v2483, %v2482
    %v2760 = vpack.c.bf16 %v2547, %v2546
    %v2761 = vpack.c.bf16 %v2485, %v2484
    %v2762 = vpack.c.bf16 %v2549, %v2548
    %v2763 = vpack.c.bf16 %v2487, %v2486
    %v2764 = vpack.c.bf16 %v2551, %v2550
    %v2765 = vpack.c.bf16 %v2489, %v2488
    %v2766 = vpack.c.bf16 %v2553, %v2552
    %v2767 = vpack.c.bf16 %v2491, %v2490
    %v2768 = vpack.c.bf16 %v2555, %v2554
    %v2769 = vpack.c.bf16 %v2493, %v2492
    %v2770 = vpack.c.bf16 %v2557, %v2556
    %v2771 = vpack.c.bf16 %v2495, %v2494
    %v2772 = vpack.c.bf16 %v2559, %v2558
    %v2773 = vpack.c.bf16 %v2042, %v2040
    %v2774 = vpack.c.bf16 %v2047, %v2045
    %v2775 = vpack.c.bf16 %v2052, %v2050
    %v2776 = vpack.c.bf16 %v2057, %v2055
    %v2777 = vpack.c.bf16 %v2062, %v2060
    %v2778 = vpack.c.bf16 %v2067, %v2065
    %v2779 = vpack.c.bf16 %v2072, %v2070
    %v2780 = vpack.c.bf16 %v2077, %v2075
    %v2781 = vpack.c.bf16 %v2082, %v2080
    %v2782 = vpack.c.bf16 %v2087, %v2085
    %v2783 = vpack.c.bf16 %v2092, %v2090
    %v2784 = vpack.c.bf16 %v2097, %v2095
    %v2785 = vpack.c.bf16 %v2102, %v2100
    %v2786 = vpack.c.bf16 %v2107, %v2105
    %v2787 = vpack.c.bf16 %v2112, %v2110
    %v2788 = vpack.c.bf16 %v2117, %v2115
    %2789 = vmatpush.bf16.msra.mxu0 %v2780
    %2790 = vmatpush.bf16.msra.mxu0 %v2779
    %2791 = vmatpush.bf16.msra.mxu0 %v2778
    %2792 = vmatpush.bf16.msra.mxu0 %v2777
    %2793 = vmatpush.bf16.msra.mxu0 %v2776
    %2794 = vmatpush.bf16.msra.mxu0 %v2775
    %2795 = vmatpush.bf16.msra.mxu0 %v2774
    %2796 = vmatpush.bf16.msra.mxu0 %v2773
    %2797 = vmatmul.bf16.gmra.mxu0 %v2757
    %v2798 = vpop.f32.mrf.mxu0
    %v2799 = vadd.f32 0.0, %v2798
    %v2800 = vpop.f32.mrf.mxu0
    %v2801 = vadd.f32 0.0, %v2800
    %2802 = vmatmul.bf16.gmra.mxu0 %v2759
    %v2803 = vpop.f32.mrf.mxu0
    %v2804 = vadd.f32 0.0, %v2803
    %v2805 = vpop.f32.mrf.mxu0
    %v2806 = vadd.f32 0.0, %v2805
    %2807 = vmatmul.bf16.gmra.mxu0 %v2761
    %v2808 = vpop.f32.mrf.mxu0
    %v2809 = vadd.f32 0.0, %v2808
    %v2810 = vpop.f32.mrf.mxu0
    %v2811 = vadd.f32 0.0, %v2810
    %2812 = vmatmul.bf16.gmra.mxu0 %v2763
    %v2813 = vpop.f32.mrf.mxu0
    %v2814 = vadd.f32 0.0, %v2813
    %v2815 = vpop.f32.mrf.mxu0
    %v2816 = vadd.f32 0.0, %v2815
    %2817 = vmatmul.bf16.gmra.mxu0 %v2765
    %v2818 = vpop.f32.mrf.mxu0
    %v2819 = vadd.f32 0.0, %v2818
    %v2820 = vpop.f32.mrf.mxu0
    %v2821 = vadd.f32 0.0, %v2820
    %2822 = vmatmul.bf16.gmra.mxu0 %v2767
    %v2823 = vpop.f32.mrf.mxu0
    %v2824 = vadd.f32 0.0, %v2823
    %v2825 = vpop.f32.mrf.mxu0
    %v2826 = vadd.f32 0.0, %v2825
    %2827 = vmatmul.bf16.gmra.mxu0 %v2769
    %v2828 = vpop.f32.mrf.mxu0
    %v2829 = vadd.f32 0.0, %v2828
    %v2830 = vpop.f32.mrf.mxu0
    %v2831 = vadd.f32 0.0, %v2830
    %2832 = vmatmul.bf16.gmra.mxu0 %v2771
    %v2833 = vpop.f32.mrf.mxu0
    %v2834 = vadd.f32 0.0, %v2833
    %v2835 = vpop.f32.mrf.mxu0
    %v2836 = vadd.f32 0.0, %v2835
    %2837 = vdwg.mxu0
    %2838 = vmatpush.bf16.msra.mxu0 %v2788
    %2839 = vmatpush.bf16.msra.mxu0 %v2787
    %2840 = vmatpush.bf16.msra.mxu0 %v2786
    %2841 = vmatpush.bf16.msra.mxu0 %v2785
    %2842 = vmatpush.bf16.msra.mxu0 %v2784
    %2843 = vmatpush.bf16.msra.mxu0 %v2783
    %2844 = vmatpush.bf16.msra.mxu0 %v2782
    %2845 = vmatpush.bf16.msra.mxu0 %v2781
    %2846 = vmatmul.bf16.gmra.mxu0 %v2758
    %v2847 = vpop.f32.mrf.mxu0
    %v2848 = vadd.f32 %v2799, %v2847
    %v2849 = vpop.f32.mrf.mxu0
    %v2850 = vadd.f32 %v2801, %v2849
    %2851 = vmatmul.bf16.gmra.mxu0 %v2760
    %v2852 = vpop.f32.mrf.mxu0
    %v2853 = vadd.f32 %v2804, %v2852
    %v2854 = vpop.f32.mrf.mxu0
    %v2855 = vadd.f32 %v2806, %v2854
    %2856 = vmatmul.bf16.gmra.mxu0 %v2762
    %v2857 = vpop.f32.mrf.mxu0
    %v2858 = vadd.f32 %v2809, %v2857
    %v2859 = vpop.f32.mrf.mxu0
    %v2860 = vadd.f32 %v2811, %v2859
    %2861 = vmatmul.bf16.gmra.mxu0 %v2764
    %v2862 = vpop.f32.mrf.mxu0
    %v2863 = vadd.f32 %v2814, %v2862
    %v2864 = vpop.f32.mrf.mxu0
    %v2865 = vadd.f32 %v2816, %v2864
    %2866 = vmatmul.bf16.gmra.mxu0 %v2766
    %v2867 = vpop.f32.mrf.mxu0
    %v2868 = vadd.f32 %v2819, %v2867
    %v2869 = vpop.f32.mrf.mxu0
    %v2870 = vadd.f32 %v2821, %v2869
    %2871 = vmatmul.bf16.gmra.mxu0 %v2768
    %v2872 = vpop.f32.mrf.mxu0
    %v2873 = vadd.f32 %v2824, %v2872
    %v2874 = vpop.f32.mrf.mxu0
    %v2875 = vadd.f32 %v2826, %v2874
    %2876 = vmatmul.bf16.gmra.mxu0 %v2770
    %v2877 = vpop.f32.mrf.mxu0
    %v2878 = vadd.f32 %v2829, %v2877
    %v2879 = vpop.f32.mrf.mxu0
    %v2880 = vadd.f32 %v2831, %v2879
    %2881 = vmatmul.bf16.gmra.mxu0 %v2772
    %v2882 = vpop.f32.mrf.mxu0
    %v2883 = vadd.f32 %v2834, %v2882
    %v2884 = vpop.f32.mrf.mxu0
    %v2885 = vadd.f32 %v2836, %v2884
    %2886 = vdwg.mxu0
    %v2887 = vpack.c.bf16 %v2274, %v2272
    %v2888 = vpack.c.bf16 %v2278, %v2276
    %v2889 = vpack.c.bf16 %v2282, %v2280
    %v2890 = vpack.c.bf16 %v2286, %v2284
    %v2891 = vpack.c.bf16 %v2290, %v2288
    %v2892 = vpack.c.bf16 %v2294, %v2292
    %v2893 = vpack.c.bf16 %v2298, %v2296
    %v2894 = vpack.c.bf16 %v2302, %v2300
    %v2895 = vpack.c.bf16 %v2306, %v2304
    %v2896 = vpack.c.bf16 %v2310, %v2308
    %v2897 = vpack.c.bf16 %v2314, %v2312
    %v2898 = vpack.c.bf16 %v2318, %v2316
    %v2899 = vpack.c.bf16 %v2322, %v2320
    %v2900 = vpack.c.bf16 %v2326, %v2324
    %v2901 = vpack.c.bf16 %v2330, %v2328
    %v2902 = vpack.c.bf16 %v2334, %v2332
    %v2903 = vpack.c.bf16 %v2850, %v2848
    %v2904 = vpack.c.bf16 %v2855, %v2853
    %v2905 = vpack.c.bf16 %v2860, %v2858
    %v2906 = vpack.c.bf16 %v2865, %v2863
    %v2907 = vpack.c.bf16 %v2870, %v2868
    %v2908 = vpack.c.bf16 %v2875, %v2873
    %v2909 = vpack.c.bf16 %v2880, %v2878
    %v2910 = vpack.c.bf16 %v2885, %v2883
    %2911 = vmatpush.bf16.msra.mxu0 %v2910
    %2912 = vmatpush.bf16.msra.mxu0 %v2909
    %2913 = vmatpush.bf16.msra.mxu0 %v2908
    %2914 = vmatpush.bf16.msra.mxu0 %v2907
    %2915 = vmatpush.bf16.msra.mxu0 %v2906
    %2916 = vmatpush.bf16.msra.mxu0 %v2905
    %2917 = vmatpush.bf16.msra.mxu0 %v2904
    %2918 = vmatpush.bf16.msra.mxu0 %v2903
    %2919 = vmatmul.bf16.gmra.mxu0 %v2887
    %v2920 = vpop.f32.mrf.mxu0
    %v2921 = vadd.f32 0.0, %v2920
    %v2922 = vpop.f32.mrf.mxu0
    %v2923 = vadd.f32 0.0, %v2922
    %2924 = vmatmul.bf16.gmra.mxu0 %v2888
    %v2925 = vpop.f32.mrf.mxu0
    %v2926 = vadd.f32 0.0, %v2925
    %v2927 = vpop.f32.mrf.mxu0
    %v2928 = vadd.f32 0.0, %v2927
    %2929 = vmatmul.bf16.gmra.mxu0 %v2889
    %v2930 = vpop.f32.mrf.mxu0
    %v2931 = vadd.f32 0.0, %v2930
    %v2932 = vpop.f32.mrf.mxu0
    %v2933 = vadd.f32 0.0, %v2932
    %2934 = vmatmul.bf16.gmra.mxu0 %v2890
    %v2935 = vpop.f32.mrf.mxu0
    %v2936 = vadd.f32 0.0, %v2935
    %v2937 = vpop.f32.mrf.mxu0
    %v2938 = vadd.f32 0.0, %v2937
    %2939 = vmatmul.bf16.gmra.mxu0 %v2891
    %v2940 = vpop.f32.mrf.mxu0
    %v2941 = vadd.f32 0.0, %v2940
    %v2942 = vpop.f32.mrf.mxu0
    %v2943 = vadd.f32 0.0, %v2942
    %2944 = vmatmul.bf16.gmra.mxu0 %v2892
    %v2945 = vpop.f32.mrf.mxu0
    %v2946 = vadd.f32 0.0, %v2945
    %v2947 = vpop.f32.mrf.mxu0
    %v2948 = vadd.f32 0.0, %v2947
    %2949 = vmatmul.bf16.gmra.mxu0 %v2893
    %v2950 = vpop.f32.mrf.mxu0
    %v2951 = vadd.f32 0.0, %v2950
    %v2952 = vpop.f32.mrf.mxu0
    %v2953 = vadd.f32 0.0, %v2952
    %2954 = vmatmul.bf16.gmra.mxu0 %v2894
    %v2955 = vpop.f32.mrf.mxu0
    %v2956 = vadd.f32 0.0, %v2955
    %v2957 = vpop.f32.mrf.mxu0
    %v2958 = vadd.f32 0.0, %v2957
    %2959 = vmatmul.bf16.gmra.mxu0 %v2895
    %v2960 = vpop.f32.mrf.mxu0
    %v2961 = vadd.f32 0.0, %v2960
    %v2962 = vpop.f32.mrf.mxu0
    %v2963 = vadd.f32 0.0, %v2962
    %2964 = vmatmul.bf16.gmra.mxu0 %v2896
    %v2965 = vpop.f32.mrf.mxu0
    %v2966 = vadd.f32 0.0, %v2965
    %v2967 = vpop.f32.mrf.mxu0
    %v2968 = vadd.f32 0.0, %v2967
    %2969 = vmatmul.bf16.gmra.mxu0 %v2897
    %v2970 = vpop.f32.mrf.mxu0
    %v2971 = vadd.f32 0.0, %v2970
    %v2972 = vpop.f32.mrf.mxu0
    %v2973 = vadd.f32 0.0, %v2972
    %2974 = vmatmul.bf16.gmra.mxu0 %v2898
    %v2975 = vpop.f32.mrf.mxu0
    %v2976 = vadd.f32 0.0, %v2975
    %v2977 = vpop.f32.mrf.mxu0
    %v2978 = vadd.f32 0.0, %v2977
    %2979 = vmatmul.bf16.gmra.mxu0 %v2899
    %v2980 = vpop.f32.mrf.mxu0
    %v2981 = vadd.f32 0.0, %v2980
    %v2982 = vpop.f32.mrf.mxu0
    %v2983 = vadd.f32 0.0, %v2982
    %2984 = vmatmul.bf16.gmra.mxu0 %v2900
    %v2985 = vpop.f32.mrf.mxu0
    %v2986 = vadd.f32 0.0, %v2985
    %v2987 = vpop.f32.mrf.mxu0
    %v2988 = vadd.f32 0.0, %v2987
    %2989 = vmatmul.bf16.gmra.mxu0 %v2901
    %v2990 = vpop.f32.mrf.mxu0
    %v2991 = vadd.f32 0.0, %v2990
    %v2992 = vpop.f32.mrf.mxu0
    %v2993 = vadd.f32 0.0, %v2992
    %2994 = vmatmul.bf16.gmra.mxu0 %v2902
    %v2995 = vpop.f32.mrf.mxu0
    %v2996 = vadd.f32 0.0, %v2995
    %v2997 = vpop.f32.mrf.mxu0
    %v2998 = vadd.f32 0.0, %v2997
    %2999 = vdwg.mxu0
    %v3000 = vmul.f32 %v2921, %v2725
    %v3001 = vmul.f32 %v2923, %v2726
    %v3002 = vmul.f32 %v2926, %v2727
    %v3003 = vmul.f32 %v2928, %v2728
    %v3004 = vmul.f32 %v2931, %v2729
    %v3005 = vmul.f32 %v2933, %v2730
    %v3006 = vmul.f32 %v2936, %v2731
    %v3007 = vmul.f32 %v2938, %v2732
    %v3008 = vmul.f32 %v2941, %v2733
    %v3009 = vmul.f32 %v2943, %v2734
    %v3010 = vmul.f32 %v2946, %v2735
    %v3011 = vmul.f32 %v2948, %v2736
    %v3012 = vmul.f32 %v2951, %v2737
    %v3013 = vmul.f32 %v2953, %v2738
    %v3014 = vmul.f32 %v2956, %v2739
    %v3015 = vmul.f32 %v2958, %v2740
    %v3016 = vmul.f32 %v2961, %v2741
    %v3017 = vmul.f32 %v2963, %v2742
    %v3018 = vmul.f32 %v2966, %v2743
    %v3019 = vmul.f32 %v2968, %v2744
    %v3020 = vmul.f32 %v2971, %v2745
    %v3021 = vmul.f32 %v2973, %v2746
    %v3022 = vmul.f32 %v2976, %v2747
    %v3023 = vmul.f32 %v2978, %v2748
    %v3024 = vmul.f32 %v2981, %v2749
    %v3025 = vmul.f32 %v2983, %v2750
    %v3026 = vmul.f32 %v2986, %v2751
    %v3027 = vmul.f32 %v2988, %v2752
    %v3028 = vmul.f32 %v2991, %v2753
    %v3029 = vmul.f32 %v2993, %v2754
    %v3030 = vmul.f32 %v2996, %v2755
    %v3031 = vmul.f32 %v2998, %v2756
    %v3032 = vadd.f32 %v2401, %v2403
    %v3033 = vadd.f32 %v3032, %v2405
    %v3034 = vadd.f32 %v3033, %v2407
    %v3035 = vadd.f32 %v3034, %v2409
    %v3036 = vadd.f32 %v3035, %v2411
    %v3037 = vadd.f32 %v3036, %v2413
    %v3038 = vadd.f32 %v3037, %v2415
    %v3039 = vadd.f32 %v3038, %v2417
    %v3040 = vadd.f32 %v3039, %v2419
    %v3041 = vadd.f32 %v3040, %v2421
    %v3042 = vadd.f32 %v3041, %v2423
    %v3043 = vadd.f32 %v3042, %v2425
    %v3044 = vadd.f32 %v3043, %v2427
    %v3045 = vadd.f32 %v3044, %v2429
    %v3046 = vadd.f32 %v3045, %v2431
    %v3047 = vadd.f32 %v3046, %v2433
    %v3048 = vadd.f32 %v3047, %v2435
    %v3049 = vadd.f32 %v3048, %v2437
    %v3050 = vadd.f32 %v3049, %v2439
    %v3051 = vadd.f32 %v3050, %v2441
    %v3052 = vadd.f32 %v3051, %v2443
    %v3053 = vadd.f32 %v3052, %v2445
    %v3054 = vadd.f32 %v3053, %v2447
    %v3055 = vadd.f32 %v3054, %v2449
    %v3056 = vadd.f32 %v3055, %v2451
    %v3057 = vadd.f32 %v3056, %v2453
    %v3058 = vadd.f32 %v3057, %v2455
    %v3059 = vadd.f32 %v3058, %v2457
    %v3060 = vadd.f32 %v3059, %v2459
    %v3061 = vadd.f32 %v3060, %v2461
    %v3062 = vadd.f32 %v3061, %v2463
    %v3063 = vrot.slane %v3062, 4
    %v3064 = vadd.f32 %v3062, %v3063
    %v3065 = vrot.slane %v3064, 2
    %v3066 = vadd.f32 %v3064, %v3065
    %v3067 = vrot.slane %v3066, 1
    %v3068 = vadd.f32 %v3066, %v3067
    %v3069 = vmul.f32 %v2273, %v3068
    %v3070 = vmul.f32 %v2275, %v3068
    %v3071 = vmul.f32 %v2277, %v3068
    %v3072 = vmul.f32 %v2279, %v3068
    %v3073 = vmul.f32 %v2281, %v3068
    %v3074 = vmul.f32 %v2283, %v3068
    %v3075 = vmul.f32 %v2285, %v3068
    %v3076 = vmul.f32 %v2287, %v3068
    %v3077 = vmul.f32 %v2289, %v3068
    %v3078 = vmul.f32 %v2291, %v3068
    %v3079 = vmul.f32 %v2293, %v3068
    %v3080 = vmul.f32 %v2295, %v3068
    %v3081 = vmul.f32 %v2297, %v3068
    %v3082 = vmul.f32 %v2299, %v3068
    %v3083 = vmul.f32 %v2301, %v3068
    %v3084 = vmul.f32 %v2303, %v3068
    %v3085 = vmul.f32 %v2305, %v3068
    %v3086 = vmul.f32 %v2307, %v3068
    %v3087 = vmul.f32 %v2309, %v3068
    %v3088 = vmul.f32 %v2311, %v3068
    %v3089 = vmul.f32 %v2313, %v3068
    %v3090 = vmul.f32 %v2315, %v3068
    %v3091 = vmul.f32 %v2317, %v3068
    %v3092 = vmul.f32 %v2319, %v3068
    %v3093 = vmul.f32 %v2321, %v3068
    %v3094 = vmul.f32 %v2323, %v3068
    %v3095 = vmul.f32 %v2325, %v3068
    %v3096 = vmul.f32 %v2327, %v3068
    %v3097 = vmul.f32 %v2329, %v3068
    %v3098 = vmul.f32 %v2331, %v3068
    %v3099 = vmul.f32 %v2333, %v3068
    %v3100 = vmul.f32 %v2335, %v3068
    %3101 = vadd.xlane.f32.xlu0 %v3069
    %v3102 = vpop.xlane.xlu0 %3101
    %3103 = vadd.xlane.f32.xlu0 %v3070
    %v3104 = vpop.xlane.xlu0 %3103
    %3105 = vadd.xlane.f32.xlu0 %v3071
    %v3106 = vpop.xlane.xlu0 %3105
    %3107 = vadd.xlane.f32.xlu0 %v3072
    %v3108 = vpop.xlane.xlu0 %3107
    %3109 = vadd.xlane.f32.xlu0 %v3073
    %v3110 = vpop.xlane.xlu0 %3109
    %3111 = vadd.xlane.f32.xlu0 %v3074
    %v3112 = vpop.xlane.xlu0 %3111
    %3113 = vadd.xlane.f32.xlu0 %v3075
    %v3114 = vpop.xlane.xlu0 %3113
    %3115 = vadd.xlane.f32.xlu0 %v3076
    %v3116 = vpop.xlane.xlu0 %3115
    %3117 = vadd.xlane.f32.xlu0 %v3077
    %v3118 = vpop.xlane.xlu0 %3117
    %3119 = vadd.xlane.f32.xlu0 %v3078
    %v3120 = vpop.xlane.xlu0 %3119
    %3121 = vadd.xlane.f32.xlu0 %v3079
    %v3122 = vpop.xlane.xlu0 %3121
    %3123 = vadd.xlane.f32.xlu0 %v3080
    %v3124 = vpop.xlane.xlu0 %3123
    %3125 = vadd.xlane.f32.xlu0 %v3081
    %v3126 = vpop.xlane.xlu0 %3125
    %3127 = vadd.xlane.f32.xlu0 %v3082
    %v3128 = vpop.xlane.xlu0 %3127
    %3129 = vadd.xlane.f32.xlu0 %v3083
    %v3130 = vpop.xlane.xlu0 %3129
    %3131 = vadd.xlane.f32.xlu0 %v3084
    %v3132 = vpop.xlane.xlu0 %3131
    %3133 = vadd.xlane.f32.xlu0 %v3085
    %v3134 = vpop.xlane.xlu0 %3133
    %3135 = vadd.xlane.f32.xlu0 %v3086
    %v3136 = vpop.xlane.xlu0 %3135
    %3137 = vadd.xlane.f32.xlu0 %v3087
    %v3138 = vpop.xlane.xlu0 %3137
    %3139 = vadd.xlane.f32.xlu0 %v3088
    %v3140 = vpop.xlane.xlu0 %3139
    %3141 = vadd.xlane.f32.xlu0 %v3089
    %v3142 = vpop.xlane.xlu0 %3141
    %3143 = vadd.xlane.f32.xlu0 %v3090
    %v3144 = vpop.xlane.xlu0 %3143
    %3145 = vadd.xlane.f32.xlu0 %v3091
    %v3146 = vpop.xlane.xlu0 %3145
    %3147 = vadd.xlane.f32.xlu0 %v3092
    %v3148 = vpop.xlane.xlu0 %3147
    %3149 = vadd.xlane.f32.xlu0 %v3093
    %v3150 = vpop.xlane.xlu0 %3149
    %3151 = vadd.xlane.f32.xlu0 %v3094
    %v3152 = vpop.xlane.xlu0 %3151
    %3153 = vadd.xlane.f32.xlu0 %v3095
    %v3154 = vpop.xlane.xlu0 %3153
    %3155 = vadd.xlane.f32.xlu0 %v3096
    %v3156 = vpop.xlane.xlu0 %3155
    %3157 = vadd.xlane.f32.xlu0 %v3097
    %v3158 = vpop.xlane.xlu0 %3157
    %3159 = vadd.xlane.f32.xlu0 %v3098
    %v3160 = vpop.xlane.xlu0 %3159
    %3161 = vadd.xlane.f32.xlu0 %v3099
    %v3162 = vpop.xlane.xlu0 %3161
    %3163 = vadd.xlane.f32.xlu0 %v3100
    %v3164 = vpop.xlane.xlu0 %3163
    %v3165 = vrcp.pop %v3102
    %v3166 = vrcp.pop %v3104
    %v3167 = vrcp.pop %v3106
    %v3168 = vrcp.pop %v3108
    %v3169 = vrcp.pop %v3110
    %v3170 = vrcp.pop %v3112
    %v3171 = vrcp.pop %v3114
    %v3172 = vrcp.pop %v3116
    %v3173 = vrcp.pop %v3118
    %v3174 = vrcp.pop %v3120
    %v3175 = vrcp.pop %v3122
    %v3176 = vrcp.pop %v3124
    %v3177 = vrcp.pop %v3126
    %v3178 = vrcp.pop %v3128
    %v3179 = vrcp.pop %v3130
    %v3180 = vrcp.pop %v3132
    %v3181 = vrcp.pop %v3134
    %v3182 = vrcp.pop %v3136
    %v3183 = vrcp.pop %v3138
    %v3184 = vrcp.pop %v3140
    %v3185 = vrcp.pop %v3142
    %v3186 = vrcp.pop %v3144
    %v3187 = vrcp.pop %v3146
    %v3188 = vrcp.pop %v3148
    %v3189 = vrcp.pop %v3150
    %v3190 = vrcp.pop %v3152
    %v3191 = vrcp.pop %v3154
    %v3192 = vrcp.pop %v3156
    %v3193 = vrcp.pop %v3158
    %v3194 = vrcp.pop %v3160
    %v3195 = vrcp.pop %v3162
    %v3196 = vrcp.pop %v3164
    %v3197 = vpack.c.bf16 %v2513, %v2512
    %v3198 = vpack.c.bf16 %v2577, %v2576
    %v3199 = vpack.c.bf16 %v2515, %v2514
    %v3200 = vpack.c.bf16 %v2579, %v2578
    %v3201 = vpack.c.bf16 %v2517, %v2516
    %v3202 = vpack.c.bf16 %v2581, %v2580
    %v3203 = vpack.c.bf16 %v2519, %v2518
    %v3204 = vpack.c.bf16 %v2583, %v2582
    %v3205 = vpack.c.bf16 %v2521, %v2520
    %v3206 = vpack.c.bf16 %v2585, %v2584
    %v3207 = vpack.c.bf16 %v2523, %v2522
    %v3208 = vpack.c.bf16 %v2587, %v2586
    %v3209 = vpack.c.bf16 %v2525, %v2524
    %v3210 = vpack.c.bf16 %v2589, %v2588
    %v3211 = vpack.c.bf16 %v2527, %v2526
    %v3212 = vpack.c.bf16 %v2591, %v2590
    %v3213 = vpack.c.bf16 %v2131, %v2129
    %v3214 = vpack.c.bf16 %v2136, %v2134
    %v3215 = vpack.c.bf16 %v2141, %v2139
    %v3216 = vpack.c.bf16 %v2146, %v2144
    %v3217 = vpack.c.bf16 %v2151, %v2149
    %v3218 = vpack.c.bf16 %v2156, %v2154
    %v3219 = vpack.c.bf16 %v2161, %v2159
    %v3220 = vpack.c.bf16 %v2166, %v2164
    %v3221 = vpack.c.bf16 %v2171, %v2169
    %v3222 = vpack.c.bf16 %v2176, %v2174
    %v3223 = vpack.c.bf16 %v2181, %v2179
    %v3224 = vpack.c.bf16 %v2186, %v2184
    %v3225 = vpack.c.bf16 %v2191, %v2189
    %v3226 = vpack.c.bf16 %v2196, %v2194
    %v3227 = vpack.c.bf16 %v2201, %v2199
    %v3228 = vpack.c.bf16 %v2206, %v2204
    %3229 = vmatpush.bf16.msra.mxu0 %v3220
    %3230 = vmatpush.bf16.msra.mxu0 %v3219
    %3231 = vmatpush.bf16.msra.mxu0 %v3218
    %3232 = vmatpush.bf16.msra.mxu0 %v3217
    %3233 = vmatpush.bf16.msra.mxu0 %v3216
    %3234 = vmatpush.bf16.msra.mxu0 %v3215
    %3235 = vmatpush.bf16.msra.mxu0 %v3214
    %3236 = vmatpush.bf16.msra.mxu0 %v3213
    %3237 = vmatmul.bf16.gmra.mxu0 %v3197
    %v3238 = vpop.f32.mrf.mxu0
    %v3239 = vadd.f32 0.0, %v3238
    %v3240 = vpop.f32.mrf.mxu0
    %v3241 = vadd.f32 0.0, %v3240
    %3242 = vmatmul.bf16.gmra.mxu0 %v3199
    %v3243 = vpop.f32.mrf.mxu0
    %v3244 = vadd.f32 0.0, %v3243
    %v3245 = vpop.f32.mrf.mxu0
    %v3246 = vadd.f32 0.0, %v3245
    %3247 = vmatmul.bf16.gmra.mxu0 %v3201
    %v3248 = vpop.f32.mrf.mxu0
    %v3249 = vadd.f32 0.0, %v3248
    %v3250 = vpop.f32.mrf.mxu0
    %v3251 = vadd.f32 0.0, %v3250
    %3252 = vmatmul.bf16.gmra.mxu0 %v3203
    %v3253 = vpop.f32.mrf.mxu0
    %v3254 = vadd.f32 0.0, %v3253
    %v3255 = vpop.f32.mrf.mxu0
    %v3256 = vadd.f32 0.0, %v3255
    %3257 = vmatmul.bf16.gmra.mxu0 %v3205
    %v3258 = vpop.f32.mrf.mxu0
    %v3259 = vadd.f32 0.0, %v3258
    %v3260 = vpop.f32.mrf.mxu0
    %v3261 = vadd.f32 0.0, %v3260
    %3262 = vmatmul.bf16.gmra.mxu0 %v3207
    %v3263 = vpop.f32.mrf.mxu0
    %v3264 = vadd.f32 0.0, %v3263
    %v3265 = vpop.f32.mrf.mxu0
    %v3266 = vadd.f32 0.0, %v3265
    %3267 = vmatmul.bf16.gmra.mxu0 %v3209
    %v3268 = vpop.f32.mrf.mxu0
    %v3269 = vadd.f32 0.0, %v3268
    %v3270 = vpop.f32.mrf.mxu0
    %v3271 = vadd.f32 0.0, %v3270
    %3272 = vmatmul.bf16.gmra.mxu0 %v3211
    %v3273 = vpop.f32.mrf.mxu0
    %v3274 = vadd.f32 0.0, %v3273
    %v3275 = vpop.f32.mrf.mxu0
    %v3276 = vadd.f32 0.0, %v3275
    %3277 = vdwg.mxu0
    %3278 = vmatpush.bf16.msra.mxu0 %v3228
    %3279 = vmatpush.bf16.msra.mxu0 %v3227
    %3280 = vmatpush.bf16.msra.mxu0 %v3226
    %3281 = vmatpush.bf16.msra.mxu0 %v3225
    %3282 = vmatpush.bf16.msra.mxu0 %v3224
    %3283 = vmatpush.bf16.msra.mxu0 %v3223
    %3284 = vmatpush.bf16.msra.mxu0 %v3222
    %3285 = vmatpush.bf16.msra.mxu0 %v3221
    %3286 = vmatmul.bf16.gmra.mxu0 %v3198
    %v3287 = vpop.f32.mrf.mxu0
    %v3288 = vadd.f32 %v3239, %v3287
    %v3289 = vpop.f32.mrf.mxu0
    %v3290 = vadd.f32 %v3241, %v3289
    %3291 = vmatmul.bf16.gmra.mxu0 %v3200
    %v3292 = vpop.f32.mrf.mxu0
    %v3293 = vadd.f32 %v3244, %v3292
    %v3294 = vpop.f32.mrf.mxu0
    %v3295 = vadd.f32 %v3246, %v3294
    %3296 = vmatmul.bf16.gmra.mxu0 %v3202
    %v3297 = vpop.f32.mrf.mxu0
    %v3298 = vadd.f32 %v3249, %v3297
    %v3299 = vpop.f32.mrf.mxu0
    %v3300 = vadd.f32 %v3251, %v3299
    %3301 = vmatmul.bf16.gmra.mxu0 %v3204
    %v3302 = vpop.f32.mrf.mxu0
    %v3303 = vadd.f32 %v3254, %v3302
    %v3304 = vpop.f32.mrf.mxu0
    %v3305 = vadd.f32 %v3256, %v3304
    %3306 = vmatmul.bf16.gmra.mxu0 %v3206
    %v3307 = vpop.f32.mrf.mxu0
    %v3308 = vadd.f32 %v3259, %v3307
    %v3309 = vpop.f32.mrf.mxu0
    %v3310 = vadd.f32 %v3261, %v3309
    %3311 = vmatmul.bf16.gmra.mxu0 %v3208
    %v3312 = vpop.f32.mrf.mxu0
    %v3313 = vadd.f32 %v3264, %v3312
    %v3314 = vpop.f32.mrf.mxu0
    %v3315 = vadd.f32 %v3266, %v3314
    %3316 = vmatmul.bf16.gmra.mxu0 %v3210
    %v3317 = vpop.f32.mrf.mxu0
    %v3318 = vadd.f32 %v3269, %v3317
    %v3319 = vpop.f32.mrf.mxu0
    %v3320 = vadd.f32 %v3271, %v3319
    %3321 = vmatmul.bf16.gmra.mxu0 %v3212
    %v3322 = vpop.f32.mrf.mxu0
    %v3323 = vadd.f32 %v3274, %v3322
    %v3324 = vpop.f32.mrf.mxu0
    %v3325 = vadd.f32 %v3276, %v3324
    %3326 = vdwg.mxu0
    %v3327 = vpack.c.bf16 %v2275, %v2273
    %v3328 = vpack.c.bf16 %v2279, %v2277
    %v3329 = vpack.c.bf16 %v2283, %v2281
    %v3330 = vpack.c.bf16 %v2287, %v2285
    %v3331 = vpack.c.bf16 %v2291, %v2289
    %v3332 = vpack.c.bf16 %v2295, %v2293
    %v3333 = vpack.c.bf16 %v2299, %v2297
    %v3334 = vpack.c.bf16 %v2303, %v2301
    %v3335 = vpack.c.bf16 %v2307, %v2305
    %v3336 = vpack.c.bf16 %v2311, %v2309
    %v3337 = vpack.c.bf16 %v2315, %v2313
    %v3338 = vpack.c.bf16 %v2319, %v2317
    %v3339 = vpack.c.bf16 %v2323, %v2321
    %v3340 = vpack.c.bf16 %v2327, %v2325
    %v3341 = vpack.c.bf16 %v2331, %v2329
    %v3342 = vpack.c.bf16 %v2335, %v2333
    %v3343 = vpack.c.bf16 %v3290, %v3288
    %v3344 = vpack.c.bf16 %v3295, %v3293
    %v3345 = vpack.c.bf16 %v3300, %v3298
    %v3346 = vpack.c.bf16 %v3305, %v3303
    %v3347 = vpack.c.bf16 %v3310, %v3308
    %v3348 = vpack.c.bf16 %v3315, %v3313
    %v3349 = vpack.c.bf16 %v3320, %v3318
    %v3350 = vpack.c.bf16 %v3325, %v3323
    %3351 = vmatpush.bf16.msra.mxu0 %v3350
    %3352 = vmatpush.bf16.msra.mxu0 %v3349
    %3353 = vmatpush.bf16.msra.mxu0 %v3348
    %3354 = vmatpush.bf16.msra.mxu0 %v3347
    %3355 = vmatpush.bf16.msra.mxu0 %v3346
    %3356 = vmatpush.bf16.msra.mxu0 %v3345
    %3357 = vmatpush.bf16.msra.mxu0 %v3344
    %3358 = vmatpush.bf16.msra.mxu0 %v3343
    %3359 = vmatmul.bf16.gmra.mxu0 %v3327
    %v3360 = vpop.f32.mrf.mxu0
    %v3361 = vadd.f32 0.0, %v3360
    %v3362 = vpop.f32.mrf.mxu0
    %v3363 = vadd.f32 0.0, %v3362
    %3364 = vmatmul.bf16.gmra.mxu0 %v3328
    %v3365 = vpop.f32.mrf.mxu0
    %v3366 = vadd.f32 0.0, %v3365
    %v3367 = vpop.f32.mrf.mxu0
    %v3368 = vadd.f32 0.0, %v3367
    %3369 = vmatmul.bf16.gmra.mxu0 %v3329
    %v3370 = vpop.f32.mrf.mxu0
    %v3371 = vadd.f32 0.0, %v3370
    %v3372 = vpop.f32.mrf.mxu0
    %v3373 = vadd.f32 0.0, %v3372
    %3374 = vmatmul.bf16.gmra.mxu0 %v3330
    %v3375 = vpop.f32.mrf.mxu0
    %v3376 = vadd.f32 0.0, %v3375
    %v3377 = vpop.f32.mrf.mxu0
    %v3378 = vadd.f32 0.0, %v3377
    %3379 = vmatmul.bf16.gmra.mxu0 %v3331
    %v3380 = vpop.f32.mrf.mxu0
    %v3381 = vadd.f32 0.0, %v3380
    %v3382 = vpop.f32.mrf.mxu0
    %v3383 = vadd.f32 0.0, %v3382
    %3384 = vmatmul.bf16.gmra.mxu0 %v3332
    %v3385 = vpop.f32.mrf.mxu0
    %v3386 = vadd.f32 0.0, %v3385
    %v3387 = vpop.f32.mrf.mxu0
    %v3388 = vadd.f32 0.0, %v3387
    %3389 = vmatmul.bf16.gmra.mxu0 %v3333
    %v3390 = vpop.f32.mrf.mxu0
    %v3391 = vadd.f32 0.0, %v3390
    %v3392 = vpop.f32.mrf.mxu0
    %v3393 = vadd.f32 0.0, %v3392
    %3394 = vmatmul.bf16.gmra.mxu0 %v3334
    %v3395 = vpop.f32.mrf.mxu0
    %v3396 = vadd.f32 0.0, %v3395
    %v3397 = vpop.f32.mrf.mxu0
    %v3398 = vadd.f32 0.0, %v3397
    %3399 = vmatmul.bf16.gmra.mxu0 %v3335
    %v3400 = vpop.f32.mrf.mxu0
    %v3401 = vadd.f32 0.0, %v3400
    %v3402 = vpop.f32.mrf.mxu0
    %v3403 = vadd.f32 0.0, %v3402
    %3404 = vmatmul.bf16.gmra.mxu0 %v3336
    %v3405 = vpop.f32.mrf.mxu0
    %v3406 = vadd.f32 0.0, %v3405
    %v3407 = vpop.f32.mrf.mxu0
    %v3408 = vadd.f32 0.0, %v3407
    %3409 = vmatmul.bf16.gmra.mxu0 %v3337
    %v3410 = vpop.f32.mrf.mxu0
    %v3411 = vadd.f32 0.0, %v3410
    %v3412 = vpop.f32.mrf.mxu0
    %v3413 = vadd.f32 0.0, %v3412
    %3414 = vmatmul.bf16.gmra.mxu0 %v3338
    %v3415 = vpop.f32.mrf.mxu0
    %v3416 = vadd.f32 0.0, %v3415
    %v3417 = vpop.f32.mrf.mxu0
    %v3418 = vadd.f32 0.0, %v3417
    %3419 = vmatmul.bf16.gmra.mxu0 %v3339
    %v3420 = vpop.f32.mrf.mxu0
    %v3421 = vadd.f32 0.0, %v3420
    %v3422 = vpop.f32.mrf.mxu0
    %v3423 = vadd.f32 0.0, %v3422
    %3424 = vmatmul.bf16.gmra.mxu0 %v3340
    %v3425 = vpop.f32.mrf.mxu0
    %v3426 = vadd.f32 0.0, %v3425
    %v3427 = vpop.f32.mrf.mxu0
    %v3428 = vadd.f32 0.0, %v3427
    %3429 = vmatmul.bf16.gmra.mxu0 %v3341
    %v3430 = vpop.f32.mrf.mxu0
    %v3431 = vadd.f32 0.0, %v3430
    %v3432 = vpop.f32.mrf.mxu0
    %v3433 = vadd.f32 0.0, %v3432
    %3434 = vmatmul.bf16.gmra.mxu0 %v3342
    %v3435 = vpop.f32.mrf.mxu0
    %v3436 = vadd.f32 0.0, %v3435
    %v3437 = vpop.f32.mrf.mxu0
    %v3438 = vadd.f32 0.0, %v3437
    %3439 = vdwg.mxu0
    %v3440 = vmul.f32 %v3361, %v3165
    %v3441 = vmul.f32 %v3363, %v3166
    %v3442 = vmul.f32 %v3366, %v3167
    %v3443 = vmul.f32 %v3368, %v3168
    %v3444 = vmul.f32 %v3371, %v3169
    %v3445 = vmul.f32 %v3373, %v3170
    %v3446 = vmul.f32 %v3376, %v3171
    %v3447 = vmul.f32 %v3378, %v3172
    %v3448 = vmul.f32 %v3381, %v3173
    %v3449 = vmul.f32 %v3383, %v3174
    %v3450 = vmul.f32 %v3386, %v3175
    %v3451 = vmul.f32 %v3388, %v3176
    %v3452 = vmul.f32 %v3391, %v3177
    %v3453 = vmul.f32 %v3393, %v3178
    %v3454 = vmul.f32 %v3396, %v3179
    %v3455 = vmul.f32 %v3398, %v3180
    %v3456 = vmul.f32 %v3401, %v3181
    %v3457 = vmul.f32 %v3403, %v3182
    %v3458 = vmul.f32 %v3406, %v3183
    %v3459 = vmul.f32 %v3408, %v3184
    %v3460 = vmul.f32 %v3411, %v3185
    %v3461 = vmul.f32 %v3413, %v3186
    %v3462 = vmul.f32 %v3416, %v3187
    %v3463 = vmul.f32 %v3418, %v3188
    %v3464 = vmul.f32 %v3421, %v3189
    %v3465 = vmul.f32 %v3423, %v3190
    %v3466 = vmul.f32 %v3426, %v3191
    %v3467 = vmul.f32 %v3428, %v3192
    %v3468 = vmul.f32 %v3431, %v3193
    %v3469 = vmul.f32 %v3433, %v3194
    %v3470 = vmul.f32 %v3436, %v3195
    %v3471 = vmul.f32 %v3438, %v3196
    %v3472 = vadd.f32 %v3000, %v3440
    %v3473 = vadd.f32 %v3001, %v3441
    %v3474 = vadd.f32 %v3002, %v3442
    %v3475 = vadd.f32 %v3003, %v3443
    %v3476 = vadd.f32 %v3004, %v3444
    %v3477 = vadd.f32 %v3005, %v3445
    %v3478 = vadd.f32 %v3006, %v3446
    %v3479 = vadd.f32 %v3007, %v3447
    %v3480 = vadd.f32 %v3008, %v3448
    %v3481 = vadd.f32 %v3009, %v3449
    %v3482 = vadd.f32 %v3010, %v3450
    %v3483 = vadd.f32 %v3011, %v3451
    %v3484 = vadd.f32 %v3012, %v3452
    %v3485 = vadd.f32 %v3013, %v3453
    %v3486 = vadd.f32 %v3014, %v3454
    %v3487 = vadd.f32 %v3015, %v3455
    %v3488 = vadd.f32 %v3016, %v3456
    %v3489 = vadd.f32 %v3017, %v3457
    %v3490 = vadd.f32 %v3018, %v3458
    %v3491 = vadd.f32 %v3019, %v3459
    %v3492 = vadd.f32 %v3020, %v3460
    %v3493 = vadd.f32 %v3021, %v3461
    %v3494 = vadd.f32 %v3022, %v3462
    %v3495 = vadd.f32 %v3023, %v3463
    %v3496 = vadd.f32 %v3024, %v3464
    %v3497 = vadd.f32 %v3025, %v3465
    %v3498 = vadd.f32 %v3026, %v3466
    %v3499 = vadd.f32 %v3027, %v3467
    %v3500 = vadd.f32 %v3028, %v3468
    %v3501 = vadd.f32 %v3029, %v3469
    %v3502 = vadd.f32 %v3030, %v3470
    %v3503 = vadd.f32 %v3031, %v3471
    %v3504 = vld [vmem:[%s9] sm:$0x1]
    %v3506 = vperm.slane %v3504, 0
    %v3508 = vadd.f32 %v3472, %v3506
    %v3509 = vadd.f32 %v3473, %v3506
    %v3510 = vadd.f32 %v3474, %v3506
    %v3511 = vadd.f32 %v3475, %v3506
    %v3512 = vadd.f32 %v3476, %v3506
    %v3513 = vadd.f32 %v3477, %v3506
    %v3514 = vadd.f32 %v3478, %v3506
    %v3515 = vadd.f32 %v3479, %v3506
    %v3516 = vadd.f32 %v3480, %v3506
    %v3517 = vadd.f32 %v3481, %v3506
    %v3518 = vadd.f32 %v3482, %v3506
    %v3519 = vadd.f32 %v3483, %v3506
    %v3520 = vadd.f32 %v3484, %v3506
    %v3521 = vadd.f32 %v3485, %v3506
    %v3522 = vadd.f32 %v3486, %v3506
    %v3523 = vadd.f32 %v3487, %v3506
    %v3524 = vadd.f32 %v3488, %v3506
    %v3525 = vadd.f32 %v3489, %v3506
    %v3526 = vadd.f32 %v3490, %v3506
    %v3527 = vadd.f32 %v3491, %v3506
    %v3528 = vadd.f32 %v3492, %v3506
    %v3529 = vadd.f32 %v3493, %v3506
    %v3530 = vadd.f32 %v3494, %v3506
    %v3531 = vadd.f32 %v3495, %v3506
    %v3532 = vadd.f32 %v3496, %v3506
    %v3533 = vadd.f32 %v3497, %v3506
    %v3534 = vadd.f32 %v3498, %v3506
    %v3535 = vadd.f32 %v3499, %v3506
    %v3536 = vadd.f32 %v3500, %v3506
    %v3537 = vadd.f32 %v3501, %v3506
    %v3538 = vadd.f32 %v3502, %v3506
    %v3539 = vadd.f32 %v3503, %v3506
    %v3540 = vadd.f32 %v3508, %v262
    %v3541 = vadd.f32 %v3509, %v263
    %v3542 = vadd.f32 %v3510, %v264
    %v3543 = vadd.f32 %v3511, %v265
    %v3544 = vadd.f32 %v3512, %v266
    %v3545 = vadd.f32 %v3513, %v267
    %v3546 = vadd.f32 %v3514, %v268
    %v3547 = vadd.f32 %v3515, %v269
    %v3548 = vadd.f32 %v3516, %v270
    %v3549 = vadd.f32 %v3517, %v271
    %v3550 = vadd.f32 %v3518, %v272
    %v3551 = vadd.f32 %v3519, %v273
    %v3552 = vadd.f32 %v3520, %v274
    %v3553 = vadd.f32 %v3521, %v275
    %v3554 = vadd.f32 %v3522, %v276
    %v3555 = vadd.f32 %v3523, %v277
    %v3556 = vadd.f32 %v3524, %v278
    %v3557 = vadd.f32 %v3525, %v279
    %v3558 = vadd.f32 %v3526, %v280
    %v3559 = vadd.f32 %v3527, %v281
    %v3560 = vadd.f32 %v3528, %v282
    %v3561 = vadd.f32 %v3529, %v283
    %v3562 = vadd.f32 %v3530, %v284
    %v3563 = vadd.f32 %v3531, %v285
    %v3564 = vadd.f32 %v3532, %v286
    %v3565 = vadd.f32 %v3533, %v287
    %v3566 = vadd.f32 %v3534, %v288
    %v3567 = vadd.f32 %v3535, %v289
    %v3568 = vadd.f32 %v3536, %v290
    %v3569 = vadd.f32 %v3537, %v291
    %v3570 = vadd.f32 %v3538, %v292
    %v3571 = vadd.f32 %v3539, %v293
    %v3572 = vld [vmem:[%s10] sm:$0x1]
    %v3574 = vperm.slane %v3572, 0
    %v3576 = vmul.f32 %v3540, %v3574
    %v3577 = vmul.f32 %v3541, %v3574
    %v3578 = vmul.f32 %v3542, %v3574
    %v3579 = vmul.f32 %v3543, %v3574
    %v3580 = vmul.f32 %v3544, %v3574
    %v3581 = vmul.f32 %v3545, %v3574
    %v3582 = vmul.f32 %v3546, %v3574
    %v3583 = vmul.f32 %v3547, %v3574
    %v3584 = vmul.f32 %v3548, %v3574
    %v3585 = vmul.f32 %v3549, %v3574
    %v3586 = vmul.f32 %v3550, %v3574
    %v3587 = vmul.f32 %v3551, %v3574
    %v3588 = vmul.f32 %v3552, %v3574
    %v3589 = vmul.f32 %v3553, %v3574
    %v3590 = vmul.f32 %v3554, %v3574
    %v3591 = vmul.f32 %v3555, %v3574
    %v3592 = vmul.f32 %v3556, %v3574
    %v3593 = vmul.f32 %v3557, %v3574
    %v3594 = vmul.f32 %v3558, %v3574
    %v3595 = vmul.f32 %v3559, %v3574
    %v3596 = vmul.f32 %v3560, %v3574
    %v3597 = vmul.f32 %v3561, %v3574
    %v3598 = vmul.f32 %v3562, %v3574
    %v3599 = vmul.f32 %v3563, %v3574
    %v3600 = vmul.f32 %v3564, %v3574
    %v3601 = vmul.f32 %v3565, %v3574
    %v3602 = vmul.f32 %v3566, %v3574
    %v3603 = vmul.f32 %v3567, %v3574
    %v3604 = vmul.f32 %v3568, %v3574
    %v3605 = vmul.f32 %v3569, %v3574
    %v3606 = vmul.f32 %v3570, %v3574
    %v3607 = vmul.f32 %v3571, %v3574
    %v3608 = vld [vmem:[#allocation14] sm:$0x1]
    %v3610 = vperm.slane %v3608, 0
    %v3612 = vadd.f32 %v3576, %v3610
    %v3613 = vadd.f32 %v3577, %v3610
    %v3614 = vadd.f32 %v3578, %v3610
    %v3615 = vadd.f32 %v3579, %v3610
    %v3616 = vadd.f32 %v3580, %v3610
    %v3617 = vadd.f32 %v3581, %v3610
    %v3618 = vadd.f32 %v3582, %v3610
    %v3619 = vadd.f32 %v3583, %v3610
    %v3620 = vadd.f32 %v3584, %v3610
    %v3621 = vadd.f32 %v3585, %v3610
    %v3622 = vadd.f32 %v3586, %v3610
    %v3623 = vadd.f32 %v3587, %v3610
    %v3624 = vadd.f32 %v3588, %v3610
    %v3625 = vadd.f32 %v3589, %v3610
    %v3626 = vadd.f32 %v3590, %v3610
    %v3627 = vadd.f32 %v3591, %v3610
    %v3628 = vadd.f32 %v3592, %v3610
    %v3629 = vadd.f32 %v3593, %v3610
    %v3630 = vadd.f32 %v3594, %v3610
    %v3631 = vadd.f32 %v3595, %v3610
    %v3632 = vadd.f32 %v3596, %v3610
    %v3633 = vadd.f32 %v3597, %v3610
    %v3634 = vadd.f32 %v3598, %v3610
    %v3635 = vadd.f32 %v3599, %v3610
    %v3636 = vadd.f32 %v3600, %v3610
    %v3637 = vadd.f32 %v3601, %v3610
    %v3638 = vadd.f32 %v3602, %v3610
    %v3639 = vadd.f32 %v3603, %v3610
    %v3640 = vadd.f32 %v3604, %v3610
    %v3641 = vadd.f32 %v3605, %v3610
    %v3642 = vadd.f32 %v3606, %v3610
    %v3643 = vadd.f32 %v3607, %v3610
    %v3644 = vadd.f32 %v1258, %v3612
    %v3645 = vadd.f32 %v1259, %v3613
    %v3646 = vadd.f32 %v1260, %v3614
    %v3647 = vadd.f32 %v1261, %v3615
    %v3648 = vadd.f32 %v1262, %v3616
    %v3649 = vadd.f32 %v1263, %v3617
    %v3650 = vadd.f32 %v1264, %v3618
    %v3651 = vadd.f32 %v1265, %v3619
    %v3652 = vadd.f32 %v1266, %v3620
    %v3653 = vadd.f32 %v1267, %v3621
    %v3654 = vadd.f32 %v1268, %v3622
    %v3655 = vadd.f32 %v1269, %v3623
    %v3656 = vadd.f32 %v1270, %v3624
    %v3657 = vadd.f32 %v1271, %v3625
    %v3658 = vadd.f32 %v1272, %v3626
    %v3659 = vadd.f32 %v1273, %v3627
    %v3660 = vadd.f32 %v1274, %v3628
    %v3661 = vadd.f32 %v1275, %v3629
    %v3662 = vadd.f32 %v1276, %v3630
    %v3663 = vadd.f32 %v1277, %v3631
    %v3664 = vadd.f32 %v1278, %v3632
    %v3665 = vadd.f32 %v1279, %v3633
    %v3666 = vadd.f32 %v1280, %v3634
    %v3667 = vadd.f32 %v1281, %v3635
    %v3668 = vadd.f32 %v1282, %v3636
    %v3669 = vadd.f32 %v1283, %v3637
    %v3670 = vadd.f32 %v1284, %v3638
    %v3671 = vadd.f32 %v1285, %v3639
    %v3672 = vadd.f32 %v1286, %v3640
    %v3673 = vadd.f32 %v1287, %v3641
    %v3674 = vadd.f32 %v1288, %v3642
    %v3675 = vadd.f32 %v1289, %v3643
    %v3676 = vpack.c.bf16 %v3645, %v3644
    %v3677 = vpack.c.bf16 %v3647, %v3646
    %v3678 = vpack.c.bf16 %v3649, %v3648
    %v3679 = vpack.c.bf16 %v3651, %v3650
    %v3680 = vpack.c.bf16 %v3653, %v3652
    %v3681 = vpack.c.bf16 %v3655, %v3654
    %v3682 = vpack.c.bf16 %v3657, %v3656
    %v3683 = vpack.c.bf16 %v3659, %v3658
    %v3684 = vpack.c.bf16 %v3661, %v3660
    %v3685 = vpack.c.bf16 %v3663, %v3662
    %v3686 = vpack.c.bf16 %v3665, %v3664
    %v3687 = vpack.c.bf16 %v3667, %v3666
    %v3688 = vpack.c.bf16 %v3669, %v3668
    %v3689 = vpack.c.bf16 %v3671, %v3670
    %v3690 = vpack.c.bf16 %v3673, %v3672
    %v3691 = vpack.c.bf16 %v3675, %v3674
    %v3692 = vld [vmem:[#allocation16] sm:$0xff]
    %v3693 = vld [vmem:[#allocation16 + $0x8] sm:$0xff]
    %v3694 = vld [vmem:[#allocation16 + $0x10] sm:$0xff]
    %v3695 = vld [vmem:[#allocation16 + $0x18] sm:$0xff]
    %v3696 = vld [vmem:[#allocation16 + $0x20] sm:$0xff]
    %v3697 = vld [vmem:[#allocation16 + $0x28] sm:$0xff]
    %v3698 = vld [vmem:[#allocation16 + $0x30] sm:$0xff]
    %v3699 = vld [vmem:[#allocation16 + $0x38] sm:$0xff]
    %v3700 = vld [vmem:[#allocation16 + $0x40] sm:$0xff]
    %v3701 = vld [vmem:[#allocation16 + $0x48] sm:$0xff]
    %v3702 = vld [vmem:[#allocation16 + $0x50] sm:$0xff]
    %v3703 = vld [vmem:[#allocation16 + $0x58] sm:$0xff]
    %v3704 = vld [vmem:[#allocation16 + $0x60] sm:$0xff]
    %v3705 = vld [vmem:[#allocation16 + $0x68] sm:$0xff]
    %v3706 = vld [vmem:[#allocation16 + $0x70] sm:$0xff]
    %v3707 = vld [vmem:[#allocation16 + $0x78] sm:$0xff]
    %v3708 = vld [vmem:[#allocation17] sm:$0x3]
    %v3710 = vperm.slane %v3708, 0
    %v3711 = vperm.slane %v3708, 1
    %v3730 = vunpack.c.l.b16 %v3692
    %v3731 = vunpack.c.h.b16 %v3692
    %v3732 = vunpack.c.l.b16 %v3693
    %v3733 = vunpack.c.h.b16 %v3693
    %v3734 = vunpack.c.l.b16 %v3694
    %v3735 = vunpack.c.h.b16 %v3694
    %v3736 = vunpack.c.l.b16 %v3695
    %v3737 = vunpack.c.h.b16 %v3695
    %v3738 = vunpack.c.l.b16 %v3696
    %v3739 = vunpack.c.h.b16 %v3696
    %v3740 = vunpack.c.l.b16 %v3697
    %v3741 = vunpack.c.h.b16 %v3697
    %v3742 = vunpack.c.l.b16 %v3698
    %v3743 = vunpack.c.h.b16 %v3698
    %v3744 = vunpack.c.l.b16 %v3699
    %v3745 = vunpack.c.h.b16 %v3699
    %v3746 = vunpack.c.l.b16 %v3700
    %v3747 = vunpack.c.h.b16 %v3700
    %v3748 = vunpack.c.l.b16 %v3701
    %v3749 = vunpack.c.h.b16 %v3701
    %v3750 = vunpack.c.l.b16 %v3702
    %v3751 = vunpack.c.h.b16 %v3702
    %v3752 = vunpack.c.l.b16 %v3703
    %v3753 = vunpack.c.h.b16 %v3703
    %v3754 = vunpack.c.l.b16 %v3704
    %v3755 = vunpack.c.h.b16 %v3704
    %v3756 = vunpack.c.l.b16 %v3705
    %v3757 = vunpack.c.h.b16 %v3705
    %v3758 = vunpack.c.l.b16 %v3706
    %v3759 = vunpack.c.h.b16 %v3706
    %v3760 = vunpack.c.l.b16 %v3707
    %v3761 = vunpack.c.h.b16 %v3707
    %v3762 = vpack.c.b16 %v3732, %v3730
    %v3763 = vpack.c.b16 %v3733, %v3731
    %v3764 = vpack.c.b16 %v3736, %v3734
    %v3765 = vpack.c.b16 %v3737, %v3735
    %v3766 = vpack.c.b16 %v3740, %v3738
    %v3767 = vpack.c.b16 %v3741, %v3739
    %v3768 = vpack.c.b16 %v3744, %v3742
    %v3769 = vpack.c.b16 %v3745, %v3743
    %v3770 = vpack.c.b16 %v3748, %v3746
    %v3771 = vpack.c.b16 %v3749, %v3747
    %v3772 = vpack.c.b16 %v3752, %v3750
    %v3773 = vpack.c.b16 %v3753, %v3751
    %v3774 = vpack.c.b16 %v3756, %v3754
    %v3775 = vpack.c.b16 %v3757, %v3755
    %v3776 = vpack.c.b16 %v3760, %v3758
    %v3777 = vpack.c.b16 %v3761, %v3759
    %3794 = vmatpush.bf16.msra.mxu0 %v3776
    %3795 = vmatpush.bf16.msra.mxu0 %v3774
    %3796 = vmatpush.bf16.msra.mxu0 %v3772
    %3797 = vmatpush.bf16.msra.mxu0 %v3770
    %3798 = vmatpush.bf16.msra.mxu0 %v3768
    %3799 = vmatpush.bf16.msra.mxu0 %v3766
    %3800 = vmatpush.bf16.msra.mxu0 %v3764
    %3801 = vmatpush.bf16.msra.mxu0 %v3762
    %3802 = vmatmul.bf16.gmra.mxu0 %v3676
    %v3803 = vpop.f32.mrf.mxu0
    %v3804 = vadd.f32 %v3710, %v3803
    %v3805 = vpop.f32.mrf.mxu0
    %v3806 = vadd.f32 %v3710, %v3805
    %3807 = vmatmul.bf16.gmra.mxu0 %v3677
    %v3808 = vpop.f32.mrf.mxu0
    %v3809 = vadd.f32 %v3710, %v3808
    %v3810 = vpop.f32.mrf.mxu0
    %v3811 = vadd.f32 %v3710, %v3810
    %3812 = vmatmul.bf16.gmra.mxu0 %v3678
    %v3813 = vpop.f32.mrf.mxu0
    %v3814 = vadd.f32 %v3710, %v3813
    %v3815 = vpop.f32.mrf.mxu0
    %v3816 = vadd.f32 %v3710, %v3815
    %3817 = vmatmul.bf16.gmra.mxu0 %v3679
    %v3818 = vpop.f32.mrf.mxu0
    %v3819 = vadd.f32 %v3710, %v3818
    %v3820 = vpop.f32.mrf.mxu0
    %v3821 = vadd.f32 %v3710, %v3820
    %3822 = vmatmul.bf16.gmra.mxu0 %v3680
    %v3823 = vpop.f32.mrf.mxu0
    %v3824 = vadd.f32 %v3710, %v3823
    %v3825 = vpop.f32.mrf.mxu0
    %v3826 = vadd.f32 %v3710, %v3825
    %3827 = vmatmul.bf16.gmra.mxu0 %v3681
    %v3828 = vpop.f32.mrf.mxu0
    %v3829 = vadd.f32 %v3710, %v3828
    %v3830 = vpop.f32.mrf.mxu0
    %v3831 = vadd.f32 %v3710, %v3830
    %3832 = vmatmul.bf16.gmra.mxu0 %v3682
    %v3833 = vpop.f32.mrf.mxu0
    %v3834 = vadd.f32 %v3710, %v3833
    %v3835 = vpop.f32.mrf.mxu0
    %v3836 = vadd.f32 %v3710, %v3835
    %3837 = vmatmul.bf16.gmra.mxu0 %v3683
    %v3838 = vpop.f32.mrf.mxu0
    %v3839 = vadd.f32 %v3710, %v3838
    %v3840 = vpop.f32.mrf.mxu0
    %v3841 = vadd.f32 %v3710, %v3840
    %3842 = vmatmul.bf16.gmra.mxu0 %v3684
    %v3843 = vpop.f32.mrf.mxu0
    %v3844 = vadd.f32 %v3710, %v3843
    %v3845 = vpop.f32.mrf.mxu0
    %v3846 = vadd.f32 %v3710, %v3845
    %3847 = vmatmul.bf16.gmra.mxu0 %v3685
    %v3848 = vpop.f32.mrf.mxu0
    %v3849 = vadd.f32 %v3710, %v3848
    %v3850 = vpop.f32.mrf.mxu0
    %v3851 = vadd.f32 %v3710, %v3850
    %3852 = vmatmul.bf16.gmra.mxu0 %v3686
    %v3853 = vpop.f32.mrf.mxu0
    %v3854 = vadd.f32 %v3710, %v3853
    %v3855 = vpop.f32.mrf.mxu0
    %v3856 = vadd.f32 %v3710, %v3855
    %3857 = vmatmul.bf16.gmra.mxu0 %v3687
    %v3858 = vpop.f32.mrf.mxu0
    %v3859 = vadd.f32 %v3710, %v3858
    %v3860 = vpop.f32.mrf.mxu0
    %v3861 = vadd.f32 %v3710, %v3860
    %3862 = vmatmul.bf16.gmra.mxu0 %v3688
    %v3863 = vpop.f32.mrf.mxu0
    %v3864 = vadd.f32 %v3710, %v3863
    %v3865 = vpop.f32.mrf.mxu0
    %v3866 = vadd.f32 %v3710, %v3865
    %3867 = vmatmul.bf16.gmra.mxu0 %v3689
    %v3868 = vpop.f32.mrf.mxu0
    %v3869 = vadd.f32 %v3710, %v3868
    %v3870 = vpop.f32.mrf.mxu0
    %v3871 = vadd.f32 %v3710, %v3870
    %3872 = vmatmul.bf16.gmra.mxu0 %v3690
    %v3873 = vpop.f32.mrf.mxu0
    %v3874 = vadd.f32 %v3710, %v3873
    %v3875 = vpop.f32.mrf.mxu0
    %v3876 = vadd.f32 %v3710, %v3875
    %3877 = vmatmul.bf16.gmra.mxu0 %v3691
    %v3878 = vpop.f32.mrf.mxu0
    %v3879 = vadd.f32 %v3710, %v3878
    %v3880 = vpop.f32.mrf.mxu0
    %v3881 = vadd.f32 %v3710, %v3880
    %3882 = vdwg.mxu0
    %3883 = vmatpush.bf16.msra.mxu0 %v3777
    %3884 = vmatpush.bf16.msra.mxu0 %v3775
    %3885 = vmatpush.bf16.msra.mxu0 %v3773
    %3886 = vmatpush.bf16.msra.mxu0 %v3771
    %3887 = vmatpush.bf16.msra.mxu0 %v3769
    %3888 = vmatpush.bf16.msra.mxu0 %v3767
    %3889 = vmatpush.bf16.msra.mxu0 %v3765
    %3890 = vmatpush.bf16.msra.mxu0 %v3763
    %3891 = vmatmul.bf16.gmra.mxu0 %v3676
    %v3892 = vpop.f32.mrf.mxu0
    %v3893 = vadd.f32 %v3711, %v3892
    %v3894 = vpop.f32.mrf.mxu0
    %v3895 = vadd.f32 %v3711, %v3894
    %3896 = vmatmul.bf16.gmra.mxu0 %v3677
    %v3897 = vpop.f32.mrf.mxu0
    %v3898 = vadd.f32 %v3711, %v3897
    %v3899 = vpop.f32.mrf.mxu0
    %v3900 = vadd.f32 %v3711, %v3899
    %3901 = vmatmul.bf16.gmra.mxu0 %v3678
    %v3902 = vpop.f32.mrf.mxu0
    %v3903 = vadd.f32 %v3711, %v3902
    %v3904 = vpop.f32.mrf.mxu0
    %v3905 = vadd.f32 %v3711, %v3904
    %3906 = vmatmul.bf16.gmra.mxu0 %v3679
    %v3907 = vpop.f32.mrf.mxu0
    %v3908 = vadd.f32 %v3711, %v3907
    %v3909 = vpop.f32.mrf.mxu0
    %v3910 = vadd.f32 %v3711, %v3909
    %3911 = vmatmul.bf16.gmra.mxu0 %v3680
    %v3912 = vpop.f32.mrf.mxu0
    %v3913 = vadd.f32 %v3711, %v3912
    %v3914 = vpop.f32.mrf.mxu0
    %v3915 = vadd.f32 %v3711, %v3914
    %3916 = vmatmul.bf16.gmra.mxu0 %v3681
    %v3917 = vpop.f32.mrf.mxu0
    %v3918 = vadd.f32 %v3711, %v3917
    %v3919 = vpop.f32.mrf.mxu0
    %v3920 = vadd.f32 %v3711, %v3919
    %3921 = vmatmul.bf16.gmra.mxu0 %v3682
    %v3922 = vpop.f32.mrf.mxu0
    %v3923 = vadd.f32 %v3711, %v3922
    %v3924 = vpop.f32.mrf.mxu0
    %v3925 = vadd.f32 %v3711, %v3924
    %3926 = vmatmul.bf16.gmra.mxu0 %v3683
    %v3927 = vpop.f32.mrf.mxu0
    %v3928 = vadd.f32 %v3711, %v3927
    %v3929 = vpop.f32.mrf.mxu0
    %v3930 = vadd.f32 %v3711, %v3929
    %3931 = vmatmul.bf16.gmra.mxu0 %v3684
    %v3932 = vpop.f32.mrf.mxu0
    %v3933 = vadd.f32 %v3711, %v3932
    %v3934 = vpop.f32.mrf.mxu0
    %v3935 = vadd.f32 %v3711, %v3934
    %3936 = vmatmul.bf16.gmra.mxu0 %v3685
    %v3937 = vpop.f32.mrf.mxu0
    %v3938 = vadd.f32 %v3711, %v3937
    %v3939 = vpop.f32.mrf.mxu0
    %v3940 = vadd.f32 %v3711, %v3939
    %3941 = vmatmul.bf16.gmra.mxu0 %v3686
    %v3942 = vpop.f32.mrf.mxu0
    %v3943 = vadd.f32 %v3711, %v3942
    %v3944 = vpop.f32.mrf.mxu0
    %v3945 = vadd.f32 %v3711, %v3944
    %3946 = vmatmul.bf16.gmra.mxu0 %v3687
    %v3947 = vpop.f32.mrf.mxu0
    %v3948 = vadd.f32 %v3711, %v3947
    %v3949 = vpop.f32.mrf.mxu0
    %v3950 = vadd.f32 %v3711, %v3949
    %3951 = vmatmul.bf16.gmra.mxu0 %v3688
    %v3952 = vpop.f32.mrf.mxu0
    %v3953 = vadd.f32 %v3711, %v3952
    %v3954 = vpop.f32.mrf.mxu0
    %v3955 = vadd.f32 %v3711, %v3954
    %3956 = vmatmul.bf16.gmra.mxu0 %v3689
    %v3957 = vpop.f32.mrf.mxu0
    %v3958 = vadd.f32 %v3711, %v3957
    %v3959 = vpop.f32.mrf.mxu0
    %v3960 = vadd.f32 %v3711, %v3959
    %3961 = vmatmul.bf16.gmra.mxu0 %v3690
    %v3962 = vpop.f32.mrf.mxu0
    %v3963 = vadd.f32 %v3711, %v3962
    %v3964 = vpop.f32.mrf.mxu0
    %v3965 = vadd.f32 %v3711, %v3964
    %3966 = vmatmul.bf16.gmra.mxu0 %v3691
    %v3967 = vpop.f32.mrf.mxu0
    %v3968 = vadd.f32 %v3711, %v3967
    %v3969 = vpop.f32.mrf.mxu0
    %v3970 = vadd.f32 %v3711, %v3969
    %3971 = vdwg.mxu0
    %v3972 = vmax.f32 %v3804, 0.0
    %v3973 = vmax.f32 %v3893, 0.0
    %v3974 = vmax.f32 %v3806, 0.0
    %v3975 = vmax.f32 %v3895, 0.0
    %v3976 = vmax.f32 %v3809, 0.0
    %v3977 = vmax.f32 %v3898, 0.0
    %v3978 = vmax.f32 %v3811, 0.0
    %v3979 = vmax.f32 %v3900, 0.0
    %v3980 = vmax.f32 %v3814, 0.0
    %v3981 = vmax.f32 %v3903, 0.0
    %v3982 = vmax.f32 %v3816, 0.0
    %v3983 = vmax.f32 %v3905, 0.0
    %v3984 = vmax.f32 %v3819, 0.0
    %v3985 = vmax.f32 %v3908, 0.0
    %v3986 = vmax.f32 %v3821, 0.0
    %v3987 = vmax.f32 %v3910, 0.0
    %v3988 = vmax.f32 %v3824, 0.0
    %v3989 = vmax.f32 %v3913, 0.0
    %v3990 = vmax.f32 %v3826, 0.0
    %v3991 = vmax.f32 %v3915, 0.0
    %v3992 = vmax.f32 %v3829, 0.0
    %v3993 = vmax.f32 %v3918, 0.0
    %v3994 = vmax.f32 %v3831, 0.0
    %v3995 = vmax.f32 %v3920, 0.0
    %v3996 = vmax.f32 %v3834, 0.0
    %v3997 = vmax.f32 %v3923, 0.0
    %v3998 = vmax.f32 %v3836, 0.0
    %v3999 = vmax.f32 %v3925, 0.0
    %v4000 = vmax.f32 %v3839, 0.0
    %v4001 = vmax.f32 %v3928, 0.0
    %v4002 = vmax.f32 %v3841, 0.0
    %v4003 = vmax.f32 %v3930, 0.0
    %v4004 = vmax.f32 %v3844, 0.0
    %v4005 = vmax.f32 %v3933, 0.0
    %v4006 = vmax.f32 %v3846, 0.0
    %v4007 = vmax.f32 %v3935, 0.0
    %v4008 = vmax.f32 %v3849, 0.0
    %v4009 = vmax.f32 %v3938, 0.0
    %v4010 = vmax.f32 %v3851, 0.0
    %v4011 = vmax.f32 %v3940, 0.0
    %v4012 = vmax.f32 %v3854, 0.0
    %v4013 = vmax.f32 %v3943, 0.0
    %v4014 = vmax.f32 %v3856, 0.0
    %v4015 = vmax.f32 %v3945, 0.0
    %v4016 = vmax.f32 %v3859, 0.0
    %v4017 = vmax.f32 %v3948, 0.0
    %v4018 = vmax.f32 %v3861, 0.0
    %v4019 = vmax.f32 %v3950, 0.0
    %v4020 = vmax.f32 %v3864, 0.0
    %v4021 = vmax.f32 %v3953, 0.0
    %v4022 = vmax.f32 %v3866, 0.0
    %v4023 = vmax.f32 %v3955, 0.0
    %v4024 = vmax.f32 %v3869, 0.0
    %v4025 = vmax.f32 %v3958, 0.0
    %v4026 = vmax.f32 %v3871, 0.0
    %v4027 = vmax.f32 %v3960, 0.0
    %v4028 = vmax.f32 %v3874, 0.0
    %v4029 = vmax.f32 %v3963, 0.0
    %v4030 = vmax.f32 %v3876, 0.0
    %v4031 = vmax.f32 %v3965, 0.0
    %v4032 = vmax.f32 %v3879, 0.0
    %v4033 = vmax.f32 %v3968, 0.0
    %v4034 = vmax.f32 %v3881, 0.0
    %v4035 = vmax.f32 %v3970, 0.0
    %v4036 = vpack.c.bf16 %v3974, %v3972
    %v4037 = vpack.c.bf16 %v3975, %v3973
    %v4038 = vpack.c.bf16 %v3978, %v3976
    %v4039 = vpack.c.bf16 %v3979, %v3977
    %v4040 = vpack.c.bf16 %v3982, %v3980
    %v4041 = vpack.c.bf16 %v3983, %v3981
    %v4042 = vpack.c.bf16 %v3986, %v3984
    %v4043 = vpack.c.bf16 %v3987, %v3985
    %v4044 = vpack.c.bf16 %v3990, %v3988
    %v4045 = vpack.c.bf16 %v3991, %v3989
    %v4046 = vpack.c.bf16 %v3994, %v3992
    %v4047 = vpack.c.bf16 %v3995, %v3993
    %v4048 = vpack.c.bf16 %v3998, %v3996
    %v4049 = vpack.c.bf16 %v3999, %v3997
    %v4050 = vpack.c.bf16 %v4002, %v4000
    %v4051 = vpack.c.bf16 %v4003, %v4001
    %v4052 = vpack.c.bf16 %v4006, %v4004
    %v4053 = vpack.c.bf16 %v4007, %v4005
    %v4054 = vpack.c.bf16 %v4010, %v4008
    %v4055 = vpack.c.bf16 %v4011, %v4009
    %v4056 = vpack.c.bf16 %v4014, %v4012
    %v4057 = vpack.c.bf16 %v4015, %v4013
    %v4058 = vpack.c.bf16 %v4018, %v4016
    %v4059 = vpack.c.bf16 %v4019, %v4017
    %v4060 = vpack.c.bf16 %v4022, %v4020
    %v4061 = vpack.c.bf16 %v4023, %v4021
    %v4062 = vpack.c.bf16 %v4026, %v4024
    %v4063 = vpack.c.bf16 %v4027, %v4025
    %v4064 = vpack.c.bf16 %v4030, %v4028
    %v4065 = vpack.c.bf16 %v4031, %v4029
    %v4066 = vpack.c.bf16 %v4034, %v4032
    %v4067 = vpack.c.bf16 %v4035, %v4033
    %v4068 = vld [vmem:[#allocation19] sm:$0xf]
    %v4069 = vld [vmem:[#allocation19 + $0x4] sm:$0xf]
    %v4070 = vld [vmem:[#allocation19 + $0x8] sm:$0xf]
    %v4071 = vld [vmem:[#allocation19 + $0xc] sm:$0xf]
    %v4072 = vld [vmem:[#allocation19 + $0x10] sm:$0xf]
    %v4073 = vld [vmem:[#allocation19 + $0x14] sm:$0xf]
    %v4074 = vld [vmem:[#allocation19 + $0x18] sm:$0xf]
    %v4075 = vld [vmem:[#allocation19 + $0x1c] sm:$0xf]
    %v4076 = vld [vmem:[#allocation19 + $0x20] sm:$0xf]
    %v4077 = vld [vmem:[#allocation19 + $0x24] sm:$0xf]
    %v4078 = vld [vmem:[#allocation19 + $0x28] sm:$0xf]
    %v4079 = vld [vmem:[#allocation19 + $0x2c] sm:$0xf]
    %v4080 = vld [vmem:[#allocation19 + $0x30] sm:$0xf]
    %v4081 = vld [vmem:[#allocation19 + $0x34] sm:$0xf]
    %v4082 = vld [vmem:[#allocation19 + $0x38] sm:$0xf]
    %v4083 = vld [vmem:[#allocation19 + $0x3c] sm:$0xf]
    %v4084 = vld [vmem:[#allocation19 + $0x40] sm:$0xf]
    %v4085 = vld [vmem:[#allocation19 + $0x44] sm:$0xf]
    %v4086 = vld [vmem:[#allocation19 + $0x48] sm:$0xf]
    %v4087 = vld [vmem:[#allocation19 + $0x4c] sm:$0xf]
    %v4088 = vld [vmem:[#allocation19 + $0x50] sm:$0xf]
    %v4089 = vld [vmem:[#allocation19 + $0x54] sm:$0xf]
    %v4090 = vld [vmem:[#allocation19 + $0x58] sm:$0xf]
    %v4091 = vld [vmem:[#allocation19 + $0x5c] sm:$0xf]
    %v4092 = vld [vmem:[#allocation19 + $0x60] sm:$0xf]
    %v4093 = vld [vmem:[#allocation19 + $0x64] sm:$0xf]
    %v4094 = vld [vmem:[#allocation19 + $0x68] sm:$0xf]
    %v4095 = vld [vmem:[#allocation19 + $0x6c] sm:$0xf]
    %v4096 = vld [vmem:[#allocation19 + $0x70] sm:$0xf]
    %v4097 = vld [vmem:[#allocation19 + $0x74] sm:$0xf]
    %v4098 = vld [vmem:[#allocation19 + $0x78] sm:$0xf]
    %v4099 = vld [vmem:[#allocation19 + $0x7c] sm:$0xf]
    %v4100 = vld [vmem:[#allocation20] sm:$0x1]
    %v4102 = vperm.slane %v4100, 0
    %v4136 = vunpack.c.l.b16 %v4068
    %v4137 = vunpack.c.l.b16 %v4069
    %v4138 = vunpack.c.l.b16 %v4070
    %v4139 = vunpack.c.l.b16 %v4071
    %v4140 = vunpack.c.l.b16 %v4072
    %v4141 = vunpack.c.l.b16 %v4073
    %v4142 = vunpack.c.l.b16 %v4074
    %v4143 = vunpack.c.l.b16 %v4075
    %v4144 = vunpack.c.l.b16 %v4076
    %v4145 = vunpack.c.l.b16 %v4077
    %v4146 = vunpack.c.l.b16 %v4078
    %v4147 = vunpack.c.l.b16 %v4079
    %v4148 = vunpack.c.l.b16 %v4080
    %v4149 = vunpack.c.l.b16 %v4081
    %v4150 = vunpack.c.l.b16 %v4082
    %v4151 = vunpack.c.l.b16 %v4083
    %v4152 = vunpack.c.l.b16 %v4084
    %v4153 = vunpack.c.l.b16 %v4085
    %v4154 = vunpack.c.l.b16 %v4086
    %v4155 = vunpack.c.l.b16 %v4087
    %v4156 = vunpack.c.l.b16 %v4088
    %v4157 = vunpack.c.l.b16 %v4089
    %v4158 = vunpack.c.l.b16 %v4090
    %v4159 = vunpack.c.l.b16 %v4091
    %v4160 = vunpack.c.l.b16 %v4092
    %v4161 = vunpack.c.l.b16 %v4093
    %v4162 = vunpack.c.l.b16 %v4094
    %v4163 = vunpack.c.l.b16 %v4095
    %v4164 = vunpack.c.l.b16 %v4096
    %v4165 = vunpack.c.l.b16 %v4097
    %v4166 = vunpack.c.l.b16 %v4098
    %v4167 = vunpack.c.l.b16 %v4099
    %v4168 = vpack.c.b16 %v4137, %v4136
    %v4169 = vpack.c.b16 %v4139, %v4138
    %v4170 = vpack.c.b16 %v4141, %v4140
    %v4171 = vpack.c.b16 %v4143, %v4142
    %v4172 = vpack.c.b16 %v4145, %v4144
    %v4173 = vpack.c.b16 %v4147, %v4146
    %v4174 = vpack.c.b16 %v4149, %v4148
    %v4175 = vpack.c.b16 %v4151, %v4150
    %v4176 = vpack.c.b16 %v4153, %v4152
    %v4177 = vpack.c.b16 %v4155, %v4154
    %v4178 = vpack.c.b16 %v4157, %v4156
    %v4179 = vpack.c.b16 %v4159, %v4158
    %v4180 = vpack.c.b16 %v4161, %v4160
    %v4181 = vpack.c.b16 %v4163, %v4162
    %v4182 = vpack.c.b16 %v4165, %v4164
    %v4183 = vpack.c.b16 %v4167, %v4166
    %4200 = vmatpush.bf16.msra.mxu0 %v4175
    %4201 = vmatpush.bf16.msra.mxu0 %v4174
    %4202 = vmatpush.bf16.msra.mxu0 %v4173
    %4203 = vmatpush.bf16.msra.mxu0 %v4172
    %4204 = vmatpush.bf16.msra.mxu0 %v4171
    %4205 = vmatpush.bf16.msra.mxu0 %v4170
    %4206 = vmatpush.bf16.msra.mxu0 %v4169
    %4207 = vmatpush.bf16.msra.mxu0 %v4168
    %4208 = vmatmul.bf16.gmra.mxu0 %v4036
    %v4209 = vpop.f32.mrf.mxu0
    %v4210 = vadd.f32 %v4102, %v4209
    %v4211 = vpop.f32.mrf.mxu0
    %v4212 = vadd.f32 %v4102, %v4211
    %4213 = vmatmul.bf16.gmra.mxu0 %v4038
    %v4214 = vpop.f32.mrf.mxu0
    %v4215 = vadd.f32 %v4102, %v4214
    %v4216 = vpop.f32.mrf.mxu0
    %v4217 = vadd.f32 %v4102, %v4216
    %4218 = vmatmul.bf16.gmra.mxu0 %v4040
    %v4219 = vpop.f32.mrf.mxu0
    %v4220 = vadd.f32 %v4102, %v4219
    %v4221 = vpop.f32.mrf.mxu0
    %v4222 = vadd.f32 %v4102, %v4221
    %4223 = vmatmul.bf16.gmra.mxu0 %v4042
    %v4224 = vpop.f32.mrf.mxu0
    %v4225 = vadd.f32 %v4102, %v4224
    %v4226 = vpop.f32.mrf.mxu0
    %v4227 = vadd.f32 %v4102, %v4226
    %4228 = vmatmul.bf16.gmra.mxu0 %v4044
    %v4229 = vpop.f32.mrf.mxu0
    %v4230 = vadd.f32 %v4102, %v4229
    %v4231 = vpop.f32.mrf.mxu0
    %v4232 = vadd.f32 %v4102, %v4231
    %4233 = vmatmul.bf16.gmra.mxu0 %v4046
    %v4234 = vpop.f32.mrf.mxu0
    %v4235 = vadd.f32 %v4102, %v4234
    %v4236 = vpop.f32.mrf.mxu0
    %v4237 = vadd.f32 %v4102, %v4236
    %4238 = vmatmul.bf16.gmra.mxu0 %v4048
    %v4239 = vpop.f32.mrf.mxu0
    %v4240 = vadd.f32 %v4102, %v4239
    %v4241 = vpop.f32.mrf.mxu0
    %v4242 = vadd.f32 %v4102, %v4241
    %4243 = vmatmul.bf16.gmra.mxu0 %v4050
    %v4244 = vpop.f32.mrf.mxu0
    %v4245 = vadd.f32 %v4102, %v4244
    %v4246 = vpop.f32.mrf.mxu0
    %v4247 = vadd.f32 %v4102, %v4246
    %4248 = vmatmul.bf16.gmra.mxu0 %v4052
    %v4249 = vpop.f32.mrf.mxu0
    %v4250 = vadd.f32 %v4102, %v4249
    %v4251 = vpop.f32.mrf.mxu0
    %v4252 = vadd.f32 %v4102, %v4251
    %4253 = vmatmul.bf16.gmra.mxu0 %v4054
    %v4254 = vpop.f32.mrf.mxu0
    %v4255 = vadd.f32 %v4102, %v4254
    %v4256 = vpop.f32.mrf.mxu0
    %v4257 = vadd.f32 %v4102, %v4256
    %4258 = vmatmul.bf16.gmra.mxu0 %v4056
    %v4259 = vpop.f32.mrf.mxu0
    %v4260 = vadd.f32 %v4102, %v4259
    %v4261 = vpop.f32.mrf.mxu0
    %v4262 = vadd.f32 %v4102, %v4261
    %4263 = vmatmul.bf16.gmra.mxu0 %v4058
    %v4264 = vpop.f32.mrf.mxu0
    %v4265 = vadd.f32 %v4102, %v4264
    %v4266 = vpop.f32.mrf.mxu0
    %v4267 = vadd.f32 %v4102, %v4266
    %4268 = vmatmul.bf16.gmra.mxu0 %v4060
    %v4269 = vpop.f32.mrf.mxu0
    %v4270 = vadd.f32 %v4102, %v4269
    %v4271 = vpop.f32.mrf.mxu0
    %v4272 = vadd.f32 %v4102, %v4271
    %4273 = vmatmul.bf16.gmra.mxu0 %v4062
    %v4274 = vpop.f32.mrf.mxu0
    %v4275 = vadd.f32 %v4102, %v4274
    %v4276 = vpop.f32.mrf.mxu0
    %v4277 = vadd.f32 %v4102, %v4276
    %4278 = vmatmul.bf16.gmra.mxu0 %v4064
    %v4279 = vpop.f32.mrf.mxu0
    %v4280 = vadd.f32 %v4102, %v4279
    %v4281 = vpop.f32.mrf.mxu0
    %v4282 = vadd.f32 %v4102, %v4281
    %4283 = vmatmul.bf16.gmra.mxu0 %v4066
    %v4284 = vpop.f32.mrf.mxu0
    %v4285 = vadd.f32 %v4102, %v4284
    %v4286 = vpop.f32.mrf.mxu0
    %v4287 = vadd.f32 %v4102, %v4286
    %4288 = vdwg.mxu0
    %4289 = vmatpush.bf16.msra.mxu0 %v4183
    %4290 = vmatpush.bf16.msra.mxu0 %v4182
    %4291 = vmatpush.bf16.msra.mxu0 %v4181
    %4292 = vmatpush.bf16.msra.mxu0 %v4180
    %4293 = vmatpush.bf16.msra.mxu0 %v4179
    %4294 = vmatpush.bf16.msra.mxu0 %v4178
    %4295 = vmatpush.bf16.msra.mxu0 %v4177
    %4296 = vmatpush.bf16.msra.mxu0 %v4176
    %4297 = vmatmul.bf16.gmra.mxu0 %v4037
    %v4298 = vpop.f32.mrf.mxu0
    %v4299 = vadd.f32 %v4210, %v4298
    %v4300 = vpop.f32.mrf.mxu0
    %v4301 = vadd.f32 %v4212, %v4300
    %4302 = vmatmul.bf16.gmra.mxu0 %v4039
    %v4303 = vpop.f32.mrf.mxu0
    %v4304 = vadd.f32 %v4215, %v4303
    %v4305 = vpop.f32.mrf.mxu0
    %v4306 = vadd.f32 %v4217, %v4305
    %4307 = vmatmul.bf16.gmra.mxu0 %v4041
    %v4308 = vpop.f32.mrf.mxu0
    %v4309 = vadd.f32 %v4220, %v4308
    %v4310 = vpop.f32.mrf.mxu0
    %v4311 = vadd.f32 %v4222, %v4310
    %4312 = vmatmul.bf16.gmra.mxu0 %v4043
    %v4313 = vpop.f32.mrf.mxu0
    %v4314 = vadd.f32 %v4225, %v4313
    %v4315 = vpop.f32.mrf.mxu0
    %v4316 = vadd.f32 %v4227, %v4315
    %4317 = vmatmul.bf16.gmra.mxu0 %v4045
    %v4318 = vpop.f32.mrf.mxu0
    %v4319 = vadd.f32 %v4230, %v4318
    %v4320 = vpop.f32.mrf.mxu0
    %v4321 = vadd.f32 %v4232, %v4320
    %4322 = vmatmul.bf16.gmra.mxu0 %v4047
    %v4323 = vpop.f32.mrf.mxu0
    %v4324 = vadd.f32 %v4235, %v4323
    %v4325 = vpop.f32.mrf.mxu0
    %v4326 = vadd.f32 %v4237, %v4325
    %4327 = vmatmul.bf16.gmra.mxu0 %v4049
    %v4328 = vpop.f32.mrf.mxu0
    %v4329 = vadd.f32 %v4240, %v4328
    %v4330 = vpop.f32.mrf.mxu0
    %v4331 = vadd.f32 %v4242, %v4330
    %4332 = vmatmul.bf16.gmra.mxu0 %v4051
    %v4333 = vpop.f32.mrf.mxu0
    %v4334 = vadd.f32 %v4245, %v4333
    %v4335 = vpop.f32.mrf.mxu0
    %v4336 = vadd.f32 %v4247, %v4335
    %4337 = vmatmul.bf16.gmra.mxu0 %v4053
    %v4338 = vpop.f32.mrf.mxu0
    %v4339 = vadd.f32 %v4250, %v4338
    %v4340 = vpop.f32.mrf.mxu0
    %v4341 = vadd.f32 %v4252, %v4340
    %4342 = vmatmul.bf16.gmra.mxu0 %v4055
    %v4343 = vpop.f32.mrf.mxu0
    %v4344 = vadd.f32 %v4255, %v4343
    %v4345 = vpop.f32.mrf.mxu0
    %v4346 = vadd.f32 %v4257, %v4345
    %4347 = vmatmul.bf16.gmra.mxu0 %v4057
    %v4348 = vpop.f32.mrf.mxu0
    %v4349 = vadd.f32 %v4260, %v4348
    %v4350 = vpop.f32.mrf.mxu0
    %v4351 = vadd.f32 %v4262, %v4350
    %4352 = vmatmul.bf16.gmra.mxu0 %v4059
    %v4353 = vpop.f32.mrf.mxu0
    %v4354 = vadd.f32 %v4265, %v4353
    %v4355 = vpop.f32.mrf.mxu0
    %v4356 = vadd.f32 %v4267, %v4355
    %4357 = vmatmul.bf16.gmra.mxu0 %v4061
    %v4358 = vpop.f32.mrf.mxu0
    %v4359 = vadd.f32 %v4270, %v4358
    %v4360 = vpop.f32.mrf.mxu0
    %v4361 = vadd.f32 %v4272, %v4360
    %4362 = vmatmul.bf16.gmra.mxu0 %v4063
    %v4363 = vpop.f32.mrf.mxu0
    %v4364 = vadd.f32 %v4275, %v4363
    %v4365 = vpop.f32.mrf.mxu0
    %v4366 = vadd.f32 %v4277, %v4365
    %4367 = vmatmul.bf16.gmra.mxu0 %v4065
    %v4368 = vpop.f32.mrf.mxu0
    %v4369 = vadd.f32 %v4280, %v4368
    %v4370 = vpop.f32.mrf.mxu0
    %v4371 = vadd.f32 %v4282, %v4370
    %4372 = vmatmul.bf16.gmra.mxu0 %v4067
    %v4373 = vpop.f32.mrf.mxu0
    %v4374 = vadd.f32 %v4285, %v4373
    %v4375 = vpop.f32.mrf.mxu0
    %v4376 = vadd.f32 %v4287, %v4375
    %4377 = vdwg.mxu0
    %v4378 = vadd.f32 %v3644, %v4299
    %v4379 = vadd.f32 %v3645, %v4301
    %v4380 = vadd.f32 %v3646, %v4304
    %v4381 = vadd.f32 %v3647, %v4306
    %v4382 = vadd.f32 %v3648, %v4309
    %v4383 = vadd.f32 %v3649, %v4311
    %v4384 = vadd.f32 %v3650, %v4314
    %v4385 = vadd.f32 %v3651, %v4316
    %v4386 = vadd.f32 %v3652, %v4319
    %v4387 = vadd.f32 %v3653, %v4321
    %v4388 = vadd.f32 %v3654, %v4324
    %v4389 = vadd.f32 %v3655, %v4326
    %v4390 = vadd.f32 %v3656, %v4329
    %v4391 = vadd.f32 %v3657, %v4331
    %v4392 = vadd.f32 %v3658, %v4334
    %v4393 = vadd.f32 %v3659, %v4336
    %v4394 = vadd.f32 %v3660, %v4339
    %v4395 = vadd.f32 %v3661, %v4341
    %v4396 = vadd.f32 %v3662, %v4344
    %v4397 = vadd.f32 %v3663, %v4346
    %v4398 = vadd.f32 %v3664, %v4349
    %v4399 = vadd.f32 %v3665, %v4351
    %v4400 = vadd.f32 %v3666, %v4354
    %v4401 = vadd.f32 %v3667, %v4356
    %v4402 = vadd.f32 %v3668, %v4359
    %v4403 = vadd.f32 %v3669, %v4361
    %v4404 = vadd.f32 %v3670, %v4364
    %v4405 = vadd.f32 %v3671, %v4366
    %v4406 = vadd.f32 %v3672, %v4369
    %v4407 = vadd.f32 %v3673, %v4371
    %v4408 = vadd.f32 %v3674, %v4374
    %v4409 = vadd.f32 %v3675, %v4376
    %v4410 = vld [vmem:[%s16] sm:$0x1]
    %v4412 = vperm.slane %v4410, 0
    %v4414 = vmul.f32 %v4378, %v4412
    %v4415 = vmul.f32 %v4379, %v4412
    %v4416 = vmul.f32 %v4380, %v4412
    %v4417 = vmul.f32 %v4381, %v4412
    %v4418 = vmul.f32 %v4382, %v4412
    %v4419 = vmul.f32 %v4383, %v4412
    %v4420 = vmul.f32 %v4384, %v4412
    %v4421 = vmul.f32 %v4385, %v4412
    %v4422 = vmul.f32 %v4386, %v4412
    %v4423 = vmul.f32 %v4387, %v4412
    %v4424 = vmul.f32 %v4388, %v4412
    %v4425 = vmul.f32 %v4389, %v4412
    %v4426 = vmul.f32 %v4390, %v4412
    %v4427 = vmul.f32 %v4391, %v4412
    %v4428 = vmul.f32 %v4392, %v4412
    %v4429 = vmul.f32 %v4393, %v4412
    %v4430 = vmul.f32 %v4394, %v4412
    %v4431 = vmul.f32 %v4395, %v4412
    %v4432 = vmul.f32 %v4396, %v4412
    %v4433 = vmul.f32 %v4397, %v4412
    %v4434 = vmul.f32 %v4398, %v4412
    %v4435 = vmul.f32 %v4399, %v4412
    %v4436 = vmul.f32 %v4400, %v4412
    %v4437 = vmul.f32 %v4401, %v4412
    %v4438 = vmul.f32 %v4402, %v4412
    %v4439 = vmul.f32 %v4403, %v4412
    %v4440 = vmul.f32 %v4404, %v4412
    %v4441 = vmul.f32 %v4405, %v4412
    %v4442 = vmul.f32 %v4406, %v4412
    %v4443 = vmul.f32 %v4407, %v4412
    %v4444 = vmul.f32 %v4408, %v4412
    %v4445 = vmul.f32 %v4409, %v4412
    %v4446 = vld [vmem:[#allocation22] sm:$0x1]
    %v4448 = vperm.slane %v4446, 0
    %v4450 = vadd.f32 %v4414, %v4448
    %v4451 = vadd.f32 %v4415, %v4448
    %v4452 = vadd.f32 %v4416, %v4448
    %v4453 = vadd.f32 %v4417, %v4448
    %v4454 = vadd.f32 %v4418, %v4448
    %v4455 = vadd.f32 %v4419, %v4448
    %v4456 = vadd.f32 %v4420, %v4448
    %v4457 = vadd.f32 %v4421, %v4448
    %v4458 = vadd.f32 %v4422, %v4448
    %v4459 = vadd.f32 %v4423, %v4448
    %v4460 = vadd.f32 %v4424, %v4448
    %v4461 = vadd.f32 %v4425, %v4448
    %v4462 = vadd.f32 %v4426, %v4448
    %v4463 = vadd.f32 %v4427, %v4448
    %v4464 = vadd.f32 %v4428, %v4448
    %v4465 = vadd.f32 %v4429, %v4448
    %v4466 = vadd.f32 %v4430, %v4448
    %v4467 = vadd.f32 %v4431, %v4448
    %v4468 = vadd.f32 %v4432, %v4448
    %v4469 = vadd.f32 %v4433, %v4448
    %v4470 = vadd.f32 %v4434, %v4448
    %v4471 = vadd.f32 %v4435, %v4448
    %v4472 = vadd.f32 %v4436, %v4448
    %v4473 = vadd.f32 %v4437, %v4448
    %v4474 = vadd.f32 %v4438, %v4448
    %v4475 = vadd.f32 %v4439, %v4448
    %v4476 = vadd.f32 %v4440, %v4448
    %v4477 = vadd.f32 %v4441, %v4448
    %v4478 = vadd.f32 %v4442, %v4448
    %v4479 = vadd.f32 %v4443, %v4448
    %v4480 = vadd.f32 %v4444, %v4448
    %v4481 = vadd.f32 %v4445, %v4448
    %v4482 = vpack.c.bf16 %v4450, %v4450
    %v4483 = vpack.c.bf16 %v4451, %v4451
    %v4484 = vpack.c.bf16 %v4452, %v4452
    %v4485 = vpack.c.bf16 %v4453, %v4453
    %v4486 = vpack.c.bf16 %v4454, %v4454
    %v4487 = vpack.c.bf16 %v4455, %v4455
    %v4488 = vpack.c.bf16 %v4456, %v4456
    %v4489 = vpack.c.bf16 %v4457, %v4457
    %v4490 = vpack.c.bf16 %v4458, %v4458
    %v4491 = vpack.c.bf16 %v4459, %v4459
    %v4492 = vpack.c.bf16 %v4460, %v4460
    %v4493 = vpack.c.bf16 %v4461, %v4461
    %v4494 = vpack.c.bf16 %v4462, %v4462
    %v4495 = vpack.c.bf16 %v4463, %v4463
    %v4496 = vpack.c.bf16 %v4464, %v4464
    %v4497 = vpack.c.bf16 %v4465, %v4465
    %v4498 = vpack.c.bf16 %v4466, %v4466
    %v4499 = vpack.c.bf16 %v4467, %v4467
    %v4500 = vpack.c.bf16 %v4468, %v4468
    %v4501 = vpack.c.bf16 %v4469, %v4469
    %v4502 = vpack.c.bf16 %v4470, %v4470
    %v4503 = vpack.c.bf16 %v4471, %v4471
    %v4504 = vpack.c.bf16 %v4472, %v4472
    %v4505 = vpack.c.bf16 %v4473, %v4473
    %v4506 = vpack.c.bf16 %v4474, %v4474
    %v4507 = vpack.c.bf16 %v4475, %v4475
    %v4508 = vpack.c.bf16 %v4476, %v4476
    %v4509 = vpack.c.bf16 %v4477, %v4477
    %v4510 = vpack.c.bf16 %v4478, %v4478
    %v4511 = vpack.c.bf16 %v4479, %v4479
    %v4512 = vpack.c.bf16 %v4480, %v4480
    %v4513 = vpack.c.bf16 %v4481, %v4481
    %v4514 = vunpack.c.l.bf16 %v4482
    %v4515 = vunpack.c.l.bf16 %v4483
    %v4516 = vunpack.c.l.bf16 %v4484
    %v4517 = vunpack.c.l.bf16 %v4485
    %v4518 = vunpack.c.l.bf16 %v4486
    %v4519 = vunpack.c.l.bf16 %v4487
    %v4520 = vunpack.c.l.bf16 %v4488
    %v4521 = vunpack.c.l.bf16 %v4489
    %v4522 = vunpack.c.l.bf16 %v4490
    %v4523 = vunpack.c.l.bf16 %v4491
    %v4524 = vunpack.c.l.bf16 %v4492
    %v4525 = vunpack.c.l.bf16 %v4493
    %v4526 = vunpack.c.l.bf16 %v4494
    %v4527 = vunpack.c.l.bf16 %v4495
    %v4528 = vunpack.c.l.bf16 %v4496
    %v4529 = vunpack.c.l.bf16 %v4497
    %v4530 = vunpack.c.l.bf16 %v4498
    %v4531 = vunpack.c.l.bf16 %v4499
    %v4532 = vunpack.c.l.bf16 %v4500
    %v4533 = vunpack.c.l.bf16 %v4501
    %v4534 = vunpack.c.l.bf16 %v4502
    %v4535 = vunpack.c.l.bf16 %v4503
    %v4536 = vunpack.c.l.bf16 %v4504
    %v4537 = vunpack.c.l.bf16 %v4505
    %v4538 = vunpack.c.l.bf16 %v4506
    %v4539 = vunpack.c.l.bf16 %v4507
    %v4540 = vunpack.c.l.bf16 %v4508
    %v4541 = vunpack.c.l.bf16 %v4509
    %v4542 = vunpack.c.l.bf16 %v4510
    %v4543 = vunpack.c.l.bf16 %v4511
    %v4544 = vunpack.c.l.bf16 %v4512
    %v4545 = vunpack.c.l.bf16 %v4513
    %v4546 = vmax.f32 %v4514, 0.0
    %v4547 = vmax.f32 %v4515, 0.0
    %v4548 = vmax.f32 %v4516, 0.0
    %v4549 = vmax.f32 %v4517, 0.0
    %v4550 = vmax.f32 %v4518, 0.0
    %v4551 = vmax.f32 %v4519, 0.0
    %v4552 = vmax.f32 %v4520, 0.0
    %v4553 = vmax.f32 %v4521, 0.0
    %v4554 = vmax.f32 %v4522, 0.0
    %v4555 = vmax.f32 %v4523, 0.0
    %v4556 = vmax.f32 %v4524, 0.0
    %v4557 = vmax.f32 %v4525, 0.0
    %v4558 = vmax.f32 %v4526, 0.0
    %v4559 = vmax.f32 %v4527, 0.0
    %v4560 = vmax.f32 %v4528, 0.0
    %v4561 = vmax.f32 %v4529, 0.0
    %v4562 = vmax.f32 %v4530, 0.0
    %v4563 = vmax.f32 %v4531, 0.0
    %v4564 = vmax.f32 %v4532, 0.0
    %v4565 = vmax.f32 %v4533, 0.0
    %v4566 = vmax.f32 %v4534, 0.0
    %v4567 = vmax.f32 %v4535, 0.0
    %v4568 = vmax.f32 %v4536, 0.0
    %v4569 = vmax.f32 %v4537, 0.0
    %v4570 = vmax.f32 %v4538, 0.0
    %v4571 = vmax.f32 %v4539, 0.0
    %v4572 = vmax.f32 %v4540, 0.0
    %v4573 = vmax.f32 %v4541, 0.0
    %v4574 = vmax.f32 %v4542, 0.0
    %v4575 = vmax.f32 %v4543, 0.0
    %v4576 = vmax.f32 %v4544, 0.0
    %v4577 = vmax.f32 %v4545, 0.0
    %v4578 = vpack.c.bf16 %v4547, %v4546
    %v4579 = vpack.c.bf16 %v4549, %v4548
    %v4580 = vpack.c.bf16 %v4551, %v4550
    %v4581 = vpack.c.bf16 %v4553, %v4552
    %v4582 = vpack.c.bf16 %v4555, %v4554
    %v4583 = vpack.c.bf16 %v4557, %v4556
    %v4584 = vpack.c.bf16 %v4559, %v4558
    %v4585 = vpack.c.bf16 %v4561, %v4560
    %v4586 = vpack.c.bf16 %v4563, %v4562
    %v4587 = vpack.c.bf16 %v4565, %v4564
    %v4588 = vpack.c.bf16 %v4567, %v4566
    %v4589 = vpack.c.bf16 %v4569, %v4568
    %v4590 = vpack.c.bf16 %v4571, %v4570
    %v4591 = vpack.c.bf16 %v4573, %v4572
    %v4592 = vpack.c.bf16 %v4575, %v4574
    %v4593 = vpack.c.bf16 %v4577, %v4576
    %4594 = vmatpush.bf16.msra.mxu0 %v4585
    %4595 = vmatpush.bf16.msra.mxu0 %v4584
    %4596 = vmatpush.bf16.msra.mxu0 %v4583
    %4597 = vmatpush.bf16.msra.mxu0 %v4582
    %4598 = vmatpush.bf16.msra.mxu0 %v4581
    %4599 = vmatpush.bf16.msra.mxu0 %v4580
    %4600 = vmatpush.bf16.msra.mxu0 %v4579
    %4601 = vmatpush.bf16.msra.mxu0 %v4578
    %4602 = vmatmul.bf16.gmra.mxu0 %v534
    %v4603 = vpop.f32.mrf.mxu0
    %v4604 = vadd.f32 0.0, %v4603
    %v4605 = vpop.f32.mrf.mxu0
    %v4606 = vadd.f32 0.0, %v4605
    %4607 = vmatmul.bf16.gmra.mxu0 %v536
    %v4608 = vpop.f32.mrf.mxu0
    %v4609 = vadd.f32 0.0, %v4608
    %v4610 = vpop.f32.mrf.mxu0
    %v4611 = vadd.f32 0.0, %v4610
    %4612 = vmatmul.bf16.gmra.mxu0 %v538
    %v4613 = vpop.f32.mrf.mxu0
    %v4614 = vadd.f32 0.0, %v4613
    %v4615 = vpop.f32.mrf.mxu0
    %v4616 = vadd.f32 0.0, %v4615
    %4617 = vmatmul.bf16.gmra.mxu0 %v540
    %v4618 = vpop.f32.mrf.mxu0
    %v4619 = vadd.f32 0.0, %v4618
    %v4620 = vpop.f32.mrf.mxu0
    %v4621 = vadd.f32 0.0, %v4620
    %4622 = vmatmul.bf16.gmra.mxu0 %v542
    %v4623 = vpop.f32.mrf.mxu0
    %v4624 = vadd.f32 0.0, %v4623
    %v4625 = vpop.f32.mrf.mxu0
    %v4626 = vadd.f32 0.0, %v4625
    %4627 = vmatmul.bf16.gmra.mxu0 %v544
    %v4628 = vpop.f32.mrf.mxu0
    %v4629 = vadd.f32 0.0, %v4628
    %v4630 = vpop.f32.mrf.mxu0
    %v4631 = vadd.f32 0.0, %v4630
    %4632 = vmatmul.bf16.gmra.mxu0 %v546
    %v4633 = vpop.f32.mrf.mxu0
    %v4634 = vadd.f32 0.0, %v4633
    %v4635 = vpop.f32.mrf.mxu0
    %v4636 = vadd.f32 0.0, %v4635
    %4637 = vmatmul.bf16.gmra.mxu0 %v548
    %v4638 = vpop.f32.mrf.mxu0
    %v4639 = vadd.f32 0.0, %v4638
    %v4640 = vpop.f32.mrf.mxu0
    %v4641 = vadd.f32 0.0, %v4640
    %4642 = vmatmul.bf16.gmra.mxu0 %v550
    %v4643 = vpop.f32.mrf.mxu0
    %v4644 = vadd.f32 0.0, %v4643
    %v4645 = vpop.f32.mrf.mxu0
    %v4646 = vadd.f32 0.0, %v4645
    %4647 = vmatmul.bf16.gmra.mxu0 %v552
    %v4648 = vpop.f32.mrf.mxu0
    %v4649 = vadd.f32 0.0, %v4648
    %v4650 = vpop.f32.mrf.mxu0
    %v4651 = vadd.f32 0.0, %v4650
    %4652 = vmatmul.bf16.gmra.mxu0 %v554
    %v4653 = vpop.f32.mrf.mxu0
    %v4654 = vadd.f32 0.0, %v4653
    %v4655 = vpop.f32.mrf.mxu0
    %v4656 = vadd.f32 0.0, %v4655
    %4657 = vmatmul.bf16.gmra.mxu0 %v556
    %v4658 = vpop.f32.mrf.mxu0
    %v4659 = vadd.f32 0.0, %v4658
    %v4660 = vpop.f32.mrf.mxu0
    %v4661 = vadd.f32 0.0, %v4660
    %4662 = vmatmul.bf16.gmra.mxu0 %v558
    %v4663 = vpop.f32.mrf.mxu0
    %v4664 = vadd.f32 0.0, %v4663
    %v4665 = vpop.f32.mrf.mxu0
    %v4666 = vadd.f32 0.0, %v4665
    %4667 = vmatmul.bf16.gmra.mxu0 %v560
    %v4668 = vpop.f32.mrf.mxu0
    %v4669 = vadd.f32 0.0, %v4668
    %v4670 = vpop.f32.mrf.mxu0
    %v4671 = vadd.f32 0.0, %v4670
    %4672 = vmatmul.bf16.gmra.mxu0 %v562
    %v4673 = vpop.f32.mrf.mxu0
    %v4674 = vadd.f32 0.0, %v4673
    %v4675 = vpop.f32.mrf.mxu0
    %v4676 = vadd.f32 0.0, %v4675
    %4677 = vmatmul.bf16.gmra.mxu0 %v564
    %v4678 = vpop.f32.mrf.mxu0
    %v4679 = vadd.f32 0.0, %v4678
    %v4680 = vpop.f32.mrf.mxu0
    %v4681 = vadd.f32 0.0, %v4680
    %4682 = vdwg.mxu0
    %4683 = vmatpush.bf16.msra.mxu0 %v4593
    %4684 = vmatpush.bf16.msra.mxu0 %v4592
    %4685 = vmatpush.bf16.msra.mxu0 %v4591
    %4686 = vmatpush.bf16.msra.mxu0 %v4590
    %4687 = vmatpush.bf16.msra.mxu0 %v4589
    %4688 = vmatpush.bf16.msra.mxu0 %v4588
    %4689 = vmatpush.bf16.msra.mxu0 %v4587
    %4690 = vmatpush.bf16.msra.mxu0 %v4586
    %4691 = vmatmul.bf16.gmra.mxu0 %v535
    %v4692 = vpop.f32.mrf.mxu0
    %v4693 = vadd.f32 %v4604, %v4692
    %v4694 = vpop.f32.mrf.mxu0
    %v4695 = vadd.f32 %v4606, %v4694
    %4696 = vmatmul.bf16.gmra.mxu0 %v537
    %v4697 = vpop.f32.mrf.mxu0
    %v4698 = vadd.f32 %v4609, %v4697
    %v4699 = vpop.f32.mrf.mxu0
    %v4700 = vadd.f32 %v4611, %v4699
    %4701 = vmatmul.bf16.gmra.mxu0 %v539
    %v4702 = vpop.f32.mrf.mxu0
    %v4703 = vadd.f32 %v4614, %v4702
    %v4704 = vpop.f32.mrf.mxu0
    %v4705 = vadd.f32 %v4616, %v4704
    %4706 = vmatmul.bf16.gmra.mxu0 %v541
    %v4707 = vpop.f32.mrf.mxu0
    %v4708 = vadd.f32 %v4619, %v4707
    %v4709 = vpop.f32.mrf.mxu0
    %v4710 = vadd.f32 %v4621, %v4709
    %4711 = vmatmul.bf16.gmra.mxu0 %v543
    %v4712 = vpop.f32.mrf.mxu0
    %v4713 = vadd.f32 %v4624, %v4712
    %v4714 = vpop.f32.mrf.mxu0
    %v4715 = vadd.f32 %v4626, %v4714
    %4716 = vmatmul.bf16.gmra.mxu0 %v545
    %v4717 = vpop.f32.mrf.mxu0
    %v4718 = vadd.f32 %v4629, %v4717
    %v4719 = vpop.f32.mrf.mxu0
    %v4720 = vadd.f32 %v4631, %v4719
    %4721 = vmatmul.bf16.gmra.mxu0 %v547
    %v4722 = vpop.f32.mrf.mxu0
    %v4723 = vadd.f32 %v4634, %v4722
    %v4724 = vpop.f32.mrf.mxu0
    %v4725 = vadd.f32 %v4636, %v4724
    %4726 = vmatmul.bf16.gmra.mxu0 %v549
    %v4727 = vpop.f32.mrf.mxu0
    %v4728 = vadd.f32 %v4639, %v4727
    %v4729 = vpop.f32.mrf.mxu0
    %v4730 = vadd.f32 %v4641, %v4729
    %4731 = vmatmul.bf16.gmra.mxu0 %v551
    %v4732 = vpop.f32.mrf.mxu0
    %v4733 = vadd.f32 %v4644, %v4732
    %v4734 = vpop.f32.mrf.mxu0
    %v4735 = vadd.f32 %v4646, %v4734
    %4736 = vmatmul.bf16.gmra.mxu0 %v553
    %v4737 = vpop.f32.mrf.mxu0
    %v4738 = vadd.f32 %v4649, %v4737
    %v4739 = vpop.f32.mrf.mxu0
    %v4740 = vadd.f32 %v4651, %v4739
    %4741 = vmatmul.bf16.gmra.mxu0 %v555
    %v4742 = vpop.f32.mrf.mxu0
    %v4743 = vadd.f32 %v4654, %v4742
    %v4744 = vpop.f32.mrf.mxu0
    %v4745 = vadd.f32 %v4656, %v4744
    %4746 = vmatmul.bf16.gmra.mxu0 %v557
    %v4747 = vpop.f32.mrf.mxu0
    %v4748 = vadd.f32 %v4659, %v4747
    %v4749 = vpop.f32.mrf.mxu0
    %v4750 = vadd.f32 %v4661, %v4749
    %4751 = vmatmul.bf16.gmra.mxu0 %v559
    %v4752 = vpop.f32.mrf.mxu0
    %v4753 = vadd.f32 %v4664, %v4752
    %v4754 = vpop.f32.mrf.mxu0
    %v4755 = vadd.f32 %v4666, %v4754
    %4756 = vmatmul.bf16.gmra.mxu0 %v561
    %v4757 = vpop.f32.mrf.mxu0
    %v4758 = vadd.f32 %v4669, %v4757
    %v4759 = vpop.f32.mrf.mxu0
    %v4760 = vadd.f32 %v4671, %v4759
    %4761 = vmatmul.bf16.gmra.mxu0 %v563
    %v4762 = vpop.f32.mrf.mxu0
    %v4763 = vadd.f32 %v4674, %v4762
    %v4764 = vpop.f32.mrf.mxu0
    %v4765 = vadd.f32 %v4676, %v4764
    %4766 = vmatmul.bf16.gmra.mxu0 %v565
    %v4767 = vpop.f32.mrf.mxu0
    %v4768 = vadd.f32 %v4679, %v4767
    %v4769 = vpop.f32.mrf.mxu0
    %v4770 = vadd.f32 %v4681, %v4769
    %4771 = vdwg.mxu0
    %v4772 = vadd.f32 %v4450, %v4693
    %v4773 = vadd.f32 %v4451, %v4695
    %v4774 = vadd.f32 %v4452, %v4698
    %v4775 = vadd.f32 %v4453, %v4700
    %v4776 = vadd.f32 %v4454, %v4703
    %v4777 = vadd.f32 %v4455, %v4705
    %v4778 = vadd.f32 %v4456, %v4708
    %v4779 = vadd.f32 %v4457, %v4710
    %v4780 = vadd.f32 %v4458, %v4713
    %v4781 = vadd.f32 %v4459, %v4715
    %v4782 = vadd.f32 %v4460, %v4718
    %v4783 = vadd.f32 %v4461, %v4720
    %v4784 = vadd.f32 %v4462, %v4723
    %v4785 = vadd.f32 %v4463, %v4725
    %v4786 = vadd.f32 %v4464, %v4728
    %v4787 = vadd.f32 %v4465, %v4730
    %v4788 = vadd.f32 %v4466, %v4733
    %v4789 = vadd.f32 %v4467, %v4735
    %v4790 = vadd.f32 %v4468, %v4738
    %v4791 = vadd.f32 %v4469, %v4740
    %v4792 = vadd.f32 %v4470, %v4743
    %v4793 = vadd.f32 %v4471, %v4745
    %v4794 = vadd.f32 %v4472, %v4748
    %v4795 = vadd.f32 %v4473, %v4750
    %v4796 = vadd.f32 %v4474, %v4753
    %v4797 = vadd.f32 %v4475, %v4755
    %v4798 = vadd.f32 %v4476, %v4758
    %v4799 = vadd.f32 %v4477, %v4760
    %v4800 = vadd.f32 %v4478, %v4763
    %v4801 = vadd.f32 %v4479, %v4765
    %v4802 = vadd.f32 %v4480, %v4768
    %v4803 = vadd.f32 %v4481, %v4770
    %v4804 = vpack.c.bf16 %v4773, %v4772
    %v4805 = vpack.c.bf16 %v4775, %v4774
    %v4806 = vpack.c.bf16 %v4777, %v4776
    %v4807 = vpack.c.bf16 %v4779, %v4778
    %v4808 = vpack.c.bf16 %v4781, %v4780
    %v4809 = vpack.c.bf16 %v4783, %v4782
    %v4810 = vpack.c.bf16 %v4785, %v4784
    %v4811 = vpack.c.bf16 %v4787, %v4786
    %v4812 = vpack.c.bf16 %v4789, %v4788
    %v4813 = vpack.c.bf16 %v4791, %v4790
    %v4814 = vpack.c.bf16 %v4793, %v4792
    %v4815 = vpack.c.bf16 %v4795, %v4794
    %v4816 = vpack.c.bf16 %v4797, %v4796
    %v4817 = vpack.c.bf16 %v4799, %v4798
    %v4818 = vpack.c.bf16 %v4801, %v4800
    %v4819 = vpack.c.bf16 %v4803, %v4802
    %s4820 = scalar_lea.vmem [#allocation7], 64
    %v4821 = vld [vmem:[%s4820] sm:$0xf]
    %v4822 = vld [vmem:[%s4820 + $0x4] sm:$0xf]
    %v4823 = vld [vmem:[%s4820 + $0x8] sm:$0xf]
    %v4824 = vld [vmem:[%s4820 + $0xc] sm:$0xf]
    %v4825 = vld [vmem:[%s4820 + $0x10] sm:$0xf]
    %v4826 = vld [vmem:[%s4820 + $0x14] sm:$0xf]
    %v4827 = vld [vmem:[%s4820 + $0x18] sm:$0xf]
    %v4828 = vld [vmem:[%s4820 + $0x1c] sm:$0xf]
    %v4829 = vld [vmem:[%s4820 + $0x20] sm:$0xf]
    %v4830 = vld [vmem:[%s4820 + $0x24] sm:$0xf]
    %v4831 = vld [vmem:[%s4820 + $0x28] sm:$0xf]
    %v4832 = vld [vmem:[%s4820 + $0x2c] sm:$0xf]
    %v4833 = vld [vmem:[%s4820 + $0x30] sm:$0xf]
    %v4834 = vld [vmem:[%s4820 + $0x34] sm:$0xf]
    %v4835 = vld [vmem:[%s4820 + $0x38] sm:$0xf]
    %v4836 = vld [vmem:[%s4820 + $0x3c] sm:$0xf]
    %s4837 = scalar_lea.vmem [#allocation8], 1
    %v4838 = vld [vmem:[%s4837] sm:$0x1]
    %v4840 = vperm.slane %v4838, 0
    %v4858 = vunpack.c.l.b16 %v4821
    %v4859 = vunpack.c.l.b16 %v4822
    %v4860 = vunpack.c.l.b16 %v4823
    %v4861 = vunpack.c.l.b16 %v4824
    %v4862 = vunpack.c.l.b16 %v4825
    %v4863 = vunpack.c.l.b16 %v4826
    %v4864 = vunpack.c.l.b16 %v4827
    %v4865 = vunpack.c.l.b16 %v4828
    %v4866 = vunpack.c.l.b16 %v4829
    %v4867 = vunpack.c.l.b16 %v4830
    %v4868 = vunpack.c.l.b16 %v4831
    %v4869 = vunpack.c.l.b16 %v4832
    %v4870 = vunpack.c.l.b16 %v4833
    %v4871 = vunpack.c.l.b16 %v4834
    %v4872 = vunpack.c.l.b16 %v4835
    %v4873 = vunpack.c.l.b16 %v4836
    %v4874 = vpack.c.b16 %v4859, %v4858
    %v4875 = vpack.c.b16 %v4861, %v4860
    %v4876 = vpack.c.b16 %v4863, %v4862
    %v4877 = vpack.c.b16 %v4865, %v4864
    %v4878 = vpack.c.b16 %v4867, %v4866
    %v4879 = vpack.c.b16 %v4869, %v4868
    %v4880 = vpack.c.b16 %v4871, %v4870
    %v4881 = vpack.c.b16 %v4873, %v4872
    %4890 = vmatpush.bf16.msra.mxu0 %v4881
    %4891 = vmatpush.bf16.msra.mxu0 %v4880
    %4892 = vmatpush.bf16.msra.mxu0 %v4879
    %4893 = vmatpush.bf16.msra.mxu0 %v4878
    %4894 = vmatpush.bf16.msra.mxu0 %v4877
    %4895 = vmatpush.bf16.msra.mxu0 %v4876
    %4896 = vmatpush.bf16.msra.mxu0 %v4875
    %4897 = vmatpush.bf16.msra.mxu0 %v4874
    %4898 = vmatmul.bf16.gmra.mxu0 %v4804
    %v4899 = vpop.f32.mrf.mxu0
    %v4900 = vadd.f32 %v4840, %v4899
    %v4901 = vpop.f32.mrf.mxu0
    %v4902 = vadd.f32 %v4840, %v4901
    %4903 = vmatmul.bf16.gmra.mxu0 %v4805
    %v4904 = vpop.f32.mrf.mxu0
    %v4905 = vadd.f32 %v4840, %v4904
    %v4906 = vpop.f32.mrf.mxu0
    %v4907 = vadd.f32 %v4840, %v4906
    %4908 = vmatmul.bf16.gmra.mxu0 %v4806
    %v4909 = vpop.f32.mrf.mxu0
    %v4910 = vadd.f32 %v4840, %v4909
    %v4911 = vpop.f32.mrf.mxu0
    %v4912 = vadd.f32 %v4840, %v4911
    %4913 = vmatmul.bf16.gmra.mxu0 %v4807
    %v4914 = vpop.f32.mrf.mxu0
    %v4915 = vadd.f32 %v4840, %v4914
    %v4916 = vpop.f32.mrf.mxu0
    %v4917 = vadd.f32 %v4840, %v4916
    %4918 = vmatmul.bf16.gmra.mxu0 %v4808
    %v4919 = vpop.f32.mrf.mxu0
    %v4920 = vadd.f32 %v4840, %v4919
    %v4921 = vpop.f32.mrf.mxu0
    %v4922 = vadd.f32 %v4840, %v4921
    %4923 = vmatmul.bf16.gmra.mxu0 %v4809
    %v4924 = vpop.f32.mrf.mxu0
    %v4925 = vadd.f32 %v4840, %v4924
    %v4926 = vpop.f32.mrf.mxu0
    %v4927 = vadd.f32 %v4840, %v4926
    %4928 = vmatmul.bf16.gmra.mxu0 %v4810
    %v4929 = vpop.f32.mrf.mxu0
    %v4930 = vadd.f32 %v4840, %v4929
    %v4931 = vpop.f32.mrf.mxu0
    %v4932 = vadd.f32 %v4840, %v4931
    %4933 = vmatmul.bf16.gmra.mxu0 %v4811
    %v4934 = vpop.f32.mrf.mxu0
    %v4935 = vadd.f32 %v4840, %v4934
    %v4936 = vpop.f32.mrf.mxu0
    %v4937 = vadd.f32 %v4840, %v4936
    %4938 = vmatmul.bf16.gmra.mxu0 %v4812
    %v4939 = vpop.f32.mrf.mxu0
    %v4940 = vadd.f32 %v4840, %v4939
    %v4941 = vpop.f32.mrf.mxu0
    %v4942 = vadd.f32 %v4840, %v4941
    %4943 = vmatmul.bf16.gmra.mxu0 %v4813
    %v4944 = vpop.f32.mrf.mxu0
    %v4945 = vadd.f32 %v4840, %v4944
    %v4946 = vpop.f32.mrf.mxu0
    %v4947 = vadd.f32 %v4840, %v4946
    %4948 = vmatmul.bf16.gmra.mxu0 %v4814
    %v4949 = vpop.f32.mrf.mxu0
    %v4950 = vadd.f32 %v4840, %v4949
    %v4951 = vpop.f32.mrf.mxu0
    %v4952 = vadd.f32 %v4840, %v4951
    %4953 = vmatmul.bf16.gmra.mxu0 %v4815
    %v4954 = vpop.f32.mrf.mxu0
    %v4955 = vadd.f32 %v4840, %v4954
    %v4956 = vpop.f32.mrf.mxu0
    %v4957 = vadd.f32 %v4840, %v4956
    %4958 = vmatmul.bf16.gmra.mxu0 %v4816
    %v4959 = vpop.f32.mrf.mxu0
    %v4960 = vadd.f32 %v4840, %v4959
    %v4961 = vpop.f32.mrf.mxu0
    %v4962 = vadd.f32 %v4840, %v4961
    %4963 = vmatmul.bf16.gmra.mxu0 %v4817
    %v4964 = vpop.f32.mrf.mxu0
    %v4965 = vadd.f32 %v4840, %v4964
    %v4966 = vpop.f32.mrf.mxu0
    %v4967 = vadd.f32 %v4840, %v4966
    %4968 = vmatmul.bf16.gmra.mxu0 %v4818
    %v4969 = vpop.f32.mrf.mxu0
    %v4970 = vadd.f32 %v4840, %v4969
    %v4971 = vpop.f32.mrf.mxu0
    %v4972 = vadd.f32 %v4840, %v4971
    %4973 = vmatmul.bf16.gmra.mxu0 %v4819
    %v4974 = vpop.f32.mrf.mxu0
    %v4975 = vadd.f32 %v4840, %v4974
    %v4976 = vpop.f32.mrf.mxu0
    %v4977 = vadd.f32 %v4840, %v4976
    %4978 = vdwg.mxu0
    %v4979 = vmax.f32 %v4900, 0.0
    %v4980 = vmax.f32 %v4902, 0.0
    %v4981 = vmax.f32 %v4905, 0.0
    %v4982 = vmax.f32 %v4907, 0.0
    %v4983 = vmax.f32 %v4910, 0.0
    %v4984 = vmax.f32 %v4912, 0.0
    %v4985 = vmax.f32 %v4915, 0.0
    %v4986 = vmax.f32 %v4917, 0.0
    %v4987 = vmax.f32 %v4920, 0.0
    %v4988 = vmax.f32 %v4922, 0.0
    %v4989 = vmax.f32 %v4925, 0.0
    %v4990 = vmax.f32 %v4927, 0.0
    %v4991 = vmax.f32 %v4930, 0.0
    %v4992 = vmax.f32 %v4932, 0.0
    %v4993 = vmax.f32 %v4935, 0.0
    %v4994 = vmax.f32 %v4937, 0.0
    %v4995 = vmax.f32 %v4940, 0.0
    %v4996 = vmax.f32 %v4942, 0.0
    %v4997 = vmax.f32 %v4945, 0.0
    %v4998 = vmax.f32 %v4947, 0.0
    %v4999 = vmax.f32 %v4950, 0.0
    %v5000 = vmax.f32 %v4952, 0.0
    %v5001 = vmax.f32 %v4955, 0.0
    %v5002 = vmax.f32 %v4957, 0.0
    %v5003 = vmax.f32 %v4960, 0.0
    %v5004 = vmax.f32 %v4962, 0.0
    %v5005 = vmax.f32 %v4965, 0.0
    %v5006 = vmax.f32 %v4967, 0.0
    %v5007 = vmax.f32 %v4970, 0.0
    %v5008 = vmax.f32 %v4972, 0.0
    %v5009 = vmax.f32 %v4975, 0.0
    %v5010 = vmax.f32 %v4977, 0.0
    %v5011 = vpack.c.bf16 %v4980, %v4979
    %v5012 = vpack.c.bf16 %v4982, %v4981
    %v5013 = vpack.c.bf16 %v4984, %v4983
    %v5014 = vpack.c.bf16 %v4986, %v4985
    %v5015 = vpack.c.bf16 %v4988, %v4987
    %v5016 = vpack.c.bf16 %v4990, %v4989
    %v5017 = vpack.c.bf16 %v4992, %v4991
    %v5018 = vpack.c.bf16 %v4994, %v4993
    %v5019 = vpack.c.bf16 %v4996, %v4995
    %v5020 = vpack.c.bf16 %v4998, %v4997
    %v5021 = vpack.c.bf16 %v5000, %v4999
    %v5022 = vpack.c.bf16 %v5002, %v5001
    %v5023 = vpack.c.bf16 %v5004, %v5003
    %v5024 = vpack.c.bf16 %v5006, %v5005
    %v5025 = vpack.c.bf16 %v5008, %v5007
    %v5026 = vpack.c.bf16 %v5010, %v5009
    %s5027 = scalar_lea.vmem [#allocation10], 64
    %v5028 = vld [vmem:[%s5027] sm:$0xf]
    %v5029 = vld [vmem:[%s5027 + $0x4] sm:$0xf]
    %v5030 = vld [vmem:[%s5027 + $0x8] sm:$0xf]
    %v5031 = vld [vmem:[%s5027 + $0xc] sm:$0xf]
    %v5032 = vld [vmem:[%s5027 + $0x10] sm:$0xf]
    %v5033 = vld [vmem:[%s5027 + $0x14] sm:$0xf]
    %v5034 = vld [vmem:[%s5027 + $0x18] sm:$0xf]
    %v5035 = vld [vmem:[%s5027 + $0x1c] sm:$0xf]
    %v5036 = vld [vmem:[%s5027 + $0x20] sm:$0xf]
    %v5037 = vld [vmem:[%s5027 + $0x24] sm:$0xf]
    %v5038 = vld [vmem:[%s5027 + $0x28] sm:$0xf]
    %v5039 = vld [vmem:[%s5027 + $0x2c] sm:$0xf]
    %v5040 = vld [vmem:[%s5027 + $0x30] sm:$0xf]
    %v5041 = vld [vmem:[%s5027 + $0x34] sm:$0xf]
    %v5042 = vld [vmem:[%s5027 + $0x38] sm:$0xf]
    %v5043 = vld [vmem:[%s5027 + $0x3c] sm:$0xf]
    %s5044 = scalar_lea.vmem %s5, 1
    %v5045 = vld [vmem:[%s5044] sm:$0x1]
    %v5047 = vperm.slane %v5045, 0
    %v5065 = vunpack.c.l.b16 %v5028
    %v5066 = vunpack.c.l.b16 %v5029
    %v5067 = vunpack.c.l.b16 %v5030
    %v5068 = vunpack.c.l.b16 %v5031
    %v5069 = vunpack.c.l.b16 %v5032
    %v5070 = vunpack.c.l.b16 %v5033
    %v5071 = vunpack.c.l.b16 %v5034
    %v5072 = vunpack.c.l.b16 %v5035
    %v5073 = vunpack.c.l.b16 %v5036
    %v5074 = vunpack.c.l.b16 %v5037
    %v5075 = vunpack.c.l.b16 %v5038
    %v5076 = vunpack.c.l.b16 %v5039
    %v5077 = vunpack.c.l.b16 %v5040
    %v5078 = vunpack.c.l.b16 %v5041
    %v5079 = vunpack.c.l.b16 %v5042
    %v5080 = vunpack.c.l.b16 %v5043
    %v5081 = vpack.c.b16 %v5066, %v5065
    %v5082 = vpack.c.b16 %v5068, %v5067
    %v5083 = vpack.c.b16 %v5070, %v5069
    %v5084 = vpack.c.b16 %v5072, %v5071
    %v5085 = vpack.c.b16 %v5074, %v5073
    %v5086 = vpack.c.b16 %v5076, %v5075
    %v5087 = vpack.c.b16 %v5078, %v5077
    %v5088 = vpack.c.b16 %v5080, %v5079
    %5097 = vmatpush.bf16.msra.mxu0 %v5088
    %5098 = vmatpush.bf16.msra.mxu0 %v5087
    %5099 = vmatpush.bf16.msra.mxu0 %v5086
    %5100 = vmatpush.bf16.msra.mxu0 %v5085
    %5101 = vmatpush.bf16.msra.mxu0 %v5084
    %5102 = vmatpush.bf16.msra.mxu0 %v5083
    %5103 = vmatpush.bf16.msra.mxu0 %v5082
    %5104 = vmatpush.bf16.msra.mxu0 %v5081
    %5105 = vmatmul.bf16.gmra.mxu0 %v5011
    %v5106 = vpop.f32.mrf.mxu0
    %v5107 = vadd.f32 %v5047, %v5106
    %v5108 = vpop.f32.mrf.mxu0
    %v5109 = vadd.f32 %v5047, %v5108
    %5110 = vmatmul.bf16.gmra.mxu0 %v5012
    %v5111 = vpop.f32.mrf.mxu0
    %v5112 = vadd.f32 %v5047, %v5111
    %v5113 = vpop.f32.mrf.mxu0
    %v5114 = vadd.f32 %v5047, %v5113
    %5115 = vmatmul.bf16.gmra.mxu0 %v5013
    %v5116 = vpop.f32.mrf.mxu0
    %v5117 = vadd.f32 %v5047, %v5116
    %v5118 = vpop.f32.mrf.mxu0
    %v5119 = vadd.f32 %v5047, %v5118
    %5120 = vmatmul.bf16.gmra.mxu0 %v5014
    %v5121 = vpop.f32.mrf.mxu0
    %v5122 = vadd.f32 %v5047, %v5121
    %v5123 = vpop.f32.mrf.mxu0
    %v5124 = vadd.f32 %v5047, %v5123
    %5125 = vmatmul.bf16.gmra.mxu0 %v5015
    %v5126 = vpop.f32.mrf.mxu0
    %v5127 = vadd.f32 %v5047, %v5126
    %v5128 = vpop.f32.mrf.mxu0
    %v5129 = vadd.f32 %v5047, %v5128
    %5130 = vmatmul.bf16.gmra.mxu0 %v5016
    %v5131 = vpop.f32.mrf.mxu0
    %v5132 = vadd.f32 %v5047, %v5131
    %v5133 = vpop.f32.mrf.mxu0
    %v5134 = vadd.f32 %v5047, %v5133
    %5135 = vmatmul.bf16.gmra.mxu0 %v5017
    %v5136 = vpop.f32.mrf.mxu0
    %v5137 = vadd.f32 %v5047, %v5136
    %v5138 = vpop.f32.mrf.mxu0
    %v5139 = vadd.f32 %v5047, %v5138
    %5140 = vmatmul.bf16.gmra.mxu0 %v5018
    %v5141 = vpop.f32.mrf.mxu0
    %v5142 = vadd.f32 %v5047, %v5141
    %v5143 = vpop.f32.mrf.mxu0
    %v5144 = vadd.f32 %v5047, %v5143
    %5145 = vmatmul.bf16.gmra.mxu0 %v5019
    %v5146 = vpop.f32.mrf.mxu0
    %v5147 = vadd.f32 %v5047, %v5146
    %v5148 = vpop.f32.mrf.mxu0
    %v5149 = vadd.f32 %v5047, %v5148
    %5150 = vmatmul.bf16.gmra.mxu0 %v5020
    %v5151 = vpop.f32.mrf.mxu0
    %v5152 = vadd.f32 %v5047, %v5151
    %v5153 = vpop.f32.mrf.mxu0
    %v5154 = vadd.f32 %v5047, %v5153
    %5155 = vmatmul.bf16.gmra.mxu0 %v5021
    %v5156 = vpop.f32.mrf.mxu0
    %v5157 = vadd.f32 %v5047, %v5156
    %v5158 = vpop.f32.mrf.mxu0
    %v5159 = vadd.f32 %v5047, %v5158
    %5160 = vmatmul.bf16.gmra.mxu0 %v5022
    %v5161 = vpop.f32.mrf.mxu0
    %v5162 = vadd.f32 %v5047, %v5161
    %v5163 = vpop.f32.mrf.mxu0
    %v5164 = vadd.f32 %v5047, %v5163
    %5165 = vmatmul.bf16.gmra.mxu0 %v5023
    %v5166 = vpop.f32.mrf.mxu0
    %v5167 = vadd.f32 %v5047, %v5166
    %v5168 = vpop.f32.mrf.mxu0
    %v5169 = vadd.f32 %v5047, %v5168
    %5170 = vmatmul.bf16.gmra.mxu0 %v5024
    %v5171 = vpop.f32.mrf.mxu0
    %v5172 = vadd.f32 %v5047, %v5171
    %v5173 = vpop.f32.mrf.mxu0
    %v5174 = vadd.f32 %v5047, %v5173
    %5175 = vmatmul.bf16.gmra.mxu0 %v5025
    %v5176 = vpop.f32.mrf.mxu0
    %v5177 = vadd.f32 %v5047, %v5176
    %v5178 = vpop.f32.mrf.mxu0
    %v5179 = vadd.f32 %v5047, %v5178
    %5180 = vmatmul.bf16.gmra.mxu0 %v5026
    %v5181 = vpop.f32.mrf.mxu0
    %v5182 = vadd.f32 %v5047, %v5181
    %v5183 = vpop.f32.mrf.mxu0
    %v5184 = vadd.f32 %v5047, %v5183
    %5185 = vdwg.mxu0
    %v5186 = vadd.f32 %v5107, %v4450
    %v5187 = vadd.f32 %v5109, %v4451
    %v5188 = vadd.f32 %v5112, %v4452
    %v5189 = vadd.f32 %v5114, %v4453
    %v5190 = vadd.f32 %v5117, %v4454
    %v5191 = vadd.f32 %v5119, %v4455
    %v5192 = vadd.f32 %v5122, %v4456
    %v5193 = vadd.f32 %v5124, %v4457
    %v5194 = vadd.f32 %v5127, %v4458
    %v5195 = vadd.f32 %v5129, %v4459
    %v5196 = vadd.f32 %v5132, %v4460
    %v5197 = vadd.f32 %v5134, %v4461
    %v5198 = vadd.f32 %v5137, %v4462
    %v5199 = vadd.f32 %v5139, %v4463
    %v5200 = vadd.f32 %v5142, %v4464
    %v5201 = vadd.f32 %v5144, %v4465
    %v5202 = vadd.f32 %v5147, %v4466
    %v5203 = vadd.f32 %v5149, %v4467
    %v5204 = vadd.f32 %v5152, %v4468
    %v5205 = vadd.f32 %v5154, %v4469
    %v5206 = vadd.f32 %v5157, %v4470
    %v5207 = vadd.f32 %v5159, %v4471
    %v5208 = vadd.f32 %v5162, %v4472
    %v5209 = vadd.f32 %v5164, %v4473
    %v5210 = vadd.f32 %v5167, %v4474
    %v5211 = vadd.f32 %v5169, %v4475
    %v5212 = vadd.f32 %v5172, %v4476
    %v5213 = vadd.f32 %v5174, %v4477
    %v5214 = vadd.f32 %v5177, %v4478
    %v5215 = vadd.f32 %v5179, %v4479
    %v5216 = vadd.f32 %v5182, %v4480
    %v5217 = vadd.f32 %v5184, %v4481
    %s5218 = scalar_lea.vmem %s6, 1
    %v5219 = vld [vmem:[%s5218] sm:$0x1]
    %v5221 = vperm.slane %v5219, 0
    %v5223 = vmul.f32 %v5186, %v5221
    %v5224 = vmul.f32 %v5187, %v5221
    %v5225 = vmul.f32 %v5188, %v5221
    %v5226 = vmul.f32 %v5189, %v5221
    %v5227 = vmul.f32 %v5190, %v5221
    %v5228 = vmul.f32 %v5191, %v5221
    %v5229 = vmul.f32 %v5192, %v5221
    %v5230 = vmul.f32 %v5193, %v5221
    %v5231 = vmul.f32 %v5194, %v5221
    %v5232 = vmul.f32 %v5195, %v5221
    %v5233 = vmul.f32 %v5196, %v5221
    %v5234 = vmul.f32 %v5197, %v5221
    %v5235 = vmul.f32 %v5198, %v5221
    %v5236 = vmul.f32 %v5199, %v5221
    %v5237 = vmul.f32 %v5200, %v5221
    %v5238 = vmul.f32 %v5201, %v5221
    %v5239 = vmul.f32 %v5202, %v5221
    %v5240 = vmul.f32 %v5203, %v5221
    %v5241 = vmul.f32 %v5204, %v5221
    %v5242 = vmul.f32 %v5205, %v5221
    %v5243 = vmul.f32 %v5206, %v5221
    %v5244 = vmul.f32 %v5207, %v5221
    %v5245 = vmul.f32 %v5208, %v5221
    %v5246 = vmul.f32 %v5209, %v5221
    %v5247 = vmul.f32 %v5210, %v5221
    %v5248 = vmul.f32 %v5211, %v5221
    %v5249 = vmul.f32 %v5212, %v5221
    %v5250 = vmul.f32 %v5213, %v5221
    %v5251 = vmul.f32 %v5214, %v5221
    %v5252 = vmul.f32 %v5215, %v5221
    %v5253 = vmul.f32 %v5216, %v5221
    %v5254 = vmul.f32 %v5217, %v5221
    %s5255 = scalar_lea.vmem [#allocation11], 1
    %v5256 = vld [vmem:[%s5255] sm:$0x1]
    %v5258 = vperm.slane %v5256, 0
    %v5260 = vadd.f32 %v5223, %v5258
    %v5261 = vadd.f32 %v5224, %v5258
    %v5262 = vadd.f32 %v5225, %v5258
    %v5263 = vadd.f32 %v5226, %v5258
    %v5264 = vadd.f32 %v5227, %v5258
    %v5265 = vadd.f32 %v5228, %v5258
    %v5266 = vadd.f32 %v5229, %v5258
    %v5267 = vadd.f32 %v5230, %v5258
    %v5268 = vadd.f32 %v5231, %v5258
    %v5269 = vadd.f32 %v5232, %v5258
    %v5270 = vadd.f32 %v5233, %v5258
    %v5271 = vadd.f32 %v5234, %v5258
    %v5272 = vadd.f32 %v5235, %v5258
    %v5273 = vadd.f32 %v5236, %v5258
    %v5274 = vadd.f32 %v5237, %v5258
    %v5275 = vadd.f32 %v5238, %v5258
    %v5276 = vadd.f32 %v5239, %v5258
    %v5277 = vadd.f32 %v5240, %v5258
    %v5278 = vadd.f32 %v5241, %v5258
    %v5279 = vadd.f32 %v5242, %v5258
    %v5280 = vadd.f32 %v5243, %v5258
    %v5281 = vadd.f32 %v5244, %v5258
    %v5282 = vadd.f32 %v5245, %v5258
    %v5283 = vadd.f32 %v5246, %v5258
    %v5284 = vadd.f32 %v5247, %v5258
    %v5285 = vadd.f32 %v5248, %v5258
    %v5286 = vadd.f32 %v5249, %v5258
    %v5287 = vadd.f32 %v5250, %v5258
    %v5288 = vadd.f32 %v5251, %v5258
    %v5289 = vadd.f32 %v5252, %v5258
    %v5290 = vadd.f32 %v5253, %v5258
    %v5291 = vadd.f32 %v5254, %v5258
    %s5292 = scalar_lea.vmem [#allocation13], 384
    %v5293 = vld [vmem:[%s5292] sm:$0xff]
    %v5294 = vld [vmem:[%s5292 + $0x8] sm:$0xff]
    %v5295 = vld [vmem:[%s5292 + $0x10] sm:$0xff]
    %v5296 = vld [vmem:[%s5292 + $0x18] sm:$0xff]
    %v5297 = vld [vmem:[%s5292 + $0x20] sm:$0xff]
    %v5298 = vld [vmem:[%s5292 + $0x28] sm:$0xff]
    %v5299 = vld [vmem:[%s5292 + $0x30] sm:$0xff]
    %v5300 = vld [vmem:[%s5292 + $0x38] sm:$0xff]
    %v5301 = vld [vmem:[%s5292 + $0x40] sm:$0xff]
    %v5302 = vld [vmem:[%s5292 + $0x48] sm:$0xff]
    %v5303 = vld [vmem:[%s5292 + $0x50] sm:$0xff]
    %v5304 = vld [vmem:[%s5292 + $0x58] sm:$0xff]
    %v5305 = vld [vmem:[%s5292 + $0x60] sm:$0xff]
    %v5306 = vld [vmem:[%s5292 + $0x68] sm:$0xff]
    %v5307 = vld [vmem:[%s5292 + $0x70] sm:$0xff]
    %v5308 = vld [vmem:[%s5292 + $0x78] sm:$0xff]
    %v5309 = vld [vmem:[%s5292 + $0x80] sm:$0xff]
    %v5310 = vld [vmem:[%s5292 + $0x88] sm:$0xff]
    %v5311 = vld [vmem:[%s5292 + $0x90] sm:$0xff]
    %v5312 = vld [vmem:[%s5292 + $0x98] sm:$0xff]
    %v5313 = vld [vmem:[%s5292 + $0xa0] sm:$0xff]
    %v5314 = vld [vmem:[%s5292 + $0xa8] sm:$0xff]
    %v5315 = vld [vmem:[%s5292 + $0xb0] sm:$0xff]
    %v5316 = vld [vmem:[%s5292 + $0xb8] sm:$0xff]
    %v5317 = vld [vmem:[%s5292 + $0xc0] sm:$0xff]
    %v5318 = vld [vmem:[%s5292 + $0xc8] sm:$0xff]
    %v5319 = vld [vmem:[%s5292 + $0xd0] sm:$0xff]
    %v5320 = vld [vmem:[%s5292 + $0xd8] sm:$0xff]
    %v5321 = vld [vmem:[%s5292 + $0xe0] sm:$0xff]
    %v5322 = vld [vmem:[%s5292 + $0xe8] sm:$0xff]
    %v5323 = vld [vmem:[%s5292 + $0xf0] sm:$0xff]
    %v5324 = vld [vmem:[%s5292 + $0xf8] sm:$0xff]
    %v5325 = vld [vmem:[%s5292 + $0x100] sm:$0xff]
    %v5326 = vld [vmem:[%s5292 + $0x108] sm:$0xff]
    %v5327 = vld [vmem:[%s5292 + $0x110] sm:$0xff]
    %v5328 = vld [vmem:[%s5292 + $0x118] sm:$0xff]
    %v5329 = vld [vmem:[%s5292 + $0x120] sm:$0xff]
    %v5330 = vld [vmem:[%s5292 + $0x128] sm:$0xff]
    %v5331 = vld [vmem:[%s5292 + $0x130] sm:$0xff]
    %v5332 = vld [vmem:[%s5292 + $0x138] sm:$0xff]
    %v5333 = vld [vmem:[%s5292 + $0x140] sm:$0xff]
    %v5334 = vld [vmem:[%s5292 + $0x148] sm:$0xff]
    %v5335 = vld [vmem:[%s5292 + $0x150] sm:$0xff]
    %v5336 = vld [vmem:[%s5292 + $0x158] sm:$0xff]
    %v5337 = vld [vmem:[%s5292 + $0x160] sm:$0xff]
    %v5338 = vld [vmem:[%s5292 + $0x168] sm:$0xff]
    %v5339 = vld [vmem:[%s5292 + $0x170] sm:$0xff]
    %v5340 = vld [vmem:[%s5292 + $0x178] sm:$0xff]
    %v5373 = vunpack.c.l.b16 %v4482
    %v5374 = vunpack.c.l.b16 %v4483
    %v5375 = vunpack.c.l.b16 %v4484
    %v5376 = vunpack.c.l.b16 %v4485
    %v5377 = vunpack.c.l.b16 %v4486
    %v5378 = vunpack.c.l.b16 %v4487
    %v5379 = vunpack.c.l.b16 %v4488
    %v5380 = vunpack.c.l.b16 %v4489
    %v5381 = vunpack.c.l.b16 %v4490
    %v5382 = vunpack.c.l.b16 %v4491
    %v5383 = vunpack.c.l.b16 %v4492
    %v5384 = vunpack.c.l.b16 %v4493
    %v5385 = vunpack.c.l.b16 %v4494
    %v5386 = vunpack.c.l.b16 %v4495
    %v5387 = vunpack.c.l.b16 %v4496
    %v5388 = vunpack.c.l.b16 %v4497
    %v5389 = vunpack.c.l.b16 %v4498
    %v5390 = vunpack.c.l.b16 %v4499
    %v5391 = vunpack.c.l.b16 %v4500
    %v5392 = vunpack.c.l.b16 %v4501
    %v5393 = vunpack.c.l.b16 %v4502
    %v5394 = vunpack.c.l.b16 %v4503
    %v5395 = vunpack.c.l.b16 %v4504
    %v5396 = vunpack.c.l.b16 %v4505
    %v5397 = vunpack.c.l.b16 %v4506
    %v5398 = vunpack.c.l.b16 %v4507
    %v5399 = vunpack.c.l.b16 %v4508
    %v5400 = vunpack.c.l.b16 %v4509
    %v5401 = vunpack.c.l.b16 %v4510
    %v5402 = vunpack.c.l.b16 %v4511
    %v5403 = vunpack.c.l.b16 %v4512
    %v5404 = vunpack.c.l.b16 %v4513
    %v5405 = vpack.c.b16 %v5374, %v5373
    %v5406 = vpack.c.b16 %v5376, %v5375
    %v5407 = vpack.c.b16 %v5378, %v5377
    %v5408 = vpack.c.b16 %v5380, %v5379
    %v5409 = vpack.c.b16 %v5382, %v5381
    %v5410 = vpack.c.b16 %v5384, %v5383
    %v5411 = vpack.c.b16 %v5386, %v5385
    %v5412 = vpack.c.b16 %v5388, %v5387
    %v5413 = vpack.c.b16 %v5390, %v5389
    %v5414 = vpack.c.b16 %v5392, %v5391
    %v5415 = vpack.c.b16 %v5394, %v5393
    %v5416 = vpack.c.b16 %v5396, %v5395
    %v5417 = vpack.c.b16 %v5398, %v5397
    %v5418 = vpack.c.b16 %v5400, %v5399
    %v5419 = vpack.c.b16 %v5402, %v5401
    %v5420 = vpack.c.b16 %v5404, %v5403
    %v5485 = vunpack.c.l.b16 %v5293
    %v5486 = vunpack.c.h.b16 %v5293
    %v5487 = vunpack.c.l.b16 %v5294
    %v5488 = vunpack.c.h.b16 %v5294
    %v5489 = vunpack.c.l.b16 %v5295
    %v5490 = vunpack.c.h.b16 %v5295
    %v5491 = vunpack.c.l.b16 %v5296
    %v5492 = vunpack.c.h.b16 %v5296
    %v5493 = vunpack.c.l.b16 %v5297
    %v5494 = vunpack.c.h.b16 %v5297
    %v5495 = vunpack.c.l.b16 %v5298
    %v5496 = vunpack.c.h.b16 %v5298
    %v5497 = vunpack.c.l.b16 %v5299
    %v5498 = vunpack.c.h.b16 %v5299
    %v5499 = vunpack.c.l.b16 %v5300
    %v5500 = vunpack.c.h.b16 %v5300
    %v5501 = vunpack.c.l.b16 %v5301
    %v5502 = vunpack.c.h.b16 %v5301
    %v5503 = vunpack.c.l.b16 %v5302
    %v5504 = vunpack.c.h.b16 %v5302
    %v5505 = vunpack.c.l.b16 %v5303
    %v5506 = vunpack.c.h.b16 %v5303
    %v5507 = vunpack.c.l.b16 %v5304
    %v5508 = vunpack.c.h.b16 %v5304
    %v5509 = vunpack.c.l.b16 %v5305
    %v5510 = vunpack.c.h.b16 %v5305
    %v5511 = vunpack.c.l.b16 %v5306
    %v5512 = vunpack.c.h.b16 %v5306
    %v5513 = vunpack.c.l.b16 %v5307
    %v5514 = vunpack.c.h.b16 %v5307
    %v5515 = vunpack.c.l.b16 %v5308
    %v5516 = vunpack.c.h.b16 %v5308
    %v5517 = vunpack.c.l.b16 %v5309
    %v5518 = vunpack.c.h.b16 %v5309
    %v5519 = vunpack.c.l.b16 %v5310
    %v5520 = vunpack.c.h.b16 %v5310
    %v5521 = vunpack.c.l.b16 %v5311
    %v5522 = vunpack.c.h.b16 %v5311
    %v5523 = vunpack.c.l.b16 %v5312
    %v5524 = vunpack.c.h.b16 %v5312
    %v5525 = vunpack.c.l.b16 %v5313
    %v5526 = vunpack.c.h.b16 %v5313
    %v5527 = vunpack.c.l.b16 %v5314
    %v5528 = vunpack.c.h.b16 %v5314
    %v5529 = vunpack.c.l.b16 %v5315
    %v5530 = vunpack.c.h.b16 %v5315
    %v5531 = vunpack.c.l.b16 %v5316
    %v5532 = vunpack.c.h.b16 %v5316
    %v5533 = vunpack.c.l.b16 %v5317
    %v5534 = vunpack.c.h.b16 %v5317
    %v5535 = vunpack.c.l.b16 %v5318
    %v5536 = vunpack.c.h.b16 %v5318
    %v5537 = vunpack.c.l.b16 %v5319
    %v5538 = vunpack.c.h.b16 %v5319
    %v5539 = vunpack.c.l.b16 %v5320
    %v5540 = vunpack.c.h.b16 %v5320
    %v5541 = vunpack.c.l.b16 %v5321
    %v5542 = vunpack.c.h.b16 %v5321
    %v5543 = vunpack.c.l.b16 %v5322
    %v5544 = vunpack.c.h.b16 %v5322
    %v5545 = vunpack.c.l.b16 %v5323
    %v5546 = vunpack.c.h.b16 %v5323
    %v5547 = vunpack.c.l.b16 %v5324
    %v5548 = vunpack.c.h.b16 %v5324
    %v5549 = vunpack.c.l.b16 %v5325
    %v5550 = vunpack.c.h.b16 %v5325
    %v5551 = vunpack.c.l.b16 %v5326
    %v5552 = vunpack.c.h.b16 %v5326
    %v5553 = vunpack.c.l.b16 %v5327
    %v5554 = vunpack.c.h.b16 %v5327
    %v5555 = vunpack.c.l.b16 %v5328
    %v5556 = vunpack.c.h.b16 %v5328
    %v5557 = vunpack.c.l.b16 %v5329
    %v5558 = vunpack.c.h.b16 %v5329
    %v5559 = vunpack.c.l.b16 %v5330
    %v5560 = vunpack.c.h.b16 %v5330
    %v5561 = vunpack.c.l.b16 %v5331
    %v5562 = vunpack.c.h.b16 %v5331
    %v5563 = vunpack.c.l.b16 %v5332
    %v5564 = vunpack.c.h.b16 %v5332
    %v5565 = vunpack.c.l.b16 %v5333
    %v5566 = vunpack.c.h.b16 %v5333
    %v5567 = vunpack.c.l.b16 %v5334
    %v5568 = vunpack.c.h.b16 %v5334
    %v5569 = vunpack.c.l.b16 %v5335
    %v5570 = vunpack.c.h.b16 %v5335
    %v5571 = vunpack.c.l.b16 %v5336
    %v5572 = vunpack.c.h.b16 %v5336
    %v5573 = vunpack.c.l.b16 %v5337
    %v5574 = vunpack.c.h.b16 %v5337
    %v5575 = vunpack.c.l.b16 %v5338
    %v5576 = vunpack.c.h.b16 %v5338
    %v5577 = vunpack.c.l.b16 %v5339
    %v5578 = vunpack.c.h.b16 %v5339
    %v5579 = vunpack.c.l.b16 %v5340
    %v5580 = vunpack.c.h.b16 %v5340
    %v5581 = vpack.c.b16 %v5491, %v5485
    %v5582 = vpack.c.b16 %v5492, %v5486
    %v5583 = vpack.c.b16 %v5493, %v5487
    %v5584 = vpack.c.b16 %v5494, %v5488
    %v5585 = vpack.c.b16 %v5495, %v5489
    %v5586 = vpack.c.b16 %v5496, %v5490
    %v5587 = vpack.c.b16 %v5503, %v5497
    %v5588 = vpack.c.b16 %v5504, %v5498
    %v5589 = vpack.c.b16 %v5505, %v5499
    %v5590 = vpack.c.b16 %v5506, %v5500
    %v5591 = vpack.c.b16 %v5507, %v5501
    %v5592 = vpack.c.b16 %v5508, %v5502
    %v5593 = vpack.c.b16 %v5515, %v5509
    %v5594 = vpack.c.b16 %v5516, %v5510
    %v5595 = vpack.c.b16 %v5517, %v5511
    %v5596 = vpack.c.b16 %v5518, %v5512
    %v5597 = vpack.c.b16 %v5519, %v5513
    %v5598 = vpack.c.b16 %v5520, %v5514
    %v5599 = vpack.c.b16 %v5527, %v5521
    %v5600 = vpack.c.b16 %v5528, %v5522
    %v5601 = vpack.c.b16 %v5529, %v5523
    %v5602 = vpack.c.b16 %v5530, %v5524
    %v5603 = vpack.c.b16 %v5531, %v5525
    %v5604 = vpack.c.b16 %v5532, %v5526
    %v5605 = vpack.c.b16 %v5539, %v5533
    %v5606 = vpack.c.b16 %v5540, %v5534
    %v5607 = vpack.c.b16 %v5541, %v5535
    %v5608 = vpack.c.b16 %v5542, %v5536
    %v5609 = vpack.c.b16 %v5543, %v5537
    %v5610 = vpack.c.b16 %v5544, %v5538
    %v5611 = vpack.c.b16 %v5551, %v5545
    %v5612 = vpack.c.b16 %v5552, %v5546
    %v5613 = vpack.c.b16 %v5553, %v5547
    %v5614 = vpack.c.b16 %v5554, %v5548
    %v5615 = vpack.c.b16 %v5555, %v5549
    %v5616 = vpack.c.b16 %v5556, %v5550
    %v5617 = vpack.c.b16 %v5563, %v5557
    %v5618 = vpack.c.b16 %v5564, %v5558
    %v5619 = vpack.c.b16 %v5565, %v5559
    %v5620 = vpack.c.b16 %v5566, %v5560
    %v5621 = vpack.c.b16 %v5567, %v5561
    %v5622 = vpack.c.b16 %v5568, %v5562
    %v5623 = vpack.c.b16 %v5575, %v5569
    %v5624 = vpack.c.b16 %v5576, %v5570
    %v5625 = vpack.c.b16 %v5577, %v5571
    %v5626 = vpack.c.b16 %v5578, %v5572
    %v5627 = vpack.c.b16 %v5579, %v5573
    %v5628 = vpack.c.b16 %v5580, %v5574
    %5677 = vmatpush.bf16.msra.mxu0 %v5623
    %5678 = vmatpush.bf16.msra.mxu0 %v5617
    %5679 = vmatpush.bf16.msra.mxu0 %v5611
    %5680 = vmatpush.bf16.msra.mxu0 %v5605
    %5681 = vmatpush.bf16.msra.mxu0 %v5599
    %5682 = vmatpush.bf16.msra.mxu0 %v5593
    %5683 = vmatpush.bf16.msra.mxu0 %v5587
    %5684 = vmatpush.bf16.msra.mxu0 %v5581
    %5685 = vmatmul.bf16.gmra.mxu0 %v5405
    %v5686 = vpop.f32.mrf.mxu0
    %v5687 = vadd.f32 0.0, %v5686
    %v5688 = vpop.f32.mrf.mxu0
    %v5689 = vadd.f32 0.0, %v5688
    %5690 = vmatmul.bf16.gmra.mxu0 %v5406
    %v5691 = vpop.f32.mrf.mxu0
    %v5692 = vadd.f32 0.0, %v5691
    %v5693 = vpop.f32.mrf.mxu0
    %v5694 = vadd.f32 0.0, %v5693
    %5695 = vmatmul.bf16.gmra.mxu0 %v5407
    %v5696 = vpop.f32.mrf.mxu0
    %v5697 = vadd.f32 0.0, %v5696
    %v5698 = vpop.f32.mrf.mxu0
    %v5699 = vadd.f32 0.0, %v5698
    %5700 = vmatmul.bf16.gmra.mxu0 %v5408
    %v5701 = vpop.f32.mrf.mxu0
    %v5702 = vadd.f32 0.0, %v5701
    %v5703 = vpop.f32.mrf.mxu0
    %v5704 = vadd.f32 0.0, %v5703
    %5705 = vmatmul.bf16.gmra.mxu0 %v5409
    %v5706 = vpop.f32.mrf.mxu0
    %v5707 = vadd.f32 0.0, %v5706
    %v5708 = vpop.f32.mrf.mxu0
    %v5709 = vadd.f32 0.0, %v5708
    %5710 = vmatmul.bf16.gmra.mxu0 %v5410
    %v5711 = vpop.f32.mrf.mxu0
    %v5712 = vadd.f32 0.0, %v5711
    %v5713 = vpop.f32.mrf.mxu0
    %v5714 = vadd.f32 0.0, %v5713
    %5715 = vmatmul.bf16.gmra.mxu0 %v5411
    %v5716 = vpop.f32.mrf.mxu0
    %v5717 = vadd.f32 0.0, %v5716
    %v5718 = vpop.f32.mrf.mxu0
    %v5719 = vadd.f32 0.0, %v5718
    %5720 = vmatmul.bf16.gmra.mxu0 %v5412
    %v5721 = vpop.f32.mrf.mxu0
    %v5722 = vadd.f32 0.0, %v5721
    %v5723 = vpop.f32.mrf.mxu0
    %v5724 = vadd.f32 0.0, %v5723
    %5725 = vmatmul.bf16.gmra.mxu0 %v5413
    %v5726 = vpop.f32.mrf.mxu0
    %v5727 = vadd.f32 0.0, %v5726
    %v5728 = vpop.f32.mrf.mxu0
    %v5729 = vadd.f32 0.0, %v5728
    %5730 = vmatmul.bf16.gmra.mxu0 %v5414
    %v5731 = vpop.f32.mrf.mxu0
    %v5732 = vadd.f32 0.0, %v5731
    %v5733 = vpop.f32.mrf.mxu0
    %v5734 = vadd.f32 0.0, %v5733
    %5735 = vmatmul.bf16.gmra.mxu0 %v5415
    %v5736 = vpop.f32.mrf.mxu0
    %v5737 = vadd.f32 0.0, %v5736
    %v5738 = vpop.f32.mrf.mxu0
    %v5739 = vadd.f32 0.0, %v5738
    %5740 = vmatmul.bf16.gmra.mxu0 %v5416
    %v5741 = vpop.f32.mrf.mxu0
    %v5742 = vadd.f32 0.0, %v5741
    %v5743 = vpop.f32.mrf.mxu0
    %v5744 = vadd.f32 0.0, %v5743
    %5745 = vmatmul.bf16.gmra.mxu0 %v5417
    %v5746 = vpop.f32.mrf.mxu0
    %v5747 = vadd.f32 0.0, %v5746
    %v5748 = vpop.f32.mrf.mxu0
    %v5749 = vadd.f32 0.0, %v5748
    %5750 = vmatmul.bf16.gmra.mxu0 %v5418
    %v5751 = vpop.f32.mrf.mxu0
    %v5752 = vadd.f32 0.0, %v5751
    %v5753 = vpop.f32.mrf.mxu0
    %v5754 = vadd.f32 0.0, %v5753
    %5755 = vmatmul.bf16.gmra.mxu0 %v5419
    %v5756 = vpop.f32.mrf.mxu0
    %v5757 = vadd.f32 0.0, %v5756
    %v5758 = vpop.f32.mrf.mxu0
    %v5759 = vadd.f32 0.0, %v5758
    %5760 = vmatmul.bf16.gmra.mxu0 %v5420
    %v5761 = vpop.f32.mrf.mxu0
    %v5762 = vadd.f32 0.0, %v5761
    %v5763 = vpop.f32.mrf.mxu0
    %v5764 = vadd.f32 0.0, %v5763
    %5765 = vdwg.mxu0
    %5766 = vmatpush.bf16.msra.mxu0 %v5624
    %5767 = vmatpush.bf16.msra.mxu0 %v5618
    %5768 = vmatpush.bf16.msra.mxu0 %v5612
    %5769 = vmatpush.bf16.msra.mxu0 %v5606
    %5770 = vmatpush.bf16.msra.mxu0 %v5600
    %5771 = vmatpush.bf16.msra.mxu0 %v5594
    %5772 = vmatpush.bf16.msra.mxu0 %v5588
    %5773 = vmatpush.bf16.msra.mxu0 %v5582
    %5774 = vmatmul.bf16.gmra.mxu0 %v5405
    %v5775 = vpop.f32.mrf.mxu0
    %v5776 = vadd.f32 0.0, %v5775
    %v5777 = vpop.f32.mrf.mxu0
    %v5778 = vadd.f32 0.0, %v5777
    %5779 = vmatmul.bf16.gmra.mxu0 %v5406
    %v5780 = vpop.f32.mrf.mxu0
    %v5781 = vadd.f32 0.0, %v5780
    %v5782 = vpop.f32.mrf.mxu0
    %v5783 = vadd.f32 0.0, %v5782
    %5784 = vmatmul.bf16.gmra.mxu0 %v5407
    %v5785 = vpop.f32.mrf.mxu0
    %v5786 = vadd.f32 0.0, %v5785
    %v5787 = vpop.f32.mrf.mxu0
    %v5788 = vadd.f32 0.0, %v5787
    %5789 = vmatmul.bf16.gmra.mxu0 %v5408
    %v5790 = vpop.f32.mrf.mxu0
    %v5791 = vadd.f32 0.0, %v5790
    %v5792 = vpop.f32.mrf.mxu0
    %v5793 = vadd.f32 0.0, %v5792
    %5794 = vmatmul.bf16.gmra.mxu0 %v5409
    %v5795 = vpop.f32.mrf.mxu0
    %v5796 = vadd.f32 0.0, %v5795
    %v5797 = vpop.f32.mrf.mxu0
    %v5798 = vadd.f32 0.0, %v5797
    %5799 = vmatmul.bf16.gmra.mxu0 %v5410
    %v5800 = vpop.f32.mrf.mxu0
    %v5801 = vadd.f32 0.0, %v5800
    %v5802 = vpop.f32.mrf.mxu0
    %v5803 = vadd.f32 0.0, %v5802
    %5804 = vmatmul.bf16.gmra.mxu0 %v5411
    %v5805 = vpop.f32.mrf.mxu0
    %v5806 = vadd.f32 0.0, %v5805
    %v5807 = vpop.f32.mrf.mxu0
    %v5808 = vadd.f32 0.0, %v5807
    %5809 = vmatmul.bf16.gmra.mxu0 %v5412
    %v5810 = vpop.f32.mrf.mxu0
    %v5811 = vadd.f32 0.0, %v5810
    %v5812 = vpop.f32.mrf.mxu0
    %v5813 = vadd.f32 0.0, %v5812
    %5814 = vmatmul.bf16.gmra.mxu0 %v5413
    %v5815 = vpop.f32.mrf.mxu0
    %v5816 = vadd.f32 0.0, %v5815
    %v5817 = vpop.f32.mrf.mxu0
    %v5818 = vadd.f32 0.0, %v5817
    %5819 = vmatmul.bf16.gmra.mxu0 %v5414
    %v5820 = vpop.f32.mrf.mxu0
    %v5821 = vadd.f32 0.0, %v5820
    %v5822 = vpop.f32.mrf.mxu0
    %v5823 = vadd.f32 0.0, %v5822
    %5824 = vmatmul.bf16.gmra.mxu0 %v5415
    %v5825 = vpop.f32.mrf.mxu0
    %v5826 = vadd.f32 0.0, %v5825
    %v5827 = vpop.f32.mrf.mxu0
    %v5828 = vadd.f32 0.0, %v5827
    %5829 = vmatmul.bf16.gmra.mxu0 %v5416
    %v5830 = vpop.f32.mrf.mxu0
    %v5831 = vadd.f32 0.0, %v5830
    %v5832 = vpop.f32.mrf.mxu0
    %v5833 = vadd.f32 0.0, %v5832
    %5834 = vmatmul.bf16.gmra.mxu0 %v5417
    %v5835 = vpop.f32.mrf.mxu0
    %v5836 = vadd.f32 0.0, %v5835
    %v5837 = vpop.f32.mrf.mxu0
    %v5838 = vadd.f32 0.0, %v5837
    %5839 = vmatmul.bf16.gmra.mxu0 %v5418
    %v5840 = vpop.f32.mrf.mxu0
    %v5841 = vadd.f32 0.0, %v5840
    %v5842 = vpop.f32.mrf.mxu0
    %v5843 = vadd.f32 0.0, %v5842
    %5844 = vmatmul.bf16.gmra.mxu0 %v5419
    %v5845 = vpop.f32.mrf.mxu0
    %v5846 = vadd.f32 0.0, %v5845
    %v5847 = vpop.f32.mrf.mxu0
    %v5848 = vadd.f32 0.0, %v5847
    %5849 = vmatmul.bf16.gmra.mxu0 %v5420
    %v5850 = vpop.f32.mrf.mxu0
    %v5851 = vadd.f32 0.0, %v5850
    %v5852 = vpop.f32.mrf.mxu0
    %v5853 = vadd.f32 0.0, %v5852
    %5854 = vdwg.mxu0
    %5855 = vmatpush.bf16.msra.mxu0 %v5625
    %5856 = vmatpush.bf16.msra.mxu0 %v5619
    %5857 = vmatpush.bf16.msra.mxu0 %v5613
    %5858 = vmatpush.bf16.msra.mxu0 %v5607
    %5859 = vmatpush.bf16.msra.mxu0 %v5601
    %5860 = vmatpush.bf16.msra.mxu0 %v5595
    %5861 = vmatpush.bf16.msra.mxu0 %v5589
    %5862 = vmatpush.bf16.msra.mxu0 %v5583
    %5863 = vmatmul.bf16.gmra.mxu0 %v5405
    %v5864 = vpop.f32.mrf.mxu0
    %v5865 = vadd.f32 0.0, %v5864
    %v5866 = vpop.f32.mrf.mxu0
    %v5867 = vadd.f32 0.0, %v5866
    %5868 = vmatmul.bf16.gmra.mxu0 %v5406
    %v5869 = vpop.f32.mrf.mxu0
    %v5870 = vadd.f32 0.0, %v5869
    %v5871 = vpop.f32.mrf.mxu0
    %v5872 = vadd.f32 0.0, %v5871
    %5873 = vmatmul.bf16.gmra.mxu0 %v5407
    %v5874 = vpop.f32.mrf.mxu0
    %v5875 = vadd.f32 0.0, %v5874
    %v5876 = vpop.f32.mrf.mxu0
    %v5877 = vadd.f32 0.0, %v5876
    %5878 = vmatmul.bf16.gmra.mxu0 %v5408
    %v5879 = vpop.f32.mrf.mxu0
    %v5880 = vadd.f32 0.0, %v5879
    %v5881 = vpop.f32.mrf.mxu0
    %v5882 = vadd.f32 0.0, %v5881
    %5883 = vmatmul.bf16.gmra.mxu0 %v5409
    %v5884 = vpop.f32.mrf.mxu0
    %v5885 = vadd.f32 0.0, %v5884
    %v5886 = vpop.f32.mrf.mxu0
    %v5887 = vadd.f32 0.0, %v5886
    %5888 = vmatmul.bf16.gmra.mxu0 %v5410
    %v5889 = vpop.f32.mrf.mxu0
    %v5890 = vadd.f32 0.0, %v5889
    %v5891 = vpop.f32.mrf.mxu0
    %v5892 = vadd.f32 0.0, %v5891
    %5893 = vmatmul.bf16.gmra.mxu0 %v5411
    %v5894 = vpop.f32.mrf.mxu0
    %v5895 = vadd.f32 0.0, %v5894
    %v5896 = vpop.f32.mrf.mxu0
    %v5897 = vadd.f32 0.0, %v5896
    %5898 = vmatmul.bf16.gmra.mxu0 %v5412
    %v5899 = vpop.f32.mrf.mxu0
    %v5900 = vadd.f32 0.0, %v5899
    %v5901 = vpop.f32.mrf.mxu0
    %v5902 = vadd.f32 0.0, %v5901
    %5903 = vmatmul.bf16.gmra.mxu0 %v5413
    %v5904 = vpop.f32.mrf.mxu0
    %v5905 = vadd.f32 0.0, %v5904
    %v5906 = vpop.f32.mrf.mxu0
    %v5907 = vadd.f32 0.0, %v5906
    %5908 = vmatmul.bf16.gmra.mxu0 %v5414
    %v5909 = vpop.f32.mrf.mxu0
    %v5910 = vadd.f32 0.0, %v5909
    %v5911 = vpop.f32.mrf.mxu0
    %v5912 = vadd.f32 0.0, %v5911
    %5913 = vmatmul.bf16.gmra.mxu0 %v5415
    %v5914 = vpop.f32.mrf.mxu0
    %v5915 = vadd.f32 0.0, %v5914
    %v5916 = vpop.f32.mrf.mxu0
    %v5917 = vadd.f32 0.0, %v5916
    %5918 = vmatmul.bf16.gmra.mxu0 %v5416
    %v5919 = vpop.f32.mrf.mxu0
    %v5920 = vadd.f32 0.0, %v5919
    %v5921 = vpop.f32.mrf.mxu0
    %v5922 = vadd.f32 0.0, %v5921
    %5923 = vmatmul.bf16.gmra.mxu0 %v5417
    %v5924 = vpop.f32.mrf.mxu0
    %v5925 = vadd.f32 0.0, %v5924
    %v5926 = vpop.f32.mrf.mxu0
    %v5927 = vadd.f32 0.0, %v5926
    %5928 = vmatmul.bf16.gmra.mxu0 %v5418
    %v5929 = vpop.f32.mrf.mxu0
    %v5930 = vadd.f32 0.0, %v5929
    %v5931 = vpop.f32.mrf.mxu0
    %v5932 = vadd.f32 0.0, %v5931
    %5933 = vmatmul.bf16.gmra.mxu0 %v5419
    %v5934 = vpop.f32.mrf.mxu0
    %v5935 = vadd.f32 0.0, %v5934
    %v5936 = vpop.f32.mrf.mxu0
    %v5937 = vadd.f32 0.0, %v5936
    %5938 = vmatmul.bf16.gmra.mxu0 %v5420
    %v5939 = vpop.f32.mrf.mxu0
    %v5940 = vadd.f32 0.0, %v5939
    %v5941 = vpop.f32.mrf.mxu0
    %v5942 = vadd.f32 0.0, %v5941
    %5943 = vdwg.mxu0
    %5944 = vmatpush.bf16.msra.mxu0 %v5626
    %5945 = vmatpush.bf16.msra.mxu0 %v5620
    %5946 = vmatpush.bf16.msra.mxu0 %v5614
    %5947 = vmatpush.bf16.msra.mxu0 %v5608
    %5948 = vmatpush.bf16.msra.mxu0 %v5602
    %5949 = vmatpush.bf16.msra.mxu0 %v5596
    %5950 = vmatpush.bf16.msra.mxu0 %v5590
    %5951 = vmatpush.bf16.msra.mxu0 %v5584
    %5952 = vmatmul.bf16.gmra.mxu0 %v5405
    %v5953 = vpop.f32.mrf.mxu0
    %v5954 = vadd.f32 0.0, %v5953
    %v5955 = vpop.f32.mrf.mxu0
    %v5956 = vadd.f32 0.0, %v5955
    %5957 = vmatmul.bf16.gmra.mxu0 %v5406
    %v5958 = vpop.f32.mrf.mxu0
    %v5959 = vadd.f32 0.0, %v5958
    %v5960 = vpop.f32.mrf.mxu0
    %v5961 = vadd.f32 0.0, %v5960
    %5962 = vmatmul.bf16.gmra.mxu0 %v5407
    %v5963 = vpop.f32.mrf.mxu0
    %v5964 = vadd.f32 0.0, %v5963
    %v5965 = vpop.f32.mrf.mxu0
    %v5966 = vadd.f32 0.0, %v5965
    %5967 = vmatmul.bf16.gmra.mxu0 %v5408
    %v5968 = vpop.f32.mrf.mxu0
    %v5969 = vadd.f32 0.0, %v5968
    %v5970 = vpop.f32.mrf.mxu0
    %v5971 = vadd.f32 0.0, %v5970
    %5972 = vmatmul.bf16.gmra.mxu0 %v5409
    %v5973 = vpop.f32.mrf.mxu0
    %v5974 = vadd.f32 0.0, %v5973
    %v5975 = vpop.f32.mrf.mxu0
    %v5976 = vadd.f32 0.0, %v5975
    %5977 = vmatmul.bf16.gmra.mxu0 %v5410
    %v5978 = vpop.f32.mrf.mxu0
    %v5979 = vadd.f32 0.0, %v5978
    %v5980 = vpop.f32.mrf.mxu0
    %v5981 = vadd.f32 0.0, %v5980
    %5982 = vmatmul.bf16.gmra.mxu0 %v5411
    %v5983 = vpop.f32.mrf.mxu0
    %v5984 = vadd.f32 0.0, %v5983
    %v5985 = vpop.f32.mrf.mxu0
    %v5986 = vadd.f32 0.0, %v5985
    %5987 = vmatmul.bf16.gmra.mxu0 %v5412
    %v5988 = vpop.f32.mrf.mxu0
    %v5989 = vadd.f32 0.0, %v5988
    %v5990 = vpop.f32.mrf.mxu0
    %v5991 = vadd.f32 0.0, %v5990
    %5992 = vmatmul.bf16.gmra.mxu0 %v5413
    %v5993 = vpop.f32.mrf.mxu0
    %v5994 = vadd.f32 0.0, %v5993
    %v5995 = vpop.f32.mrf.mxu0
    %v5996 = vadd.f32 0.0, %v5995
    %5997 = vmatmul.bf16.gmra.mxu0 %v5414
    %v5998 = vpop.f32.mrf.mxu0
    %v5999 = vadd.f32 0.0, %v5998
    %v6000 = vpop.f32.mrf.mxu0
    %v6001 = vadd.f32 0.0, %v6000
    %6002 = vmatmul.bf16.gmra.mxu0 %v5415
    %v6003 = vpop.f32.mrf.mxu0
    %v6004 = vadd.f32 0.0, %v6003
    %v6005 = vpop.f32.mrf.mxu0
    %v6006 = vadd.f32 0.0, %v6005
    %6007 = vmatmul.bf16.gmra.mxu0 %v5416
    %v6008 = vpop.f32.mrf.mxu0
    %v6009 = vadd.f32 0.0, %v6008
    %v6010 = vpop.f32.mrf.mxu0
    %v6011 = vadd.f32 0.0, %v6010
    %6012 = vmatmul.bf16.gmra.mxu0 %v5417
    %v6013 = vpop.f32.mrf.mxu0
    %v6014 = vadd.f32 0.0, %v6013
    %v6015 = vpop.f32.mrf.mxu0
    %v6016 = vadd.f32 0.0, %v6015
    %6017 = vmatmul.bf16.gmra.mxu0 %v5418
    %v6018 = vpop.f32.mrf.mxu0
    %v6019 = vadd.f32 0.0, %v6018
    %v6020 = vpop.f32.mrf.mxu0
    %v6021 = vadd.f32 0.0, %v6020
    %6022 = vmatmul.bf16.gmra.mxu0 %v5419
    %v6023 = vpop.f32.mrf.mxu0
    %v6024 = vadd.f32 0.0, %v6023
    %v6025 = vpop.f32.mrf.mxu0
    %v6026 = vadd.f32 0.0, %v6025
    %6027 = vmatmul.bf16.gmra.mxu0 %v5420
    %v6028 = vpop.f32.mrf.mxu0
    %v6029 = vadd.f32 0.0, %v6028
    %v6030 = vpop.f32.mrf.mxu0
    %v6031 = vadd.f32 0.0, %v6030
    %6032 = vdwg.mxu0
    %6033 = vmatpush.bf16.msra.mxu0 %v5627
    %6034 = vmatpush.bf16.msra.mxu0 %v5621
    %6035 = vmatpush.bf16.msra.mxu0 %v5615
    %6036 = vmatpush.bf16.msra.mxu0 %v5609
    %6037 = vmatpush.bf16.msra.mxu0 %v5603
    %6038 = vmatpush.bf16.msra.mxu0 %v5597
    %6039 = vmatpush.bf16.msra.mxu0 %v5591
    %6040 = vmatpush.bf16.msra.mxu0 %v5585
    %6041 = vmatmul.bf16.gmra.mxu0 %v5405
    %v6042 = vpop.f32.mrf.mxu0
    %v6043 = vadd.f32 0.0, %v6042
    %v6044 = vpop.f32.mrf.mxu0
    %v6045 = vadd.f32 0.0, %v6044
    %6046 = vmatmul.bf16.gmra.mxu0 %v5406
    %v6047 = vpop.f32.mrf.mxu0
    %v6048 = vadd.f32 0.0, %v6047
    %v6049 = vpop.f32.mrf.mxu0
    %v6050 = vadd.f32 0.0, %v6049
    %6051 = vmatmul.bf16.gmra.mxu0 %v5407
    %v6052 = vpop.f32.mrf.mxu0
    %v6053 = vadd.f32 0.0, %v6052
    %v6054 = vpop.f32.mrf.mxu0
    %v6055 = vadd.f32 0.0, %v6054
    %6056 = vmatmul.bf16.gmra.mxu0 %v5408
    %v6057 = vpop.f32.mrf.mxu0
    %v6058 = vadd.f32 0.0, %v6057
    %v6059 = vpop.f32.mrf.mxu0
    %v6060 = vadd.f32 0.0, %v6059
    %6061 = vmatmul.bf16.gmra.mxu0 %v5409
    %v6062 = vpop.f32.mrf.mxu0
    %v6063 = vadd.f32 0.0, %v6062
    %v6064 = vpop.f32.mrf.mxu0
    %v6065 = vadd.f32 0.0, %v6064
    %6066 = vmatmul.bf16.gmra.mxu0 %v5410
    %v6067 = vpop.f32.mrf.mxu0
    %v6068 = vadd.f32 0.0, %v6067
    %v6069 = vpop.f32.mrf.mxu0
    %v6070 = vadd.f32 0.0, %v6069
    %6071 = vmatmul.bf16.gmra.mxu0 %v5411
    %v6072 = vpop.f32.mrf.mxu0
    %v6073 = vadd.f32 0.0, %v6072
    %v6074 = vpop.f32.mrf.mxu0
    %v6075 = vadd.f32 0.0, %v6074
    %6076 = vmatmul.bf16.gmra.mxu0 %v5412
    %v6077 = vpop.f32.mrf.mxu0
    %v6078 = vadd.f32 0.0, %v6077
    %v6079 = vpop.f32.mrf.mxu0
    %v6080 = vadd.f32 0.0, %v6079
    %6081 = vmatmul.bf16.gmra.mxu0 %v5413
    %v6082 = vpop.f32.mrf.mxu0
    %v6083 = vadd.f32 0.0, %v6082
    %v6084 = vpop.f32.mrf.mxu0
    %v6085 = vadd.f32 0.0, %v6084
    %6086 = vmatmul.bf16.gmra.mxu0 %v5414
    %v6087 = vpop.f32.mrf.mxu0
    %v6088 = vadd.f32 0.0, %v6087
    %v6089 = vpop.f32.mrf.mxu0
    %v6090 = vadd.f32 0.0, %v6089
    %6091 = vmatmul.bf16.gmra.mxu0 %v5415
    %v6092 = vpop.f32.mrf.mxu0
    %v6093 = vadd.f32 0.0, %v6092
    %v6094 = vpop.f32.mrf.mxu0
    %v6095 = vadd.f32 0.0, %v6094
    %6096 = vmatmul.bf16.gmra.mxu0 %v5416
    %v6097 = vpop.f32.mrf.mxu0
    %v6098 = vadd.f32 0.0, %v6097
    %v6099 = vpop.f32.mrf.mxu0
    %v6100 = vadd.f32 0.0, %v6099
    %6101 = vmatmul.bf16.gmra.mxu0 %v5417
    %v6102 = vpop.f32.mrf.mxu0
    %v6103 = vadd.f32 0.0, %v6102
    %v6104 = vpop.f32.mrf.mxu0
    %v6105 = vadd.f32 0.0, %v6104
    %6106 = vmatmul.bf16.gmra.mxu0 %v5418
    %v6107 = vpop.f32.mrf.mxu0
    %v6108 = vadd.f32 0.0, %v6107
    %v6109 = vpop.f32.mrf.mxu0
    %v6110 = vadd.f32 0.0, %v6109
    %6111 = vmatmul.bf16.gmra.mxu0 %v5419
    %v6112 = vpop.f32.mrf.mxu0
    %v6113 = vadd.f32 0.0, %v6112
    %v6114 = vpop.f32.mrf.mxu0
    %v6115 = vadd.f32 0.0, %v6114
    %6116 = vmatmul.bf16.gmra.mxu0 %v5420
    %v6117 = vpop.f32.mrf.mxu0
    %v6118 = vadd.f32 0.0, %v6117
    %v6119 = vpop.f32.mrf.mxu0
    %v6120 = vadd.f32 0.0, %v6119
    %6121 = vdwg.mxu0
    %6122 = vmatpush.bf16.msra.mxu0 %v5628
    %6123 = vmatpush.bf16.msra.mxu0 %v5622
    %6124 = vmatpush.bf16.msra.mxu0 %v5616
    %6125 = vmatpush.bf16.msra.mxu0 %v5610
    %6126 = vmatpush.bf16.msra.mxu0 %v5604
    %6127 = vmatpush.bf16.msra.mxu0 %v5598
    %6128 = vmatpush.bf16.msra.mxu0 %v5592
    %6129 = vmatpush.bf16.msra.mxu0 %v5586
    %6130 = vmatmul.bf16.gmra.mxu0 %v5405
    %v6131 = vpop.f32.mrf.mxu0
    %v6132 = vadd.f32 0.0, %v6131
    %v6133 = vpop.f32.mrf.mxu0
    %v6134 = vadd.f32 0.0, %v6133
    %6135 = vmatmul.bf16.gmra.mxu0 %v5406
    %v6136 = vpop.f32.mrf.mxu0
    %v6137 = vadd.f32 0.0, %v6136
    %v6138 = vpop.f32.mrf.mxu0
    %v6139 = vadd.f32 0.0, %v6138
    %6140 = vmatmul.bf16.gmra.mxu0 %v5407
    %v6141 = vpop.f32.mrf.mxu0
    %v6142 = vadd.f32 0.0, %v6141
    %v6143 = vpop.f32.mrf.mxu0
    %v6144 = vadd.f32 0.0, %v6143
    %6145 = vmatmul.bf16.gmra.mxu0 %v5408
    %v6146 = vpop.f32.mrf.mxu0
    %v6147 = vadd.f32 0.0, %v6146
    %v6148 = vpop.f32.mrf.mxu0
    %v6149 = vadd.f32 0.0, %v6148
    %6150 = vmatmul.bf16.gmra.mxu0 %v5409
    %v6151 = vpop.f32.mrf.mxu0
    %v6152 = vadd.f32 0.0, %v6151
    %v6153 = vpop.f32.mrf.mxu0
    %v6154 = vadd.f32 0.0, %v6153
    %6155 = vmatmul.bf16.gmra.mxu0 %v5410
    %v6156 = vpop.f32.mrf.mxu0
    %v6157 = vadd.f32 0.0, %v6156
    %v6158 = vpop.f32.mrf.mxu0
    %v6159 = vadd.f32 0.0, %v6158
    %6160 = vmatmul.bf16.gmra.mxu0 %v5411
    %v6161 = vpop.f32.mrf.mxu0
    %v6162 = vadd.f32 0.0, %v6161
    %v6163 = vpop.f32.mrf.mxu0
    %v6164 = vadd.f32 0.0, %v6163
    %6165 = vmatmul.bf16.gmra.mxu0 %v5412
    %v6166 = vpop.f32.mrf.mxu0
    %v6167 = vadd.f32 0.0, %v6166
    %v6168 = vpop.f32.mrf.mxu0
    %v6169 = vadd.f32 0.0, %v6168
    %6170 = vmatmul.bf16.gmra.mxu0 %v5413
    %v6171 = vpop.f32.mrf.mxu0
    %v6172 = vadd.f32 0.0, %v6171
    %v6173 = vpop.f32.mrf.mxu0
    %v6174 = vadd.f32 0.0, %v6173
    %6175 = vmatmul.bf16.gmra.mxu0 %v5414
    %v6176 = vpop.f32.mrf.mxu0
    %v6177 = vadd.f32 0.0, %v6176
    %v6178 = vpop.f32.mrf.mxu0
    %v6179 = vadd.f32 0.0, %v6178
    %6180 = vmatmul.bf16.gmra.mxu0 %v5415
    %v6181 = vpop.f32.mrf.mxu0
    %v6182 = vadd.f32 0.0, %v6181
    %v6183 = vpop.f32.mrf.mxu0
    %v6184 = vadd.f32 0.0, %v6183
    %6185 = vmatmul.bf16.gmra.mxu0 %v5416
    %v6186 = vpop.f32.mrf.mxu0
    %v6187 = vadd.f32 0.0, %v6186
    %v6188 = vpop.f32.mrf.mxu0
    %v6189 = vadd.f32 0.0, %v6188
    %6190 = vmatmul.bf16.gmra.mxu0 %v5417
    %v6191 = vpop.f32.mrf.mxu0
    %v6192 = vadd.f32 0.0, %v6191
    %v6193 = vpop.f32.mrf.mxu0
    %v6194 = vadd.f32 0.0, %v6193
    %6195 = vmatmul.bf16.gmra.mxu0 %v5418
    %v6196 = vpop.f32.mrf.mxu0
    %v6197 = vadd.f32 0.0, %v6196
    %v6198 = vpop.f32.mrf.mxu0
    %v6199 = vadd.f32 0.0, %v6198
    %6200 = vmatmul.bf16.gmra.mxu0 %v5419
    %v6201 = vpop.f32.mrf.mxu0
    %v6202 = vadd.f32 0.0, %v6201
    %v6203 = vpop.f32.mrf.mxu0
    %v6204 = vadd.f32 0.0, %v6203
    %6205 = vmatmul.bf16.gmra.mxu0 %v5420
    %v6206 = vpop.f32.mrf.mxu0
    %v6207 = vadd.f32 0.0, %v6206
    %v6208 = vpop.f32.mrf.mxu0
    %v6209 = vadd.f32 0.0, %v6208
    %6210 = vdwg.mxu0
    %v6211 = vmax.f32 %v5687, 0.0
    %v6212 = vmax.f32 %v5776, 0.0
    %v6213 = vmax.f32 %v5689, 0.0
    %v6214 = vmax.f32 %v5778, 0.0
    %v6215 = vmax.f32 %v5692, 0.0
    %v6216 = vmax.f32 %v5781, 0.0
    %v6217 = vmax.f32 %v5694, 0.0
    %v6218 = vmax.f32 %v5783, 0.0
    %v6219 = vmax.f32 %v5697, 0.0
    %v6220 = vmax.f32 %v5786, 0.0
    %v6221 = vmax.f32 %v5699, 0.0
    %v6222 = vmax.f32 %v5788, 0.0
    %v6223 = vmax.f32 %v5702, 0.0
    %v6224 = vmax.f32 %v5791, 0.0
    %v6225 = vmax.f32 %v5704, 0.0
    %v6226 = vmax.f32 %v5793, 0.0
    %v6227 = vmax.f32 %v5707, 0.0
    %v6228 = vmax.f32 %v5796, 0.0
    %v6229 = vmax.f32 %v5709, 0.0
    %v6230 = vmax.f32 %v5798, 0.0
    %v6231 = vmax.f32 %v5712, 0.0
    %v6232 = vmax.f32 %v5801, 0.0
    %v6233 = vmax.f32 %v5714, 0.0
    %v6234 = vmax.f32 %v5803, 0.0
    %v6235 = vmax.f32 %v5717, 0.0
    %v6236 = vmax.f32 %v5806, 0.0
    %v6237 = vmax.f32 %v5719, 0.0
    %v6238 = vmax.f32 %v5808, 0.0
    %v6239 = vmax.f32 %v5722, 0.0
    %v6240 = vmax.f32 %v5811, 0.0
    %v6241 = vmax.f32 %v5724, 0.0
    %v6242 = vmax.f32 %v5813, 0.0
    %v6243 = vmax.f32 %v5727, 0.0
    %v6244 = vmax.f32 %v5816, 0.0
    %v6245 = vmax.f32 %v5729, 0.0
    %v6246 = vmax.f32 %v5818, 0.0
    %v6247 = vmax.f32 %v5732, 0.0
    %v6248 = vmax.f32 %v5821, 0.0
    %v6249 = vmax.f32 %v5734, 0.0
    %v6250 = vmax.f32 %v5823, 0.0
    %v6251 = vmax.f32 %v5737, 0.0
    %v6252 = vmax.f32 %v5826, 0.0
    %v6253 = vmax.f32 %v5739, 0.0
    %v6254 = vmax.f32 %v5828, 0.0
    %v6255 = vmax.f32 %v5742, 0.0
    %v6256 = vmax.f32 %v5831, 0.0
    %v6257 = vmax.f32 %v5744, 0.0
    %v6258 = vmax.f32 %v5833, 0.0
    %v6259 = vmax.f32 %v5747, 0.0
    %v6260 = vmax.f32 %v5836, 0.0
    %v6261 = vmax.f32 %v5749, 0.0
    %v6262 = vmax.f32 %v5838, 0.0
    %v6263 = vmax.f32 %v5752, 0.0
    %v6264 = vmax.f32 %v5841, 0.0
    %v6265 = vmax.f32 %v5754, 0.0
    %v6266 = vmax.f32 %v5843, 0.0
    %v6267 = vmax.f32 %v5757, 0.0
    %v6268 = vmax.f32 %v5846, 0.0
    %v6269 = vmax.f32 %v5759, 0.0
    %v6270 = vmax.f32 %v5848, 0.0
    %v6271 = vmax.f32 %v5762, 0.0
    %v6272 = vmax.f32 %v5851, 0.0
    %v6273 = vmax.f32 %v5764, 0.0
    %v6274 = vmax.f32 %v5853, 0.0
    %v6275 = vadd.f32 %v6211, 0.001
    %v6276 = vadd.f32 %v6212, 0.001
    %v6277 = vadd.f32 %v6213, 0.001
    %v6278 = vadd.f32 %v6214, 0.001
    %v6279 = vadd.f32 %v6215, 0.001
    %v6280 = vadd.f32 %v6216, 0.001
    %v6281 = vadd.f32 %v6217, 0.001
    %v6282 = vadd.f32 %v6218, 0.001
    %v6283 = vadd.f32 %v6219, 0.001
    %v6284 = vadd.f32 %v6220, 0.001
    %v6285 = vadd.f32 %v6221, 0.001
    %v6286 = vadd.f32 %v6222, 0.001
    %v6287 = vadd.f32 %v6223, 0.001
    %v6288 = vadd.f32 %v6224, 0.001
    %v6289 = vadd.f32 %v6225, 0.001
    %v6290 = vadd.f32 %v6226, 0.001
    %v6291 = vadd.f32 %v6227, 0.001
    %v6292 = vadd.f32 %v6228, 0.001
    %v6293 = vadd.f32 %v6229, 0.001
    %v6294 = vadd.f32 %v6230, 0.001
    %v6295 = vadd.f32 %v6231, 0.001
    %v6296 = vadd.f32 %v6232, 0.001
    %v6297 = vadd.f32 %v6233, 0.001
    %v6298 = vadd.f32 %v6234, 0.001
    %v6299 = vadd.f32 %v6235, 0.001
    %v6300 = vadd.f32 %v6236, 0.001
    %v6301 = vadd.f32 %v6237, 0.001
    %v6302 = vadd.f32 %v6238, 0.001
    %v6303 = vadd.f32 %v6239, 0.001
    %v6304 = vadd.f32 %v6240, 0.001
    %v6305 = vadd.f32 %v6241, 0.001
    %v6306 = vadd.f32 %v6242, 0.001
    %v6307 = vadd.f32 %v6243, 0.001
    %v6308 = vadd.f32 %v6244, 0.001
    %v6309 = vadd.f32 %v6245, 0.001
    %v6310 = vadd.f32 %v6246, 0.001
    %v6311 = vadd.f32 %v6247, 0.001
    %v6312 = vadd.f32 %v6248, 0.001
    %v6313 = vadd.f32 %v6249, 0.001
    %v6314 = vadd.f32 %v6250, 0.001
    %v6315 = vadd.f32 %v6251, 0.001
    %v6316 = vadd.f32 %v6252, 0.001
    %v6317 = vadd.f32 %v6253, 0.001
    %v6318 = vadd.f32 %v6254, 0.001
    %v6319 = vadd.f32 %v6255, 0.001
    %v6320 = vadd.f32 %v6256, 0.001
    %v6321 = vadd.f32 %v6257, 0.001
    %v6322 = vadd.f32 %v6258, 0.001
    %v6323 = vadd.f32 %v6259, 0.001
    %v6324 = vadd.f32 %v6260, 0.001
    %v6325 = vadd.f32 %v6261, 0.001
    %v6326 = vadd.f32 %v6262, 0.001
    %v6327 = vadd.f32 %v6263, 0.001
    %v6328 = vadd.f32 %v6264, 0.001
    %v6329 = vadd.f32 %v6265, 0.001
    %v6330 = vadd.f32 %v6266, 0.001
    %v6331 = vadd.f32 %v6267, 0.001
    %v6332 = vadd.f32 %v6268, 0.001
    %v6333 = vadd.f32 %v6269, 0.001
    %v6334 = vadd.f32 %v6270, 0.001
    %v6335 = vadd.f32 %v6271, 0.001
    %v6336 = vadd.f32 %v6272, 0.001
    %v6337 = vadd.f32 %v6273, 0.001
    %v6338 = vadd.f32 %v6274, 0.001
    %v6339 = vmax.f32 %v5865, 0.0
    %v6340 = vmax.f32 %v5954, 0.0
    %v6341 = vmax.f32 %v5867, 0.0
    %v6342 = vmax.f32 %v5956, 0.0
    %v6343 = vmax.f32 %v5870, 0.0
    %v6344 = vmax.f32 %v5959, 0.0
    %v6345 = vmax.f32 %v5872, 0.0
    %v6346 = vmax.f32 %v5961, 0.0
    %v6347 = vmax.f32 %v5875, 0.0
    %v6348 = vmax.f32 %v5964, 0.0
    %v6349 = vmax.f32 %v5877, 0.0
    %v6350 = vmax.f32 %v5966, 0.0
    %v6351 = vmax.f32 %v5880, 0.0
    %v6352 = vmax.f32 %v5969, 0.0
    %v6353 = vmax.f32 %v5882, 0.0
    %v6354 = vmax.f32 %v5971, 0.0
    %v6355 = vmax.f32 %v5885, 0.0
    %v6356 = vmax.f32 %v5974, 0.0
    %v6357 = vmax.f32 %v5887, 0.0
    %v6358 = vmax.f32 %v5976, 0.0
    %v6359 = vmax.f32 %v5890, 0.0
    %v6360 = vmax.f32 %v5979, 0.0
    %v6361 = vmax.f32 %v5892, 0.0
    %v6362 = vmax.f32 %v5981, 0.0
    %v6363 = vmax.f32 %v5895, 0.0
    %v6364 = vmax.f32 %v5984, 0.0
    %v6365 = vmax.f32 %v5897, 0.0
    %v6366 = vmax.f32 %v5986, 0.0
    %v6367 = vmax.f32 %v5900, 0.0
    %v6368 = vmax.f32 %v5989, 0.0
    %v6369 = vmax.f32 %v5902, 0.0
    %v6370 = vmax.f32 %v5991, 0.0
    %v6371 = vmax.f32 %v5905, 0.0
    %v6372 = vmax.f32 %v5994, 0.0
    %v6373 = vmax.f32 %v5907, 0.0
    %v6374 = vmax.f32 %v5996, 0.0
    %v6375 = vmax.f32 %v5910, 0.0
    %v6376 = vmax.f32 %v5999, 0.0
    %v6377 = vmax.f32 %v5912, 0.0
    %v6378 = vmax.f32 %v6001, 0.0
    %v6379 = vmax.f32 %v5915, 0.0
    %v6380 = vmax.f32 %v6004, 0.0
    %v6381 = vmax.f32 %v5917, 0.0
    %v6382 = vmax.f32 %v6006, 0.0
    %v6383 = vmax.f32 %v5920, 0.0
    %v6384 = vmax.f32 %v6009, 0.0
    %v6385 = vmax.f32 %v5922, 0.0
    %v6386 = vmax.f32 %v6011, 0.0
    %v6387 = vmax.f32 %v5925, 0.0
    %v6388 = vmax.f32 %v6014, 0.0
    %v6389 = vmax.f32 %v5927, 0.0
    %v6390 = vmax.f32 %v6016, 0.0
    %v6391 = vmax.f32 %v5930, 0.0
    %v6392 = vmax.f32 %v6019, 0.0
    %v6393 = vmax.f32 %v5932, 0.0
    %v6394 = vmax.f32 %v6021, 0.0
    %v6395 = vmax.f32 %v5935, 0.0
    %v6396 = vmax.f32 %v6024, 0.0
    %v6397 = vmax.f32 %v5937, 0.0
    %v6398 = vmax.f32 %v6026, 0.0
    %v6399 = vmax.f32 %v5940, 0.0
    %v6400 = vmax.f32 %v6029, 0.0
    %v6401 = vmax.f32 %v5942, 0.0
    %v6402 = vmax.f32 %v6031, 0.0
    %v6403 = vadd.f32 %v6339, 0.001
    %v6404 = vadd.f32 %v6340, 0.001
    %v6405 = vadd.f32 %v6341, 0.001
    %v6406 = vadd.f32 %v6342, 0.001
    %v6407 = vadd.f32 %v6343, 0.001
    %v6408 = vadd.f32 %v6344, 0.001
    %v6409 = vadd.f32 %v6345, 0.001
    %v6410 = vadd.f32 %v6346, 0.001
    %v6411 = vadd.f32 %v6347, 0.001
    %v6412 = vadd.f32 %v6348, 0.001
    %v6413 = vadd.f32 %v6349, 0.001
    %v6414 = vadd.f32 %v6350, 0.001
    %v6415 = vadd.f32 %v6351, 0.001
    %v6416 = vadd.f32 %v6352, 0.001
    %v6417 = vadd.f32 %v6353, 0.001
    %v6418 = vadd.f32 %v6354, 0.001
    %v6419 = vadd.f32 %v6355, 0.001
    %v6420 = vadd.f32 %v6356, 0.001
    %v6421 = vadd.f32 %v6357, 0.001
    %v6422 = vadd.f32 %v6358, 0.001
    %v6423 = vadd.f32 %v6359, 0.001
    %v6424 = vadd.f32 %v6360, 0.001
    %v6425 = vadd.f32 %v6361, 0.001
    %v6426 = vadd.f32 %v6362, 0.001
    %v6427 = vadd.f32 %v6363, 0.001
    %v6428 = vadd.f32 %v6364, 0.001
    %v6429 = vadd.f32 %v6365, 0.001
    %v6430 = vadd.f32 %v6366, 0.001
    %v6431 = vadd.f32 %v6367, 0.001
    %v6432 = vadd.f32 %v6368, 0.001
    %v6433 = vadd.f32 %v6369, 0.001
    %v6434 = vadd.f32 %v6370, 0.001
    %v6435 = vadd.f32 %v6371, 0.001
    %v6436 = vadd.f32 %v6372, 0.001
    %v6437 = vadd.f32 %v6373, 0.001
    %v6438 = vadd.f32 %v6374, 0.001
    %v6439 = vadd.f32 %v6375, 0.001
    %v6440 = vadd.f32 %v6376, 0.001
    %v6441 = vadd.f32 %v6377, 0.001
    %v6442 = vadd.f32 %v6378, 0.001
    %v6443 = vadd.f32 %v6379, 0.001
    %v6444 = vadd.f32 %v6380, 0.001
    %v6445 = vadd.f32 %v6381, 0.001
    %v6446 = vadd.f32 %v6382, 0.001
    %v6447 = vadd.f32 %v6383, 0.001
    %v6448 = vadd.f32 %v6384, 0.001
    %v6449 = vadd.f32 %v6385, 0.001
    %v6450 = vadd.f32 %v6386, 0.001
    %v6451 = vadd.f32 %v6387, 0.001
    %v6452 = vadd.f32 %v6388, 0.001
    %v6453 = vadd.f32 %v6389, 0.001
    %v6454 = vadd.f32 %v6390, 0.001
    %v6455 = vadd.f32 %v6391, 0.001
    %v6456 = vadd.f32 %v6392, 0.001
    %v6457 = vadd.f32 %v6393, 0.001
    %v6458 = vadd.f32 %v6394, 0.001
    %v6459 = vadd.f32 %v6395, 0.001
    %v6460 = vadd.f32 %v6396, 0.001
    %v6461 = vadd.f32 %v6397, 0.001
    %v6462 = vadd.f32 %v6398, 0.001
    %v6463 = vadd.f32 %v6399, 0.001
    %v6464 = vadd.f32 %v6400, 0.001
    %v6465 = vadd.f32 %v6401, 0.001
    %v6466 = vadd.f32 %v6402, 0.001
    %6467 = vxpose.xlu0.b32.start [1/16] %v6403, 128
    %6468 = vxpose.xlu0.b32.cont [2/16] %v6405, 128
    %6469 = vxpose.xlu0.b32.cont [3/16] %v6407, 128
    %6470 = vxpose.xlu0.b32.cont [4/16] %v6409, 128
    %6471 = vxpose.xlu0.b32.cont [5/16] %v6411, 128
    %6472 = vxpose.xlu0.b32.cont [6/16] %v6413, 128
    %6473 = vxpose.xlu0.b32.cont [7/16] %v6415, 128
    %6474 = vxpose.xlu0.b32.cont [8/16] %v6417, 128
    %6475 = vxpose.xlu0.b32.cont [9/16] %v6419, 128
    %6476 = vxpose.xlu0.b32.cont [10/16] %v6421, 128
    %6477 = vxpose.xlu0.b32.cont [11/16] %v6423, 128
    %6478 = vxpose.xlu0.b32.cont [12/16] %v6425, 128
    %6479 = vxpose.xlu0.b32.cont [13/16] %v6427, 128
    %6480 = vxpose.xlu0.b32.cont [14/16] %v6429, 128
    %6481 = vxpose.xlu0.b32.cont [15/16] %v6431, 128
    %6482 = vxpose.xlu0.b32.end [16/16] %v6433, 128
    %v6483 = vpop.trf.xlu0
    %v6484 = vpop.trf.xlu0
    %v6485 = vpop.trf.xlu0
    %v6486 = vpop.trf.xlu0
    %v6487 = vpop.trf.xlu0
    %v6488 = vpop.trf.xlu0
    %v6489 = vpop.trf.xlu0
    %v6490 = vpop.trf.xlu0
    %v6491 = vpop.trf.xlu0
    %v6492 = vpop.trf.xlu0
    %v6493 = vpop.trf.xlu0
    %v6494 = vpop.trf.xlu0
    %v6495 = vpop.trf.xlu0
    %v6496 = vpop.trf.xlu0
    %v6497 = vpop.trf.xlu0
    %v6498 = vpop.trf.xlu0
    %6499 = vxpose.xlu0.b32.start [1/16] %v6404, 128
    %6500 = vxpose.xlu0.b32.cont [2/16] %v6406, 128
    %6501 = vxpose.xlu0.b32.cont [3/16] %v6408, 128
    %6502 = vxpose.xlu0.b32.cont [4/16] %v6410, 128
    %6503 = vxpose.xlu0.b32.cont [5/16] %v6412, 128
    %6504 = vxpose.xlu0.b32.cont [6/16] %v6414, 128
    %6505 = vxpose.xlu0.b32.cont [7/16] %v6416, 128
    %6506 = vxpose.xlu0.b32.cont [8/16] %v6418, 128
    %6507 = vxpose.xlu0.b32.cont [9/16] %v6420, 128
    %6508 = vxpose.xlu0.b32.cont [10/16] %v6422, 128
    %6509 = vxpose.xlu0.b32.cont [11/16] %v6424, 128
    %6510 = vxpose.xlu0.b32.cont [12/16] %v6426, 128
    %6511 = vxpose.xlu0.b32.cont [13/16] %v6428, 128
    %6512 = vxpose.xlu0.b32.cont [14/16] %v6430, 128
    %6513 = vxpose.xlu0.b32.cont [15/16] %v6432, 128
    %6514 = vxpose.xlu0.b32.end [16/16] %v6434, 128
    %v6515 = vpop.trf.xlu0
    %v6516 = vpop.trf.xlu0
    %v6517 = vpop.trf.xlu0
    %v6518 = vpop.trf.xlu0
    %v6519 = vpop.trf.xlu0
    %v6520 = vpop.trf.xlu0
    %v6521 = vpop.trf.xlu0
    %v6522 = vpop.trf.xlu0
    %v6523 = vpop.trf.xlu0
    %v6524 = vpop.trf.xlu0
    %v6525 = vpop.trf.xlu0
    %v6526 = vpop.trf.xlu0
    %v6527 = vpop.trf.xlu0
    %v6528 = vpop.trf.xlu0
    %v6529 = vpop.trf.xlu0
    %v6530 = vpop.trf.xlu0
    %6531 = vxpose.xlu0.b32.start [1/16] %v6435, 128
    %6532 = vxpose.xlu0.b32.cont [2/16] %v6437, 128
    %6533 = vxpose.xlu0.b32.cont [3/16] %v6439, 128
    %6534 = vxpose.xlu0.b32.cont [4/16] %v6441, 128
    %6535 = vxpose.xlu0.b32.cont [5/16] %v6443, 128
    %6536 = vxpose.xlu0.b32.cont [6/16] %v6445, 128
    %6537 = vxpose.xlu0.b32.cont [7/16] %v6447, 128
    %6538 = vxpose.xlu0.b32.cont [8/16] %v6449, 128
    %6539 = vxpose.xlu0.b32.cont [9/16] %v6451, 128
    %6540 = vxpose.xlu0.b32.cont [10/16] %v6453, 128
    %6541 = vxpose.xlu0.b32.cont [11/16] %v6455, 128
    %6542 = vxpose.xlu0.b32.cont [12/16] %v6457, 128
    %6543 = vxpose.xlu0.b32.cont [13/16] %v6459, 128
    %6544 = vxpose.xlu0.b32.cont [14/16] %v6461, 128
    %6545 = vxpose.xlu0.b32.cont [15/16] %v6463, 128
    %6546 = vxpose.xlu0.b32.end [16/16] %v6465, 128
    %v6547 = vpop.trf.xlu0
    %v6548 = vpop.trf.xlu0
    %v6549 = vpop.trf.xlu0
    %v6550 = vpop.trf.xlu0
    %v6551 = vpop.trf.xlu0
    %v6552 = vpop.trf.xlu0
    %v6553 = vpop.trf.xlu0
    %v6554 = vpop.trf.xlu0
    %v6555 = vpop.trf.xlu0
    %v6556 = vpop.trf.xlu0
    %v6557 = vpop.trf.xlu0
    %v6558 = vpop.trf.xlu0
    %v6559 = vpop.trf.xlu0
    %v6560 = vpop.trf.xlu0
    %v6561 = vpop.trf.xlu0
    %v6562 = vpop.trf.xlu0
    %6563 = vxpose.xlu0.b32.start [1/16] %v6436, 128
    %6564 = vxpose.xlu0.b32.cont [2/16] %v6438, 128
    %6565 = vxpose.xlu0.b32.cont [3/16] %v6440, 128
    %6566 = vxpose.xlu0.b32.cont [4/16] %v6442, 128
    %6567 = vxpose.xlu0.b32.cont [5/16] %v6444, 128
    %6568 = vxpose.xlu0.b32.cont [6/16] %v6446, 128
    %6569 = vxpose.xlu0.b32.cont [7/16] %v6448, 128
    %6570 = vxpose.xlu0.b32.cont [8/16] %v6450, 128
    %6571 = vxpose.xlu0.b32.cont [9/16] %v6452, 128
    %6572 = vxpose.xlu0.b32.cont [10/16] %v6454, 128
    %6573 = vxpose.xlu0.b32.cont [11/16] %v6456, 128
    %6574 = vxpose.xlu0.b32.cont [12/16] %v6458, 128
    %6575 = vxpose.xlu0.b32.cont [13/16] %v6460, 128
    %6576 = vxpose.xlu0.b32.cont [14/16] %v6462, 128
    %6577 = vxpose.xlu0.b32.cont [15/16] %v6464, 128
    %6578 = vxpose.xlu0.b32.end [16/16] %v6466, 128
    %v6579 = vpop.trf.xlu0
    %v6580 = vpop.trf.xlu0
    %v6581 = vpop.trf.xlu0
    %v6582 = vpop.trf.xlu0
    %v6583 = vpop.trf.xlu0
    %v6584 = vpop.trf.xlu0
    %v6585 = vpop.trf.xlu0
    %v6586 = vpop.trf.xlu0
    %v6587 = vpop.trf.xlu0
    %v6588 = vpop.trf.xlu0
    %v6589 = vpop.trf.xlu0
    %v6590 = vpop.trf.xlu0
    %v6591 = vpop.trf.xlu0
    %v6592 = vpop.trf.xlu0
    %v6593 = vpop.trf.xlu0
    %v6594 = vpop.trf.xlu0
    %v6595 = vadd.f32 %v6403, %v6405
    %v6596 = vadd.f32 %v6595, %v6407
    %v6597 = vadd.f32 %v6596, %v6409
    %v6598 = vadd.f32 %v6597, %v6411
    %v6599 = vadd.f32 %v6598, %v6413
    %v6600 = vadd.f32 %v6599, %v6415
    %v6601 = vadd.f32 %v6600, %v6417
    %v6602 = vadd.f32 %v6601, %v6419
    %v6603 = vadd.f32 %v6602, %v6421
    %v6604 = vadd.f32 %v6603, %v6423
    %v6605 = vadd.f32 %v6604, %v6425
    %v6606 = vadd.f32 %v6605, %v6427
    %v6607 = vadd.f32 %v6606, %v6429
    %v6608 = vadd.f32 %v6607, %v6431
    %v6609 = vadd.f32 %v6608, %v6433
    %v6610 = vadd.f32 %v6609, %v6435
    %v6611 = vadd.f32 %v6610, %v6437
    %v6612 = vadd.f32 %v6611, %v6439
    %v6613 = vadd.f32 %v6612, %v6441
    %v6614 = vadd.f32 %v6613, %v6443
    %v6615 = vadd.f32 %v6614, %v6445
    %v6616 = vadd.f32 %v6615, %v6447
    %v6617 = vadd.f32 %v6616, %v6449
    %v6618 = vadd.f32 %v6617, %v6451
    %v6619 = vadd.f32 %v6618, %v6453
    %v6620 = vadd.f32 %v6619, %v6455
    %v6621 = vadd.f32 %v6620, %v6457
    %v6622 = vadd.f32 %v6621, %v6459
    %v6623 = vadd.f32 %v6622, %v6461
    %v6624 = vadd.f32 %v6623, %v6463
    %v6625 = vadd.f32 %v6624, %v6465
    %v6626 = vrot.slane %v6625, 4
    %v6627 = vadd.f32 %v6625, %v6626
    %v6628 = vrot.slane %v6627, 2
    %v6629 = vadd.f32 %v6627, %v6628
    %v6630 = vrot.slane %v6629, 1
    %v6631 = vadd.f32 %v6629, %v6630
    %v6632 = vmul.f32 %v6275, %v6631
    %v6633 = vmul.f32 %v6277, %v6631
    %v6634 = vmul.f32 %v6279, %v6631
    %v6635 = vmul.f32 %v6281, %v6631
    %v6636 = vmul.f32 %v6283, %v6631
    %v6637 = vmul.f32 %v6285, %v6631
    %v6638 = vmul.f32 %v6287, %v6631
    %v6639 = vmul.f32 %v6289, %v6631
    %v6640 = vmul.f32 %v6291, %v6631
    %v6641 = vmul.f32 %v6293, %v6631
    %v6642 = vmul.f32 %v6295, %v6631
    %v6643 = vmul.f32 %v6297, %v6631
    %v6644 = vmul.f32 %v6299, %v6631
    %v6645 = vmul.f32 %v6301, %v6631
    %v6646 = vmul.f32 %v6303, %v6631
    %v6647 = vmul.f32 %v6305, %v6631
    %v6648 = vmul.f32 %v6307, %v6631
    %v6649 = vmul.f32 %v6309, %v6631
    %v6650 = vmul.f32 %v6311, %v6631
    %v6651 = vmul.f32 %v6313, %v6631
    %v6652 = vmul.f32 %v6315, %v6631
    %v6653 = vmul.f32 %v6317, %v6631
    %v6654 = vmul.f32 %v6319, %v6631
    %v6655 = vmul.f32 %v6321, %v6631
    %v6656 = vmul.f32 %v6323, %v6631
    %v6657 = vmul.f32 %v6325, %v6631
    %v6658 = vmul.f32 %v6327, %v6631
    %v6659 = vmul.f32 %v6329, %v6631
    %v6660 = vmul.f32 %v6331, %v6631
    %v6661 = vmul.f32 %v6333, %v6631
    %v6662 = vmul.f32 %v6335, %v6631
    %v6663 = vmul.f32 %v6337, %v6631
    %6664 = vadd.xlane.f32.xlu0 %v6632
    %v6665 = vpop.xlane.xlu0 %6664
    %6666 = vadd.xlane.f32.xlu0 %v6633
    %v6667 = vpop.xlane.xlu0 %6666
    %6668 = vadd.xlane.f32.xlu0 %v6634
    %v6669 = vpop.xlane.xlu0 %6668
    %6670 = vadd.xlane.f32.xlu0 %v6635
    %v6671 = vpop.xlane.xlu0 %6670
    %6672 = vadd.xlane.f32.xlu0 %v6636
    %v6673 = vpop.xlane.xlu0 %6672
    %6674 = vadd.xlane.f32.xlu0 %v6637
    %v6675 = vpop.xlane.xlu0 %6674
    %6676 = vadd.xlane.f32.xlu0 %v6638
    %v6677 = vpop.xlane.xlu0 %6676
    %6678 = vadd.xlane.f32.xlu0 %v6639
    %v6679 = vpop.xlane.xlu0 %6678
    %6680 = vadd.xlane.f32.xlu0 %v6640
    %v6681 = vpop.xlane.xlu0 %6680
    %6682 = vadd.xlane.f32.xlu0 %v6641
    %v6683 = vpop.xlane.xlu0 %6682
    %6684 = vadd.xlane.f32.xlu0 %v6642
    %v6685 = vpop.xlane.xlu0 %6684
    %6686 = vadd.xlane.f32.xlu0 %v6643
    %v6687 = vpop.xlane.xlu0 %6686
    %6688 = vadd.xlane.f32.xlu0 %v6644
    %v6689 = vpop.xlane.xlu0 %6688
    %6690 = vadd.xlane.f32.xlu0 %v6645
    %v6691 = vpop.xlane.xlu0 %6690
    %6692 = vadd.xlane.f32.xlu0 %v6646
    %v6693 = vpop.xlane.xlu0 %6692
    %6694 = vadd.xlane.f32.xlu0 %v6647
    %v6695 = vpop.xlane.xlu0 %6694
    %6696 = vadd.xlane.f32.xlu0 %v6648
    %v6697 = vpop.xlane.xlu0 %6696
    %6698 = vadd.xlane.f32.xlu0 %v6649
    %v6699 = vpop.xlane.xlu0 %6698
    %6700 = vadd.xlane.f32.xlu0 %v6650
    %v6701 = vpop.xlane.xlu0 %6700
    %6702 = vadd.xlane.f32.xlu0 %v6651
    %v6703 = vpop.xlane.xlu0 %6702
    %6704 = vadd.xlane.f32.xlu0 %v6652
    %v6705 = vpop.xlane.xlu0 %6704
    %6706 = vadd.xlane.f32.xlu0 %v6653
    %v6707 = vpop.xlane.xlu0 %6706
    %6708 = vadd.xlane.f32.xlu0 %v6654
    %v6709 = vpop.xlane.xlu0 %6708
    %6710 = vadd.xlane.f32.xlu0 %v6655
    %v6711 = vpop.xlane.xlu0 %6710
    %6712 = vadd.xlane.f32.xlu0 %v6656
    %v6713 = vpop.xlane.xlu0 %6712
    %6714 = vadd.xlane.f32.xlu0 %v6657
    %v6715 = vpop.xlane.xlu0 %6714
    %6716 = vadd.xlane.f32.xlu0 %v6658
    %v6717 = vpop.xlane.xlu0 %6716
    %6718 = vadd.xlane.f32.xlu0 %v6659
    %v6719 = vpop.xlane.xlu0 %6718
    %6720 = vadd.xlane.f32.xlu0 %v6660
    %v6721 = vpop.xlane.xlu0 %6720
    %6722 = vadd.xlane.f32.xlu0 %v6661
    %v6723 = vpop.xlane.xlu0 %6722
    %6724 = vadd.xlane.f32.xlu0 %v6662
    %v6725 = vpop.xlane.xlu0 %6724
    %6726 = vadd.xlane.f32.xlu0 %v6663
    %v6727 = vpop.xlane.xlu0 %6726
    %v6728 = vrcp.pop %v6665
    %v6729 = vrcp.pop %v6667
    %v6730 = vrcp.pop %v6669
    %v6731 = vrcp.pop %v6671
    %v6732 = vrcp.pop %v6673
    %v6733 = vrcp.pop %v6675
    %v6734 = vrcp.pop %v6677
    %v6735 = vrcp.pop %v6679
    %v6736 = vrcp.pop %v6681
    %v6737 = vrcp.pop %v6683
    %v6738 = vrcp.pop %v6685
    %v6739 = vrcp.pop %v6687
    %v6740 = vrcp.pop %v6689
    %v6741 = vrcp.pop %v6691
    %v6742 = vrcp.pop %v6693
    %v6743 = vrcp.pop %v6695
    %v6744 = vrcp.pop %v6697
    %v6745 = vrcp.pop %v6699
    %v6746 = vrcp.pop %v6701
    %v6747 = vrcp.pop %v6703
    %v6748 = vrcp.pop %v6705
    %v6749 = vrcp.pop %v6707
    %v6750 = vrcp.pop %v6709
    %v6751 = vrcp.pop %v6711
    %v6752 = vrcp.pop %v6713
    %v6753 = vrcp.pop %v6715
    %v6754 = vrcp.pop %v6717
    %v6755 = vrcp.pop %v6719
    %v6756 = vrcp.pop %v6721
    %v6757 = vrcp.pop %v6723
    %v6758 = vrcp.pop %v6725
    %v6759 = vrcp.pop %v6727
    %v6760 = vpack.c.bf16 %v6484, %v6483
    %v6761 = vpack.c.bf16 %v6548, %v6547
    %v6762 = vpack.c.bf16 %v6486, %v6485
    %v6763 = vpack.c.bf16 %v6550, %v6549
    %v6764 = vpack.c.bf16 %v6488, %v6487
    %v6765 = vpack.c.bf16 %v6552, %v6551
    %v6766 = vpack.c.bf16 %v6490, %v6489
    %v6767 = vpack.c.bf16 %v6554, %v6553
    %v6768 = vpack.c.bf16 %v6492, %v6491
    %v6769 = vpack.c.bf16 %v6556, %v6555
    %v6770 = vpack.c.bf16 %v6494, %v6493
    %v6771 = vpack.c.bf16 %v6558, %v6557
    %v6772 = vpack.c.bf16 %v6496, %v6495
    %v6773 = vpack.c.bf16 %v6560, %v6559
    %v6774 = vpack.c.bf16 %v6498, %v6497
    %v6775 = vpack.c.bf16 %v6562, %v6561
    %v6776 = vpack.c.bf16 %v6045, %v6043
    %v6777 = vpack.c.bf16 %v6050, %v6048
    %v6778 = vpack.c.bf16 %v6055, %v6053
    %v6779 = vpack.c.bf16 %v6060, %v6058
    %v6780 = vpack.c.bf16 %v6065, %v6063
    %v6781 = vpack.c.bf16 %v6070, %v6068
    %v6782 = vpack.c.bf16 %v6075, %v6073
    %v6783 = vpack.c.bf16 %v6080, %v6078
    %v6784 = vpack.c.bf16 %v6085, %v6083
    %v6785 = vpack.c.bf16 %v6090, %v6088
    %v6786 = vpack.c.bf16 %v6095, %v6093
    %v6787 = vpack.c.bf16 %v6100, %v6098
    %v6788 = vpack.c.bf16 %v6105, %v6103
    %v6789 = vpack.c.bf16 %v6110, %v6108
    %v6790 = vpack.c.bf16 %v6115, %v6113
    %v6791 = vpack.c.bf16 %v6120, %v6118
    %6792 = vmatpush.bf16.msra.mxu0 %v6783
    %6793 = vmatpush.bf16.msra.mxu0 %v6782
    %6794 = vmatpush.bf16.msra.mxu0 %v6781
    %6795 = vmatpush.bf16.msra.mxu0 %v6780
    %6796 = vmatpush.bf16.msra.mxu0 %v6779
    %6797 = vmatpush.bf16.msra.mxu0 %v6778
    %6798 = vmatpush.bf16.msra.mxu0 %v6777
    %6799 = vmatpush.bf16.msra.mxu0 %v6776
    %6800 = vmatmul.bf16.gmra.mxu0 %v6760
    %v6801 = vpop.f32.mrf.mxu0
    %v6802 = vadd.f32 0.0, %v6801
    %v6803 = vpop.f32.mrf.mxu0
    %v6804 = vadd.f32 0.0, %v6803
    %6805 = vmatmul.bf16.gmra.mxu0 %v6762
    %v6806 = vpop.f32.mrf.mxu0
    %v6807 = vadd.f32 0.0, %v6806
    %v6808 = vpop.f32.mrf.mxu0
    %v6809 = vadd.f32 0.0, %v6808
    %6810 = vmatmul.bf16.gmra.mxu0 %v6764
    %v6811 = vpop.f32.mrf.mxu0
    %v6812 = vadd.f32 0.0, %v6811
    %v6813 = vpop.f32.mrf.mxu0
    %v6814 = vadd.f32 0.0, %v6813
    %6815 = vmatmul.bf16.gmra.mxu0 %v6766
    %v6816 = vpop.f32.mrf.mxu0
    %v6817 = vadd.f32 0.0, %v6816
    %v6818 = vpop.f32.mrf.mxu0
    %v6819 = vadd.f32 0.0, %v6818
    %6820 = vmatmul.bf16.gmra.mxu0 %v6768
    %v6821 = vpop.f32.mrf.mxu0
    %v6822 = vadd.f32 0.0, %v6821
    %v6823 = vpop.f32.mrf.mxu0
    %v6824 = vadd.f32 0.0, %v6823
    %6825 = vmatmul.bf16.gmra.mxu0 %v6770
    %v6826 = vpop.f32.mrf.mxu0
    %v6827 = vadd.f32 0.0, %v6826
    %v6828 = vpop.f32.mrf.mxu0
    %v6829 = vadd.f32 0.0, %v6828
    %6830 = vmatmul.bf16.gmra.mxu0 %v6772
    %v6831 = vpop.f32.mrf.mxu0
    %v6832 = vadd.f32 0.0, %v6831
    %v6833 = vpop.f32.mrf.mxu0
    %v6834 = vadd.f32 0.0, %v6833
    %6835 = vmatmul.bf16.gmra.mxu0 %v6774
    %v6836 = vpop.f32.mrf.mxu0
    %v6837 = vadd.f32 0.0, %v6836
    %v6838 = vpop.f32.mrf.mxu0
    %v6839 = vadd.f32 0.0, %v6838
    %6840 = vdwg.mxu0
    %6841 = vmatpush.bf16.msra.mxu0 %v6791
    %6842 = vmatpush.bf16.msra.mxu0 %v6790
    %6843 = vmatpush.bf16.msra.mxu0 %v6789
    %6844 = vmatpush.bf16.msra.mxu0 %v6788
    %6845 = vmatpush.bf16.msra.mxu0 %v6787
    %6846 = vmatpush.bf16.msra.mxu0 %v6786
    %6847 = vmatpush.bf16.msra.mxu0 %v6785
    %6848 = vmatpush.bf16.msra.mxu0 %v6784
    %6849 = vmatmul.bf16.gmra.mxu0 %v6761
    %v6850 = vpop.f32.mrf.mxu0
    %v6851 = vadd.f32 %v6802, %v6850
    %v6852 = vpop.f32.mrf.mxu0
    %v6853 = vadd.f32 %v6804, %v6852
    %6854 = vmatmul.bf16.gmra.mxu0 %v6763
    %v6855 = vpop.f32.mrf.mxu0
    %v6856 = vadd.f32 %v6807, %v6855
    %v6857 = vpop.f32.mrf.mxu0
    %v6858 = vadd.f32 %v6809, %v6857
    %6859 = vmatmul.bf16.gmra.mxu0 %v6765
    %v6860 = vpop.f32.mrf.mxu0
    %v6861 = vadd.f32 %v6812, %v6860
    %v6862 = vpop.f32.mrf.mxu0
    %v6863 = vadd.f32 %v6814, %v6862
    %6864 = vmatmul.bf16.gmra.mxu0 %v6767
    %v6865 = vpop.f32.mrf.mxu0
    %v6866 = vadd.f32 %v6817, %v6865
    %v6867 = vpop.f32.mrf.mxu0
    %v6868 = vadd.f32 %v6819, %v6867
    %6869 = vmatmul.bf16.gmra.mxu0 %v6769
    %v6870 = vpop.f32.mrf.mxu0
    %v6871 = vadd.f32 %v6822, %v6870
    %v6872 = vpop.f32.mrf.mxu0
    %v6873 = vadd.f32 %v6824, %v6872
    %6874 = vmatmul.bf16.gmra.mxu0 %v6771
    %v6875 = vpop.f32.mrf.mxu0
    %v6876 = vadd.f32 %v6827, %v6875
    %v6877 = vpop.f32.mrf.mxu0
    %v6878 = vadd.f32 %v6829, %v6877
    %6879 = vmatmul.bf16.gmra.mxu0 %v6773
    %v6880 = vpop.f32.mrf.mxu0
    %v6881 = vadd.f32 %v6832, %v6880
    %v6882 = vpop.f32.mrf.mxu0
    %v6883 = vadd.f32 %v6834, %v6882
    %6884 = vmatmul.bf16.gmra.mxu0 %v6775
    %v6885 = vpop.f32.mrf.mxu0
    %v6886 = vadd.f32 %v6837, %v6885
    %v6887 = vpop.f32.mrf.mxu0
    %v6888 = vadd.f32 %v6839, %v6887
    %6889 = vdwg.mxu0
    %v6890 = vpack.c.bf16 %v6277, %v6275
    %v6891 = vpack.c.bf16 %v6281, %v6279
    %v6892 = vpack.c.bf16 %v6285, %v6283
    %v6893 = vpack.c.bf16 %v6289, %v6287
    %v6894 = vpack.c.bf16 %v6293, %v6291
    %v6895 = vpack.c.bf16 %v6297, %v6295
    %v6896 = vpack.c.bf16 %v6301, %v6299
    %v6897 = vpack.c.bf16 %v6305, %v6303
    %v6898 = vpack.c.bf16 %v6309, %v6307
    %v6899 = vpack.c.bf16 %v6313, %v6311
    %v6900 = vpack.c.bf16 %v6317, %v6315
    %v6901 = vpack.c.bf16 %v6321, %v6319
    %v6902 = vpack.c.bf16 %v6325, %v6323
    %v6903 = vpack.c.bf16 %v6329, %v6327
    %v6904 = vpack.c.bf16 %v6333, %v6331
    %v6905 = vpack.c.bf16 %v6337, %v6335
    %v6906 = vpack.c.bf16 %v6853, %v6851
    %v6907 = vpack.c.bf16 %v6858, %v6856
    %v6908 = vpack.c.bf16 %v6863, %v6861
    %v6909 = vpack.c.bf16 %v6868, %v6866
    %v6910 = vpack.c.bf16 %v6873, %v6871
    %v6911 = vpack.c.bf16 %v6878, %v6876
    %v6912 = vpack.c.bf16 %v6883, %v6881
    %v6913 = vpack.c.bf16 %v6888, %v6886
    %6914 = vmatpush.bf16.msra.mxu0 %v6913
    %6915 = vmatpush.bf16.msra.mxu0 %v6912
    %6916 = vmatpush.bf16.msra.mxu0 %v6911
    %6917 = vmatpush.bf16.msra.mxu0 %v6910
    %6918 = vmatpush.bf16.msra.mxu0 %v6909
    %6919 = vmatpush.bf16.msra.mxu0 %v6908
    %6920 = vmatpush.bf16.msra.mxu0 %v6907
    %6921 = vmatpush.bf16.msra.mxu0 %v6906
    %6922 = vmatmul.bf16.gmra.mxu0 %v6890
    %v6923 = vpop.f32.mrf.mxu0
    %v6924 = vadd.f32 0.0, %v6923
    %v6925 = vpop.f32.mrf.mxu0
    %v6926 = vadd.f32 0.0, %v6925
    %6927 = vmatmul.bf16.gmra.mxu0 %v6891
    %v6928 = vpop.f32.mrf.mxu0
    %v6929 = vadd.f32 0.0, %v6928
    %v6930 = vpop.f32.mrf.mxu0
    %v6931 = vadd.f32 0.0, %v6930
    %6932 = vmatmul.bf16.gmra.mxu0 %v6892
    %v6933 = vpop.f32.mrf.mxu0
    %v6934 = vadd.f32 0.0, %v6933
    %v6935 = vpop.f32.mrf.mxu0
    %v6936 = vadd.f32 0.0, %v6935
    %6937 = vmatmul.bf16.gmra.mxu0 %v6893
    %v6938 = vpop.f32.mrf.mxu0
    %v6939 = vadd.f32 0.0, %v6938
    %v6940 = vpop.f32.mrf.mxu0
    %v6941 = vadd.f32 0.0, %v6940
    %6942 = vmatmul.bf16.gmra.mxu0 %v6894
    %v6943 = vpop.f32.mrf.mxu0
    %v6944 = vadd.f32 0.0, %v6943
    %v6945 = vpop.f32.mrf.mxu0
    %v6946 = vadd.f32 0.0, %v6945
    %6947 = vmatmul.bf16.gmra.mxu0 %v6895
    %v6948 = vpop.f32.mrf.mxu0
    %v6949 = vadd.f32 0.0, %v6948
    %v6950 = vpop.f32.mrf.mxu0
    %v6951 = vadd.f32 0.0, %v6950
    %6952 = vmatmul.bf16.gmra.mxu0 %v6896
    %v6953 = vpop.f32.mrf.mxu0
    %v6954 = vadd.f32 0.0, %v6953
    %v6955 = vpop.f32.mrf.mxu0
    %v6956 = vadd.f32 0.0, %v6955
    %6957 = vmatmul.bf16.gmra.mxu0 %v6897
    %v6958 = vpop.f32.mrf.mxu0
    %v6959 = vadd.f32 0.0, %v6958
    %v6960 = vpop.f32.mrf.mxu0
    %v6961 = vadd.f32 0.0, %v6960
    %6962 = vmatmul.bf16.gmra.mxu0 %v6898
    %v6963 = vpop.f32.mrf.mxu0
    %v6964 = vadd.f32 0.0, %v6963
    %v6965 = vpop.f32.mrf.mxu0
    %v6966 = vadd.f32 0.0, %v6965
    %6967 = vmatmul.bf16.gmra.mxu0 %v6899
    %v6968 = vpop.f32.mrf.mxu0
    %v6969 = vadd.f32 0.0, %v6968
    %v6970 = vpop.f32.mrf.mxu0
    %v6971 = vadd.f32 0.0, %v6970
    %6972 = vmatmul.bf16.gmra.mxu0 %v6900
    %v6973 = vpop.f32.mrf.mxu0
    %v6974 = vadd.f32 0.0, %v6973
    %v6975 = vpop.f32.mrf.mxu0
    %v6976 = vadd.f32 0.0, %v6975
    %6977 = vmatmul.bf16.gmra.mxu0 %v6901
    %v6978 = vpop.f32.mrf.mxu0
    %v6979 = vadd.f32 0.0, %v6978
    %v6980 = vpop.f32.mrf.mxu0
    %v6981 = vadd.f32 0.0, %v6980
    %6982 = vmatmul.bf16.gmra.mxu0 %v6902
    %v6983 = vpop.f32.mrf.mxu0
    %v6984 = vadd.f32 0.0, %v6983
    %v6985 = vpop.f32.mrf.mxu0
    %v6986 = vadd.f32 0.0, %v6985
    %6987 = vmatmul.bf16.gmra.mxu0 %v6903
    %v6988 = vpop.f32.mrf.mxu0
    %v6989 = vadd.f32 0.0, %v6988
    %v6990 = vpop.f32.mrf.mxu0
    %v6991 = vadd.f32 0.0, %v6990
    %6992 = vmatmul.bf16.gmra.mxu0 %v6904
    %v6993 = vpop.f32.mrf.mxu0
    %v6994 = vadd.f32 0.0, %v6993
    %v6995 = vpop.f32.mrf.mxu0
    %v6996 = vadd.f32 0.0, %v6995
    %6997 = vmatmul.bf16.gmra.mxu0 %v6905
    %v6998 = vpop.f32.mrf.mxu0
    %v6999 = vadd.f32 0.0, %v6998
    %v7000 = vpop.f32.mrf.mxu0
    %v7001 = vadd.f32 0.0, %v7000
    %7002 = vdwg.mxu0
    %v7003 = vmul.f32 %v6924, %v6728
    %v7004 = vmul.f32 %v6926, %v6729
    %v7005 = vmul.f32 %v6929, %v6730
    %v7006 = vmul.f32 %v6931, %v6731
    %v7007 = vmul.f32 %v6934, %v6732
    %v7008 = vmul.f32 %v6936, %v6733
    %v7009 = vmul.f32 %v6939, %v6734
    %v7010 = vmul.f32 %v6941, %v6735
    %v7011 = vmul.f32 %v6944, %v6736
    %v7012 = vmul.f32 %v6946, %v6737
    %v7013 = vmul.f32 %v6949, %v6738
    %v7014 = vmul.f32 %v6951, %v6739
    %v7015 = vmul.f32 %v6954, %v6740
    %v7016 = vmul.f32 %v6956, %v6741
    %v7017 = vmul.f32 %v6959, %v6742
    %v7018 = vmul.f32 %v6961, %v6743
    %v7019 = vmul.f32 %v6964, %v6744
    %v7020 = vmul.f32 %v6966, %v6745
    %v7021 = vmul.f32 %v6969, %v6746
    %v7022 = vmul.f32 %v6971, %v6747
    %v7023 = vmul.f32 %v6974, %v6748
    %v7024 = vmul.f32 %v6976, %v6749
    %v7025 = vmul.f32 %v6979, %v6750
    %v7026 = vmul.f32 %v6981, %v6751
    %v7027 = vmul.f32 %v6984, %v6752
    %v7028 = vmul.f32 %v6986, %v6753
    %v7029 = vmul.f32 %v6989, %v6754
    %v7030 = vmul.f32 %v6991, %v6755
    %v7031 = vmul.f32 %v6994, %v6756
    %v7032 = vmul.f32 %v6996, %v6757
    %v7033 = vmul.f32 %v6999, %v6758
    %v7034 = vmul.f32 %v7001, %v6759
    %v7035 = vadd.f32 %v6404, %v6406
    %v7036 = vadd.f32 %v7035, %v6408
    %v7037 = vadd.f32 %v7036, %v6410
    %v7038 = vadd.f32 %v7037, %v6412
    %v7039 = vadd.f32 %v7038, %v6414
    %v7040 = vadd.f32 %v7039, %v6416
    %v7041 = vadd.f32 %v7040, %v6418
    %v7042 = vadd.f32 %v7041, %v6420
    %v7043 = vadd.f32 %v7042, %v6422
    %v7044 = vadd.f32 %v7043, %v6424
    %v7045 = vadd.f32 %v7044, %v6426
    %v7046 = vadd.f32 %v7045, %v6428
    %v7047 = vadd.f32 %v7046, %v6430
    %v7048 = vadd.f32 %v7047, %v6432
    %v7049 = vadd.f32 %v7048, %v6434
    %v7050 = vadd.f32 %v7049, %v6436
    %v7051 = vadd.f32 %v7050, %v6438
    %v7052 = vadd.f32 %v7051, %v6440
    %v7053 = vadd.f32 %v7052, %v6442
    %v7054 = vadd.f32 %v7053, %v6444
    %v7055 = vadd.f32 %v7054, %v6446
    %v7056 = vadd.f32 %v7055, %v6448
    %v7057 = vadd.f32 %v7056, %v6450
    %v7058 = vadd.f32 %v7057, %v6452
    %v7059 = vadd.f32 %v7058, %v6454
    %v7060 = vadd.f32 %v7059, %v6456
    %v7061 = vadd.f32 %v7060, %v6458
    %v7062 = vadd.f32 %v7061, %v6460
    %v7063 = vadd.f32 %v7062, %v6462
    %v7064 = vadd.f32 %v7063, %v6464
    %v7065 = vadd.f32 %v7064, %v6466
    %v7066 = vrot.slane %v7065, 4
    %v7067 = vadd.f32 %v7065, %v7066
    %v7068 = vrot.slane %v7067, 2
    %v7069 = vadd.f32 %v7067, %v7068
    %v7070 = vrot.slane %v7069, 1
    %v7071 = vadd.f32 %v7069, %v7070
    %v7072 = vmul.f32 %v6276, %v7071
    %v7073 = vmul.f32 %v6278, %v7071
    %v7074 = vmul.f32 %v6280, %v7071
    %v7075 = vmul.f32 %v6282, %v7071
    %v7076 = vmul.f32 %v6284, %v7071
    %v7077 = vmul.f32 %v6286, %v7071
    %v7078 = vmul.f32 %v6288, %v7071
    %v7079 = vmul.f32 %v6290, %v7071
    %v7080 = vmul.f32 %v6292, %v7071
    %v7081 = vmul.f32 %v6294, %v7071
    %v7082 = vmul.f32 %v6296, %v7071
    %v7083 = vmul.f32 %v6298, %v7071
    %v7084 = vmul.f32 %v6300, %v7071
    %v7085 = vmul.f32 %v6302, %v7071
    %v7086 = vmul.f32 %v6304, %v7071
    %v7087 = vmul.f32 %v6306, %v7071
    %v7088 = vmul.f32 %v6308, %v7071
    %v7089 = vmul.f32 %v6310, %v7071
    %v7090 = vmul.f32 %v6312, %v7071
    %v7091 = vmul.f32 %v6314, %v7071
    %v7092 = vmul.f32 %v6316, %v7071
    %v7093 = vmul.f32 %v6318, %v7071
    %v7094 = vmul.f32 %v6320, %v7071
    %v7095 = vmul.f32 %v6322, %v7071
    %v7096 = vmul.f32 %v6324, %v7071
    %v7097 = vmul.f32 %v6326, %v7071
    %v7098 = vmul.f32 %v6328, %v7071
    %v7099 = vmul.f32 %v6330, %v7071
    %v7100 = vmul.f32 %v6332, %v7071
    %v7101 = vmul.f32 %v6334, %v7071
    %v7102 = vmul.f32 %v6336, %v7071
    %v7103 = vmul.f32 %v6338, %v7071
    %7104 = vadd.xlane.f32.xlu0 %v7072
    %v7105 = vpop.xlane.xlu0 %7104
    %7106 = vadd.xlane.f32.xlu0 %v7073
    %v7107 = vpop.xlane.xlu0 %7106
    %7108 = vadd.xlane.f32.xlu0 %v7074
    %v7109 = vpop.xlane.xlu0 %7108
    %7110 = vadd.xlane.f32.xlu0 %v7075
    %v7111 = vpop.xlane.xlu0 %7110
    %7112 = vadd.xlane.f32.xlu0 %v7076
    %v7113 = vpop.xlane.xlu0 %7112
    %7114 = vadd.xlane.f32.xlu0 %v7077
    %v7115 = vpop.xlane.xlu0 %7114
    %7116 = vadd.xlane.f32.xlu0 %v7078
    %v7117 = vpop.xlane.xlu0 %7116
    %7118 = vadd.xlane.f32.xlu0 %v7079
    %v7119 = vpop.xlane.xlu0 %7118
    %7120 = vadd.xlane.f32.xlu0 %v7080
    %v7121 = vpop.xlane.xlu0 %7120
    %7122 = vadd.xlane.f32.xlu0 %v7081
    %v7123 = vpop.xlane.xlu0 %7122
    %7124 = vadd.xlane.f32.xlu0 %v7082
    %v7125 = vpop.xlane.xlu0 %7124
    %7126 = vadd.xlane.f32.xlu0 %v7083
    %v7127 = vpop.xlane.xlu0 %7126
    %7128 = vadd.xlane.f32.xlu0 %v7084
    %v7129 = vpop.xlane.xlu0 %7128
    %7130 = vadd.xlane.f32.xlu0 %v7085
    %v7131 = vpop.xlane.xlu0 %7130
    %7132 = vadd.xlane.f32.xlu0 %v7086
    %v7133 = vpop.xlane.xlu0 %7132
    %7134 = vadd.xlane.f32.xlu0 %v7087
    %v7135 = vpop.xlane.xlu0 %7134
    %7136 = vadd.xlane.f32.xlu0 %v7088
    %v7137 = vpop.xlane.xlu0 %7136
    %7138 = vadd.xlane.f32.xlu0 %v7089
    %v7139 = vpop.xlane.xlu0 %7138
    %7140 = vadd.xlane.f32.xlu0 %v7090
    %v7141 = vpop.xlane.xlu0 %7140
    %7142 = vadd.xlane.f32.xlu0 %v7091
    %v7143 = vpop.xlane.xlu0 %7142
    %7144 = vadd.xlane.f32.xlu0 %v7092
    %v7145 = vpop.xlane.xlu0 %7144
    %7146 = vadd.xlane.f32.xlu0 %v7093
    %v7147 = vpop.xlane.xlu0 %7146
    %7148 = vadd.xlane.f32.xlu0 %v7094
    %v7149 = vpop.xlane.xlu0 %7148
    %7150 = vadd.xlane.f32.xlu0 %v7095
    %v7151 = vpop.xlane.xlu0 %7150
    %7152 = vadd.xlane.f32.xlu0 %v7096
    %v7153 = vpop.xlane.xlu0 %7152
    %7154 = vadd.xlane.f32.xlu0 %v7097
    %v7155 = vpop.xlane.xlu0 %7154
    %7156 = vadd.xlane.f32.xlu0 %v7098
    %v7157 = vpop.xlane.xlu0 %7156
    %7158 = vadd.xlane.f32.xlu0 %v7099
    %v7159 = vpop.xlane.xlu0 %7158
    %7160 = vadd.xlane.f32.xlu0 %v7100
    %v7161 = vpop.xlane.xlu0 %7160
    %7162 = vadd.xlane.f32.xlu0 %v7101
    %v7163 = vpop.xlane.xlu0 %7162
    %7164 = vadd.xlane.f32.xlu0 %v7102
    %v7165 = vpop.xlane.xlu0 %7164
    %7166 = vadd.xlane.f32.xlu0 %v7103
    %v7167 = vpop.xlane.xlu0 %7166
    %v7168 = vrcp.pop %v7105
    %v7169 = vrcp.pop %v7107
    %v7170 = vrcp.pop %v7109
    %v7171 = vrcp.pop %v7111
    %v7172 = vrcp.pop %v7113
    %v7173 = vrcp.pop %v7115
    %v7174 = vrcp.pop %v7117
    %v7175 = vrcp.pop %v7119
    %v7176 = vrcp.pop %v7121
    %v7177 = vrcp.pop %v7123
    %v7178 = vrcp.pop %v7125
    %v7179 = vrcp.pop %v7127
    %v7180 = vrcp.pop %v7129
    %v7181 = vrcp.pop %v7131
    %v7182 = vrcp.pop %v7133
    %v7183 = vrcp.pop %v7135
    %v7184 = vrcp.pop %v7137
    %v7185 = vrcp.pop %v7139
    %v7186 = vrcp.pop %v7141
    %v7187 = vrcp.pop %v7143
    %v7188 = vrcp.pop %v7145
    %v7189 = vrcp.pop %v7147
    %v7190 = vrcp.pop %v7149
    %v7191 = vrcp.pop %v7151
    %v7192 = vrcp.pop %v7153
    %v7193 = vrcp.pop %v7155
    %v7194 = vrcp.pop %v7157
    %v7195 = vrcp.pop %v7159
    %v7196 = vrcp.pop %v7161
    %v7197 = vrcp.pop %v7163
    %v7198 = vrcp.pop %v7165
    %v7199 = vrcp.pop %v7167
    %v7200 = vpack.c.bf16 %v6516, %v6515
    %v7201 = vpack.c.bf16 %v6580, %v6579
    %v7202 = vpack.c.bf16 %v6518, %v6517
    %v7203 = vpack.c.bf16 %v6582, %v6581
    %v7204 = vpack.c.bf16 %v6520, %v6519
    %v7205 = vpack.c.bf16 %v6584, %v6583
    %v7206 = vpack.c.bf16 %v6522, %v6521
    %v7207 = vpack.c.bf16 %v6586, %v6585
    %v7208 = vpack.c.bf16 %v6524, %v6523
    %v7209 = vpack.c.bf16 %v6588, %v6587
    %v7210 = vpack.c.bf16 %v6526, %v6525
    %v7211 = vpack.c.bf16 %v6590, %v6589
    %v7212 = vpack.c.bf16 %v6528, %v6527
    %v7213 = vpack.c.bf16 %v6592, %v6591
    %v7214 = vpack.c.bf16 %v6530, %v6529
    %v7215 = vpack.c.bf16 %v6594, %v6593
    %v7216 = vpack.c.bf16 %v6134, %v6132
    %v7217 = vpack.c.bf16 %v6139, %v6137
    %v7218 = vpack.c.bf16 %v6144, %v6142
    %v7219 = vpack.c.bf16 %v6149, %v6147
    %v7220 = vpack.c.bf16 %v6154, %v6152
    %v7221 = vpack.c.bf16 %v6159, %v6157
    %v7222 = vpack.c.bf16 %v6164, %v6162
    %v7223 = vpack.c.bf16 %v6169, %v6167
    %v7224 = vpack.c.bf16 %v6174, %v6172
    %v7225 = vpack.c.bf16 %v6179, %v6177
    %v7226 = vpack.c.bf16 %v6184, %v6182
    %v7227 = vpack.c.bf16 %v6189, %v6187
    %v7228 = vpack.c.bf16 %v6194, %v6192
    %v7229 = vpack.c.bf16 %v6199, %v6197
    %v7230 = vpack.c.bf16 %v6204, %v6202
    %v7231 = vpack.c.bf16 %v6209, %v6207
    %7232 = vmatpush.bf16.msra.mxu0 %v7223
    %7233 = vmatpush.bf16.msra.mxu0 %v7222
    %7234 = vmatpush.bf16.msra.mxu0 %v7221
    %7235 = vmatpush.bf16.msra.mxu0 %v7220
    %7236 = vmatpush.bf16.msra.mxu0 %v7219
    %7237 = vmatpush.bf16.msra.mxu0 %v7218
    %7238 = vmatpush.bf16.msra.mxu0 %v7217
    %7239 = vmatpush.bf16.msra.mxu0 %v7216
    %7240 = vmatmul.bf16.gmra.mxu0 %v7200
    %v7241 = vpop.f32.mrf.mxu0
    %v7242 = vadd.f32 0.0, %v7241
    %v7243 = vpop.f32.mrf.mxu0
    %v7244 = vadd.f32 0.0, %v7243
    %7245 = vmatmul.bf16.gmra.mxu0 %v7202
    %v7246 = vpop.f32.mrf.mxu0
    %v7247 = vadd.f32 0.0, %v7246
    %v7248 = vpop.f32.mrf.mxu0
    %v7249 = vadd.f32 0.0, %v7248
    %7250 = vmatmul.bf16.gmra.mxu0 %v7204
    %v7251 = vpop.f32.mrf.mxu0
    %v7252 = vadd.f32 0.0, %v7251
    %v7253 = vpop.f32.mrf.mxu0
    %v7254 = vadd.f32 0.0, %v7253
    %7255 = vmatmul.bf16.gmra.mxu0 %v7206
    %v7256 = vpop.f32.mrf.mxu0
    %v7257 = vadd.f32 0.0, %v7256
    %v7258 = vpop.f32.mrf.mxu0
    %v7259 = vadd.f32 0.0, %v7258
    %7260 = vmatmul.bf16.gmra.mxu0 %v7208
    %v7261 = vpop.f32.mrf.mxu0
    %v7262 = vadd.f32 0.0, %v7261
    %v7263 = vpop.f32.mrf.mxu0
    %v7264 = vadd.f32 0.0, %v7263
    %7265 = vmatmul.bf16.gmra.mxu0 %v7210
    %v7266 = vpop.f32.mrf.mxu0
    %v7267 = vadd.f32 0.0, %v7266
    %v7268 = vpop.f32.mrf.mxu0
    %v7269 = vadd.f32 0.0, %v7268
    %7270 = vmatmul.bf16.gmra.mxu0 %v7212
    %v7271 = vpop.f32.mrf.mxu0
    %v7272 = vadd.f32 0.0, %v7271
    %v7273 = vpop.f32.mrf.mxu0
    %v7274 = vadd.f32 0.0, %v7273
    %7275 = vmatmul.bf16.gmra.mxu0 %v7214
    %v7276 = vpop.f32.mrf.mxu0
    %v7277 = vadd.f32 0.0, %v7276
    %v7278 = vpop.f32.mrf.mxu0
    %v7279 = vadd.f32 0.0, %v7278
    %7280 = vdwg.mxu0
    %7281 = vmatpush.bf16.msra.mxu0 %v7231
    %7282 = vmatpush.bf16.msra.mxu0 %v7230
    %7283 = vmatpush.bf16.msra.mxu0 %v7229
    %7284 = vmatpush.bf16.msra.mxu0 %v7228
    %7285 = vmatpush.bf16.msra.mxu0 %v7227
    %7286 = vmatpush.bf16.msra.mxu0 %v7226
    %7287 = vmatpush.bf16.msra.mxu0 %v7225
    %7288 = vmatpush.bf16.msra.mxu0 %v7224
    %7289 = vmatmul.bf16.gmra.mxu0 %v7201
    %v7290 = vpop.f32.mrf.mxu0
    %v7291 = vadd.f32 %v7242, %v7290
    %v7292 = vpop.f32.mrf.mxu0
    %v7293 = vadd.f32 %v7244, %v7292
    %7294 = vmatmul.bf16.gmra.mxu0 %v7203
    %v7295 = vpop.f32.mrf.mxu0
    %v7296 = vadd.f32 %v7247, %v7295
    %v7297 = vpop.f32.mrf.mxu0
    %v7298 = vadd.f32 %v7249, %v7297
    %7299 = vmatmul.bf16.gmra.mxu0 %v7205
    %v7300 = vpop.f32.mrf.mxu0
    %v7301 = vadd.f32 %v7252, %v7300
    %v7302 = vpop.f32.mrf.mxu0
    %v7303 = vadd.f32 %v7254, %v7302
    %7304 = vmatmul.bf16.gmra.mxu0 %v7207
    %v7305 = vpop.f32.mrf.mxu0
    %v7306 = vadd.f32 %v7257, %v7305
    %v7307 = vpop.f32.mrf.mxu0
    %v7308 = vadd.f32 %v7259, %v7307
    %7309 = vmatmul.bf16.gmra.mxu0 %v7209
    %v7310 = vpop.f32.mrf.mxu0
    %v7311 = vadd.f32 %v7262, %v7310
    %v7312 = vpop.f32.mrf.mxu0
    %v7313 = vadd.f32 %v7264, %v7312
    %7314 = vmatmul.bf16.gmra.mxu0 %v7211
    %v7315 = vpop.f32.mrf.mxu0
    %v7316 = vadd.f32 %v7267, %v7315
    %v7317 = vpop.f32.mrf.mxu0
    %v7318 = vadd.f32 %v7269, %v7317
    %7319 = vmatmul.bf16.gmra.mxu0 %v7213
    %v7320 = vpop.f32.mrf.mxu0
    %v7321 = vadd.f32 %v7272, %v7320
    %v7322 = vpop.f32.mrf.mxu0
    %v7323 = vadd.f32 %v7274, %v7322
    %7324 = vmatmul.bf16.gmra.mxu0 %v7215
    %v7325 = vpop.f32.mrf.mxu0
    %v7326 = vadd.f32 %v7277, %v7325
    %v7327 = vpop.f32.mrf.mxu0
    %v7328 = vadd.f32 %v7279, %v7327
    %7329 = vdwg.mxu0
    %v7330 = vpack.c.bf16 %v6278, %v6276
    %v7331 = vpack.c.bf16 %v6282, %v6280
    %v7332 = vpack.c.bf16 %v6286, %v6284
    %v7333 = vpack.c.bf16 %v6290, %v6288
    %v7334 = vpack.c.bf16 %v6294, %v6292
    %v7335 = vpack.c.bf16 %v6298, %v6296
    %v7336 = vpack.c.bf16 %v6302, %v6300
    %v7337 = vpack.c.bf16 %v6306, %v6304
    %v7338 = vpack.c.bf16 %v6310, %v6308
    %v7339 = vpack.c.bf16 %v6314, %v6312
    %v7340 = vpack.c.bf16 %v6318, %v6316
    %v7341 = vpack.c.bf16 %v6322, %v6320
    %v7342 = vpack.c.bf16 %v6326, %v6324
    %v7343 = vpack.c.bf16 %v6330, %v6328
    %v7344 = vpack.c.bf16 %v6334, %v6332
    %v7345 = vpack.c.bf16 %v6338, %v6336
    %v7346 = vpack.c.bf16 %v7293, %v7291
    %v7347 = vpack.c.bf16 %v7298, %v7296
    %v7348 = vpack.c.bf16 %v7303, %v7301
    %v7349 = vpack.c.bf16 %v7308, %v7306
    %v7350 = vpack.c.bf16 %v7313, %v7311
    %v7351 = vpack.c.bf16 %v7318, %v7316
    %v7352 = vpack.c.bf16 %v7323, %v7321
    %v7353 = vpack.c.bf16 %v7328, %v7326
    %7354 = vmatpush.bf16.msra.mxu0 %v7353
    %7355 = vmatpush.bf16.msra.mxu0 %v7352
    %7356 = vmatpush.bf16.msra.mxu0 %v7351
    %7357 = vmatpush.bf16.msra.mxu0 %v7350
    %7358 = vmatpush.bf16.msra.mxu0 %v7349
    %7359 = vmatpush.bf16.msra.mxu0 %v7348
    %7360 = vmatpush.bf16.msra.mxu0 %v7347
    %7361 = vmatpush.bf16.msra.mxu0 %v7346
    %7362 = vmatmul.bf16.gmra.mxu0 %v7330
    %v7363 = vpop.f32.mrf.mxu0
    %v7364 = vadd.f32 0.0, %v7363
    %v7365 = vpop.f32.mrf.mxu0
    %v7366 = vadd.f32 0.0, %v7365
    %7367 = vmatmul.bf16.gmra.mxu0 %v7331
    %v7368 = vpop.f32.mrf.mxu0
    %v7369 = vadd.f32 0.0, %v7368
    %v7370 = vpop.f32.mrf.mxu0
    %v7371 = vadd.f32 0.0, %v7370
    %7372 = vmatmul.bf16.gmra.mxu0 %v7332
    %v7373 = vpop.f32.mrf.mxu0
    %v7374 = vadd.f32 0.0, %v7373
    %v7375 = vpop.f32.mrf.mxu0
    %v7376 = vadd.f32 0.0, %v7375
    %7377 = vmatmul.bf16.gmra.mxu0 %v7333
    %v7378 = vpop.f32.mrf.mxu0
    %v7379 = vadd.f32 0.0, %v7378
    %v7380 = vpop.f32.mrf.mxu0
    %v7381 = vadd.f32 0.0, %v7380
    %7382 = vmatmul.bf16.gmra.mxu0 %v7334
    %v7383 = vpop.f32.mrf.mxu0
    %v7384 = vadd.f32 0.0, %v7383
    %v7385 = vpop.f32.mrf.mxu0
    %v7386 = vadd.f32 0.0, %v7385
    %7387 = vmatmul.bf16.gmra.mxu0 %v7335
    %v7388 = vpop.f32.mrf.mxu0
    %v7389 = vadd.f32 0.0, %v7388
    %v7390 = vpop.f32.mrf.mxu0
    %v7391 = vadd.f32 0.0, %v7390
    %7392 = vmatmul.bf16.gmra.mxu0 %v7336
    %v7393 = vpop.f32.mrf.mxu0
    %v7394 = vadd.f32 0.0, %v7393
    %v7395 = vpop.f32.mrf.mxu0
    %v7396 = vadd.f32 0.0, %v7395
    %7397 = vmatmul.bf16.gmra.mxu0 %v7337
    %v7398 = vpop.f32.mrf.mxu0
    %v7399 = vadd.f32 0.0, %v7398
    %v7400 = vpop.f32.mrf.mxu0
    %v7401 = vadd.f32 0.0, %v7400
    %7402 = vmatmul.bf16.gmra.mxu0 %v7338
    %v7403 = vpop.f32.mrf.mxu0
    %v7404 = vadd.f32 0.0, %v7403
    %v7405 = vpop.f32.mrf.mxu0
    %v7406 = vadd.f32 0.0, %v7405
    %7407 = vmatmul.bf16.gmra.mxu0 %v7339
    %v7408 = vpop.f32.mrf.mxu0
    %v7409 = vadd.f32 0.0, %v7408
    %v7410 = vpop.f32.mrf.mxu0
    %v7411 = vadd.f32 0.0, %v7410
    %7412 = vmatmul.bf16.gmra.mxu0 %v7340
    %v7413 = vpop.f32.mrf.mxu0
    %v7414 = vadd.f32 0.0, %v7413
    %v7415 = vpop.f32.mrf.mxu0
    %v7416 = vadd.f32 0.0, %v7415
    %7417 = vmatmul.bf16.gmra.mxu0 %v7341
    %v7418 = vpop.f32.mrf.mxu0
    %v7419 = vadd.f32 0.0, %v7418
    %v7420 = vpop.f32.mrf.mxu0
    %v7421 = vadd.f32 0.0, %v7420
    %7422 = vmatmul.bf16.gmra.mxu0 %v7342
    %v7423 = vpop.f32.mrf.mxu0
    %v7424 = vadd.f32 0.0, %v7423
    %v7425 = vpop.f32.mrf.mxu0
    %v7426 = vadd.f32 0.0, %v7425
    %7427 = vmatmul.bf16.gmra.mxu0 %v7343
    %v7428 = vpop.f32.mrf.mxu0
    %v7429 = vadd.f32 0.0, %v7428
    %v7430 = vpop.f32.mrf.mxu0
    %v7431 = vadd.f32 0.0, %v7430
    %7432 = vmatmul.bf16.gmra.mxu0 %v7344
    %v7433 = vpop.f32.mrf.mxu0
    %v7434 = vadd.f32 0.0, %v7433
    %v7435 = vpop.f32.mrf.mxu0
    %v7436 = vadd.f32 0.0, %v7435
    %7437 = vmatmul.bf16.gmra.mxu0 %v7345
    %v7438 = vpop.f32.mrf.mxu0
    %v7439 = vadd.f32 0.0, %v7438
    %v7440 = vpop.f32.mrf.mxu0
    %v7441 = vadd.f32 0.0, %v7440
    %7442 = vdwg.mxu0
    %v7443 = vmul.f32 %v7364, %v7168
    %v7444 = vmul.f32 %v7366, %v7169
    %v7445 = vmul.f32 %v7369, %v7170
    %v7446 = vmul.f32 %v7371, %v7171
    %v7447 = vmul.f32 %v7374, %v7172
    %v7448 = vmul.f32 %v7376, %v7173
    %v7449 = vmul.f32 %v7379, %v7174
    %v7450 = vmul.f32 %v7381, %v7175
    %v7451 = vmul.f32 %v7384, %v7176
    %v7452 = vmul.f32 %v7386, %v7177
    %v7453 = vmul.f32 %v7389, %v7178
    %v7454 = vmul.f32 %v7391, %v7179
    %v7455 = vmul.f32 %v7394, %v7180
    %v7456 = vmul.f32 %v7396, %v7181
    %v7457 = vmul.f32 %v7399, %v7182
    %v7458 = vmul.f32 %v7401, %v7183
    %v7459 = vmul.f32 %v7404, %v7184
    %v7460 = vmul.f32 %v7406, %v7185
    %v7461 = vmul.f32 %v7409, %v7186
    %v7462 = vmul.f32 %v7411, %v7187
    %v7463 = vmul.f32 %v7414, %v7188
    %v7464 = vmul.f32 %v7416, %v7189
    %v7465 = vmul.f32 %v7419, %v7190
    %v7466 = vmul.f32 %v7421, %v7191
    %v7467 = vmul.f32 %v7424, %v7192
    %v7468 = vmul.f32 %v7426, %v7193
    %v7469 = vmul.f32 %v7429, %v7194
    %v7470 = vmul.f32 %v7431, %v7195
    %v7471 = vmul.f32 %v7434, %v7196
    %v7472 = vmul.f32 %v7436, %v7197
    %v7473 = vmul.f32 %v7439, %v7198
    %v7474 = vmul.f32 %v7441, %v7199
    %v7475 = vadd.f32 %v7003, %v7443
    %v7476 = vadd.f32 %v7004, %v7444
    %v7477 = vadd.f32 %v7005, %v7445
    %v7478 = vadd.f32 %v7006, %v7446
    %v7479 = vadd.f32 %v7007, %v7447
    %v7480 = vadd.f32 %v7008, %v7448
    %v7481 = vadd.f32 %v7009, %v7449
    %v7482 = vadd.f32 %v7010, %v7450
    %v7483 = vadd.f32 %v7011, %v7451
    %v7484 = vadd.f32 %v7012, %v7452
    %v7485 = vadd.f32 %v7013, %v7453
    %v7486 = vadd.f32 %v7014, %v7454
    %v7487 = vadd.f32 %v7015, %v7455
    %v7488 = vadd.f32 %v7016, %v7456
    %v7489 = vadd.f32 %v7017, %v7457
    %v7490 = vadd.f32 %v7018, %v7458
    %v7491 = vadd.f32 %v7019, %v7459
    %v7492 = vadd.f32 %v7020, %v7460
    %v7493 = vadd.f32 %v7021, %v7461
    %v7494 = vadd.f32 %v7022, %v7462
    %v7495 = vadd.f32 %v7023, %v7463
    %v7496 = vadd.f32 %v7024, %v7464
    %v7497 = vadd.f32 %v7025, %v7465
    %v7498 = vadd.f32 %v7026, %v7466
    %v7499 = vadd.f32 %v7027, %v7467
    %v7500 = vadd.f32 %v7028, %v7468
    %v7501 = vadd.f32 %v7029, %v7469
    %v7502 = vadd.f32 %v7030, %v7470
    %v7503 = vadd.f32 %v7031, %v7471
    %v7504 = vadd.f32 %v7032, %v7472
    %v7505 = vadd.f32 %v7033, %v7473
    %v7506 = vadd.f32 %v7034, %v7474
    %s7507 = scalar_lea.vmem %s9, 1
    %v7508 = vld [vmem:[%s7507] sm:$0x1]
    %v7510 = vperm.slane %v7508, 0
    %v7512 = vadd.f32 %v7475, %v7510
    %v7513 = vadd.f32 %v7476, %v7510
    %v7514 = vadd.f32 %v7477, %v7510
    %v7515 = vadd.f32 %v7478, %v7510
    %v7516 = vadd.f32 %v7479, %v7510
    %v7517 = vadd.f32 %v7480, %v7510
    %v7518 = vadd.f32 %v7481, %v7510
    %v7519 = vadd.f32 %v7482, %v7510
    %v7520 = vadd.f32 %v7483, %v7510
    %v7521 = vadd.f32 %v7484, %v7510
    %v7522 = vadd.f32 %v7485, %v7510
    %v7523 = vadd.f32 %v7486, %v7510
    %v7524 = vadd.f32 %v7487, %v7510
    %v7525 = vadd.f32 %v7488, %v7510
    %v7526 = vadd.f32 %v7489, %v7510
    %v7527 = vadd.f32 %v7490, %v7510
    %v7528 = vadd.f32 %v7491, %v7510
    %v7529 = vadd.f32 %v7492, %v7510
    %v7530 = vadd.f32 %v7493, %v7510
    %v7531 = vadd.f32 %v7494, %v7510
    %v7532 = vadd.f32 %v7495, %v7510
    %v7533 = vadd.f32 %v7496, %v7510
    %v7534 = vadd.f32 %v7497, %v7510
    %v7535 = vadd.f32 %v7498, %v7510
    %v7536 = vadd.f32 %v7499, %v7510
    %v7537 = vadd.f32 %v7500, %v7510
    %v7538 = vadd.f32 %v7501, %v7510
    %v7539 = vadd.f32 %v7502, %v7510
    %v7540 = vadd.f32 %v7503, %v7510
    %v7541 = vadd.f32 %v7504, %v7510
    %v7542 = vadd.f32 %v7505, %v7510
    %v7543 = vadd.f32 %v7506, %v7510
    %v7544 = vadd.f32 %v7512, %v4450
    %v7545 = vadd.f32 %v7513, %v4451
    %v7546 = vadd.f32 %v7514, %v4452
    %v7547 = vadd.f32 %v7515, %v4453
    %v7548 = vadd.f32 %v7516, %v4454
    %v7549 = vadd.f32 %v7517, %v4455
    %v7550 = vadd.f32 %v7518, %v4456
    %v7551 = vadd.f32 %v7519, %v4457
    %v7552 = vadd.f32 %v7520, %v4458
    %v7553 = vadd.f32 %v7521, %v4459
    %v7554 = vadd.f32 %v7522, %v4460
    %v7555 = vadd.f32 %v7523, %v4461
    %v7556 = vadd.f32 %v7524, %v4462
    %v7557 = vadd.f32 %v7525, %v4463
    %v7558 = vadd.f32 %v7526, %v4464
    %v7559 = vadd.f32 %v7527, %v4465
    %v7560 = vadd.f32 %v7528, %v4466
    %v7561 = vadd.f32 %v7529, %v4467
    %v7562 = vadd.f32 %v7530, %v4468
    %v7563 = vadd.f32 %v7531, %v4469
    %v7564 = vadd.f32 %v7532, %v4470
    %v7565 = vadd.f32 %v7533, %v4471
    %v7566 = vadd.f32 %v7534, %v4472
    %v7567 = vadd.f32 %v7535, %v4473
    %v7568 = vadd.f32 %v7536, %v4474
    %v7569 = vadd.f32 %v7537, %v4475
    %v7570 = vadd.f32 %v7538, %v4476
    %v7571 = vadd.f32 %v7539, %v4477
    %v7572 = vadd.f32 %v7540, %v4478
    %v7573 = vadd.f32 %v7541, %v4479
    %v7574 = vadd.f32 %v7542, %v4480
    %v7575 = vadd.f32 %v7543, %v4481
    %s7576 = scalar_lea.vmem %s10, 1
    %v7577 = vld [vmem:[%s7576] sm:$0x1]
    %v7579 = vperm.slane %v7577, 0
    %v7581 = vmul.f32 %v7544, %v7579
    %v7582 = vmul.f32 %v7545, %v7579
    %v7583 = vmul.f32 %v7546, %v7579
    %v7584 = vmul.f32 %v7547, %v7579
    %v7585 = vmul.f32 %v7548, %v7579
    %v7586 = vmul.f32 %v7549, %v7579
    %v7587 = vmul.f32 %v7550, %v7579
    %v7588 = vmul.f32 %v7551, %v7579
    %v7589 = vmul.f32 %v7552, %v7579
    %v7590 = vmul.f32 %v7553, %v7579
    %v7591 = vmul.f32 %v7554, %v7579
    %v7592 = vmul.f32 %v7555, %v7579
    %v7593 = vmul.f32 %v7556, %v7579
    %v7594 = vmul.f32 %v7557, %v7579
    %v7595 = vmul.f32 %v7558, %v7579
    %v7596 = vmul.f32 %v7559, %v7579
    %v7597 = vmul.f32 %v7560, %v7579
    %v7598 = vmul.f32 %v7561, %v7579
    %v7599 = vmul.f32 %v7562, %v7579
    %v7600 = vmul.f32 %v7563, %v7579
    %v7601 = vmul.f32 %v7564, %v7579
    %v7602 = vmul.f32 %v7565, %v7579
    %v7603 = vmul.f32 %v7566, %v7579
    %v7604 = vmul.f32 %v7567, %v7579
    %v7605 = vmul.f32 %v7568, %v7579
    %v7606 = vmul.f32 %v7569, %v7579
    %v7607 = vmul.f32 %v7570, %v7579
    %v7608 = vmul.f32 %v7571, %v7579
    %v7609 = vmul.f32 %v7572, %v7579
    %v7610 = vmul.f32 %v7573, %v7579
    %v7611 = vmul.f32 %v7574, %v7579
    %v7612 = vmul.f32 %v7575, %v7579
    %s7613 = scalar_lea.vmem [#allocation14], 1
    %v7614 = vld [vmem:[%s7613] sm:$0x1]
    %v7616 = vperm.slane %v7614, 0
    %v7618 = vadd.f32 %v7581, %v7616
    %v7619 = vadd.f32 %v7582, %v7616
    %v7620 = vadd.f32 %v7583, %v7616
    %v7621 = vadd.f32 %v7584, %v7616
    %v7622 = vadd.f32 %v7585, %v7616
    %v7623 = vadd.f32 %v7586, %v7616
    %v7624 = vadd.f32 %v7587, %v7616
    %v7625 = vadd.f32 %v7588, %v7616
    %v7626 = vadd.f32 %v7589, %v7616
    %v7627 = vadd.f32 %v7590, %v7616
    %v7628 = vadd.f32 %v7591, %v7616
    %v7629 = vadd.f32 %v7592, %v7616
    %v7630 = vadd.f32 %v7593, %v7616
    %v7631 = vadd.f32 %v7594, %v7616
    %v7632 = vadd.f32 %v7595, %v7616
    %v7633 = vadd.f32 %v7596, %v7616
    %v7634 = vadd.f32 %v7597, %v7616
    %v7635 = vadd.f32 %v7598, %v7616
    %v7636 = vadd.f32 %v7599, %v7616
    %v7637 = vadd.f32 %v7600, %v7616
    %v7638 = vadd.f32 %v7601, %v7616
    %v7639 = vadd.f32 %v7602, %v7616
    %v7640 = vadd.f32 %v7603, %v7616
    %v7641 = vadd.f32 %v7604, %v7616
    %v7642 = vadd.f32 %v7605, %v7616
    %v7643 = vadd.f32 %v7606, %v7616
    %v7644 = vadd.f32 %v7607, %v7616
    %v7645 = vadd.f32 %v7608, %v7616
    %v7646 = vadd.f32 %v7609, %v7616
    %v7647 = vadd.f32 %v7610, %v7616
    %v7648 = vadd.f32 %v7611, %v7616
    %v7649 = vadd.f32 %v7612, %v7616
    %v7650 = vadd.f32 %v5260, %v7618
    %v7651 = vadd.f32 %v5261, %v7619
    %v7652 = vadd.f32 %v5262, %v7620
    %v7653 = vadd.f32 %v5263, %v7621
    %v7654 = vadd.f32 %v5264, %v7622
    %v7655 = vadd.f32 %v5265, %v7623
    %v7656 = vadd.f32 %v5266, %v7624
    %v7657 = vadd.f32 %v5267, %v7625
    %v7658 = vadd.f32 %v5268, %v7626
    %v7659 = vadd.f32 %v5269, %v7627
    %v7660 = vadd.f32 %v5270, %v7628
    %v7661 = vadd.f32 %v5271, %v7629
    %v7662 = vadd.f32 %v5272, %v7630
    %v7663 = vadd.f32 %v5273, %v7631
    %v7664 = vadd.f32 %v5274, %v7632
    %v7665 = vadd.f32 %v5275, %v7633
    %v7666 = vadd.f32 %v5276, %v7634
    %v7667 = vadd.f32 %v5277, %v7635
    %v7668 = vadd.f32 %v5278, %v7636
    %v7669 = vadd.f32 %v5279, %v7637
    %v7670 = vadd.f32 %v5280, %v7638
    %v7671 = vadd.f32 %v5281, %v7639
    %v7672 = vadd.f32 %v5282, %v7640
    %v7673 = vadd.f32 %v5283, %v7641
    %v7674 = vadd.f32 %v5284, %v7642
    %v7675 = vadd.f32 %v5285, %v7643
    %v7676 = vadd.f32 %v5286, %v7644
    %v7677 = vadd.f32 %v5287, %v7645
    %v7678 = vadd.f32 %v5288, %v7646
    %v7679 = vadd.f32 %v5289, %v7647
    %v7680 = vadd.f32 %v5290, %v7648
    %v7681 = vadd.f32 %v5291, %v7649
    %v7682 = vpack.c.bf16 %v7651, %v7650
    %v7683 = vpack.c.bf16 %v7653, %v7652
    %v7684 = vpack.c.bf16 %v7655, %v7654
    %v7685 = vpack.c.bf16 %v7657, %v7656
    %v7686 = vpack.c.bf16 %v7659, %v7658
    %v7687 = vpack.c.bf16 %v7661, %v7660
    %v7688 = vpack.c.bf16 %v7663, %v7662
    %v7689 = vpack.c.bf16 %v7665, %v7664
    %v7690 = vpack.c.bf16 %v7667, %v7666
    %v7691 = vpack.c.bf16 %v7669, %v7668
    %v7692 = vpack.c.bf16 %v7671, %v7670
    %v7693 = vpack.c.bf16 %v7673, %v7672
    %v7694 = vpack.c.bf16 %v7675, %v7674
    %v7695 = vpack.c.bf16 %v7677, %v7676
    %v7696 = vpack.c.bf16 %v7679, %v7678
    %v7697 = vpack.c.bf16 %v7681, %v7680
    %s7698 = scalar_lea.vmem [#allocation16], 128
    %v7699 = vld [vmem:[%s7698] sm:$0xff]
    %v7700 = vld [vmem:[%s7698 + $0x8] sm:$0xff]
    %v7701 = vld [vmem:[%s7698 + $0x10] sm:$0xff]
    %v7702 = vld [vmem:[%s7698 + $0x18] sm:$0xff]
    %v7703 = vld [vmem:[%s7698 + $0x20] sm:$0xff]
    %v7704 = vld [vmem:[%s7698 + $0x28] sm:$0xff]
    %v7705 = vld [vmem:[%s7698 + $0x30] sm:$0xff]
    %v7706 = vld [vmem:[%s7698 + $0x38] sm:$0xff]
    %v7707 = vld [vmem:[%s7698 + $0x40] sm:$0xff]
    %v7708 = vld [vmem:[%s7698 + $0x48] sm:$0xff]
    %v7709 = vld [vmem:[%s7698 + $0x50] sm:$0xff]
    %v7710 = vld [vmem:[%s7698 + $0x58] sm:$0xff]
    %v7711 = vld [vmem:[%s7698 + $0x60] sm:$0xff]
    %v7712 = vld [vmem:[%s7698 + $0x68] sm:$0xff]
    %v7713 = vld [vmem:[%s7698 + $0x70] sm:$0xff]
    %v7714 = vld [vmem:[%s7698 + $0x78] sm:$0xff]
    %s7715 = scalar_lea.vmem [#allocation17], 2
    %v7716 = vld [vmem:[%s7715] sm:$0x3]
    %v7718 = vperm.slane %v7716, 0
    %v7719 = vperm.slane %v7716, 1
    %v7738 = vunpack.c.l.b16 %v7699
    %v7739 = vunpack.c.h.b16 %v7699
    %v7740 = vunpack.c.l.b16 %v7700
    %v7741 = vunpack.c.h.b16 %v7700
    %v7742 = vunpack.c.l.b16 %v7701
    %v7743 = vunpack.c.h.b16 %v7701
    %v7744 = vunpack.c.l.b16 %v7702
    %v7745 = vunpack.c.h.b16 %v7702
    %v7746 = vunpack.c.l.b16 %v7703
    %v7747 = vunpack.c.h.b16 %v7703
    %v7748 = vunpack.c.l.b16 %v7704
    %v7749 = vunpack.c.h.b16 %v7704
    %v7750 = vunpack.c.l.b16 %v7705
    %v7751 = vunpack.c.h.b16 %v7705
    %v7752 = vunpack.c.l.b16 %v7706
    %v7753 = vunpack.c.h.b16 %v7706
    %v7754 = vunpack.c.l.b16 %v7707
    %v7755 = vunpack.c.h.b16 %v7707
    %v7756 = vunpack.c.l.b16 %v7708
    %v7757 = vunpack.c.h.b16 %v7708
    %v7758 = vunpack.c.l.b16 %v7709
    %v7759 = vunpack.c.h.b16 %v7709
    %v7760 = vunpack.c.l.b16 %v7710
    %v7761 = vunpack.c.h.b16 %v7710
    %v7762 = vunpack.c.l.b16 %v7711
    %v7763 = vunpack.c.h.b16 %v7711
    %v7764 = vunpack.c.l.b16 %v7712
    %v7765 = vunpack.c.h.b16 %v7712
    %v7766 = vunpack.c.l.b16 %v7713
    %v7767 = vunpack.c.h.b16 %v7713
    %v7768 = vunpack.c.l.b16 %v7714
    %v7769 = vunpack.c.h.b16 %v7714
    %v7770 = vpack.c.b16 %v7740, %v7738
    %v7771 = vpack.c.b16 %v7741, %v7739
    %v7772 = vpack.c.b16 %v7744, %v7742
    %v7773 = vpack.c.b16 %v7745, %v7743
    %v7774 = vpack.c.b16 %v7748, %v7746
    %v7775 = vpack.c.b16 %v7749, %v7747
    %v7776 = vpack.c.b16 %v7752, %v7750
    %v7777 = vpack.c.b16 %v7753, %v7751
    %v7778 = vpack.c.b16 %v7756, %v7754
    %v7779 = vpack.c.b16 %v7757, %v7755
    %v7780 = vpack.c.b16 %v7760, %v7758
    %v7781 = vpack.c.b16 %v7761, %v7759
    %v7782 = vpack.c.b16 %v7764, %v7762
    %v7783 = vpack.c.b16 %v7765, %v7763
    %v7784 = vpack.c.b16 %v7768, %v7766
    %v7785 = vpack.c.b16 %v7769, %v7767
    %7802 = vmatpush.bf16.msra.mxu0 %v7784
    %7803 = vmatpush.bf16.msra.mxu0 %v7782
    %7804 = vmatpush.bf16.msra.mxu0 %v7780
    %7805 = vmatpush.bf16.msra.mxu0 %v7778
    %7806 = vmatpush.bf16.msra.mxu0 %v7776
    %7807 = vmatpush.bf16.msra.mxu0 %v7774
    %7808 = vmatpush.bf16.msra.mxu0 %v7772
    %7809 = vmatpush.bf16.msra.mxu0 %v7770
    %7810 = vmatmul.bf16.gmra.mxu0 %v7682
    %v7811 = vpop.f32.mrf.mxu0
    %v7812 = vadd.f32 %v7718, %v7811
    %v7813 = vpop.f32.mrf.mxu0
    %v7814 = vadd.f32 %v7718, %v7813
    %7815 = vmatmul.bf16.gmra.mxu0 %v7683
    %v7816 = vpop.f32.mrf.mxu0
    %v7817 = vadd.f32 %v7718, %v7816
    %v7818 = vpop.f32.mrf.mxu0
    %v7819 = vadd.f32 %v7718, %v7818
    %7820 = vmatmul.bf16.gmra.mxu0 %v7684
    %v7821 = vpop.f32.mrf.mxu0
    %v7822 = vadd.f32 %v7718, %v7821
    %v7823 = vpop.f32.mrf.mxu0
    %v7824 = vadd.f32 %v7718, %v7823
    %7825 = vmatmul.bf16.gmra.mxu0 %v7685
    %v7826 = vpop.f32.mrf.mxu0
    %v7827 = vadd.f32 %v7718, %v7826
    %v7828 = vpop.f32.mrf.mxu0
    %v7829 = vadd.f32 %v7718, %v7828
    %7830 = vmatmul.bf16.gmra.mxu0 %v7686
    %v7831 = vpop.f32.mrf.mxu0
    %v7832 = vadd.f32 %v7718, %v7831
    %v7833 = vpop.f32.mrf.mxu0
    %v7834 = vadd.f32 %v7718, %v7833
    %7835 = vmatmul.bf16.gmra.mxu0 %v7687
    %v7836 = vpop.f32.mrf.mxu0
    %v7837 = vadd.f32 %v7718, %v7836
    %v7838 = vpop.f32.mrf.mxu0
    %v7839 = vadd.f32 %v7718, %v7838
    %7840 = vmatmul.bf16.gmra.mxu0 %v7688
    %v7841 = vpop.f32.mrf.mxu0
    %v7842 = vadd.f32 %v7718, %v7841
    %v7843 = vpop.f32.mrf.mxu0
    %v7844 = vadd.f32 %v7718, %v7843
    %7845 = vmatmul.bf16.gmra.mxu0 %v7689
    %v7846 = vpop.f32.mrf.mxu0
    %v7847 = vadd.f32 %v7718, %v7846
    %v7848 = vpop.f32.mrf.mxu0
    %v7849 = vadd.f32 %v7718, %v7848
    %7850 = vmatmul.bf16.gmra.mxu0 %v7690
    %v7851 = vpop.f32.mrf.mxu0
    %v7852 = vadd.f32 %v7718, %v7851
    %v7853 = vpop.f32.mrf.mxu0
    %v7854 = vadd.f32 %v7718, %v7853
    %7855 = vmatmul.bf16.gmra.mxu0 %v7691
    %v7856 = vpop.f32.mrf.mxu0
    %v7857 = vadd.f32 %v7718, %v7856
    %v7858 = vpop.f32.mrf.mxu0
    %v7859 = vadd.f32 %v7718, %v7858
    %7860 = vmatmul.bf16.gmra.mxu0 %v7692
    %v7861 = vpop.f32.mrf.mxu0
    %v7862 = vadd.f32 %v7718, %v7861
    %v7863 = vpop.f32.mrf.mxu0
    %v7864 = vadd.f32 %v7718, %v7863
    %7865 = vmatmul.bf16.gmra.mxu0 %v7693
    %v7866 = vpop.f32.mrf.mxu0
    %v7867 = vadd.f32 %v7718, %v7866
    %v7868 = vpop.f32.mrf.mxu0
    %v7869 = vadd.f32 %v7718, %v7868
    %7870 = vmatmul.bf16.gmra.mxu0 %v7694
    %v7871 = vpop.f32.mrf.mxu0
    %v7872 = vadd.f32 %v7718, %v7871
    %v7873 = vpop.f32.mrf.mxu0
    %v7874 = vadd.f32 %v7718, %v7873
    %7875 = vmatmul.bf16.gmra.mxu0 %v7695
    %v7876 = vpop.f32.mrf.mxu0
    %v7877 = vadd.f32 %v7718, %v7876
    %v7878 = vpop.f32.mrf.mxu0
    %v7879 = vadd.f32 %v7718, %v7878
    %7880 = vmatmul.bf16.gmra.mxu0 %v7696
    %v7881 = vpop.f32.mrf.mxu0
    %v7882 = vadd.f32 %v7718, %v7881
    %v7883 = vpop.f32.mrf.mxu0
    %v7884 = vadd.f32 %v7718, %v7883
    %7885 = vmatmul.bf16.gmra.mxu0 %v7697
    %v7886 = vpop.f32.mrf.mxu0
    %v7887 = vadd.f32 %v7718, %v7886
    %v7888 = vpop.f32.mrf.mxu0
    %v7889 = vadd.f32 %v7718, %v7888
    %7890 = vdwg.mxu0
    %7891 = vmatpush.bf16.msra.mxu0 %v7785
    %7892 = vmatpush.bf16.msra.mxu0 %v7783
    %7893 = vmatpush.bf16.msra.mxu0 %v7781
    %7894 = vmatpush.bf16.msra.mxu0 %v7779
    %7895 = vmatpush.bf16.msra.mxu0 %v7777
    %7896 = vmatpush.bf16.msra.mxu0 %v7775
    %7897 = vmatpush.bf16.msra.mxu0 %v7773
    %7898 = vmatpush.bf16.msra.mxu0 %v7771
    %7899 = vmatmul.bf16.gmra.mxu0 %v7682
    %v7900 = vpop.f32.mrf.mxu0
    %v7901 = vadd.f32 %v7719, %v7900
    %v7902 = vpop.f32.mrf.mxu0
    %v7903 = vadd.f32 %v7719, %v7902
    %7904 = vmatmul.bf16.gmra.mxu0 %v7683
    %v7905 = vpop.f32.mrf.mxu0
    %v7906 = vadd.f32 %v7719, %v7905
    %v7907 = vpop.f32.mrf.mxu0
    %v7908 = vadd.f32 %v7719, %v7907
    %7909 = vmatmul.bf16.gmra.mxu0 %v7684
    %v7910 = vpop.f32.mrf.mxu0
    %v7911 = vadd.f32 %v7719, %v7910
    %v7912 = vpop.f32.mrf.mxu0
    %v7913 = vadd.f32 %v7719, %v7912
    %7914 = vmatmul.bf16.gmra.mxu0 %v7685
    %v7915 = vpop.f32.mrf.mxu0
    %v7916 = vadd.f32 %v7719, %v7915
    %v7917 = vpop.f32.mrf.mxu0
    %v7918 = vadd.f32 %v7719, %v7917
    %7919 = vmatmul.bf16.gmra.mxu0 %v7686
    %v7920 = vpop.f32.mrf.mxu0
    %v7921 = vadd.f32 %v7719, %v7920
    %v7922 = vpop.f32.mrf.mxu0
    %v7923 = vadd.f32 %v7719, %v7922
    %7924 = vmatmul.bf16.gmra.mxu0 %v7687
    %v7925 = vpop.f32.mrf.mxu0
    %v7926 = vadd.f32 %v7719, %v7925
    %v7927 = vpop.f32.mrf.mxu0
    %v7928 = vadd.f32 %v7719, %v7927
    %7929 = vmatmul.bf16.gmra.mxu0 %v7688
    %v7930 = vpop.f32.mrf.mxu0
    %v7931 = vadd.f32 %v7719, %v7930
    %v7932 = vpop.f32.mrf.mxu0
    %v7933 = vadd.f32 %v7719, %v7932
    %7934 = vmatmul.bf16.gmra.mxu0 %v7689
    %v7935 = vpop.f32.mrf.mxu0
    %v7936 = vadd.f32 %v7719, %v7935
    %v7937 = vpop.f32.mrf.mxu0
    %v7938 = vadd.f32 %v7719, %v7937
    %7939 = vmatmul.bf16.gmra.mxu0 %v7690
    %v7940 = vpop.f32.mrf.mxu0
    %v7941 = vadd.f32 %v7719, %v7940
    %v7942 = vpop.f32.mrf.mxu0
    %v7943 = vadd.f32 %v7719, %v7942
    %7944 = vmatmul.bf16.gmra.mxu0 %v7691
    %v7945 = vpop.f32.mrf.mxu0
    %v7946 = vadd.f32 %v7719, %v7945
    %v7947 = vpop.f32.mrf.mxu0
    %v7948 = vadd.f32 %v7719, %v7947
    %7949 = vmatmul.bf16.gmra.mxu0 %v7692
    %v7950 = vpop.f32.mrf.mxu0
    %v7951 = vadd.f32 %v7719, %v7950
    %v7952 = vpop.f32.mrf.mxu0
    %v7953 = vadd.f32 %v7719, %v7952
    %7954 = vmatmul.bf16.gmra.mxu0 %v7693
    %v7955 = vpop.f32.mrf.mxu0
    %v7956 = vadd.f32 %v7719, %v7955
    %v7957 = vpop.f32.mrf.mxu0
    %v7958 = vadd.f32 %v7719, %v7957
    %7959 = vmatmul.bf16.gmra.mxu0 %v7694
    %v7960 = vpop.f32.mrf.mxu0
    %v7961 = vadd.f32 %v7719, %v7960
    %v7962 = vpop.f32.mrf.mxu0
    %v7963 = vadd.f32 %v7719, %v7962
    %7964 = vmatmul.bf16.gmra.mxu0 %v7695
    %v7965 = vpop.f32.mrf.mxu0
    %v7966 = vadd.f32 %v7719, %v7965
    %v7967 = vpop.f32.mrf.mxu0
    %v7968 = vadd.f32 %v7719, %v7967
    %7969 = vmatmul.bf16.gmra.mxu0 %v7696
    %v7970 = vpop.f32.mrf.mxu0
    %v7971 = vadd.f32 %v7719, %v7970
    %v7972 = vpop.f32.mrf.mxu0
    %v7973 = vadd.f32 %v7719, %v7972
    %7974 = vmatmul.bf16.gmra.mxu0 %v7697
    %v7975 = vpop.f32.mrf.mxu0
    %v7976 = vadd.f32 %v7719, %v7975
    %v7977 = vpop.f32.mrf.mxu0
    %v7978 = vadd.f32 %v7719, %v7977
    %7979 = vdwg.mxu0
    %v7980 = vmax.f32 %v7812, 0.0
    %v7981 = vmax.f32 %v7901, 0.0
    %v7982 = vmax.f32 %v7814, 0.0
    %v7983 = vmax.f32 %v7903, 0.0
    %v7984 = vmax.f32 %v7817, 0.0
    %v7985 = vmax.f32 %v7906, 0.0
    %v7986 = vmax.f32 %v7819, 0.0
    %v7987 = vmax.f32 %v7908, 0.0
    %v7988 = vmax.f32 %v7822, 0.0
    %v7989 = vmax.f32 %v7911, 0.0
    %v7990 = vmax.f32 %v7824, 0.0
    %v7991 = vmax.f32 %v7913, 0.0
    %v7992 = vmax.f32 %v7827, 0.0
    %v7993 = vmax.f32 %v7916, 0.0
    %v7994 = vmax.f32 %v7829, 0.0
    %v7995 = vmax.f32 %v7918, 0.0
    %v7996 = vmax.f32 %v7832, 0.0
    %v7997 = vmax.f32 %v7921, 0.0
    %v7998 = vmax.f32 %v7834, 0.0
    %v7999 = vmax.f32 %v7923, 0.0
    %v8000 = vmax.f32 %v7837, 0.0
    %v8001 = vmax.f32 %v7926, 0.0
    %v8002 = vmax.f32 %v7839, 0.0
    %v8003 = vmax.f32 %v7928, 0.0
    %v8004 = vmax.f32 %v7842, 0.0
    %v8005 = vmax.f32 %v7931, 0.0
    %v8006 = vmax.f32 %v7844, 0.0
    %v8007 = vmax.f32 %v7933, 0.0
    %v8008 = vmax.f32 %v7847, 0.0
    %v8009 = vmax.f32 %v7936, 0.0
    %v8010 = vmax.f32 %v7849, 0.0
    %v8011 = vmax.f32 %v7938, 0.0
    %v8012 = vmax.f32 %v7852, 0.0
    %v8013 = vmax.f32 %v7941, 0.0
    %v8014 = vmax.f32 %v7854, 0.0
    %v8015 = vmax.f32 %v7943, 0.0
    %v8016 = vmax.f32 %v7857, 0.0
    %v8017 = vmax.f32 %v7946, 0.0
    %v8018 = vmax.f32 %v7859, 0.0
    %v8019 = vmax.f32 %v7948, 0.0
    %v8020 = vmax.f32 %v7862, 0.0
    %v8021 = vmax.f32 %v7951, 0.0
    %v8022 = vmax.f32 %v7864, 0.0
    %v8023 = vmax.f32 %v7953, 0.0
    %v8024 = vmax.f32 %v7867, 0.0
    %v8025 = vmax.f32 %v7956, 0.0
    %v8026 = vmax.f32 %v7869, 0.0
    %v8027 = vmax.f32 %v7958, 0.0
    %v8028 = vmax.f32 %v7872, 0.0
    %v8029 = vmax.f32 %v7961, 0.0
    %v8030 = vmax.f32 %v7874, 0.0
    %v8031 = vmax.f32 %v7963, 0.0
    %v8032 = vmax.f32 %v7877, 0.0
    %v8033 = vmax.f32 %v7966, 0.0
    %v8034 = vmax.f32 %v7879, 0.0
    %v8035 = vmax.f32 %v7968, 0.0
    %v8036 = vmax.f32 %v7882, 0.0
    %v8037 = vmax.f32 %v7971, 0.0
    %v8038 = vmax.f32 %v7884, 0.0
    %v8039 = vmax.f32 %v7973, 0.0
    %v8040 = vmax.f32 %v7887, 0.0
    %v8041 = vmax.f32 %v7976, 0.0
    %v8042 = vmax.f32 %v7889, 0.0
    %v8043 = vmax.f32 %v7978, 0.0
    %v8044 = vpack.c.bf16 %v7982, %v7980
    %v8045 = vpack.c.bf16 %v7983, %v7981
    %v8046 = vpack.c.bf16 %v7986, %v7984
    %v8047 = vpack.c.bf16 %v7987, %v7985
    %v8048 = vpack.c.bf16 %v7990, %v7988
    %v8049 = vpack.c.bf16 %v7991, %v7989
    %v8050 = vpack.c.bf16 %v7994, %v7992
    %v8051 = vpack.c.bf16 %v7995, %v7993
    %v8052 = vpack.c.bf16 %v7998, %v7996
    %v8053 = vpack.c.bf16 %v7999, %v7997
    %v8054 = vpack.c.bf16 %v8002, %v8000
    %v8055 = vpack.c.bf16 %v8003, %v8001
    %v8056 = vpack.c.bf16 %v8006, %v8004
    %v8057 = vpack.c.bf16 %v8007, %v8005
    %v8058 = vpack.c.bf16 %v8010, %v8008
    %v8059 = vpack.c.bf16 %v8011, %v8009
    %v8060 = vpack.c.bf16 %v8014, %v8012
    %v8061 = vpack.c.bf16 %v8015, %v8013
    %v8062 = vpack.c.bf16 %v8018, %v8016
    %v8063 = vpack.c.bf16 %v8019, %v8017
    %v8064 = vpack.c.bf16 %v8022, %v8020
    %v8065 = vpack.c.bf16 %v8023, %v8021
    %v8066 = vpack.c.bf16 %v8026, %v8024
    %v8067 = vpack.c.bf16 %v8027, %v8025
    %v8068 = vpack.c.bf16 %v8030, %v8028
    %v8069 = vpack.c.bf16 %v8031, %v8029
    %v8070 = vpack.c.bf16 %v8034, %v8032
    %v8071 = vpack.c.bf16 %v8035, %v8033
    %v8072 = vpack.c.bf16 %v8038, %v8036
    %v8073 = vpack.c.bf16 %v8039, %v8037
    %v8074 = vpack.c.bf16 %v8042, %v8040
    %v8075 = vpack.c.bf16 %v8043, %v8041
    %s8076 = scalar_lea.vmem [#allocation19], 128
    %v8077 = vld [vmem:[%s8076] sm:$0xf]
    %v8078 = vld [vmem:[%s8076 + $0x4] sm:$0xf]
    %v8079 = vld [vmem:[%s8076 + $0x8] sm:$0xf]
    %v8080 = vld [vmem:[%s8076 + $0xc] sm:$0xf]
    %v8081 = vld [vmem:[%s8076 + $0x10] sm:$0xf]
    %v8082 = vld [vmem:[%s8076 + $0x14] sm:$0xf]
    %v8083 = vld [vmem:[%s8076 + $0x18] sm:$0xf]
    %v8084 = vld [vmem:[%s8076 + $0x1c] sm:$0xf]
    %v8085 = vld [vmem:[%s8076 + $0x20] sm:$0xf]
    %v8086 = vld [vmem:[%s8076 + $0x24] sm:$0xf]
    %v8087 = vld [vmem:[%s8076 + $0x28] sm:$0xf]
    %v8088 = vld [vmem:[%s8076 + $0x2c] sm:$0xf]
    %v8089 = vld [vmem:[%s8076 + $0x30] sm:$0xf]
    %v8090 = vld [vmem:[%s8076 + $0x34] sm:$0xf]
    %v8091 = vld [vmem:[%s8076 + $0x38] sm:$0xf]
    %v8092 = vld [vmem:[%s8076 + $0x3c] sm:$0xf]
    %v8093 = vld [vmem:[%s8076 + $0x40] sm:$0xf]
    %v8094 = vld [vmem:[%s8076 + $0x44] sm:$0xf]
    %v8095 = vld [vmem:[%s8076 + $0x48] sm:$0xf]
    %v8096 = vld [vmem:[%s8076 + $0x4c] sm:$0xf]
    %v8097 = vld [vmem:[%s8076 + $0x50] sm:$0xf]
    %v8098 = vld [vmem:[%s8076 + $0x54] sm:$0xf]
    %v8099 = vld [vmem:[%s8076 + $0x58] sm:$0xf]
    %v8100 = vld [vmem:[%s8076 + $0x5c] sm:$0xf]
    %v8101 = vld [vmem:[%s8076 + $0x60] sm:$0xf]
    %v8102 = vld [vmem:[%s8076 + $0x64] sm:$0xf]
    %v8103 = vld [vmem:[%s8076 + $0x68] sm:$0xf]
    %v8104 = vld [vmem:[%s8076 + $0x6c] sm:$0xf]
    %v8105 = vld [vmem:[%s8076 + $0x70] sm:$0xf]
    %v8106 = vld [vmem:[%s8076 + $0x74] sm:$0xf]
    %v8107 = vld [vmem:[%s8076 + $0x78] sm:$0xf]
    %v8108 = vld [vmem:[%s8076 + $0x7c] sm:$0xf]
    %s8109 = scalar_lea.vmem [#allocation20], 1
    %v8110 = vld [vmem:[%s8109] sm:$0x1]
    %v8112 = vperm.slane %v8110, 0
    %v8146 = vunpack.c.l.b16 %v8077
    %v8147 = vunpack.c.l.b16 %v8078
    %v8148 = vunpack.c.l.b16 %v8079
    %v8149 = vunpack.c.l.b16 %v8080
    %v8150 = vunpack.c.l.b16 %v8081
    %v8151 = vunpack.c.l.b16 %v8082
    %v8152 = vunpack.c.l.b16 %v8083
    %v8153 = vunpack.c.l.b16 %v8084
    %v8154 = vunpack.c.l.b16 %v8085
    %v8155 = vunpack.c.l.b16 %v8086
    %v8156 = vunpack.c.l.b16 %v8087
    %v8157 = vunpack.c.l.b16 %v8088
    %v8158 = vunpack.c.l.b16 %v8089
    %v8159 = vunpack.c.l.b16 %v8090
    %v8160 = vunpack.c.l.b16 %v8091
    %v8161 = vunpack.c.l.b16 %v8092
    %v8162 = vunpack.c.l.b16 %v8093
    %v8163 = vunpack.c.l.b16 %v8094
    %v8164 = vunpack.c.l.b16 %v8095
    %v8165 = vunpack.c.l.b16 %v8096
    %v8166 = vunpack.c.l.b16 %v8097
    %v8167 = vunpack.c.l.b16 %v8098
    %v8168 = vunpack.c.l.b16 %v8099
    %v8169 = vunpack.c.l.b16 %v8100
    %v8170 = vunpack.c.l.b16 %v8101
    %v8171 = vunpack.c.l.b16 %v8102
    %v8172 = vunpack.c.l.b16 %v8103
    %v8173 = vunpack.c.l.b16 %v8104
    %v8174 = vunpack.c.l.b16 %v8105
    %v8175 = vunpack.c.l.b16 %v8106
    %v8176 = vunpack.c.l.b16 %v8107
    %v8177 = vunpack.c.l.b16 %v8108
    %v8178 = vpack.c.b16 %v8147, %v8146
    %v8179 = vpack.c.b16 %v8149, %v8148
    %v8180 = vpack.c.b16 %v8151, %v8150
    %v8181 = vpack.c.b16 %v8153, %v8152
    %v8182 = vpack.c.b16 %v8155, %v8154
    %v8183 = vpack.c.b16 %v8157, %v8156
    %v8184 = vpack.c.b16 %v8159, %v8158
    %v8185 = vpack.c.b16 %v8161, %v8160
    %v8186 = vpack.c.b16 %v8163, %v8162
    %v8187 = vpack.c.b16 %v8165, %v8164
    %v8188 = vpack.c.b16 %v8167, %v8166
    %v8189 = vpack.c.b16 %v8169, %v8168
    %v8190 = vpack.c.b16 %v8171, %v8170
    %v8191 = vpack.c.b16 %v8173, %v8172
    %v8192 = vpack.c.b16 %v8175, %v8174
    %v8193 = vpack.c.b16 %v8177, %v8176
    %8210 = vmatpush.bf16.msra.mxu0 %v8185
    %8211 = vmatpush.bf16.msra.mxu0 %v8184
    %8212 = vmatpush.bf16.msra.mxu0 %v8183
    %8213 = vmatpush.bf16.msra.mxu0 %v8182
    %8214 = vmatpush.bf16.msra.mxu0 %v8181
    %8215 = vmatpush.bf16.msra.mxu0 %v8180
    %8216 = vmatpush.bf16.msra.mxu0 %v8179
    %8217 = vmatpush.bf16.msra.mxu0 %v8178
    %8218 = vmatmul.bf16.gmra.mxu0 %v8044
    %v8219 = vpop.f32.mrf.mxu0
    %v8220 = vadd.f32 %v8112, %v8219
    %v8221 = vpop.f32.mrf.mxu0
    %v8222 = vadd.f32 %v8112, %v8221
    %8223 = vmatmul.bf16.gmra.mxu0 %v8046
    %v8224 = vpop.f32.mrf.mxu0
    %v8225 = vadd.f32 %v8112, %v8224
    %v8226 = vpop.f32.mrf.mxu0
    %v8227 = vadd.f32 %v8112, %v8226
    %8228 = vmatmul.bf16.gmra.mxu0 %v8048
    %v8229 = vpop.f32.mrf.mxu0
    %v8230 = vadd.f32 %v8112, %v8229
    %v8231 = vpop.f32.mrf.mxu0
    %v8232 = vadd.f32 %v8112, %v8231
    %8233 = vmatmul.bf16.gmra.mxu0 %v8050
    %v8234 = vpop.f32.mrf.mxu0
    %v8235 = vadd.f32 %v8112, %v8234
    %v8236 = vpop.f32.mrf.mxu0
    %v8237 = vadd.f32 %v8112, %v8236
    %8238 = vmatmul.bf16.gmra.mxu0 %v8052
    %v8239 = vpop.f32.mrf.mxu0
    %v8240 = vadd.f32 %v8112, %v8239
    %v8241 = vpop.f32.mrf.mxu0
    %v8242 = vadd.f32 %v8112, %v8241
    %8243 = vmatmul.bf16.gmra.mxu0 %v8054
    %v8244 = vpop.f32.mrf.mxu0
    %v8245 = vadd.f32 %v8112, %v8244
    %v8246 = vpop.f32.mrf.mxu0
    %v8247 = vadd.f32 %v8112, %v8246
    %8248 = vmatmul.bf16.gmra.mxu0 %v8056
    %v8249 = vpop.f32.mrf.mxu0
    %v8250 = vadd.f32 %v8112, %v8249
    %v8251 = vpop.f32.mrf.mxu0
    %v8252 = vadd.f32 %v8112, %v8251
    %8253 = vmatmul.bf16.gmra.mxu0 %v8058
    %v8254 = vpop.f32.mrf.mxu0
    %v8255 = vadd.f32 %v8112, %v8254
    %v8256 = vpop.f32.mrf.mxu0
    %v8257 = vadd.f32 %v8112, %v8256
    %8258 = vmatmul.bf16.gmra.mxu0 %v8060
    %v8259 = vpop.f32.mrf.mxu0
    %v8260 = vadd.f32 %v8112, %v8259
    %v8261 = vpop.f32.mrf.mxu0
    %v8262 = vadd.f32 %v8112, %v8261
    %8263 = vmatmul.bf16.gmra.mxu0 %v8062
    %v8264 = vpop.f32.mrf.mxu0
    %v8265 = vadd.f32 %v8112, %v8264
    %v8266 = vpop.f32.mrf.mxu0
    %v8267 = vadd.f32 %v8112, %v8266
    %8268 = vmatmul.bf16.gmra.mxu0 %v8064
    %v8269 = vpop.f32.mrf.mxu0
    %v8270 = vadd.f32 %v8112, %v8269
    %v8271 = vpop.f32.mrf.mxu0
    %v8272 = vadd.f32 %v8112, %v8271
    %8273 = vmatmul.bf16.gmra.mxu0 %v8066
    %v8274 = vpop.f32.mrf.mxu0
    %v8275 = vadd.f32 %v8112, %v8274
    %v8276 = vpop.f32.mrf.mxu0
    %v8277 = vadd.f32 %v8112, %v8276
    %8278 = vmatmul.bf16.gmra.mxu0 %v8068
    %v8279 = vpop.f32.mrf.mxu0
    %v8280 = vadd.f32 %v8112, %v8279
    %v8281 = vpop.f32.mrf.mxu0
    %v8282 = vadd.f32 %v8112, %v8281
    %8283 = vmatmul.bf16.gmra.mxu0 %v8070
    %v8284 = vpop.f32.mrf.mxu0
    %v8285 = vadd.f32 %v8112, %v8284
    %v8286 = vpop.f32.mrf.mxu0
    %v8287 = vadd.f32 %v8112, %v8286
    %8288 = vmatmul.bf16.gmra.mxu0 %v8072
    %v8289 = vpop.f32.mrf.mxu0
    %v8290 = vadd.f32 %v8112, %v8289
    %v8291 = vpop.f32.mrf.mxu0
    %v8292 = vadd.f32 %v8112, %v8291
    %8293 = vmatmul.bf16.gmra.mxu0 %v8074
    %v8294 = vpop.f32.mrf.mxu0
    %v8295 = vadd.f32 %v8112, %v8294
    %v8296 = vpop.f32.mrf.mxu0
    %v8297 = vadd.f32 %v8112, %v8296
    %8298 = vdwg.mxu0
    %8299 = vmatpush.bf16.msra.mxu0 %v8193
    %8300 = vmatpush.bf16.msra.mxu0 %v8192
    %8301 = vmatpush.bf16.msra.mxu0 %v8191
    %8302 = vmatpush.bf16.msra.mxu0 %v8190
    %8303 = vmatpush.bf16.msra.mxu0 %v8189
    %8304 = vmatpush.bf16.msra.mxu0 %v8188
    %8305 = vmatpush.bf16.msra.mxu0 %v8187
    %8306 = vmatpush.bf16.msra.mxu0 %v8186
    %8307 = vmatmul.bf16.gmra.mxu0 %v8045
    %v8308 = vpop.f32.mrf.mxu0
    %v8309 = vadd.f32 %v8220, %v8308
    %v8310 = vpop.f32.mrf.mxu0
    %v8311 = vadd.f32 %v8222, %v8310
    %8312 = vmatmul.bf16.gmra.mxu0 %v8047
    %v8313 = vpop.f32.mrf.mxu0
    %v8314 = vadd.f32 %v8225, %v8313
    %v8315 = vpop.f32.mrf.mxu0
    %v8316 = vadd.f32 %v8227, %v8315
    %8317 = vmatmul.bf16.gmra.mxu0 %v8049
    %v8318 = vpop.f32.mrf.mxu0
    %v8319 = vadd.f32 %v8230, %v8318
    %v8320 = vpop.f32.mrf.mxu0
    %v8321 = vadd.f32 %v8232, %v8320
    %8322 = vmatmul.bf16.gmra.mxu0 %v8051
    %v8323 = vpop.f32.mrf.mxu0
    %v8324 = vadd.f32 %v8235, %v8323
    %v8325 = vpop.f32.mrf.mxu0
    %v8326 = vadd.f32 %v8237, %v8325
    %8327 = vmatmul.bf16.gmra.mxu0 %v8053
    %v8328 = vpop.f32.mrf.mxu0
    %v8329 = vadd.f32 %v8240, %v8328
    %v8330 = vpop.f32.mrf.mxu0
    %v8331 = vadd.f32 %v8242, %v8330
    %8332 = vmatmul.bf16.gmra.mxu0 %v8055
    %v8333 = vpop.f32.mrf.mxu0
    %v8334 = vadd.f32 %v8245, %v8333
    %v8335 = vpop.f32.mrf.mxu0
    %v8336 = vadd.f32 %v8247, %v8335
    %8337 = vmatmul.bf16.gmra.mxu0 %v8057
    %v8338 = vpop.f32.mrf.mxu0
    %v8339 = vadd.f32 %v8250, %v8338
    %v8340 = vpop.f32.mrf.mxu0
    %v8341 = vadd.f32 %v8252, %v8340
    %8342 = vmatmul.bf16.gmra.mxu0 %v8059
    %v8343 = vpop.f32.mrf.mxu0
    %v8344 = vadd.f32 %v8255, %v8343
    %v8345 = vpop.f32.mrf.mxu0
    %v8346 = vadd.f32 %v8257, %v8345
    %8347 = vmatmul.bf16.gmra.mxu0 %v8061
    %v8348 = vpop.f32.mrf.mxu0
    %v8349 = vadd.f32 %v8260, %v8348
    %v8350 = vpop.f32.mrf.mxu0
    %v8351 = vadd.f32 %v8262, %v8350
    %8352 = vmatmul.bf16.gmra.mxu0 %v8063
    %v8353 = vpop.f32.mrf.mxu0
    %v8354 = vadd.f32 %v8265, %v8353
    %v8355 = vpop.f32.mrf.mxu0
    %v8356 = vadd.f32 %v8267, %v8355
    %8357 = vmatmul.bf16.gmra.mxu0 %v8065
    %v8358 = vpop.f32.mrf.mxu0
    %v8359 = vadd.f32 %v8270, %v8358
    %v8360 = vpop.f32.mrf.mxu0
    %v8361 = vadd.f32 %v8272, %v8360
    %8362 = vmatmul.bf16.gmra.mxu0 %v8067
    %v8363 = vpop.f32.mrf.mxu0
    %v8364 = vadd.f32 %v8275, %v8363
    %v8365 = vpop.f32.mrf.mxu0
    %v8366 = vadd.f32 %v8277, %v8365
    %8367 = vmatmul.bf16.gmra.mxu0 %v8069
    %v8368 = vpop.f32.mrf.mxu0
    %v8369 = vadd.f32 %v8280, %v8368
    %v8370 = vpop.f32.mrf.mxu0
    %v8371 = vadd.f32 %v8282, %v8370
    %8372 = vmatmul.bf16.gmra.mxu0 %v8071
    %v8373 = vpop.f32.mrf.mxu0
    %v8374 = vadd.f32 %v8285, %v8373
    %v8375 = vpop.f32.mrf.mxu0
    %v8376 = vadd.f32 %v8287, %v8375
    %8377 = vmatmul.bf16.gmra.mxu0 %v8073
    %v8378 = vpop.f32.mrf.mxu0
    %v8379 = vadd.f32 %v8290, %v8378
    %v8380 = vpop.f32.mrf.mxu0
    %v8381 = vadd.f32 %v8292, %v8380
    %8382 = vmatmul.bf16.gmra.mxu0 %v8075
    %v8383 = vpop.f32.mrf.mxu0
    %v8384 = vadd.f32 %v8295, %v8383
    %v8385 = vpop.f32.mrf.mxu0
    %v8386 = vadd.f32 %v8297, %v8385
    %8387 = vdwg.mxu0
    %v8388 = vadd.f32 %v7650, %v8309
    %v8389 = vadd.f32 %v7651, %v8311
    %v8390 = vadd.f32 %v7652, %v8314
    %v8391 = vadd.f32 %v7653, %v8316
    %v8392 = vadd.f32 %v7654, %v8319
    %v8393 = vadd.f32 %v7655, %v8321
    %v8394 = vadd.f32 %v7656, %v8324
    %v8395 = vadd.f32 %v7657, %v8326
    %v8396 = vadd.f32 %v7658, %v8329
    %v8397 = vadd.f32 %v7659, %v8331
    %v8398 = vadd.f32 %v7660, %v8334
    %v8399 = vadd.f32 %v7661, %v8336
    %v8400 = vadd.f32 %v7662, %v8339
    %v8401 = vadd.f32 %v7663, %v8341
    %v8402 = vadd.f32 %v7664, %v8344
    %v8403 = vadd.f32 %v7665, %v8346
    %v8404 = vadd.f32 %v7666, %v8349
    %v8405 = vadd.f32 %v7667, %v8351
    %v8406 = vadd.f32 %v7668, %v8354
    %v8407 = vadd.f32 %v7669, %v8356
    %v8408 = vadd.f32 %v7670, %v8359
    %v8409 = vadd.f32 %v7671, %v8361
    %v8410 = vadd.f32 %v7672, %v8364
    %v8411 = vadd.f32 %v7673, %v8366
    %v8412 = vadd.f32 %v7674, %v8369
    %v8413 = vadd.f32 %v7675, %v8371
    %v8414 = vadd.f32 %v7676, %v8374
    %v8415 = vadd.f32 %v7677, %v8376
    %v8416 = vadd.f32 %v7678, %v8379
    %v8417 = vadd.f32 %v7679, %v8381
    %v8418 = vadd.f32 %v7680, %v8384
    %v8419 = vadd.f32 %v7681, %v8386
    %s8420 = scalar_lea.vmem %s16, 1
    %v8421 = vld [vmem:[%s8420] sm:$0x1]
    %v8423 = vperm.slane %v8421, 0
    %v8425 = vmul.f32 %v8388, %v8423
    %v8426 = vmul.f32 %v8389, %v8423
    %v8427 = vmul.f32 %v8390, %v8423
    %v8428 = vmul.f32 %v8391, %v8423
    %v8429 = vmul.f32 %v8392, %v8423
    %v8430 = vmul.f32 %v8393, %v8423
    %v8431 = vmul.f32 %v8394, %v8423
    %v8432 = vmul.f32 %v8395, %v8423
    %v8433 = vmul.f32 %v8396, %v8423
    %v8434 = vmul.f32 %v8397, %v8423
    %v8435 = vmul.f32 %v8398, %v8423
    %v8436 = vmul.f32 %v8399, %v8423
    %v8437 = vmul.f32 %v8400, %v8423
    %v8438 = vmul.f32 %v8401, %v8423
    %v8439 = vmul.f32 %v8402, %v8423
    %v8440 = vmul.f32 %v8403, %v8423
    %v8441 = vmul.f32 %v8404, %v8423
    %v8442 = vmul.f32 %v8405, %v8423
    %v8443 = vmul.f32 %v8406, %v8423
    %v8444 = vmul.f32 %v8407, %v8423
    %v8445 = vmul.f32 %v8408, %v8423
    %v8446 = vmul.f32 %v8409, %v8423
    %v8447 = vmul.f32 %v8410, %v8423
    %v8448 = vmul.f32 %v8411, %v8423
    %v8449 = vmul.f32 %v8412, %v8423
    %v8450 = vmul.f32 %v8413, %v8423
    %v8451 = vmul.f32 %v8414, %v8423
    %v8452 = vmul.f32 %v8415, %v8423
    %v8453 = vmul.f32 %v8416, %v8423
    %v8454 = vmul.f32 %v8417, %v8423
    %v8455 = vmul.f32 %v8418, %v8423
    %v8456 = vmul.f32 %v8419, %v8423
    %s8457 = scalar_lea.vmem [#allocation22], 1
    %v8458 = vld [vmem:[%s8457] sm:$0x1]
    %v8460 = vperm.slane %v8458, 0
    %v8462 = vadd.f32 %v8425, %v8460
    %v8463 = vadd.f32 %v8426, %v8460
    %v8464 = vadd.f32 %v8427, %v8460
    %v8465 = vadd.f32 %v8428, %v8460
    %v8466 = vadd.f32 %v8429, %v8460
    %v8467 = vadd.f32 %v8430, %v8460
    %v8468 = vadd.f32 %v8431, %v8460
    %v8469 = vadd.f32 %v8432, %v8460
    %v8470 = vadd.f32 %v8433, %v8460
    %v8471 = vadd.f32 %v8434, %v8460
    %v8472 = vadd.f32 %v8435, %v8460
    %v8473 = vadd.f32 %v8436, %v8460
    %v8474 = vadd.f32 %v8437, %v8460
    %v8475 = vadd.f32 %v8438, %v8460
    %v8476 = vadd.f32 %v8439, %v8460
    %v8477 = vadd.f32 %v8440, %v8460
    %v8478 = vadd.f32 %v8441, %v8460
    %v8479 = vadd.f32 %v8442, %v8460
    %v8480 = vadd.f32 %v8443, %v8460
    %v8481 = vadd.f32 %v8444, %v8460
    %v8482 = vadd.f32 %v8445, %v8460
    %v8483 = vadd.f32 %v8446, %v8460
    %v8484 = vadd.f32 %v8447, %v8460
    %v8485 = vadd.f32 %v8448, %v8460
    %v8486 = vadd.f32 %v8449, %v8460
    %v8487 = vadd.f32 %v8450, %v8460
    %v8488 = vadd.f32 %v8451, %v8460
    %v8489 = vadd.f32 %v8452, %v8460
    %v8490 = vadd.f32 %v8453, %v8460
    %v8491 = vadd.f32 %v8454, %v8460
    %v8492 = vadd.f32 %v8455, %v8460
    %v8493 = vadd.f32 %v8456, %v8460
    %8494 = vst [vmem:[#allocation23] sm:$0xff] %v8462
    %8495 = vst [vmem:[#allocation23 + $0x8] sm:$0xff] %v8463
    %8496 = vst [vmem:[#allocation23 + $0x10] sm:$0xff] %v8464
    %8497 = vst [vmem:[#allocation23 + $0x18] sm:$0xff] %v8465
    %8498 = vst [vmem:[#allocation23 + $0x20] sm:$0xff] %v8466
    %8499 = vst [vmem:[#allocation23 + $0x28] sm:$0xff] %v8467
    %8500 = vst [vmem:[#allocation23 + $0x30] sm:$0xff] %v8468
    %8501 = vst [vmem:[#allocation23 + $0x38] sm:$0xff] %v8469
    %8502 = vst [vmem:[#allocation23 + $0x40] sm:$0xff] %v8470
    %8503 = vst [vmem:[#allocation23 + $0x48] sm:$0xff] %v8471
    %8504 = vst [vmem:[#allocation23 + $0x50] sm:$0xff] %v8472
    %8505 = vst [vmem:[#allocation23 + $0x58] sm:$0xff] %v8473
    %8506 = vst [vmem:[#allocation23 + $0x60] sm:$0xff] %v8474
    %8507 = vst [vmem:[#allocation23 + $0x68] sm:$0xff] %v8475
    %8508 = vst [vmem:[#allocation23 + $0x70] sm:$0xff] %v8476
    %8509 = vst [vmem:[#allocation23 + $0x78] sm:$0xff] %v8477
    %8510 = vst [vmem:[#allocation23 + $0x80] sm:$0xff] %v8478
    %8511 = vst [vmem:[#allocation23 + $0x88] sm:$0xff] %v8479
    %8512 = vst [vmem:[#allocation23 + $0x90] sm:$0xff] %v8480
    %8513 = vst [vmem:[#allocation23 + $0x98] sm:$0xff] %v8481
    %8514 = vst [vmem:[#allocation23 + $0xa0] sm:$0xff] %v8482
    %8515 = vst [vmem:[#allocation23 + $0xa8] sm:$0xff] %v8483
    %8516 = vst [vmem:[#allocation23 + $0xb0] sm:$0xff] %v8484
    %8517 = vst [vmem:[#allocation23 + $0xb8] sm:$0xff] %v8485
    %8518 = vst [vmem:[#allocation23 + $0xc0] sm:$0xff] %v8486
    %8519 = vst [vmem:[#allocation23 + $0xc8] sm:$0xff] %v8487
    %8520 = vst [vmem:[#allocation23 + $0xd0] sm:$0xff] %v8488
    %8521 = vst [vmem:[#allocation23 + $0xd8] sm:$0xff] %v8489
    %8522 = vst [vmem:[#allocation23 + $0xe0] sm:$0xff] %v8490
    %8523 = vst [vmem:[#allocation23 + $0xe8] sm:$0xff] %v8491
    %8524 = vst [vmem:[#allocation23 + $0xf0] sm:$0xff] %v8492
    %8525 = vst [vmem:[#allocation23 + $0xf8] sm:$0xff] %v8493
    // Predicated region
    $region126: #{gps_forward.1} parent=1 // pred_check
      _
    $region127: #{gps_forward.1} parent=1 // pred_check_branch
      %8527 = sbr.rel (0) target = $region129
    $region128: #{gps_forward.1} parent=1 // pred_region
      %8529 = vsyncadd [#allocation4], 0
      %s8530 = sshll.u32 [#allocation23], 4
      %s8531 = int_to_ptr.vmem [resolvable:$true] %s8530
      %s8532 = sshll.u32 %s18, 4
      %s8533 = int_to_ptr.hbm [resolvable:$true] %s8532
      %8538 = dma.vmem_to_hbm [thread:$0]  %s8531, 4096, %s8533, [#allocation4], 128, 128, 8
    $region129: #{gps_forward.1} parent=1 // pred_fallthru
      _
    // Predicated region
    $region130: #{gps_forward.1} parent=1 // pred_check
      _
    $region131: #{gps_forward.1} parent=1 // pred_check_branch
      %8540 = sbr.rel (0) target = $region133
    $region132: #{gps_forward.1} parent=1 // pred_region
      %8542 = dma.done [#allocation4], 4096
    $region133: #{gps_forward.1} parent=1 // pred_fallthru
      _
    %8543 = vsyncpa [#allocation3], 1
    %8544 = vsyncpa [#allocation6], 1
    %8545 = vsyncpa [#allocation9], 1
    %8546 = vsyncpa [#allocation12], 1
    %8547 = vsyncpa [#allocation15], 1
    %8548 = vsyncpa [#allocation18], 1
    %8549 = vsyncpa [#allocation21], 1
    %8550 = vsyncpa [#allocation4], 1

</llo_original>
